<compile_context>
chip_gen: v7x
topology: tpu7x:2x2x1
jax: 0.10.0
libtpu: 0.0.40
codegen_flags: <defaults>
</compile_context>

<pallas_src>
import numpy as np
import jax
import jax.numpy as jnp
from jax.experimental import pallas as pl
from jax.experimental.pallas import tpu as pltpu


# Python floats (NOT jnp arrays) so the kernel does not capture traced consts.
_NEG_FILL = -3.0e38
_POS_FILL = 3.0e38

# per-step flag bits in the work list
_F_FIRST = 1   # first chunk of a tile  -> init accumulators
_F_LAST = 2    # last chunk of a tile   -> finalize / write output
_F_VALID = 4   # real work (not padding)


def _split3_bf16(x):
    """Split f32 (N, C) into three stacked bf16 slabs (N, 3C) whose sum
    reproduces x to ~24 mantissa bits.  Lets the counts/sums matmul run as a
    single bf16 MXU pass instead of 6 f32-emulation passes."""
    x = x.astype(jnp.float32)
    x0 = x.astype(jnp.bfloat16)
    r1 = x - x0.astype(jnp.float32)
    x1 = r1.astype(jnp.bfloat16)
    r2 = r1 - x1.astype(jnp.float32)
    x2 = r2.astype(jnp.bfloat16)
    return jnp.concatenate([x0, x1, x2], axis=1)


# ----------------------------------------------------------------------------
# Pallas kernel factory.
#
# Kernel signature (max/min):
#   kernel(tile_ref, chunk_ref, flags_ref, seg_ref, base3_ref, feat_t_ref,
#          out_ref, sum_acc, ext_acc)
# Kernel signature (sum/mean):
#   kernel(tile_ref, chunk_ref, flags_ref, seg_ref, base3_ref, out_ref, sum_acc)
#
#   tile/chunk/flags : SMEM int32 work-list arrays (scalar prefetch)
#   seg_ref    : (1, PT)          int32  cluster id of each point in the chunk
#   base3_ref  : (PT, 3*ncols)    bf16   3-way split of [ones | coord (| feat)]
#   feat_t_ref : (Cf, PT)         f32    transposed features (max/min only)
#   out_ref    : (TM, Cc+Cf)      f32    fused [coord_mean | feat_reduce] slab
#   sum_acc    : (TM, 3*ncols)    f32    running split counts / sums
#   ext_acc    : (TM, Cf)         f32    running max/min (max/min only)
# ----------------------------------------------------------------------------
def _make_segment_kernel(reduction, cc, cf, tile_m, pt_chunk, steps_per_core, sb):
    ncols = 1 + cc + (cf if reduction in ("sum", "mean") else 0)

    if reduction in ("max", "min"):

        def kernel(tile_ref, chunk_ref, flags_ref, seg_ref, base3_ref, ft_ref,
                   out_ref, sum_acc, ext_acc):
            widx = pl.program_id(0) * steps_per_core + pl.program_id(1)
            fl = flags_ref[widx]
            tile = tile_ref[widx]

            @pl.when((fl & _F_FIRST) != 0)
            def _init():
                sum_acc[...] = jnp.zeros(sum_acc.shape, jnp.float32)
                fill = _NEG_FILL if reduction == "max" else _POS_FILL
                ext_acc[...] = jnp.full(ext_acc.shape, fill, jnp.float32)

            @pl.when((fl & _F_VALID) != 0)
            def _body():
                seg = seg_ref[...]                                   # (1, PT)
                cid = tile * tile_m + jax.lax.broadcasted_iota(
                    jnp.int32, (tile_m, 1), 0)                       # (TM, 1)

                # counts + coord sums: single bf16 MXU matmul, f32 accumulation.
                maskb = (seg == cid).astype(jnp.bfloat16)            # (TM, PT)
                sum_acc[...] += jnp.dot(maskb, base3_ref[...],
                                        preferred_element_type=jnp.float32)

                # max/min: per-channel masked select over 128-lane sub-blocks
                # (no rank-3 intermediate, live set stays inside the vreg file).
                lane = jax.lax.broadcasted_iota(jnp.int32, (tile_m, cf), 1)
                ext = ext_acc[...]                                   # (TM, Cf)
                for p0 in range(0, pt_chunk, sb):
                    m_blk = seg_ref[:, p0:p0 + sb] == cid            # (TM, sb)
                    for c in range(cf):
                        row = ft_ref[c:c + 1, p0:p0 + sb]            # (1, sb)
                        if reduction == "max":
                            colv = jnp.max(jnp.where(m_blk, row, _NEG_FILL),
                                           axis=-1, keepdims=True)   # (TM, 1)
                            ext = jnp.maximum(
                                ext, jnp.where(lane == c, colv, _NEG_FILL))
                        else:
                            colv = jnp.min(jnp.where(m_blk, row, _POS_FILL),
                                           axis=-1, keepdims=True)
                            ext = jnp.minimum(
                                ext, jnp.where(lane == c, colv, _POS_FILL))
                ext_acc[...] = ext

            @pl.when((fl & _F_LAST) != 0)
            def _fin():
                tot = (sum_acc[:, 0:ncols] + sum_acc[:, ncols:2 * ncols]
                       + sum_acc[:, 2 * ncols:3 * ncols])
                denom = jnp.maximum(tot[:, 0:1], 1.0)
                coord_mean = tot[:, 1:1 + cc] / denom
                out_ref[...] = jnp.concatenate([coord_mean, ext_acc[...]], axis=1)

        return kernel

    # sum / mean: everything is one bf16 MXU matmul per chunk.
    def kernel(tile_ref, chunk_ref, flags_ref, seg_ref, base3_ref,
               out_ref, sum_acc):
        widx = pl.program_id(0) * steps_per_core + pl.program_id(1)
        fl = flags_ref[widx]
        tile = tile_ref[widx]

        @pl.when((fl & _F_FIRST) != 0)
        def _init():
            sum_acc[...] = jnp.zeros(sum_acc.shape, jnp.float32)

        @pl.when((fl & _F_VALID) != 0)
        def _body():
            seg = seg_ref[...]                                       # (1, PT)
            cid = tile * tile_m + jax.lax.broadcasted_iota(
                jnp.int32, (tile_m, 1), 0)                           # (TM, 1)
            maskb = (seg == cid).astype(jnp.bfloat16)                # (TM, PT)
            sum_acc[...] += jnp.dot(maskb, base3_ref[...],
                                    preferred_element_type=jnp.float32)

        @pl.when((fl & _F_LAST) != 0)
        def _fin():
            tot = (sum_acc[:, 0:ncols] + sum_acc[:, ncols:2 * ncols]
                   + sum_acc[:, 2 * ncols:3 * ncols])
            denom = jnp.maximum(tot[:, 0:1], 1.0)
            coord_mean = tot[:, 1:1 + cc] / denom
            feat_sum = tot[:, 1 + cc:1 + cc + cf]
            featv = feat_sum / denom if reduction == "mean" else feat_sum
            out_ref[...] = jnp.concatenate([coord_mean, featv], axis=1)

    return kernel


def segment_reduce_pallas(seg_ids, sorted_coord, sorted_feat, idx_ptr,
                          num_clusters, reduction="max",
                          tile_m=128, pt_chunk=512):
    """segment_csr over cluster-sorted points, via a Pallas TPU kernel."""
    if reduction not in ("max", "min", "sum", "mean"):
        raise ValueError(f"unsupported reduction: {reduction}")

    n_pts = int(sorted_coord.shape[0])
    cc = int(sorted_coord.shape[1])
    cf = int(sorted_feat.shape[1])
    m = int(num_clusters)

    sb = 128 if pt_chunk % 128 == 0 else pt_chunk     # max/min sub-block (lanes)

    m_pad = max(tile_m, ((m + tile_m - 1) // tile_m) * tile_m)
    n_tiles = m_pad // tile_m

    n_chunks_total = max(1, (n_pts + pt_chunk - 1) // pt_chunk)
    np_pad = n_chunks_total * pt_chunk
    pad = np_pad - n_pts

    # ---- host: per-tile chunk windows from idx_ptr, flattened to a work list
    idx_ptr = np.asarray(idx_ptr, dtype=np.int64)
    t = np.arange(n_tiles, dtype=np.int64)
    s_pt = idx_ptr[np.minimum(t * tile_m, m)]
    e_pt = idx_ptr[np.minimum((t + 1) * tile_m, m)]
    start_chunk = np.minimum(s_pt // pt_chunk, n_chunks_total - 1)
    nchunks = np.where(
        e_pt > s_pt,
        (e_pt - start_chunk * pt_chunk + pt_chunk - 1) // pt_chunk, 0
    ).astype(np.int64)

    def tile_steps(tt):
        nc = int(nchunks[tt])
        st = int(start_chunk[tt])
        steps = []
        for j in range(nc):
            f = _F_VALID | (_F_FIRST if j == 0 else 0) | (_F_LAST if j == nc - 1 else 0)
            steps.append((tt, st + j, f))
        return steps

    # split whole tiles across 2 cores (v7x megacore), balanced by step count
    if n_tiles >= 2:
        csum = np.cumsum(nchunks)
        total = csum[-1]
        k = int(np.argmin(np.abs(csum[:-1] - total / 2.0))) + 1
        groups = [range(0, k), range(k, n_tiles)]
    else:
        groups = [range(0, n_tiles)]

    per_core = []
    for g in groups:
        lst = []
        for tt in g:
            lst.extend(tile_steps(tt))
        per_core.append(lst)
    if len(per_core) == 2 and (not per_core[0] or not per_core[1]):
        per_core = [per_core[0] + per_core[1]]       # degenerate: single core
    ncores = len(per_core)
    steps_per_core = max(1, max(len(l) for l in per_core))

    tile_arr = np.zeros((ncores, steps_per_core), np.int32)
    chunk_arr = np.zeros((ncores, steps_per_core), np.int32)
    flags_arr = np.zeros((ncores, steps_per_core), np.int32)
    for ci, lst in enumerate(per_core):
        if not lst:
            lst = [(0, 0, 0)]                          # never written (m == 0)
        for si in range(steps_per_core):
            if si < len(lst):
                tt, ch, f = lst[si]
            else:                                      # pad: repeat last indices,
                tt, ch, f = lst[-1][0], lst[-1][1], 0  # flags 0 -> no DMA, no write
            tile_arr[ci, si] = tt
            chunk_arr[ci, si] = ch
            flags_arr[ci, si] = f

    tile_j = jnp.asarray(tile_arr.reshape(-1))
    chunk_j = jnp.asarray(chunk_arr.reshape(-1))
    flags_j = jnp.asarray(flags_arr.reshape(-1))

    # ---- padded, layout-prepared inputs (plain JAX glue, outside the kernel)
    seg2 = jnp.pad(seg_ids.astype(jnp.int32), (0, pad),
                   constant_values=-1).reshape(1, np_pad)     # (1, Np_pad) lane-major
    coord_f32 = sorted_coord.astype(jnp.float32)
    feat_f32 = sorted_feat.astype(jnp.float32)
    ones = jnp.ones((n_pts, 1), jnp.float32)
    if reduction in ("sum", "mean"):
        base = jnp.concatenate([ones, coord_f32, feat_f32], axis=1)
    else:
        base = jnp.concatenate([ones, coord_f32], axis=1)
    ncols = int(base.shape[1])
    base = jnp.pad(base, ((0, pad), (0, 0)))                  # (Np_pad, ncols)
    base3 = _split3_bf16(base)                                # (Np_pad, 3*ncols) bf16

    S = steps_per_core

    def widx(c, s):
        return c * S + s

    seg_spec = pl.BlockSpec(
        (1, pt_chunk), lambda c, s, tr, cr, fr: (0, cr[widx(c, s)]))
    base_spec = pl.BlockSpec(
        (pt_chunk, 3 * ncols), lambda c, s, tr, cr, fr: (cr[widx(c, s)], 0))
    out_spec = pl.BlockSpec(
        (tile_m, cc + cf), lambda c, s, tr, cr, fr: (tr[widx(c, s)], 0))

    kernel = _make_segment_kernel(reduction, cc, cf, tile_m, pt_chunk, S, sb)

    if reduction in ("max", "min"):
        feat_t = jnp.pad(feat_f32, ((0, pad), (0, 0))).T      # (Cf, Np_pad)
        ft_spec = pl.BlockSpec(
            (cf, pt_chunk), lambda c, s, tr, cr, fr: (0, cr[widx(c, s)]))
        in_specs = [seg_spec, base_spec, ft_spec]
        operands = (seg2, base3, feat_t)
        scratch = [pltpu.VMEM((tile_m, 3 * ncols), jnp.float32),
                   pltpu.VMEM((tile_m, cf), jnp.float32)]
    else:
        in_specs = [seg_spec, base_spec]
        operands = (seg2, base3)
        scratch = [pltpu.VMEM((tile_m, 3 * ncols), jnp.float32)]

    out = pl.pallas_call(
        kernel,
        out_shape=jax.ShapeDtypeStruct((m_pad, cc + cf), jnp.float32),
        grid_spec=pltpu.PrefetchScalarGridSpec(
            num_scalar_prefetch=3,
            grid=(ncores, steps_per_core),
            in_specs=in_specs,
            out_specs=out_spec,
            scratch_shapes=scratch),
        compiler_params=pltpu.CompilerParams(
            dimension_semantics=("parallel", "arbitrary"),
            vmem_limit_bytes=32 * 1024 * 1024),
    )(tile_j, chunk_j, flags_j, *operands)

    pooled_coord = out[:m, :cc]
    pooled_feat = out[:m, cc:cc + cf].astype(sorted_feat.dtype)
    return pooled_coord, pooled_feat


# ----------------------------------------------------------------------------
# Host-side glue: voxelize_helper equivalent (data-dependent shapes -> numpy).
# TODO(synk): voxelization (unique/sort with dynamic output sizes) has no clean
# static-shape Pallas equivalent; it stays on the host.
# ----------------------------------------------------------------------------
def _voxelize_numpy(coord, offset, grid_size, start=None):
    coord = np.asarray(coord, dtype=np.float64)
    offset = np.asarray(offset, dtype=np.int64)
    b = offset.shape[0]
    counts_pb = np.diff(np.concatenate([[0], offset]))
    batch = np.repeat(np.arange(b), counts_pb)

    if start is None:
        start = np.stack([coord[batch == i].min(axis=0) for i in range(b)], axis=0)
    else:
        start = np.asarray(start, dtype=np.float64)
        if start.ndim == 1:
            start = np.broadcast_to(start, (b, coord.shape[1]))

    grid = np.floor((coord - start[batch]) / grid_size).astype(np.int64)
    grid = grid - grid.min(axis=0)  # keep keys non-negative (ordering preserved)
    dims = grid.max(axis=0) + 1
    key = ((batch * dims[0] + grid[:, 0]) * dims[1] + grid[:, 1]) * dims[2] + grid[:, 2]

    _, cluster, counts = np.unique(key, return_inverse=True, return_counts=True)
    sorted_cluster_indices = np.argsort(cluster, kind="stable")
    idx_ptr = np.concatenate([[0], np.cumsum(counts)]).astype(np.int64)
    return batch, cluster, sorted_cluster_indices, idx_ptr, counts


def grid_pooling_forward(coord, feat, offset, grid_size, reduction="max", start=None):
    """GridPooling.forward: returns [pooled_coord, pooled_feat, pooled_offset]."""
    batch, cluster, sort_idx, idx_ptr, counts = _voxelize_numpy(
        coord, offset, grid_size, start)
    num_clusters = int(counts.shape[0])

    # cluster id per *sorted* point (non-decreasing)
    seg_ids = jnp.asarray(cluster[sort_idx].astype(np.int32))
    sort_idx_j = jnp.asarray(sort_idx.astype(np.int32))
    sorted_coord = jnp.take(coord, sort_idx_j, axis=0)   # gather glue in plain JAX
    sorted_feat = jnp.take(feat, sort_idx_j, axis=0)

    pooled_coord, pooled_feat = segment_reduce_pallas(
        seg_ids, sorted_coord, sorted_feat, idx_ptr, num_clusters,
        reduction=reduction)

    # batch = batch[idx_ptr[:-1]]; offset = batch2offset(batch)
    new_batch = batch[idx_ptr[:-1]]
    num_batches = int(np.asarray(offset).shape[0])
    new_offset = jnp.asarray(
        np.cumsum(np.bincount(new_batch, minlength=num_batches)).astype(np.int64))
    return [pooled_coord, pooled_feat, new_offset]


# ----------------------------------------------------------------------------
# Reference (numpy) for validation
# ----------------------------------------------------------------------------
def _reference(coord, feat, offset, grid_size, reduction="max", start=None):
    batch, cluster, sort_idx, idx_ptr, counts = _voxelize_numpy(
        coord, offset, grid_size, start)
    c = np.asarray(coord)[sort_idx]
    f = np.asarray(feat)[sort_idx]
    m = counts.shape[0]
    out_c = np.zeros((m, c.shape[1]), np.float32)
    out_f = np.zeros((m, f.shape[1]), np.float32)
    for i in range(m):
        s, e = idx_ptr[i], idx_ptr[i + 1]
        out_c[i] = c[s:e].mean(axis=0)
        if reduction == "max":
            out_f[i] = f[s:e].max(axis=0)
        elif reduction == "min":
            out_f[i] = f[s:e].min(axis=0)
        elif reduction == "sum":
            out_f[i] = f[s:e].sum(axis=0)
        else:
            out_f[i] = f[s:e].mean(axis=0)
    new_batch = batch[idx_ptr[:-1]]
    new_offset = np.cumsum(np.bincount(new_batch, minlength=len(np.asarray(offset))))
    return out_c, out_f, new_offset


if __name__ == "__main__":
    key = jax.random.PRNGKey(0)
    k1, k2 = jax.random.split(key)

    # small shapes: 2 point clouds with 40 + 24 points, 16 feature channels
    n1, n2 = 40, 24
    n_total = n1 + n2
    n_feat = 16
    grid_size = 0.5

    coord = jax.random.uniform(k1, (n_total, 3), jnp.float32, 0.0, 2.0)
    feat = jax.random.normal(k2, (n_total, n_feat), jnp.float32)
    offset = jnp.array([n1, n_total], dtype=jnp.int32)

    # max-reduction path (default GridPooling config)
    pooled_coord, pooled_feat, pooled_offset = grid_pooling_forward(
        coord, feat, offset, grid_size=grid_size, reduction="max")
    jax.block_until_ready((pooled_coord, pooled_feat, pooled_offset))

    ref_c, ref_f, ref_o = _reference(np.asarray(coord), np.asarray(feat),
                                     np.asarray(offset), grid_size, "max")
    np.testing.assert_allclose(np.asarray(pooled_coord), ref_c, rtol=1e-5, atol=1e-5)
    np.testing.assert_allclose(np.asarray(pooled_feat), ref_f, rtol=1e-5, atol=1e-5)
    np.testing.assert_array_equal(np.asarray(pooled_offset), ref_o)

    # mean-reduction path (exercises the sum/mean kernel)
    pc2, pf2, po2 = grid_pooling_forward(
        coord, feat, offset, grid_size=grid_size, reduction="mean")
    jax.block_until_ready((pc2, pf2, po2))
    ref_c2, ref_f2, ref_o2 = _reference(np.asarray(coord), np.asarray(feat),
                                        np.asarray(offset), grid_size, "mean")
    np.testing.assert_allclose(np.asarray(pc2), ref_c2, rtol=1e-5, atol=1e-5)
    np.testing.assert_allclose(np.asarray(pf2), ref_f2, rtol=1e-5, atol=1e-5)
    np.testing.assert_array_equal(np.asarray(po2), ref_o2)

    print("KERNEL_OK")
</pallas_src>

<mosaic_0001>
module attributes {stable_mosaic.version = 11 : i64} {
  func.func @kernel(%arg0: i32, %arg1: i32, %arg2: memref<1xi32, #tpu.memory_space<smem>>, %arg3: memref<1xi32, #tpu.memory_space<smem>>, %arg4: memref<1xi32, #tpu.memory_space<smem>>, %arg5: memref<1x512xi32, #tpu.memory_space<vmem>>, %arg6: memref<512x12xbf16, #tpu.memory_space<vmem>>, %arg7: memref<16x512xf32, #tpu.memory_space<vmem>>, %arg8: memref<128x19xf32, #tpu.memory_space<vmem>>, %arg9: memref<128x12xf32, #tpu.memory_space<vmem>>, %arg10: memref<128x16xf32, #tpu.memory_space<vmem>>) attributes {dimension_semantics = [#tpu.dimension_semantics<parallel>, #tpu.dimension_semantics<arbitrary>], iteration_bounds = array<i64: 1, 1>, scalar_prefetch = 3 : i64, scratch_operands = 2 : i64, tpu.core_type = #tpu.core_type<tc>, window_params = [{transform_indices = @transform_0, window_bounds = array<i64: 1, 512>}, {transform_indices = @transform_1, window_bounds = array<i64: 512, 12>}, {transform_indices = @transform_2, window_bounds = array<i64: 16, 512>}, {transform_indices = @transform_3, window_bounds = array<i64: 128, 19>}]} {
    %c1_i32 = arith.constant 1 : i32
    %0 = arith.muli %arg0, %c1_i32 : i32
    %1 = arith.addi %0, %arg1 : i32
    %2 = arith.index_cast %1 : i32 to index
    %3 = memref.load %arg4[%2] : memref<1xi32, #tpu.memory_space<smem>>
    %4 = arith.index_cast %1 : i32 to index
    %5 = memref.load %arg2[%4] : memref<1xi32, #tpu.memory_space<smem>>
    %c1_i32_0 = arith.constant 1 : i32
    %6 = arith.andi %3, %c1_i32_0 : i32
    %c0_i32 = arith.constant 0 : i32
    %7 = arith.cmpi ne, %6, %c0_i32 : i32
    %8 = arith.extui %7 : i1 to i32
    %c0_i32_1 = arith.constant 0 : i32
    %9 = arith.cmpi ne, %8, %c0_i32_1 : i32
    scf.if %9 {
      %cst = arith.constant 0.000000e+00 : f32
      %18 = vector.broadcast %cst : f32 to vector<128x12xf32>
      %c0 = arith.constant 0 : index
      %c0_6 = arith.constant 0 : index
      %19 = vector.load %arg9[%c0, %c0_6] : memref<128x12xf32, #tpu.memory_space<vmem>>, vector<128x12xf32>
      tpu.vector_store %arg9[%c0, %c0_6], %18 {strides = array<i32>} : memref<128x12xf32, #tpu.memory_space<vmem>>, vector<128x12xf32>,
      %cst_7 = arith.constant -3.000000e+38 : f32
      %20 = vector.broadcast %cst_7 : f32 to vector<128x16xf32>
      %c0_8 = arith.constant 0 : index
      %c0_9 = arith.constant 0 : index
      %21 = vector.load %arg10[%c0_8, %c0_9] : memref<128x16xf32, #tpu.memory_space<vmem>>, vector<128x16xf32>
      tpu.vector_store %arg10[%c0_8, %c0_9], %20 {strides = array<i32>} : memref<128x16xf32, #tpu.memory_space<vmem>>, vector<128x16xf32>,
    } else {
    }
    %c4_i32 = arith.constant 4 : i32
    %10 = arith.andi %3, %c4_i32 : i32
    %c0_i32_2 = arith.constant 0 : i32
    %11 = arith.cmpi ne, %10, %c0_i32_2 : i32
    %12 = arith.extui %11 : i1 to i32
    %c0_i32_3 = arith.constant 0 : i32
    %13 = arith.cmpi ne, %12, %c0_i32_3 : i32
    scf.if %13 {
      %c0 = arith.constant 0 : index
      %c0_6 = arith.constant 0 : index
      %18 = vector.load %arg5[%c0, %c0_6] : memref<1x512xi32, #tpu.memory_space<vmem>>, vector<1x512xi32>
      %c128_i32 = arith.constant 128 : i32
      %19 = arith.muli %5, %c128_i32 : i32
      %20 = tpu.iota {dimensions = array<i32: 0>} : vector<128x1xi32>
      %21 = vector.broadcast %19 : i32 to vector<128x1xi32>
      %22 = arith.addi %21, %20 : vector<128x1xi32>
      %23 = vector.broadcast %18 : vector<1x512xi32> to vector<128x512xi32>
      %24 = vector.broadcast %22 : vector<128x1xi32> to vector<128x512xi32>
      %25 = arith.cmpi eq, %23, %24 : vector<128x512xi32>
      %26 = arith.extui %25 : vector<128x512xi1> to vector<128x512xi32>
      %27 = arith.sitofp %26 : vector<128x512xi32> to vector<128x512xf32>
      %28 = arith.truncf %27 : vector<128x512xf32> to vector<128x512xbf16>
      %c0_7 = arith.constant 0 : index
      %c0_8 = arith.constant 0 : index
      %29 = vector.load %arg9[%c0_7, %c0_8] : memref<128x12xf32, #tpu.memory_space<vmem>>, vector<128x12xf32>
      %c0_9 = arith.constant 0 : index
      %c0_10 = arith.constant 0 : index
      %30 = vector.load %arg6[%c0_9, %c0_10] : memref<512x12xbf16, #tpu.memory_space<vmem>>, vector<512x12xbf16>
      %cst = arith.constant dense<0.000000e+00> : vector<128x12xf32>
      %31 = tpu.matmul %28, %30, %cst {dimension_numbers = #tpu.dot_dimension_numbers<[1], [0], [0], [1], [0, 0, 1, 1], [], []>} : vector<128x512xbf16>, vector<512x12xbf16>, vector<128x12xf32> -> vector<128x12xf32>
      %32 = arith.addf %29, %31 : vector<128x12xf32>
      %c0_11 = arith.constant 0 : index
      %c0_12 = arith.constant 0 : index
      %33 = vector.load %arg9[%c0_11, %c0_12] : memref<128x12xf32, #tpu.memory_space<vmem>>, vector<128x12xf32>
      tpu.vector_store %arg9[%c0_11, %c0_12], %32 {strides = array<i32>} : memref<128x12xf32, #tpu.memory_space<vmem>>, vector<128x12xf32>,
      %34 = tpu.iota {dimensions = array<i32: 1>} : vector<128x16xi32>
      %c0_13 = arith.constant 0 : index
      %c0_14 = arith.constant 0 : index
      %35 = vector.load %arg10[%c0_13, %c0_14] : memref<128x16xf32, #tpu.memory_space<vmem>>, vector<128x16xf32>
      %c0_15 = arith.constant 0 : index
      %c0_16 = arith.constant 0 : index
      %36 = vector.load %arg5[%c0_15, %c0_16] : memref<1x512xi32, #tpu.memory_space<vmem>>, vector<1x128xi32>
      %37 = vector.broadcast %36 : vector<1x128xi32> to vector<128x128xi32>
      %38 = vector.broadcast %22 : vector<128x1xi32> to vector<128x128xi32>
      %39 = arith.cmpi eq, %37, %38 : vector<128x128xi32>
      %c0_17 = arith.constant 0 : index
      %c0_18 = arith.constant 0 : index
      %40 = vector.load %arg7[%c0_17, %c0_18] : memref<16x512xf32, #tpu.memory_space<vmem>>, vector<1x128xf32>
      %cst_19 = arith.constant -3.000000e+38 : f32
      %41 = vector.shape_cast %40 : vector<1x128xf32> to vector<1x128xf32>
      %42 = vector.broadcast %41 : vector<1x128xf32> to vector<128x128xf32>
      %43 = vector.broadcast %cst_19 : f32 to vector<128x128xf32>
      %44 = arith.select %39, %42, %43 : vector<128x128xi1>, vector<128x128xf32>
      %cst_20 = arith.constant dense<0xFF800000> : vector<128xf32>
      %45 = vector.multi_reduction <maximumf>, %44, %cst_20 [1] : vector<128x128xf32> to vector<128xf32>
      %46 = vector.shape_cast %45 : vector<128xf32> to vector<128x1xf32>
      %c0_i32_21 = arith.constant 0 : i32
      %47 = vector.broadcast %c0_i32_21 : i32 to vector<128x16xi32>
      %48 = arith.cmpi eq, %34, %47 : vector<128x16xi32>
      %cst_22 = arith.constant -3.000000e+38 : f32
      %49 = vector.shape_cast %46 : vector<128x1xf32> to vector<128x1xf32>
      %50 = vector.broadcast %49 : vector<128x1xf32> to vector<128x16xf32>
      %51 = vector.broadcast %cst_22 : f32 to vector<128x16xf32>
      %52 = arith.select %48, %50, %51 : vector<128x16xi1>, vector<128x16xf32>
      %53 = arith.maximumf %35, %52 : vector<128x16xf32>
      %c1 = arith.constant 1 : index
      %c0_23 = arith.constant 0 : index
      %54 = vector.load %arg7[%c1, %c0_23] : memref<16x512xf32, #tpu.memory_space<vmem>>, vector<1x128xf32>
      %cst_24 = arith.constant -3.000000e+38 : f32
      %55 = vector.shape_cast %54 : vector<1x128xf32> to vector<1x128xf32>
      %56 = vector.broadcast %55 : vector<1x128xf32> to vector<128x128xf32>
      %57 = vector.broadcast %cst_24 : f32 to vector<128x128xf32>
      %58 = arith.select %39, %56, %57 : vector<128x128xi1>, vector<128x128xf32>
      %cst_25 = arith.constant dense<0xFF800000> : vector<128xf32>
      %59 = vector.multi_reduction <maximumf>, %58, %cst_25 [1] : vector<128x128xf32> to vector<128xf32>
      %60 = vector.shape_cast %59 : vector<128xf32> to vector<128x1xf32>
      %c1_i32_26 = arith.constant 1 : i32
      %61 = vector.broadcast %c1_i32_26 : i32 to vector<128x16xi32>
      %62 = arith.cmpi eq, %34, %61 : vector<128x16xi32>
      %cst_27 = arith.constant -3.000000e+38 : f32
      %63 = vector.shape_cast %60 : vector<128x1xf32> to vector<128x1xf32>
      %64 = vector.broadcast %63 : vector<128x1xf32> to vector<128x16xf32>
      %65 = vector.broadcast %cst_27 : f32 to vector<128x16xf32>
      %66 = arith.select %62, %64, %65 : vector<128x16xi1>, vector<128x16xf32>
      %67 = arith.maximumf %53, %66 : vector<128x16xf32>
      %c2 = arith.constant 2 : index
      %c0_28 = arith.constant 0 : index
      %68 = vector.load %arg7[%c2, %c0_28] : memref<16x512xf32, #tpu.memory_space<vmem>>, vector<1x128xf32>
      %cst_29 = arith.constant -3.000000e+38 : f32
      %69 = vector.shape_cast %68 : vector<1x128xf32> to vector<1x128xf32>
      %70 = vector.broadcast %69 : vector<1x128xf32> to vector<128x128xf32>
      %71 = vector.broadcast %cst_29 : f32 to vector<128x128xf32>
      %72 = arith.select %39, %70, %71 : vector<128x128xi1>, vector<128x128xf32>
      %cst_30 = arith.constant dense<0xFF800000> : vector<128xf32>
      %73 = vector.multi_reduction <maximumf>, %72, %cst_30 [1] : vector<128x128xf32> to vector<128xf32>
      %74 = vector.shape_cast %73 : vector<128xf32> to vector<128x1xf32>
      %c2_i32_31 = arith.constant 2 : i32
      %75 = vector.broadcast %c2_i32_31 : i32 to vector<128x16xi32>
      %76 = arith.cmpi eq, %34, %75 : vector<128x16xi32>
      %cst_32 = arith.constant -3.000000e+38 : f32
      %77 = vector.shape_cast %74 : vector<128x1xf32> to vector<128x1xf32>
      %78 = vector.broadcast %77 : vector<128x1xf32> to vector<128x16xf32>
      %79 = vector.broadcast %cst_32 : f32 to vector<128x16xf32>
      %80 = arith.select %76, %78, %79 : vector<128x16xi1>, vector<128x16xf32>
      %81 = arith.maximumf %67, %80 : vector<128x16xf32>
      %c3 = arith.constant 3 : index
      %c0_33 = arith.constant 0 : index
      %82 = vector.load %arg7[%c3, %c0_33] : memref<16x512xf32, #tpu.memory_space<vmem>>, vector<1x128xf32>
      %cst_34 = arith.constant -3.000000e+38 : f32
      %83 = vector.shape_cast %82 : vector<1x128xf32> to vector<1x128xf32>
      %84 = vector.broadcast %83 : vector<1x128xf32> to vector<128x128xf32>
      %85 = vector.broadcast %cst_34 : f32 to vector<128x128xf32>
      %86 = arith.select %39, %84, %85 : vector<128x128xi1>, vector<128x128xf32>
      %cst_35 = arith.constant dense<0xFF800000> : vector<128xf32>
      %87 = vector.multi_reduction <maximumf>, %86, %cst_35 [1] : vector<128x128xf32> to vector<128xf32>
      %88 = vector.shape_cast %87 : vector<128xf32> to vector<128x1xf32>
      %c3_i32 = arith.constant 3 : i32
      %89 = vector.broadcast %c3_i32 : i32 to vector<128x16xi32>
      %90 = arith.cmpi eq, %34, %89 : vector<128x16xi32>
      %cst_36 = arith.constant -3.000000e+38 : f32
      %91 = vector.shape_cast %88 : vector<128x1xf32> to vector<128x1xf32>
      %92 = vector.broadcast %91 : vector<128x1xf32> to vector<128x16xf32>
      %93 = vector.broadcast %cst_36 : f32 to vector<128x16xf32>
      %94 = arith.select %90, %92, %93 : vector<128x16xi1>, vector<128x16xf32>
      %95 = arith.maximumf %81, %94 : vector<128x16xf32>
      %c4 = arith.constant 4 : index
      %c0_37 = arith.constant 0 : index
      %96 = vector.load %arg7[%c4, %c0_37] : memref<16x512xf32, #tpu.memory_space<vmem>>, vector<1x128xf32>
      %cst_38 = arith.constant -3.000000e+38 : f32
      %97 = vector.shape_cast %96 : vector<1x128xf32> to vector<1x128xf32>
      %98 = vector.broadcast %97 : vector<1x128xf32> to vector<128x128xf32>
      %99 = vector.broadcast %cst_38 : f32 to vector<128x128xf32>
      %100 = arith.select %39, %98, %99 : vector<128x128xi1>, vector<128x128xf32>
      %cst_39 = arith.constant dense<0xFF800000> : vector<128xf32>
      %101 = vector.multi_reduction <maximumf>, %100, %cst_39 [1] : vector<128x128xf32> to vector<128xf32>
      %102 = vector.shape_cast %101 : vector<128xf32> to vector<128x1xf32>
      %c4_i32_40 = arith.constant 4 : i32
      %103 = vector.broadcast %c4_i32_40 : i32 to vector<128x16xi32>
      %104 = arith.cmpi eq, %34, %103 : vector<128x16xi32>
      %cst_41 = arith.constant -3.000000e+38 : f32
      %105 = vector.shape_cast %102 : vector<128x1xf32> to vector<128x1xf32>
      %106 = vector.broadcast %105 : vector<128x1xf32> to vector<128x16xf32>
      %107 = vector.broadcast %cst_41 : f32 to vector<128x16xf32>
      %108 = arith.select %104, %106, %107 : vector<128x16xi1>, vector<128x16xf32>
      %109 = arith.maximumf %95, %108 : vector<128x16xf32>
      %c5 = arith.constant 5 : index
      %c0_42 = arith.constant 0 : index
      %110 = vector.load %arg7[%c5, %c0_42] : memref<16x512xf32, #tpu.memory_space<vmem>>, vector<1x128xf32>
      %cst_43 = arith.constant -3.000000e+38 : f32
      %111 = vector.shape_cast %110 : vector<1x128xf32> to vector<1x128xf32>
      %112 = vector.broadcast %111 : vector<1x128xf32> to vector<128x128xf32>
      %113 = vector.broadcast %cst_43 : f32 to vector<128x128xf32>
      %114 = arith.select %39, %112, %113 : vector<128x128xi1>, vector<128x128xf32>
      %cst_44 = arith.constant dense<0xFF800000> : vector<128xf32>
      %115 = vector.multi_reduction <maximumf>, %114, %cst_44 [1] : vector<128x128xf32> to vector<128xf32>
      %116 = vector.shape_cast %115 : vector<128xf32> to vector<128x1xf32>
      %c5_i32 = arith.constant 5 : i32
      %117 = vector.broadcast %c5_i32 : i32 to vector<128x16xi32>
      %118 = arith.cmpi eq, %34, %117 : vector<128x16xi32>
      %cst_45 = arith.constant -3.000000e+38 : f32
      %119 = vector.shape_cast %116 : vector<128x1xf32> to vector<128x1xf32>
      %120 = vector.broadcast %119 : vector<128x1xf32> to vector<128x16xf32>
      %121 = vector.broadcast %cst_45 : f32 to vector<128x16xf32>
      %122 = arith.select %118, %120, %121 : vector<128x16xi1>, vector<128x16xf32>
      %123 = arith.maximumf %109, %122 : vector<128x16xf32>
      %c6 = arith.constant 6 : index
      %c0_46 = arith.constant 0 : index
      %124 = vector.load %arg7[%c6, %c0_46] : memref<16x512xf32, #tpu.memory_space<vmem>>, vector<1x128xf32>
      %cst_47 = arith.constant -3.000000e+38 : f32
      %125 = vector.shape_cast %124 : vector<1x128xf32> to vector<1x128xf32>
      %126 = vector.broadcast %125 : vector<1x128xf32> to vector<128x128xf32>
      %127 = vector.broadcast %cst_47 : f32 to vector<128x128xf32>
      %128 = arith.select %39, %126, %127 : vector<128x128xi1>, vector<128x128xf32>
      %cst_48 = arith.constant dense<0xFF800000> : vector<128xf32>
      %129 = vector.multi_reduction <maximumf>, %128, %cst_48 [1] : vector<128x128xf32> to vector<128xf32>
      %130 = vector.shape_cast %129 : vector<128xf32> to vector<128x1xf32>
      %c6_i32 = arith.constant 6 : i32
      %131 = vector.broadcast %c6_i32 : i32 to vector<128x16xi32>
      %132 = arith.cmpi eq, %34, %131 : vector<128x16xi32>
      %cst_49 = arith.constant -3.000000e+38 : f32
      %133 = vector.shape_cast %130 : vector<128x1xf32> to vector<128x1xf32>
      %134 = vector.broadcast %133 : vector<128x1xf32> to vector<128x16xf32>
      %135 = vector.broadcast %cst_49 : f32 to vector<128x16xf32>
      %136 = arith.select %132, %134, %135 : vector<128x16xi1>, vector<128x16xf32>
      %137 = arith.maximumf %123, %136 : vector<128x16xf32>
      %c7 = arith.constant 7 : index
      %c0_50 = arith.constant 0 : index
      %138 = vector.load %arg7[%c7, %c0_50] : memref<16x512xf32, #tpu.memory_space<vmem>>, vector<1x128xf32>
      %cst_51 = arith.constant -3.000000e+38 : f32
      %139 = vector.shape_cast %138 : vector<1x128xf32> to vector<1x128xf32>
      %140 = vector.broadcast %139 : vector<1x128xf32> to vector<128x128xf32>
      %141 = vector.broadcast %cst_51 : f32 to vector<128x128xf32>
      %142 = arith.select %39, %140, %141 : vector<128x128xi1>, vector<128x128xf32>
      %cst_52 = arith.constant dense<0xFF800000> : vector<128xf32>
      %143 = vector.multi_reduction <maximumf>, %142, %cst_52 [1] : vector<128x128xf32> to vector<128xf32>
      %144 = vector.shape_cast %143 : vector<128xf32> to vector<128x1xf32>
      %c7_i32 = arith.constant 7 : i32
      %145 = vector.broadcast %c7_i32 : i32 to vector<128x16xi32>
      %146 = arith.cmpi eq, %34, %145 : vector<128x16xi32>
      %cst_53 = arith.constant -3.000000e+38 : f32
      %147 = vector.shape_cast %144 : vector<128x1xf32> to vector<128x1xf32>
      %148 = vector.broadcast %147 : vector<128x1xf32> to vector<128x16xf32>
      %149 = vector.broadcast %cst_53 : f32 to vector<128x16xf32>
      %150 = arith.select %146, %148, %149 : vector<128x16xi1>, vector<128x16xf32>
      %151 = arith.maximumf %137, %150 : vector<128x16xf32>
      %c8 = arith.constant 8 : index
      %c0_54 = arith.constant 0 : index
      %152 = vector.load %arg7[%c8, %c0_54] : memref<16x512xf32, #tpu.memory_space<vmem>>, vector<1x128xf32>
      %cst_55 = arith.constant -3.000000e+38 : f32
      %153 = vector.shape_cast %152 : vector<1x128xf32> to vector<1x128xf32>
      %154 = vector.broadcast %153 : vector<1x128xf32> to vector<128x128xf32>
      %155 = vector.broadcast %cst_55 : f32 to vector<128x128xf32>
      %156 = arith.select %39, %154, %155 : vector<128x128xi1>, vector<128x128xf32>
      %cst_56 = arith.constant dense<0xFF800000> : vector<128xf32>
      %157 = vector.multi_reduction <maximumf>, %156, %cst_56 [1] : vector<128x128xf32> to vector<128xf32>
      %158 = vector.shape_cast %157 : vector<128xf32> to vector<128x1xf32>
      %c8_i32 = arith.constant 8 : i32
      %159 = vector.broadcast %c8_i32 : i32 to vector<128x16xi32>
      %160 = arith.cmpi eq, %34, %159 : vector<128x16xi32>
      %cst_57 = arith.constant -3.000000e+38 : f32
      %161 = vector.shape_cast %158 : vector<128x1xf32> to vector<128x1xf32>
      %162 = vector.broadcast %161 : vector<128x1xf32> to vector<128x16xf32>
      %163 = vector.broadcast %cst_57 : f32 to vector<128x16xf32>
      %164 = arith.select %160, %162, %163 : vector<128x16xi1>, vector<128x16xf32>
      %165 = arith.maximumf %151, %164 : vector<128x16xf32>
      %c9 = arith.constant 9 : index
      %c0_58 = arith.constant 0 : index
      %166 = vector.load %arg7[%c9, %c0_58] : memref<16x512xf32, #tpu.memory_space<vmem>>, vector<1x128xf32>
      %cst_59 = arith.constant -3.000000e+38 : f32
      %167 = vector.shape_cast %166 : vector<1x128xf32> to vector<1x128xf32>
      %168 = vector.broadcast %167 : vector<1x128xf32> to vector<128x128xf32>
      %169 = vector.broadcast %cst_59 : f32 to vector<128x128xf32>
      %170 = arith.select %39, %168, %169 : vector<128x128xi1>, vector<128x128xf32>
      %cst_60 = arith.constant dense<0xFF800000> : vector<128xf32>
      %171 = vector.multi_reduction <maximumf>, %170, %cst_60 [1] : vector<128x128xf32> to vector<128xf32>
      %172 = vector.shape_cast %171 : vector<128xf32> to vector<128x1xf32>
      %c9_i32 = arith.constant 9 : i32
      %173 = vector.broadcast %c9_i32 : i32 to vector<128x16xi32>
      %174 = arith.cmpi eq, %34, %173 : vector<128x16xi32>
      %cst_61 = arith.constant -3.000000e+38 : f32
      %175 = vector.shape_cast %172 : vector<128x1xf32> to vector<128x1xf32>
      %176 = vector.broadcast %175 : vector<128x1xf32> to vector<128x16xf32>
      %177 = vector.broadcast %cst_61 : f32 to vector<128x16xf32>
      %178 = arith.select %174, %176, %177 : vector<128x16xi1>, vector<128x16xf32>
      %179 = arith.maximumf %165, %178 : vector<128x16xf32>
      %c10 = arith.constant 10 : index
      %c0_62 = arith.constant 0 : index
      %180 = vector.load %arg7[%c10, %c0_62] : memref<16x512xf32, #tpu.memory_space<vmem>>, vector<1x128xf32>
      %cst_63 = arith.constant -3.000000e+38 : f32
      %181 = vector.shape_cast %180 : vector<1x128xf32> to vector<1x128xf32>
      %182 = vector.broadcast %181 : vector<1x128xf32> to vector<128x128xf32>
      %183 = vector.broadcast %cst_63 : f32 to vector<128x128xf32>
      %184 = arith.select %39, %182, %183 : vector<128x128xi1>, vector<128x128xf32>
      %cst_64 = arith.constant dense<0xFF800000> : vector<128xf32>
      %185 = vector.multi_reduction <maximumf>, %184, %cst_64 [1] : vector<128x128xf32> to vector<128xf32>
      %186 = vector.shape_cast %185 : vector<128xf32> to vector<128x1xf32>
      %c10_i32 = arith.constant 10 : i32
      %187 = vector.broadcast %c10_i32 : i32 to vector<128x16xi32>
      %188 = arith.cmpi eq, %34, %187 : vector<128x16xi32>
      %cst_65 = arith.constant -3.000000e+38 : f32
      %189 = vector.shape_cast %186 : vector<128x1xf32> to vector<128x1xf32>
      %190 = vector.broadcast %189 : vector<128x1xf32> to vector<128x16xf32>
      %191 = vector.broadcast %cst_65 : f32 to vector<128x16xf32>
      %192 = arith.select %188, %190, %191 : vector<128x16xi1>, vector<128x16xf32>
      %193 = arith.maximumf %179, %192 : vector<128x16xf32>
      %c11 = arith.constant 11 : index
      %c0_66 = arith.constant 0 : index
      %194 = vector.load %arg7[%c11, %c0_66] : memref<16x512xf32, #tpu.memory_space<vmem>>, vector<1x128xf32>
      %cst_67 = arith.constant -3.000000e+38 : f32
      %195 = vector.shape_cast %194 : vector<1x128xf32> to vector<1x128xf32>
      %196 = vector.broadcast %195 : vector<1x128xf32> to vector<128x128xf32>
      %197 = vector.broadcast %cst_67 : f32 to vector<128x128xf32>
      %198 = arith.select %39, %196, %197 : vector<128x128xi1>, vector<128x128xf32>
      %cst_68 = arith.constant dense<0xFF800000> : vector<128xf32>
      %199 = vector.multi_reduction <maximumf>, %198, %cst_68 [1] : vector<128x128xf32> to vector<128xf32>
      %200 = vector.shape_cast %199 : vector<128xf32> to vector<128x1xf32>
      %c11_i32 = arith.constant 11 : i32
      %201 = vector.broadcast %c11_i32 : i32 to vector<128x16xi32>
      %202 = arith.cmpi eq, %34, %201 : vector<128x16xi32>
      %cst_69 = arith.constant -3.000000e+38 : f32
      %203 = vector.shape_cast %200 : vector<128x1xf32> to vector<128x1xf32>
      %204 = vector.broadcast %203 : vector<128x1xf32> to vector<128x16xf32>
      %205 = vector.broadcast %cst_69 : f32 to vector<128x16xf32>
      %206 = arith.select %202, %204, %205 : vector<128x16xi1>, vector<128x16xf32>
      %207 = arith.maximumf %193, %206 : vector<128x16xf32>
      %c12 = arith.constant 12 : index
      %c0_70 = arith.constant 0 : index
      %208 = vector.load %arg7[%c12, %c0_70] : memref<16x512xf32, #tpu.memory_space<vmem>>, vector<1x128xf32>
      %cst_71 = arith.constant -3.000000e+38 : f32
      %209 = vector.shape_cast %208 : vector<1x128xf32> to vector<1x128xf32>
      %210 = vector.broadcast %209 : vector<1x128xf32> to vector<128x128xf32>
      %211 = vector.broadcast %cst_71 : f32 to vector<128x128xf32>
      %212 = arith.select %39, %210, %211 : vector<128x128xi1>, vector<128x128xf32>
      %cst_72 = arith.constant dense<0xFF800000> : vector<128xf32>
      %213 = vector.multi_reduction <maximumf>, %212, %cst_72 [1] : vector<128x128xf32> to vector<128xf32>
      %214 = vector.shape_cast %213 : vector<128xf32> to vector<128x1xf32>
      %c12_i32 = arith.constant 12 : i32
      %215 = vector.broadcast %c12_i32 : i32 to vector<128x16xi32>
      %216 = arith.cmpi eq, %34, %215 : vector<128x16xi32>
      %cst_73 = arith.constant -3.000000e+38 : f32
      %217 = vector.shape_cast %214 : vector<128x1xf32> to vector<128x1xf32>
      %218 = vector.broadcast %217 : vector<128x1xf32> to vector<128x16xf32>
      %219 = vector.broadcast %cst_73 : f32 to vector<128x16xf32>
      %220 = arith.select %216, %218, %219 : vector<128x16xi1>, vector<128x16xf32>
      %221 = arith.maximumf %207, %220 : vector<128x16xf32>
      %c13 = arith.constant 13 : index
      %c0_74 = arith.constant 0 : index
      %222 = vector.load %arg7[%c13, %c0_74] : memref<16x512xf32, #tpu.memory_space<vmem>>, vector<1x128xf32>
      %cst_75 = arith.constant -3.000000e+38 : f32
      %223 = vector.shape_cast %222 : vector<1x128xf32> to vector<1x128xf32>
      %224 = vector.broadcast %223 : vector<1x128xf32> to vector<128x128xf32>
      %225 = vector.broadcast %cst_75 : f32 to vector<128x128xf32>
      %226 = arith.select %39, %224, %225 : vector<128x128xi1>, vector<128x128xf32>
      %cst_76 = arith.constant dense<0xFF800000> : vector<128xf32>
      %227 = vector.multi_reduction <maximumf>, %226, %cst_76 [1] : vector<128x128xf32> to vector<128xf32>
      %228 = vector.shape_cast %227 : vector<128xf32> to vector<128x1xf32>
      %c13_i32 = arith.constant 13 : i32
      %229 = vector.broadcast %c13_i32 : i32 to vector<128x16xi32>
      %230 = arith.cmpi eq, %34, %229 : vector<128x16xi32>
      %cst_77 = arith.constant -3.000000e+38 : f32
      %231 = vector.shape_cast %228 : vector<128x1xf32> to vector<128x1xf32>
      %232 = vector.broadcast %231 : vector<128x1xf32> to vector<128x16xf32>
      %233 = vector.broadcast %cst_77 : f32 to vector<128x16xf32>
      %234 = arith.select %230, %232, %233 : vector<128x16xi1>, vector<128x16xf32>
      %235 = arith.maximumf %221, %234 : vector<128x16xf32>
      %c14 = arith.constant 14 : index
      %c0_78 = arith.constant 0 : index
      %236 = vector.load %arg7[%c14, %c0_78] : memref<16x512xf32, #tpu.memory_space<vmem>>, vector<1x128xf32>
      %cst_79 = arith.constant -3.000000e+38 : f32
      %237 = vector.shape_cast %236 : vector<1x128xf32> to vector<1x128xf32>
      %238 = vector.broadcast %237 : vector<1x128xf32> to vector<128x128xf32>
      %239 = vector.broadcast %cst_79 : f32 to vector<128x128xf32>
      %240 = arith.select %39, %238, %239 : vector<128x128xi1>, vector<128x128xf32>
      %cst_80 = arith.constant dense<0xFF800000> : vector<128xf32>
      %241 = vector.multi_reduction <maximumf>, %240, %cst_80 [1] : vector<128x128xf32> to vector<128xf32>
      %242 = vector.shape_cast %241 : vector<128xf32> to vector<128x1xf32>
      %c14_i32 = arith.constant 14 : i32
      %243 = vector.broadcast %c14_i32 : i32 to vector<128x16xi32>
      %244 = arith.cmpi eq, %34, %243 : vector<128x16xi32>
      %cst_81 = arith.constant -3.000000e+38 : f32
      %245 = vector.shape_cast %242 : vector<128x1xf32> to vector<128x1xf32>
      %246 = vector.broadcast %245 : vector<128x1xf32> to vector<128x16xf32>
      %247 = vector.broadcast %cst_81 : f32 to vector<128x16xf32>
      %248 = arith.select %244, %246, %247 : vector<128x16xi1>, vector<128x16xf32>
      %249 = arith.maximumf %235, %248 : vector<128x16xf32>
      %c15 = arith.constant 15 : index
      %c0_82 = arith.constant 0 : index
      %250 = vector.load %arg7[%c15, %c0_82] : memref<16x512xf32, #tpu.memory_space<vmem>>, vector<1x128xf32>
      %cst_83 = arith.constant -3.000000e+38 : f32
      %251 = vector.shape_cast %250 : vector<1x128xf32> to vector<1x128xf32>
      %252 = vector.broadcast %251 : vector<1x128xf32> to vector<128x128xf32>
      %253 = vector.broadcast %cst_83 : f32 to vector<128x128xf32>
      %254 = arith.select %39, %252, %253 : vector<128x128xi1>, vector<128x128xf32>
      %cst_84 = arith.constant dense<0xFF800000> : vector<128xf32>
      %255 = vector.multi_reduction <maximumf>, %254, %cst_84 [1] : vector<128x128xf32> to vector<128xf32>
      %256 = vector.shape_cast %255 : vector<128xf32> to vector<128x1xf32>
      %c15_i32 = arith.constant 15 : i32
      %257 = vector.broadcast %c15_i32 : i32 to vector<128x16xi32>
      %258 = arith.cmpi eq, %34, %257 : vector<128x16xi32>
      %cst_85 = arith.constant -3.000000e+38 : f32
      %259 = vector.shape_cast %256 : vector<128x1xf32> to vector<128x1xf32>
      %260 = vector.broadcast %259 : vector<128x1xf32> to vector<128x16xf32>
      %261 = vector.broadcast %cst_85 : f32 to vector<128x16xf32>
      %262 = arith.select %258, %260, %261 : vector<128x16xi1>, vector<128x16xf32>
      %263 = arith.maximumf %249, %262 : vector<128x16xf32>
      %c0_86 = arith.constant 0 : index
      %c128 = arith.constant 128 : index
      %264 = vector.load %arg5[%c0_86, %c128] : memref<1x512xi32, #tpu.memory_space<vmem>>, vector<1x128xi32>
      %265 = vector.broadcast %264 : vector<1x128xi32> to vector<128x128xi32>
      %266 = vector.broadcast %22 : vector<128x1xi32> to vector<128x128xi32>
      %267 = arith.cmpi eq, %265, %266 : vector<128x128xi32>
      %c0_87 = arith.constant 0 : index
      %c128_88 = arith.constant 128 : index
      %268 = vector.load %arg7[%c0_87, %c128_88] : memref<16x512xf32, #tpu.memory_space<vmem>>, vector<1x128xf32>
      %cst_89 = arith.constant -3.000000e+38 : f32
      %269 = vector.shape_cast %268 : vector<1x128xf32> to vector<1x128xf32>
      %270 = vector.broadcast %269 : vector<1x128xf32> to vector<128x128xf32>
      %271 = vector.broadcast %cst_89 : f32 to vector<128x128xf32>
      %272 = arith.select %267, %270, %271 : vector<128x128xi1>, vector<128x128xf32>
      %cst_90 = arith.constant dense<0xFF800000> : vector<128xf32>
      %273 = vector.multi_reduction <maximumf>, %272, %cst_90 [1] : vector<128x128xf32> to vector<128xf32>
      %274 = vector.shape_cast %273 : vector<128xf32> to vector<128x1xf32>
      %c0_i32_91 = arith.constant 0 : i32
      %275 = vector.broadcast %c0_i32_91 : i32 to vector<128x16xi32>
      %276 = arith.cmpi eq, %34, %275 : vector<128x16xi32>
      %cst_92 = arith.constant -3.000000e+38 : f32
      %277 = vector.shape_cast %274 : vector<128x1xf32> to vector<128x1xf32>
      %278 = vector.broadcast %277 : vector<128x1xf32> to vector<128x16xf32>
      %279 = vector.broadcast %cst_92 : f32 to vector<128x16xf32>
      %280 = arith.select %276, %278, %279 : vector<128x16xi1>, vector<128x16xf32>
      %281 = arith.maximumf %263, %280 : vector<128x16xf32>
      %c1_93 = arith.constant 1 : index
      %c128_94 = arith.constant 128 : index
      %282 = vector.load %arg7[%c1_93, %c128_94] : memref<16x512xf32, #tpu.memory_space<vmem>>, vector<1x128xf32>
      %cst_95 = arith.constant -3.000000e+38 : f32
      %283 = vector.shape_cast %282 : vector<1x128xf32> to vector<1x128xf32>
      %284 = vector.broadcast %283 : vector<1x128xf32> to vector<128x128xf32>
      %285 = vector.broadcast %cst_95 : f32 to vector<128x128xf32>
      %286 = arith.select %267, %284, %285 : vector<128x128xi1>, vector<128x128xf32>
      %cst_96 = arith.constant dense<0xFF800000> : vector<128xf32>
      %287 = vector.multi_reduction <maximumf>, %286, %cst_96 [1] : vector<128x128xf32> to vector<128xf32>
      %288 = vector.shape_cast %287 : vector<128xf32> to vector<128x1xf32>
      %c1_i32_97 = arith.constant 1 : i32
      %289 = vector.broadcast %c1_i32_97 : i32 to vector<128x16xi32>
      %290 = arith.cmpi eq, %34, %289 : vector<128x16xi32>
      %cst_98 = arith.constant -3.000000e+38 : f32
      %291 = vector.shape_cast %288 : vector<128x1xf32> to vector<128x1xf32>
      %292 = vector.broadcast %291 : vector<128x1xf32> to vector<128x16xf32>
      %293 = vector.broadcast %cst_98 : f32 to vector<128x16xf32>
      %294 = arith.select %290, %292, %293 : vector<128x16xi1>, vector<128x16xf32>
      %295 = arith.maximumf %281, %294 : vector<128x16xf32>
      %c2_99 = arith.constant 2 : index
      %c128_100 = arith.constant 128 : index
      %296 = vector.load %arg7[%c2_99, %c128_100] : memref<16x512xf32, #tpu.memory_space<vmem>>, vector<1x128xf32>
      %cst_101 = arith.constant -3.000000e+38 : f32
      %297 = vector.shape_cast %296 : vector<1x128xf32> to vector<1x128xf32>
      %298 = vector.broadcast %297 : vector<1x128xf32> to vector<128x128xf32>
      %299 = vector.broadcast %cst_101 : f32 to vector<128x128xf32>
      %300 = arith.select %267, %298, %299 : vector<128x128xi1>, vector<128x128xf32>
      %cst_102 = arith.constant dense<0xFF800000> : vector<128xf32>
      %301 = vector.multi_reduction <maximumf>, %300, %cst_102 [1] : vector<128x128xf32> to vector<128xf32>
      %302 = vector.shape_cast %301 : vector<128xf32> to vector<128x1xf32>
      %c2_i32_103 = arith.constant 2 : i32
      %303 = vector.broadcast %c2_i32_103 : i32 to vector<128x16xi32>
      %304 = arith.cmpi eq, %34, %303 : vector<128x16xi32>
      %cst_104 = arith.constant -3.000000e+38 : f32
      %305 = vector.shape_cast %302 : vector<128x1xf32> to vector<128x1xf32>
      %306 = vector.broadcast %305 : vector<128x1xf32> to vector<128x16xf32>
      %307 = vector.broadcast %cst_104 : f32 to vector<128x16xf32>
      %308 = arith.select %304, %306, %307 : vector<128x16xi1>, vector<128x16xf32>
      %309 = arith.maximumf %295, %308 : vector<128x16xf32>
      %c3_105 = arith.constant 3 : index
      %c128_106 = arith.constant 128 : index
      %310 = vector.load %arg7[%c3_105, %c128_106] : memref<16x512xf32, #tpu.memory_space<vmem>>, vector<1x128xf32>
      %cst_107 = arith.constant -3.000000e+38 : f32
      %311 = vector.shape_cast %310 : vector<1x128xf32> to vector<1x128xf32>
      %312 = vector.broadcast %311 : vector<1x128xf32> to vector<128x128xf32>
      %313 = vector.broadcast %cst_107 : f32 to vector<128x128xf32>
      %314 = arith.select %267, %312, %313 : vector<128x128xi1>, vector<128x128xf32>
      %cst_108 = arith.constant dense<0xFF800000> : vector<128xf32>
      %315 = vector.multi_reduction <maximumf>, %314, %cst_108 [1] : vector<128x128xf32> to vector<128xf32>
      %316 = vector.shape_cast %315 : vector<128xf32> to vector<128x1xf32>
      %c3_i32_109 = arith.constant 3 : i32
      %317 = vector.broadcast %c3_i32_109 : i32 to vector<128x16xi32>
      %318 = arith.cmpi eq, %34, %317 : vector<128x16xi32>
      %cst_110 = arith.constant -3.000000e+38 : f32
      %319 = vector.shape_cast %316 : vector<128x1xf32> to vector<128x1xf32>
      %320 = vector.broadcast %319 : vector<128x1xf32> to vector<128x16xf32>
      %321 = vector.broadcast %cst_110 : f32 to vector<128x16xf32>
      %322 = arith.select %318, %320, %321 : vector<128x16xi1>, vector<128x16xf32>
      %323 = arith.maximumf %309, %322 : vector<128x16xf32>
      %c4_111 = arith.constant 4 : index
      %c128_112 = arith.constant 128 : index
      %324 = vector.load %arg7[%c4_111, %c128_112] : memref<16x512xf32, #tpu.memory_space<vmem>>, vector<1x128xf32>
      %cst_113 = arith.constant -3.000000e+38 : f32
      %325 = vector.shape_cast %324 : vector<1x128xf32> to vector<1x128xf32>
      %326 = vector.broadcast %325 : vector<1x128xf32> to vector<128x128xf32>
      %327 = vector.broadcast %cst_113 : f32 to vector<128x128xf32>
      %328 = arith.select %267, %326, %327 : vector<128x128xi1>, vector<128x128xf32>
      %cst_114 = arith.constant dense<0xFF800000> : vector<128xf32>
      %329 = vector.multi_reduction <maximumf>, %328, %cst_114 [1] : vector<128x128xf32> to vector<128xf32>
      %330 = vector.shape_cast %329 : vector<128xf32> to vector<128x1xf32>
      %c4_i32_115 = arith.constant 4 : i32
      %331 = vector.broadcast %c4_i32_115 : i32 to vector<128x16xi32>
      %332 = arith.cmpi eq, %34, %331 : vector<128x16xi32>
      %cst_116 = arith.constant -3.000000e+38 : f32
      %333 = vector.shape_cast %330 : vector<128x1xf32> to vector<128x1xf32>
      %334 = vector.broadcast %333 : vector<128x1xf32> to vector<128x16xf32>
      %335 = vector.broadcast %cst_116 : f32 to vector<128x16xf32>
      %336 = arith.select %332, %334, %335 : vector<128x16xi1>, vector<128x16xf32>
      %337 = arith.maximumf %323, %336 : vector<128x16xf32>
      %c5_117 = arith.constant 5 : index
      %c128_118 = arith.constant 128 : index
      %338 = vector.load %arg7[%c5_117, %c128_118] : memref<16x512xf32, #tpu.memory_space<vmem>>, vector<1x128xf32>
      %cst_119 = arith.constant -3.000000e+38 : f32
      %339 = vector.shape_cast %338 : vector<1x128xf32> to vector<1x128xf32>
      %340 = vector.broadcast %339 : vector<1x128xf32> to vector<128x128xf32>
      %341 = vector.broadcast %cst_119 : f32 to vector<128x128xf32>
      %342 = arith.select %267, %340, %341 : vector<128x128xi1>, vector<128x128xf32>
      %cst_120 = arith.constant dense<0xFF800000> : vector<128xf32>
      %343 = vector.multi_reduction <maximumf>, %342, %cst_120 [1] : vector<128x128xf32> to vector<128xf32>
      %344 = vector.shape_cast %343 : vector<128xf32> to vector<128x1xf32>
      %c5_i32_121 = arith.constant 5 : i32
      %345 = vector.broadcast %c5_i32_121 : i32 to vector<128x16xi32>
      %346 = arith.cmpi eq, %34, %345 : vector<128x16xi32>
      %cst_122 = arith.constant -3.000000e+38 : f32
      %347 = vector.shape_cast %344 : vector<128x1xf32> to vector<128x1xf32>
      %348 = vector.broadcast %347 : vector<128x1xf32> to vector<128x16xf32>
      %349 = vector.broadcast %cst_122 : f32 to vector<128x16xf32>
      %350 = arith.select %346, %348, %349 : vector<128x16xi1>, vector<128x16xf32>
      %351 = arith.maximumf %337, %350 : vector<128x16xf32>
      %c6_123 = arith.constant 6 : index
      %c128_124 = arith.constant 128 : index
      %352 = vector.load %arg7[%c6_123, %c128_124] : memref<16x512xf32, #tpu.memory_space<vmem>>, vector<1x128xf32>
      %cst_125 = arith.constant -3.000000e+38 : f32
      %353 = vector.shape_cast %352 : vector<1x128xf32> to vector<1x128xf32>
      %354 = vector.broadcast %353 : vector<1x128xf32> to vector<128x128xf32>
      %355 = vector.broadcast %cst_125 : f32 to vector<128x128xf32>
      %356 = arith.select %267, %354, %355 : vector<128x128xi1>, vector<128x128xf32>
      %cst_126 = arith.constant dense<0xFF800000> : vector<128xf32>
      %357 = vector.multi_reduction <maximumf>, %356, %cst_126 [1] : vector<128x128xf32> to vector<128xf32>
      %358 = vector.shape_cast %357 : vector<128xf32> to vector<128x1xf32>
      %c6_i32_127 = arith.constant 6 : i32
      %359 = vector.broadcast %c6_i32_127 : i32 to vector<128x16xi32>
      %360 = arith.cmpi eq, %34, %359 : vector<128x16xi32>
      %cst_128 = arith.constant -3.000000e+38 : f32
      %361 = vector.shape_cast %358 : vector<128x1xf32> to vector<128x1xf32>
      %362 = vector.broadcast %361 : vector<128x1xf32> to vector<128x16xf32>
      %363 = vector.broadcast %cst_128 : f32 to vector<128x16xf32>
      %364 = arith.select %360, %362, %363 : vector<128x16xi1>, vector<128x16xf32>
      %365 = arith.maximumf %351, %364 : vector<128x16xf32>
      %c7_129 = arith.constant 7 : index
      %c128_130 = arith.constant 128 : index
      %366 = vector.load %arg7[%c7_129, %c128_130] : memref<16x512xf32, #tpu.memory_space<vmem>>, vector<1x128xf32>
      %cst_131 = arith.constant -3.000000e+38 : f32
      %367 = vector.shape_cast %366 : vector<1x128xf32> to vector<1x128xf32>
      %368 = vector.broadcast %367 : vector<1x128xf32> to vector<128x128xf32>
      %369 = vector.broadcast %cst_131 : f32 to vector<128x128xf32>
      %370 = arith.select %267, %368, %369 : vector<128x128xi1>, vector<128x128xf32>
      %cst_132 = arith.constant dense<0xFF800000> : vector<128xf32>
      %371 = vector.multi_reduction <maximumf>, %370, %cst_132 [1] : vector<128x128xf32> to vector<128xf32>
      %372 = vector.shape_cast %371 : vector<128xf32> to vector<128x1xf32>
      %c7_i32_133 = arith.constant 7 : i32
      %373 = vector.broadcast %c7_i32_133 : i32 to vector<128x16xi32>
      %374 = arith.cmpi eq, %34, %373 : vector<128x16xi32>
      %cst_134 = arith.constant -3.000000e+38 : f32
      %375 = vector.shape_cast %372 : vector<128x1xf32> to vector<128x1xf32>
      %376 = vector.broadcast %375 : vector<128x1xf32> to vector<128x16xf32>
      %377 = vector.broadcast %cst_134 : f32 to vector<128x16xf32>
      %378 = arith.select %374, %376, %377 : vector<128x16xi1>, vector<128x16xf32>
      %379 = arith.maximumf %365, %378 : vector<128x16xf32>
      %c8_135 = arith.constant 8 : index
      %c128_136 = arith.constant 128 : index
      %380 = vector.load %arg7[%c8_135, %c128_136] : memref<16x512xf32, #tpu.memory_space<vmem>>, vector<1x128xf32>
      %cst_137 = arith.constant -3.000000e+38 : f32
      %381 = vector.shape_cast %380 : vector<1x128xf32> to vector<1x128xf32>
      %382 = vector.broadcast %381 : vector<1x128xf32> to vector<128x128xf32>
      %383 = vector.broadcast %cst_137 : f32 to vector<128x128xf32>
      %384 = arith.select %267, %382, %383 : vector<128x128xi1>, vector<128x128xf32>
      %cst_138 = arith.constant dense<0xFF800000> : vector<128xf32>
      %385 = vector.multi_reduction <maximumf>, %384, %cst_138 [1] : vector<128x128xf32> to vector<128xf32>
      %386 = vector.shape_cast %385 : vector<128xf32> to vector<128x1xf32>
      %c8_i32_139 = arith.constant 8 : i32
      %387 = vector.broadcast %c8_i32_139 : i32 to vector<128x16xi32>
      %388 = arith.cmpi eq, %34, %387 : vector<128x16xi32>
      %cst_140 = arith.constant -3.000000e+38 : f32
      %389 = vector.shape_cast %386 : vector<128x1xf32> to vector<128x1xf32>
      %390 = vector.broadcast %389 : vector<128x1xf32> to vector<128x16xf32>
      %391 = vector.broadcast %cst_140 : f32 to vector<128x16xf32>
      %392 = arith.select %388, %390, %391 : vector<128x16xi1>, vector<128x16xf32>
      %393 = arith.maximumf %379, %392 : vector<128x16xf32>
      %c9_141 = arith.constant 9 : index
      %c128_142 = arith.constant 128 : index
      %394 = vector.load %arg7[%c9_141, %c128_142] : memref<16x512xf32, #tpu.memory_space<vmem>>, vector<1x128xf32>
      %cst_143 = arith.constant -3.000000e+38 : f32
      %395 = vector.shape_cast %394 : vector<1x128xf32> to vector<1x128xf32>
      %396 = vector.broadcast %395 : vector<1x128xf32> to vector<128x128xf32>
      %397 = vector.broadcast %cst_143 : f32 to vector<128x128xf32>
      %398 = arith.select %267, %396, %397 : vector<128x128xi1>, vector<128x128xf32>
      %cst_144 = arith.constant dense<0xFF800000> : vector<128xf32>
      %399 = vector.multi_reduction <maximumf>, %398, %cst_144 [1] : vector<128x128xf32> to vector<128xf32>
      %400 = vector.shape_cast %399 : vector<128xf32> to vector<128x1xf32>
      %c9_i32_145 = arith.constant 9 : i32
      %401 = vector.broadcast %c9_i32_145 : i32 to vector<128x16xi32>
      %402 = arith.cmpi eq, %34, %401 : vector<128x16xi32>
      %cst_146 = arith.constant -3.000000e+38 : f32
      %403 = vector.shape_cast %400 : vector<128x1xf32> to vector<128x1xf32>
      %404 = vector.broadcast %403 : vector<128x1xf32> to vector<128x16xf32>
      %405 = vector.broadcast %cst_146 : f32 to vector<128x16xf32>
      %406 = arith.select %402, %404, %405 : vector<128x16xi1>, vector<128x16xf32>
      %407 = arith.maximumf %393, %406 : vector<128x16xf32>
      %c10_147 = arith.constant 10 : index
      %c128_148 = arith.constant 128 : index
      %408 = vector.load %arg7[%c10_147, %c128_148] : memref<16x512xf32, #tpu.memory_space<vmem>>, vector<1x128xf32>
      %cst_149 = arith.constant -3.000000e+38 : f32
      %409 = vector.shape_cast %408 : vector<1x128xf32> to vector<1x128xf32>
      %410 = vector.broadcast %409 : vector<1x128xf32> to vector<128x128xf32>
      %411 = vector.broadcast %cst_149 : f32 to vector<128x128xf32>
      %412 = arith.select %267, %410, %411 : vector<128x128xi1>, vector<128x128xf32>
      %cst_150 = arith.constant dense<0xFF800000> : vector<128xf32>
      %413 = vector.multi_reduction <maximumf>, %412, %cst_150 [1] : vector<128x128xf32> to vector<128xf32>
      %414 = vector.shape_cast %413 : vector<128xf32> to vector<128x1xf32>
      %c10_i32_151 = arith.constant 10 : i32
      %415 = vector.broadcast %c10_i32_151 : i32 to vector<128x16xi32>
      %416 = arith.cmpi eq, %34, %415 : vector<128x16xi32>
      %cst_152 = arith.constant -3.000000e+38 : f32
      %417 = vector.shape_cast %414 : vector<128x1xf32> to vector<128x1xf32>
      %418 = vector.broadcast %417 : vector<128x1xf32> to vector<128x16xf32>
      %419 = vector.broadcast %cst_152 : f32 to vector<128x16xf32>
      %420 = arith.select %416, %418, %419 : vector<128x16xi1>, vector<128x16xf32>
      %421 = arith.maximumf %407, %420 : vector<128x16xf32>
      %c11_153 = arith.constant 11 : index
      %c128_154 = arith.constant 128 : index
      %422 = vector.load %arg7[%c11_153, %c128_154] : memref<16x512xf32, #tpu.memory_space<vmem>>, vector<1x128xf32>
      %cst_155 = arith.constant -3.000000e+38 : f32
      %423 = vector.shape_cast %422 : vector<1x128xf32> to vector<1x128xf32>
      %424 = vector.broadcast %423 : vector<1x128xf32> to vector<128x128xf32>
      %425 = vector.broadcast %cst_155 : f32 to vector<128x128xf32>
      %426 = arith.select %267, %424, %425 : vector<128x128xi1>, vector<128x128xf32>
      %cst_156 = arith.constant dense<0xFF800000> : vector<128xf32>
      %427 = vector.multi_reduction <maximumf>, %426, %cst_156 [1] : vector<128x128xf32> to vector<128xf32>
      %428 = vector.shape_cast %427 : vector<128xf32> to vector<128x1xf32>
      %c11_i32_157 = arith.constant 11 : i32
      %429 = vector.broadcast %c11_i32_157 : i32 to vector<128x16xi32>
      %430 = arith.cmpi eq, %34, %429 : vector<128x16xi32>
      %cst_158 = arith.constant -3.000000e+38 : f32
      %431 = vector.shape_cast %428 : vector<128x1xf32> to vector<128x1xf32>
      %432 = vector.broadcast %431 : vector<128x1xf32> to vector<128x16xf32>
      %433 = vector.broadcast %cst_158 : f32 to vector<128x16xf32>
      %434 = arith.select %430, %432, %433 : vector<128x16xi1>, vector<128x16xf32>
      %435 = arith.maximumf %421, %434 : vector<128x16xf32>
      %c12_159 = arith.constant 12 : index
      %c128_160 = arith.constant 128 : index
      %436 = vector.load %arg7[%c12_159, %c128_160] : memref<16x512xf32, #tpu.memory_space<vmem>>, vector<1x128xf32>
      %cst_161 = arith.constant -3.000000e+38 : f32
      %437 = vector.shape_cast %436 : vector<1x128xf32> to vector<1x128xf32>
      %438 = vector.broadcast %437 : vector<1x128xf32> to vector<128x128xf32>
      %439 = vector.broadcast %cst_161 : f32 to vector<128x128xf32>
      %440 = arith.select %267, %438, %439 : vector<128x128xi1>, vector<128x128xf32>
      %cst_162 = arith.constant dense<0xFF800000> : vector<128xf32>
      %441 = vector.multi_reduction <maximumf>, %440, %cst_162 [1] : vector<128x128xf32> to vector<128xf32>
      %442 = vector.shape_cast %441 : vector<128xf32> to vector<128x1xf32>
      %c12_i32_163 = arith.constant 12 : i32
      %443 = vector.broadcast %c12_i32_163 : i32 to vector<128x16xi32>
      %444 = arith.cmpi eq, %34, %443 : vector<128x16xi32>
      %cst_164 = arith.constant -3.000000e+38 : f32
      %445 = vector.shape_cast %442 : vector<128x1xf32> to vector<128x1xf32>
      %446 = vector.broadcast %445 : vector<128x1xf32> to vector<128x16xf32>
      %447 = vector.broadcast %cst_164 : f32 to vector<128x16xf32>
      %448 = arith.select %444, %446, %447 : vector<128x16xi1>, vector<128x16xf32>
      %449 = arith.maximumf %435, %448 : vector<128x16xf32>
      %c13_165 = arith.constant 13 : index
      %c128_166 = arith.constant 128 : index
      %450 = vector.load %arg7[%c13_165, %c128_166] : memref<16x512xf32, #tpu.memory_space<vmem>>, vector<1x128xf32>
      %cst_167 = arith.constant -3.000000e+38 : f32
      %451 = vector.shape_cast %450 : vector<1x128xf32> to vector<1x128xf32>
      %452 = vector.broadcast %451 : vector<1x128xf32> to vector<128x128xf32>
      %453 = vector.broadcast %cst_167 : f32 to vector<128x128xf32>
      %454 = arith.select %267, %452, %453 : vector<128x128xi1>, vector<128x128xf32>
      %cst_168 = arith.constant dense<0xFF800000> : vector<128xf32>
      %455 = vector.multi_reduction <maximumf>, %454, %cst_168 [1] : vector<128x128xf32> to vector<128xf32>
      %456 = vector.shape_cast %455 : vector<128xf32> to vector<128x1xf32>
      %c13_i32_169 = arith.constant 13 : i32
      %457 = vector.broadcast %c13_i32_169 : i32 to vector<128x16xi32>
      %458 = arith.cmpi eq, %34, %457 : vector<128x16xi32>
      %cst_170 = arith.constant -3.000000e+38 : f32
      %459 = vector.shape_cast %456 : vector<128x1xf32> to vector<128x1xf32>
      %460 = vector.broadcast %459 : vector<128x1xf32> to vector<128x16xf32>
      %461 = vector.broadcast %cst_170 : f32 to vector<128x16xf32>
      %462 = arith.select %458, %460, %461 : vector<128x16xi1>, vector<128x16xf32>
      %463 = arith.maximumf %449, %462 : vector<128x16xf32>
      %c14_171 = arith.constant 14 : index
      %c128_172 = arith.constant 128 : index
      %464 = vector.load %arg7[%c14_171, %c128_172] : memref<16x512xf32, #tpu.memory_space<vmem>>, vector<1x128xf32>
      %cst_173 = arith.constant -3.000000e+38 : f32
      %465 = vector.shape_cast %464 : vector<1x128xf32> to vector<1x128xf32>
      %466 = vector.broadcast %465 : vector<1x128xf32> to vector<128x128xf32>
      %467 = vector.broadcast %cst_173 : f32 to vector<128x128xf32>
      %468 = arith.select %267, %466, %467 : vector<128x128xi1>, vector<128x128xf32>
      %cst_174 = arith.constant dense<0xFF800000> : vector<128xf32>
      %469 = vector.multi_reduction <maximumf>, %468, %cst_174 [1] : vector<128x128xf32> to vector<128xf32>
      %470 = vector.shape_cast %469 : vector<128xf32> to vector<128x1xf32>
      %c14_i32_175 = arith.constant 14 : i32
      %471 = vector.broadcast %c14_i32_175 : i32 to vector<128x16xi32>
      %472 = arith.cmpi eq, %34, %471 : vector<128x16xi32>
      %cst_176 = arith.constant -3.000000e+38 : f32
      %473 = vector.shape_cast %470 : vector<128x1xf32> to vector<128x1xf32>
      %474 = vector.broadcast %473 : vector<128x1xf32> to vector<128x16xf32>
      %475 = vector.broadcast %cst_176 : f32 to vector<128x16xf32>
      %476 = arith.select %472, %474, %475 : vector<128x16xi1>, vector<128x16xf32>
      %477 = arith.maximumf %463, %476 : vector<128x16xf32>
      %c15_177 = arith.constant 15 : index
      %c128_178 = arith.constant 128 : index
      %478 = vector.load %arg7[%c15_177, %c128_178] : memref<16x512xf32, #tpu.memory_space<vmem>>, vector<1x128xf32>
      %cst_179 = arith.constant -3.000000e+38 : f32
      %479 = vector.shape_cast %478 : vector<1x128xf32> to vector<1x128xf32>
      %480 = vector.broadcast %479 : vector<1x128xf32> to vector<128x128xf32>
      %481 = vector.broadcast %cst_179 : f32 to vector<128x128xf32>
      %482 = arith.select %267, %480, %481 : vector<128x128xi1>, vector<128x128xf32>
      %cst_180 = arith.constant dense<0xFF800000> : vector<128xf32>
      %483 = vector.multi_reduction <maximumf>, %482, %cst_180 [1] : vector<128x128xf32> to vector<128xf32>
      %484 = vector.shape_cast %483 : vector<128xf32> to vector<128x1xf32>
      %c15_i32_181 = arith.constant 15 : i32
      %485 = vector.broadcast %c15_i32_181 : i32 to vector<128x16xi32>
      %486 = arith.cmpi eq, %34, %485 : vector<128x16xi32>
      %cst_182 = arith.constant -3.000000e+38 : f32
      %487 = vector.shape_cast %484 : vector<128x1xf32> to vector<128x1xf32>
      %488 = vector.broadcast %487 : vector<128x1xf32> to vector<128x16xf32>
      %489 = vector.broadcast %cst_182 : f32 to vector<128x16xf32>
      %490 = arith.select %486, %488, %489 : vector<128x16xi1>, vector<128x16xf32>
      %491 = arith.maximumf %477, %490 : vector<128x16xf32>
      %c0_183 = arith.constant 0 : index
      %c256 = arith.constant 256 : index
      %492 = vector.load %arg5[%c0_183, %c256] : memref<1x512xi32, #tpu.memory_space<vmem>>, vector<1x128xi32>
      %493 = vector.broadcast %492 : vector<1x128xi32> to vector<128x128xi32>
      %494 = vector.broadcast %22 : vector<128x1xi32> to vector<128x128xi32>
      %495 = arith.cmpi eq, %493, %494 : vector<128x128xi32>
      %c0_184 = arith.constant 0 : index
      %c256_185 = arith.constant 256 : index
      %496 = vector.load %arg7[%c0_184, %c256_185] : memref<16x512xf32, #tpu.memory_space<vmem>>, vector<1x128xf32>
      %cst_186 = arith.constant -3.000000e+38 : f32
      %497 = vector.shape_cast %496 : vector<1x128xf32> to vector<1x128xf32>
      %498 = vector.broadcast %497 : vector<1x128xf32> to vector<128x128xf32>
      %499 = vector.broadcast %cst_186 : f32 to vector<128x128xf32>
      %500 = arith.select %495, %498, %499 : vector<128x128xi1>, vector<128x128xf32>
      %cst_187 = arith.constant dense<0xFF800000> : vector<128xf32>
      %501 = vector.multi_reduction <maximumf>, %500, %cst_187 [1] : vector<128x128xf32> to vector<128xf32>
      %502 = vector.shape_cast %501 : vector<128xf32> to vector<128x1xf32>
      %c0_i32_188 = arith.constant 0 : i32
      %503 = vector.broadcast %c0_i32_188 : i32 to vector<128x16xi32>
      %504 = arith.cmpi eq, %34, %503 : vector<128x16xi32>
      %cst_189 = arith.constant -3.000000e+38 : f32
      %505 = vector.shape_cast %502 : vector<128x1xf32> to vector<128x1xf32>
      %506 = vector.broadcast %505 : vector<128x1xf32> to vector<128x16xf32>
      %507 = vector.broadcast %cst_189 : f32 to vector<128x16xf32>
      %508 = arith.select %504, %506, %507 : vector<128x16xi1>, vector<128x16xf32>
      %509 = arith.maximumf %491, %508 : vector<128x16xf32>
      %c1_190 = arith.constant 1 : index
      %c256_191 = arith.constant 256 : index
      %510 = vector.load %arg7[%c1_190, %c256_191] : memref<16x512xf32, #tpu.memory_space<vmem>>, vector<1x128xf32>
      %cst_192 = arith.constant -3.000000e+38 : f32
      %511 = vector.shape_cast %510 : vector<1x128xf32> to vector<1x128xf32>
      %512 = vector.broadcast %511 : vector<1x128xf32> to vector<128x128xf32>
      %513 = vector.broadcast %cst_192 : f32 to vector<128x128xf32>
      %514 = arith.select %495, %512, %513 : vector<128x128xi1>, vector<128x128xf32>
      %cst_193 = arith.constant dense<0xFF800000> : vector<128xf32>
      %515 = vector.multi_reduction <maximumf>, %514, %cst_193 [1] : vector<128x128xf32> to vector<128xf32>
      %516 = vector.shape_cast %515 : vector<128xf32> to vector<128x1xf32>
      %c1_i32_194 = arith.constant 1 : i32
      %517 = vector.broadcast %c1_i32_194 : i32 to vector<128x16xi32>
      %518 = arith.cmpi eq, %34, %517 : vector<128x16xi32>
      %cst_195 = arith.constant -3.000000e+38 : f32
      %519 = vector.shape_cast %516 : vector<128x1xf32> to vector<128x1xf32>
      %520 = vector.broadcast %519 : vector<128x1xf32> to vector<128x16xf32>
      %521 = vector.broadcast %cst_195 : f32 to vector<128x16xf32>
      %522 = arith.select %518, %520, %521 : vector<128x16xi1>, vector<128x16xf32>
      %523 = arith.maximumf %509, %522 : vector<128x16xf32>
      %c2_196 = arith.constant 2 : index
      %c256_197 = arith.constant 256 : index
      %524 = vector.load %arg7[%c2_196, %c256_197] : memref<16x512xf32, #tpu.memory_space<vmem>>, vector<1x128xf32>
      %cst_198 = arith.constant -3.000000e+38 : f32
      %525 = vector.shape_cast %524 : vector<1x128xf32> to vector<1x128xf32>
      %526 = vector.broadcast %525 : vector<1x128xf32> to vector<128x128xf32>
      %527 = vector.broadcast %cst_198 : f32 to vector<128x128xf32>
      %528 = arith.select %495, %526, %527 : vector<128x128xi1>, vector<128x128xf32>
      %cst_199 = arith.constant dense<0xFF800000> : vector<128xf32>
      %529 = vector.multi_reduction <maximumf>, %528, %cst_199 [1] : vector<128x128xf32> to vector<128xf32>
      %530 = vector.shape_cast %529 : vector<128xf32> to vector<128x1xf32>
      %c2_i32_200 = arith.constant 2 : i32
      %531 = vector.broadcast %c2_i32_200 : i32 to vector<128x16xi32>
      %532 = arith.cmpi eq, %34, %531 : vector<128x16xi32>
      %cst_201 = arith.constant -3.000000e+38 : f32
      %533 = vector.shape_cast %530 : vector<128x1xf32> to vector<128x1xf32>
      %534 = vector.broadcast %533 : vector<128x1xf32> to vector<128x16xf32>
      %535 = vector.broadcast %cst_201 : f32 to vector<128x16xf32>
      %536 = arith.select %532, %534, %535 : vector<128x16xi1>, vector<128x16xf32>
      %537 = arith.maximumf %523, %536 : vector<128x16xf32>
      %c3_202 = arith.constant 3 : index
      %c256_203 = arith.constant 256 : index
      %538 = vector.load %arg7[%c3_202, %c256_203] : memref<16x512xf32, #tpu.memory_space<vmem>>, vector<1x128xf32>
      %cst_204 = arith.constant -3.000000e+38 : f32
      %539 = vector.shape_cast %538 : vector<1x128xf32> to vector<1x128xf32>
      %540 = vector.broadcast %539 : vector<1x128xf32> to vector<128x128xf32>
      %541 = vector.broadcast %cst_204 : f32 to vector<128x128xf32>
      %542 = arith.select %495, %540, %541 : vector<128x128xi1>, vector<128x128xf32>
      %cst_205 = arith.constant dense<0xFF800000> : vector<128xf32>
      %543 = vector.multi_reduction <maximumf>, %542, %cst_205 [1] : vector<128x128xf32> to vector<128xf32>
      %544 = vector.shape_cast %543 : vector<128xf32> to vector<128x1xf32>
      %c3_i32_206 = arith.constant 3 : i32
      %545 = vector.broadcast %c3_i32_206 : i32 to vector<128x16xi32>
      %546 = arith.cmpi eq, %34, %545 : vector<128x16xi32>
      %cst_207 = arith.constant -3.000000e+38 : f32
      %547 = vector.shape_cast %544 : vector<128x1xf32> to vector<128x1xf32>
      %548 = vector.broadcast %547 : vector<128x1xf32> to vector<128x16xf32>
      %549 = vector.broadcast %cst_207 : f32 to vector<128x16xf32>
      %550 = arith.select %546, %548, %549 : vector<128x16xi1>, vector<128x16xf32>
      %551 = arith.maximumf %537, %550 : vector<128x16xf32>
      %c4_208 = arith.constant 4 : index
      %c256_209 = arith.constant 256 : index
      %552 = vector.load %arg7[%c4_208, %c256_209] : memref<16x512xf32, #tpu.memory_space<vmem>>, vector<1x128xf32>
      %cst_210 = arith.constant -3.000000e+38 : f32
      %553 = vector.shape_cast %552 : vector<1x128xf32> to vector<1x128xf32>
      %554 = vector.broadcast %553 : vector<1x128xf32> to vector<128x128xf32>
      %555 = vector.broadcast %cst_210 : f32 to vector<128x128xf32>
      %556 = arith.select %495, %554, %555 : vector<128x128xi1>, vector<128x128xf32>
      %cst_211 = arith.constant dense<0xFF800000> : vector<128xf32>
      %557 = vector.multi_reduction <maximumf>, %556, %cst_211 [1] : vector<128x128xf32> to vector<128xf32>
      %558 = vector.shape_cast %557 : vector<128xf32> to vector<128x1xf32>
      %c4_i32_212 = arith.constant 4 : i32
      %559 = vector.broadcast %c4_i32_212 : i32 to vector<128x16xi32>
      %560 = arith.cmpi eq, %34, %559 : vector<128x16xi32>
      %cst_213 = arith.constant -3.000000e+38 : f32
      %561 = vector.shape_cast %558 : vector<128x1xf32> to vector<128x1xf32>
      %562 = vector.broadcast %561 : vector<128x1xf32> to vector<128x16xf32>
      %563 = vector.broadcast %cst_213 : f32 to vector<128x16xf32>
      %564 = arith.select %560, %562, %563 : vector<128x16xi1>, vector<128x16xf32>
      %565 = arith.maximumf %551, %564 : vector<128x16xf32>
      %c5_214 = arith.constant 5 : index
      %c256_215 = arith.constant 256 : index
      %566 = vector.load %arg7[%c5_214, %c256_215] : memref<16x512xf32, #tpu.memory_space<vmem>>, vector<1x128xf32>
      %cst_216 = arith.constant -3.000000e+38 : f32
      %567 = vector.shape_cast %566 : vector<1x128xf32> to vector<1x128xf32>
      %568 = vector.broadcast %567 : vector<1x128xf32> to vector<128x128xf32>
      %569 = vector.broadcast %cst_216 : f32 to vector<128x128xf32>
      %570 = arith.select %495, %568, %569 : vector<128x128xi1>, vector<128x128xf32>
      %cst_217 = arith.constant dense<0xFF800000> : vector<128xf32>
      %571 = vector.multi_reduction <maximumf>, %570, %cst_217 [1] : vector<128x128xf32> to vector<128xf32>
      %572 = vector.shape_cast %571 : vector<128xf32> to vector<128x1xf32>
      %c5_i32_218 = arith.constant 5 : i32
      %573 = vector.broadcast %c5_i32_218 : i32 to vector<128x16xi32>
      %574 = arith.cmpi eq, %34, %573 : vector<128x16xi32>
      %cst_219 = arith.constant -3.000000e+38 : f32
      %575 = vector.shape_cast %572 : vector<128x1xf32> to vector<128x1xf32>
      %576 = vector.broadcast %575 : vector<128x1xf32> to vector<128x16xf32>
      %577 = vector.broadcast %cst_219 : f32 to vector<128x16xf32>
      %578 = arith.select %574, %576, %577 : vector<128x16xi1>, vector<128x16xf32>
      %579 = arith.maximumf %565, %578 : vector<128x16xf32>
      %c6_220 = arith.constant 6 : index
      %c256_221 = arith.constant 256 : index
      %580 = vector.load %arg7[%c6_220, %c256_221] : memref<16x512xf32, #tpu.memory_space<vmem>>, vector<1x128xf32>
      %cst_222 = arith.constant -3.000000e+38 : f32
      %581 = vector.shape_cast %580 : vector<1x128xf32> to vector<1x128xf32>
      %582 = vector.broadcast %581 : vector<1x128xf32> to vector<128x128xf32>
      %583 = vector.broadcast %cst_222 : f32 to vector<128x128xf32>
      %584 = arith.select %495, %582, %583 : vector<128x128xi1>, vector<128x128xf32>
      %cst_223 = arith.constant dense<0xFF800000> : vector<128xf32>
      %585 = vector.multi_reduction <maximumf>, %584, %cst_223 [1] : vector<128x128xf32> to vector<128xf32>
      %586 = vector.shape_cast %585 : vector<128xf32> to vector<128x1xf32>
      %c6_i32_224 = arith.constant 6 : i32
      %587 = vector.broadcast %c6_i32_224 : i32 to vector<128x16xi32>
      %588 = arith.cmpi eq, %34, %587 : vector<128x16xi32>
      %cst_225 = arith.constant -3.000000e+38 : f32
      %589 = vector.shape_cast %586 : vector<128x1xf32> to vector<128x1xf32>
      %590 = vector.broadcast %589 : vector<128x1xf32> to vector<128x16xf32>
      %591 = vector.broadcast %cst_225 : f32 to vector<128x16xf32>
      %592 = arith.select %588, %590, %591 : vector<128x16xi1>, vector<128x16xf32>
      %593 = arith.maximumf %579, %592 : vector<128x16xf32>
      %c7_226 = arith.constant 7 : index
      %c256_227 = arith.constant 256 : index
      %594 = vector.load %arg7[%c7_226, %c256_227] : memref<16x512xf32, #tpu.memory_space<vmem>>, vector<1x128xf32>
      %cst_228 = arith.constant -3.000000e+38 : f32
      %595 = vector.shape_cast %594 : vector<1x128xf32> to vector<1x128xf32>
      %596 = vector.broadcast %595 : vector<1x128xf32> to vector<128x128xf32>
      %597 = vector.broadcast %cst_228 : f32 to vector<128x128xf32>
      %598 = arith.select %495, %596, %597 : vector<128x128xi1>, vector<128x128xf32>
      %cst_229 = arith.constant dense<0xFF800000> : vector<128xf32>
      %599 = vector.multi_reduction <maximumf>, %598, %cst_229 [1] : vector<128x128xf32> to vector<128xf32>
      %600 = vector.shape_cast %599 : vector<128xf32> to vector<128x1xf32>
      %c7_i32_230 = arith.constant 7 : i32
      %601 = vector.broadcast %c7_i32_230 : i32 to vector<128x16xi32>
      %602 = arith.cmpi eq, %34, %601 : vector<128x16xi32>
      %cst_231 = arith.constant -3.000000e+38 : f32
      %603 = vector.shape_cast %600 : vector<128x1xf32> to vector<128x1xf32>
      %604 = vector.broadcast %603 : vector<128x1xf32> to vector<128x16xf32>
      %605 = vector.broadcast %cst_231 : f32 to vector<128x16xf32>
      %606 = arith.select %602, %604, %605 : vector<128x16xi1>, vector<128x16xf32>
      %607 = arith.maximumf %593, %606 : vector<128x16xf32>
      %c8_232 = arith.constant 8 : index
      %c256_233 = arith.constant 256 : index
      %608 = vector.load %arg7[%c8_232, %c256_233] : memref<16x512xf32, #tpu.memory_space<vmem>>, vector<1x128xf32>
      %cst_234 = arith.constant -3.000000e+38 : f32
      %609 = vector.shape_cast %608 : vector<1x128xf32> to vector<1x128xf32>
      %610 = vector.broadcast %609 : vector<1x128xf32> to vector<128x128xf32>
      %611 = vector.broadcast %cst_234 : f32 to vector<128x128xf32>
      %612 = arith.select %495, %610, %611 : vector<128x128xi1>, vector<128x128xf32>
      %cst_235 = arith.constant dense<0xFF800000> : vector<128xf32>
      %613 = vector.multi_reduction <maximumf>, %612, %cst_235 [1] : vector<128x128xf32> to vector<128xf32>
      %614 = vector.shape_cast %613 : vector<128xf32> to vector<128x1xf32>
      %c8_i32_236 = arith.constant 8 : i32
      %615 = vector.broadcast %c8_i32_236 : i32 to vector<128x16xi32>
      %616 = arith.cmpi eq, %34, %615 : vector<128x16xi32>
      %cst_237 = arith.constant -3.000000e+38 : f32
      %617 = vector.shape_cast %614 : vector<128x1xf32> to vector<128x1xf32>
      %618 = vector.broadcast %617 : vector<128x1xf32> to vector<128x16xf32>
      %619 = vector.broadcast %cst_237 : f32 to vector<128x16xf32>
      %620 = arith.select %616, %618, %619 : vector<128x16xi1>, vector<128x16xf32>
      %621 = arith.maximumf %607, %620 : vector<128x16xf32>
      %c9_238 = arith.constant 9 : index
      %c256_239 = arith.constant 256 : index
      %622 = vector.load %arg7[%c9_238, %c256_239] : memref<16x512xf32, #tpu.memory_space<vmem>>, vector<1x128xf32>
      %cst_240 = arith.constant -3.000000e+38 : f32
      %623 = vector.shape_cast %622 : vector<1x128xf32> to vector<1x128xf32>
      %624 = vector.broadcast %623 : vector<1x128xf32> to vector<128x128xf32>
      %625 = vector.broadcast %cst_240 : f32 to vector<128x128xf32>
      %626 = arith.select %495, %624, %625 : vector<128x128xi1>, vector<128x128xf32>
      %cst_241 = arith.constant dense<0xFF800000> : vector<128xf32>
      %627 = vector.multi_reduction <maximumf>, %626, %cst_241 [1] : vector<128x128xf32> to vector<128xf32>
      %628 = vector.shape_cast %627 : vector<128xf32> to vector<128x1xf32>
      %c9_i32_242 = arith.constant 9 : i32
      %629 = vector.broadcast %c9_i32_242 : i32 to vector<128x16xi32>
      %630 = arith.cmpi eq, %34, %629 : vector<128x16xi32>
      %cst_243 = arith.constant -3.000000e+38 : f32
      %631 = vector.shape_cast %628 : vector<128x1xf32> to vector<128x1xf32>
      %632 = vector.broadcast %631 : vector<128x1xf32> to vector<128x16xf32>
      %633 = vector.broadcast %cst_243 : f32 to vector<128x16xf32>
      %634 = arith.select %630, %632, %633 : vector<128x16xi1>, vector<128x16xf32>
      %635 = arith.maximumf %621, %634 : vector<128x16xf32>
      %c10_244 = arith.constant 10 : index
      %c256_245 = arith.constant 256 : index
      %636 = vector.load %arg7[%c10_244, %c256_245] : memref<16x512xf32, #tpu.memory_space<vmem>>, vector<1x128xf32>
      %cst_246 = arith.constant -3.000000e+38 : f32
      %637 = vector.shape_cast %636 : vector<1x128xf32> to vector<1x128xf32>
      %638 = vector.broadcast %637 : vector<1x128xf32> to vector<128x128xf32>
      %639 = vector.broadcast %cst_246 : f32 to vector<128x128xf32>
      %640 = arith.select %495, %638, %639 : vector<128x128xi1>, vector<128x128xf32>
      %cst_247 = arith.constant dense<0xFF800000> : vector<128xf32>
      %641 = vector.multi_reduction <maximumf>, %640, %cst_247 [1] : vector<128x128xf32> to vector<128xf32>
      %642 = vector.shape_cast %641 : vector<128xf32> to vector<128x1xf32>
      %c10_i32_248 = arith.constant 10 : i32
      %643 = vector.broadcast %c10_i32_248 : i32 to vector<128x16xi32>
      %644 = arith.cmpi eq, %34, %643 : vector<128x16xi32>
      %cst_249 = arith.constant -3.000000e+38 : f32
      %645 = vector.shape_cast %642 : vector<128x1xf32> to vector<128x1xf32>
      %646 = vector.broadcast %645 : vector<128x1xf32> to vector<128x16xf32>
      %647 = vector.broadcast %cst_249 : f32 to vector<128x16xf32>
      %648 = arith.select %644, %646, %647 : vector<128x16xi1>, vector<128x16xf32>
      %649 = arith.maximumf %635, %648 : vector<128x16xf32>
      %c11_250 = arith.constant 11 : index
      %c256_251 = arith.constant 256 : index
      %650 = vector.load %arg7[%c11_250, %c256_251] : memref<16x512xf32, #tpu.memory_space<vmem>>, vector<1x128xf32>
      %cst_252 = arith.constant -3.000000e+38 : f32
      %651 = vector.shape_cast %650 : vector<1x128xf32> to vector<1x128xf32>
      %652 = vector.broadcast %651 : vector<1x128xf32> to vector<128x128xf32>
      %653 = vector.broadcast %cst_252 : f32 to vector<128x128xf32>
      %654 = arith.select %495, %652, %653 : vector<128x128xi1>, vector<128x128xf32>
      %cst_253 = arith.constant dense<0xFF800000> : vector<128xf32>
      %655 = vector.multi_reduction <maximumf>, %654, %cst_253 [1] : vector<128x128xf32> to vector<128xf32>
      %656 = vector.shape_cast %655 : vector<128xf32> to vector<128x1xf32>
      %c11_i32_254 = arith.constant 11 : i32
      %657 = vector.broadcast %c11_i32_254 : i32 to vector<128x16xi32>
      %658 = arith.cmpi eq, %34, %657 : vector<128x16xi32>
      %cst_255 = arith.constant -3.000000e+38 : f32
      %659 = vector.shape_cast %656 : vector<128x1xf32> to vector<128x1xf32>
      %660 = vector.broadcast %659 : vector<128x1xf32> to vector<128x16xf32>
      %661 = vector.broadcast %cst_255 : f32 to vector<128x16xf32>
      %662 = arith.select %658, %660, %661 : vector<128x16xi1>, vector<128x16xf32>
      %663 = arith.maximumf %649, %662 : vector<128x16xf32>
      %c12_256 = arith.constant 12 : index
      %c256_257 = arith.constant 256 : index
      %664 = vector.load %arg7[%c12_256, %c256_257] : memref<16x512xf32, #tpu.memory_space<vmem>>, vector<1x128xf32>
      %cst_258 = arith.constant -3.000000e+38 : f32
      %665 = vector.shape_cast %664 : vector<1x128xf32> to vector<1x128xf32>
      %666 = vector.broadcast %665 : vector<1x128xf32> to vector<128x128xf32>
      %667 = vector.broadcast %cst_258 : f32 to vector<128x128xf32>
      %668 = arith.select %495, %666, %667 : vector<128x128xi1>, vector<128x128xf32>
      %cst_259 = arith.constant dense<0xFF800000> : vector<128xf32>
      %669 = vector.multi_reduction <maximumf>, %668, %cst_259 [1] : vector<128x128xf32> to vector<128xf32>
      %670 = vector.shape_cast %669 : vector<128xf32> to vector<128x1xf32>
      %c12_i32_260 = arith.constant 12 : i32
      %671 = vector.broadcast %c12_i32_260 : i32 to vector<128x16xi32>
      %672 = arith.cmpi eq, %34, %671 : vector<128x16xi32>
      %cst_261 = arith.constant -3.000000e+38 : f32
      %673 = vector.shape_cast %670 : vector<128x1xf32> to vector<128x1xf32>
      %674 = vector.broadcast %673 : vector<128x1xf32> to vector<128x16xf32>
      %675 = vector.broadcast %cst_261 : f32 to vector<128x16xf32>
      %676 = arith.select %672, %674, %675 : vector<128x16xi1>, vector<128x16xf32>
      %677 = arith.maximumf %663, %676 : vector<128x16xf32>
      %c13_262 = arith.constant 13 : index
      %c256_263 = arith.constant 256 : index
      %678 = vector.load %arg7[%c13_262, %c256_263] : memref<16x512xf32, #tpu.memory_space<vmem>>, vector<1x128xf32>
      %cst_264 = arith.constant -3.000000e+38 : f32
      %679 = vector.shape_cast %678 : vector<1x128xf32> to vector<1x128xf32>
      %680 = vector.broadcast %679 : vector<1x128xf32> to vector<128x128xf32>
      %681 = vector.broadcast %cst_264 : f32 to vector<128x128xf32>
      %682 = arith.select %495, %680, %681 : vector<128x128xi1>, vector<128x128xf32>
      %cst_265 = arith.constant dense<0xFF800000> : vector<128xf32>
      %683 = vector.multi_reduction <maximumf>, %682, %cst_265 [1] : vector<128x128xf32> to vector<128xf32>
      %684 = vector.shape_cast %683 : vector<128xf32> to vector<128x1xf32>
      %c13_i32_266 = arith.constant 13 : i32
      %685 = vector.broadcast %c13_i32_266 : i32 to vector<128x16xi32>
      %686 = arith.cmpi eq, %34, %685 : vector<128x16xi32>
      %cst_267 = arith.constant -3.000000e+38 : f32
      %687 = vector.shape_cast %684 : vector<128x1xf32> to vector<128x1xf32>
      %688 = vector.broadcast %687 : vector<128x1xf32> to vector<128x16xf32>
      %689 = vector.broadcast %cst_267 : f32 to vector<128x16xf32>
      %690 = arith.select %686, %688, %689 : vector<128x16xi1>, vector<128x16xf32>
      %691 = arith.maximumf %677, %690 : vector<128x16xf32>
      %c14_268 = arith.constant 14 : index
      %c256_269 = arith.constant 256 : index
      %692 = vector.load %arg7[%c14_268, %c256_269] : memref<16x512xf32, #tpu.memory_space<vmem>>, vector<1x128xf32>
      %cst_270 = arith.constant -3.000000e+38 : f32
      %693 = vector.shape_cast %692 : vector<1x128xf32> to vector<1x128xf32>
      %694 = vector.broadcast %693 : vector<1x128xf32> to vector<128x128xf32>
      %695 = vector.broadcast %cst_270 : f32 to vector<128x128xf32>
      %696 = arith.select %495, %694, %695 : vector<128x128xi1>, vector<128x128xf32>
      %cst_271 = arith.constant dense<0xFF800000> : vector<128xf32>
      %697 = vector.multi_reduction <maximumf>, %696, %cst_271 [1] : vector<128x128xf32> to vector<128xf32>
      %698 = vector.shape_cast %697 : vector<128xf32> to vector<128x1xf32>
      %c14_i32_272 = arith.constant 14 : i32
      %699 = vector.broadcast %c14_i32_272 : i32 to vector<128x16xi32>
      %700 = arith.cmpi eq, %34, %699 : vector<128x16xi32>
      %cst_273 = arith.constant -3.000000e+38 : f32
      %701 = vector.shape_cast %698 : vector<128x1xf32> to vector<128x1xf32>
      %702 = vector.broadcast %701 : vector<128x1xf32> to vector<128x16xf32>
      %703 = vector.broadcast %cst_273 : f32 to vector<128x16xf32>
      %704 = arith.select %700, %702, %703 : vector<128x16xi1>, vector<128x16xf32>
      %705 = arith.maximumf %691, %704 : vector<128x16xf32>
      %c15_274 = arith.constant 15 : index
      %c256_275 = arith.constant 256 : index
      %706 = vector.load %arg7[%c15_274, %c256_275] : memref<16x512xf32, #tpu.memory_space<vmem>>, vector<1x128xf32>
      %cst_276 = arith.constant -3.000000e+38 : f32
      %707 = vector.shape_cast %706 : vector<1x128xf32> to vector<1x128xf32>
      %708 = vector.broadcast %707 : vector<1x128xf32> to vector<128x128xf32>
      %709 = vector.broadcast %cst_276 : f32 to vector<128x128xf32>
      %710 = arith.select %495, %708, %709 : vector<128x128xi1>, vector<128x128xf32>
      %cst_277 = arith.constant dense<0xFF800000> : vector<128xf32>
      %711 = vector.multi_reduction <maximumf>, %710, %cst_277 [1] : vector<128x128xf32> to vector<128xf32>
      %712 = vector.shape_cast %711 : vector<128xf32> to vector<128x1xf32>
      %c15_i32_278 = arith.constant 15 : i32
      %713 = vector.broadcast %c15_i32_278 : i32 to vector<128x16xi32>
      %714 = arith.cmpi eq, %34, %713 : vector<128x16xi32>
      %cst_279 = arith.constant -3.000000e+38 : f32
      %715 = vector.shape_cast %712 : vector<128x1xf32> to vector<128x1xf32>
      %716 = vector.broadcast %715 : vector<128x1xf32> to vector<128x16xf32>
      %717 = vector.broadcast %cst_279 : f32 to vector<128x16xf32>
      %718 = arith.select %714, %716, %717 : vector<128x16xi1>, vector<128x16xf32>
      %719 = arith.maximumf %705, %718 : vector<128x16xf32>
      %c0_280 = arith.constant 0 : index
      %c384 = arith.constant 384 : index
      %720 = vector.load %arg5[%c0_280, %c384] : memref<1x512xi32, #tpu.memory_space<vmem>>, vector<1x128xi32>
      %721 = vector.broadcast %720 : vector<1x128xi32> to vector<128x128xi32>
      %722 = vector.broadcast %22 : vector<128x1xi32> to vector<128x128xi32>
      %723 = arith.cmpi eq, %721, %722 : vector<128x128xi32>
      %c0_281 = arith.constant 0 : index
      %c384_282 = arith.constant 384 : index
      %724 = vector.load %arg7[%c0_281, %c384_282] : memref<16x512xf32, #tpu.memory_space<vmem>>, vector<1x128xf32>
      %cst_283 = arith.constant -3.000000e+38 : f32
      %725 = vector.shape_cast %724 : vector<1x128xf32> to vector<1x128xf32>
      %726 = vector.broadcast %725 : vector<1x128xf32> to vector<128x128xf32>
      %727 = vector.broadcast %cst_283 : f32 to vector<128x128xf32>
      %728 = arith.select %723, %726, %727 : vector<128x128xi1>, vector<128x128xf32>
      %cst_284 = arith.constant dense<0xFF800000> : vector<128xf32>
      %729 = vector.multi_reduction <maximumf>, %728, %cst_284 [1] : vector<128x128xf32> to vector<128xf32>
      %730 = vector.shape_cast %729 : vector<128xf32> to vector<128x1xf32>
      %c0_i32_285 = arith.constant 0 : i32
      %731 = vector.broadcast %c0_i32_285 : i32 to vector<128x16xi32>
      %732 = arith.cmpi eq, %34, %731 : vector<128x16xi32>
      %cst_286 = arith.constant -3.000000e+38 : f32
      %733 = vector.shape_cast %730 : vector<128x1xf32> to vector<128x1xf32>
      %734 = vector.broadcast %733 : vector<128x1xf32> to vector<128x16xf32>
      %735 = vector.broadcast %cst_286 : f32 to vector<128x16xf32>
      %736 = arith.select %732, %734, %735 : vector<128x16xi1>, vector<128x16xf32>
      %737 = arith.maximumf %719, %736 : vector<128x16xf32>
      %c1_287 = arith.constant 1 : index
      %c384_288 = arith.constant 384 : index
      %738 = vector.load %arg7[%c1_287, %c384_288] : memref<16x512xf32, #tpu.memory_space<vmem>>, vector<1x128xf32>
      %cst_289 = arith.constant -3.000000e+38 : f32
      %739 = vector.shape_cast %738 : vector<1x128xf32> to vector<1x128xf32>
      %740 = vector.broadcast %739 : vector<1x128xf32> to vector<128x128xf32>
      %741 = vector.broadcast %cst_289 : f32 to vector<128x128xf32>
      %742 = arith.select %723, %740, %741 : vector<128x128xi1>, vector<128x128xf32>
      %cst_290 = arith.constant dense<0xFF800000> : vector<128xf32>
      %743 = vector.multi_reduction <maximumf>, %742, %cst_290 [1] : vector<128x128xf32> to vector<128xf32>
      %744 = vector.shape_cast %743 : vector<128xf32> to vector<128x1xf32>
      %c1_i32_291 = arith.constant 1 : i32
      %745 = vector.broadcast %c1_i32_291 : i32 to vector<128x16xi32>
      %746 = arith.cmpi eq, %34, %745 : vector<128x16xi32>
      %cst_292 = arith.constant -3.000000e+38 : f32
      %747 = vector.shape_cast %744 : vector<128x1xf32> to vector<128x1xf32>
      %748 = vector.broadcast %747 : vector<128x1xf32> to vector<128x16xf32>
      %749 = vector.broadcast %cst_292 : f32 to vector<128x16xf32>
      %750 = arith.select %746, %748, %749 : vector<128x16xi1>, vector<128x16xf32>
      %751 = arith.maximumf %737, %750 : vector<128x16xf32>
      %c2_293 = arith.constant 2 : index
      %c384_294 = arith.constant 384 : index
      %752 = vector.load %arg7[%c2_293, %c384_294] : memref<16x512xf32, #tpu.memory_space<vmem>>, vector<1x128xf32>
      %cst_295 = arith.constant -3.000000e+38 : f32
      %753 = vector.shape_cast %752 : vector<1x128xf32> to vector<1x128xf32>
      %754 = vector.broadcast %753 : vector<1x128xf32> to vector<128x128xf32>
      %755 = vector.broadcast %cst_295 : f32 to vector<128x128xf32>
      %756 = arith.select %723, %754, %755 : vector<128x128xi1>, vector<128x128xf32>
      %cst_296 = arith.constant dense<0xFF800000> : vector<128xf32>
      %757 = vector.multi_reduction <maximumf>, %756, %cst_296 [1] : vector<128x128xf32> to vector<128xf32>
      %758 = vector.shape_cast %757 : vector<128xf32> to vector<128x1xf32>
      %c2_i32_297 = arith.constant 2 : i32
      %759 = vector.broadcast %c2_i32_297 : i32 to vector<128x16xi32>
      %760 = arith.cmpi eq, %34, %759 : vector<128x16xi32>
      %cst_298 = arith.constant -3.000000e+38 : f32
      %761 = vector.shape_cast %758 : vector<128x1xf32> to vector<128x1xf32>
      %762 = vector.broadcast %761 : vector<128x1xf32> to vector<128x16xf32>
      %763 = vector.broadcast %cst_298 : f32 to vector<128x16xf32>
      %764 = arith.select %760, %762, %763 : vector<128x16xi1>, vector<128x16xf32>
      %765 = arith.maximumf %751, %764 : vector<128x16xf32>
      %c3_299 = arith.constant 3 : index
      %c384_300 = arith.constant 384 : index
      %766 = vector.load %arg7[%c3_299, %c384_300] : memref<16x512xf32, #tpu.memory_space<vmem>>, vector<1x128xf32>
      %cst_301 = arith.constant -3.000000e+38 : f32
      %767 = vector.shape_cast %766 : vector<1x128xf32> to vector<1x128xf32>
      %768 = vector.broadcast %767 : vector<1x128xf32> to vector<128x128xf32>
      %769 = vector.broadcast %cst_301 : f32 to vector<128x128xf32>
      %770 = arith.select %723, %768, %769 : vector<128x128xi1>, vector<128x128xf32>
      %cst_302 = arith.constant dense<0xFF800000> : vector<128xf32>
      %771 = vector.multi_reduction <maximumf>, %770, %cst_302 [1] : vector<128x128xf32> to vector<128xf32>
      %772 = vector.shape_cast %771 : vector<128xf32> to vector<128x1xf32>
      %c3_i32_303 = arith.constant 3 : i32
      %773 = vector.broadcast %c3_i32_303 : i32 to vector<128x16xi32>
      %774 = arith.cmpi eq, %34, %773 : vector<128x16xi32>
      %cst_304 = arith.constant -3.000000e+38 : f32
      %775 = vector.shape_cast %772 : vector<128x1xf32> to vector<128x1xf32>
      %776 = vector.broadcast %775 : vector<128x1xf32> to vector<128x16xf32>
      %777 = vector.broadcast %cst_304 : f32 to vector<128x16xf32>
      %778 = arith.select %774, %776, %777 : vector<128x16xi1>, vector<128x16xf32>
      %779 = arith.maximumf %765, %778 : vector<128x16xf32>
      %c4_305 = arith.constant 4 : index
      %c384_306 = arith.constant 384 : index
      %780 = vector.load %arg7[%c4_305, %c384_306] : memref<16x512xf32, #tpu.memory_space<vmem>>, vector<1x128xf32>
      %cst_307 = arith.constant -3.000000e+38 : f32
      %781 = vector.shape_cast %780 : vector<1x128xf32> to vector<1x128xf32>
      %782 = vector.broadcast %781 : vector<1x128xf32> to vector<128x128xf32>
      %783 = vector.broadcast %cst_307 : f32 to vector<128x128xf32>
      %784 = arith.select %723, %782, %783 : vector<128x128xi1>, vector<128x128xf32>
      %cst_308 = arith.constant dense<0xFF800000> : vector<128xf32>
      %785 = vector.multi_reduction <maximumf>, %784, %cst_308 [1] : vector<128x128xf32> to vector<128xf32>
      %786 = vector.shape_cast %785 : vector<128xf32> to vector<128x1xf32>
      %c4_i32_309 = arith.constant 4 : i32
      %787 = vector.broadcast %c4_i32_309 : i32 to vector<128x16xi32>
      %788 = arith.cmpi eq, %34, %787 : vector<128x16xi32>
      %cst_310 = arith.constant -3.000000e+38 : f32
      %789 = vector.shape_cast %786 : vector<128x1xf32> to vector<128x1xf32>
      %790 = vector.broadcast %789 : vector<128x1xf32> to vector<128x16xf32>
      %791 = vector.broadcast %cst_310 : f32 to vector<128x16xf32>
      %792 = arith.select %788, %790, %791 : vector<128x16xi1>, vector<128x16xf32>
      %793 = arith.maximumf %779, %792 : vector<128x16xf32>
      %c5_311 = arith.constant 5 : index
      %c384_312 = arith.constant 384 : index
      %794 = vector.load %arg7[%c5_311, %c384_312] : memref<16x512xf32, #tpu.memory_space<vmem>>, vector<1x128xf32>
      %cst_313 = arith.constant -3.000000e+38 : f32
      %795 = vector.shape_cast %794 : vector<1x128xf32> to vector<1x128xf32>
      %796 = vector.broadcast %795 : vector<1x128xf32> to vector<128x128xf32>
      %797 = vector.broadcast %cst_313 : f32 to vector<128x128xf32>
      %798 = arith.select %723, %796, %797 : vector<128x128xi1>, vector<128x128xf32>
      %cst_314 = arith.constant dense<0xFF800000> : vector<128xf32>
      %799 = vector.multi_reduction <maximumf>, %798, %cst_314 [1] : vector<128x128xf32> to vector<128xf32>
      %800 = vector.shape_cast %799 : vector<128xf32> to vector<128x1xf32>
      %c5_i32_315 = arith.constant 5 : i32
      %801 = vector.broadcast %c5_i32_315 : i32 to vector<128x16xi32>
      %802 = arith.cmpi eq, %34, %801 : vector<128x16xi32>
      %cst_316 = arith.constant -3.000000e+38 : f32
      %803 = vector.shape_cast %800 : vector<128x1xf32> to vector<128x1xf32>
      %804 = vector.broadcast %803 : vector<128x1xf32> to vector<128x16xf32>
      %805 = vector.broadcast %cst_316 : f32 to vector<128x16xf32>
      %806 = arith.select %802, %804, %805 : vector<128x16xi1>, vector<128x16xf32>
      %807 = arith.maximumf %793, %806 : vector<128x16xf32>
      %c6_317 = arith.constant 6 : index
      %c384_318 = arith.constant 384 : index
      %808 = vector.load %arg7[%c6_317, %c384_318] : memref<16x512xf32, #tpu.memory_space<vmem>>, vector<1x128xf32>
      %cst_319 = arith.constant -3.000000e+38 : f32
      %809 = vector.shape_cast %808 : vector<1x128xf32> to vector<1x128xf32>
      %810 = vector.broadcast %809 : vector<1x128xf32> to vector<128x128xf32>
      %811 = vector.broadcast %cst_319 : f32 to vector<128x128xf32>
      %812 = arith.select %723, %810, %811 : vector<128x128xi1>, vector<128x128xf32>
      %cst_320 = arith.constant dense<0xFF800000> : vector<128xf32>
      %813 = vector.multi_reduction <maximumf>, %812, %cst_320 [1] : vector<128x128xf32> to vector<128xf32>
      %814 = vector.shape_cast %813 : vector<128xf32> to vector<128x1xf32>
      %c6_i32_321 = arith.constant 6 : i32
      %815 = vector.broadcast %c6_i32_321 : i32 to vector<128x16xi32>
      %816 = arith.cmpi eq, %34, %815 : vector<128x16xi32>
      %cst_322 = arith.constant -3.000000e+38 : f32
      %817 = vector.shape_cast %814 : vector<128x1xf32> to vector<128x1xf32>
      %818 = vector.broadcast %817 : vector<128x1xf32> to vector<128x16xf32>
      %819 = vector.broadcast %cst_322 : f32 to vector<128x16xf32>
      %820 = arith.select %816, %818, %819 : vector<128x16xi1>, vector<128x16xf32>
      %821 = arith.maximumf %807, %820 : vector<128x16xf32>
      %c7_323 = arith.constant 7 : index
      %c384_324 = arith.constant 384 : index
      %822 = vector.load %arg7[%c7_323, %c384_324] : memref<16x512xf32, #tpu.memory_space<vmem>>, vector<1x128xf32>
      %cst_325 = arith.constant -3.000000e+38 : f32
      %823 = vector.shape_cast %822 : vector<1x128xf32> to vector<1x128xf32>
      %824 = vector.broadcast %823 : vector<1x128xf32> to vector<128x128xf32>
      %825 = vector.broadcast %cst_325 : f32 to vector<128x128xf32>
      %826 = arith.select %723, %824, %825 : vector<128x128xi1>, vector<128x128xf32>
      %cst_326 = arith.constant dense<0xFF800000> : vector<128xf32>
      %827 = vector.multi_reduction <maximumf>, %826, %cst_326 [1] : vector<128x128xf32> to vector<128xf32>
      %828 = vector.shape_cast %827 : vector<128xf32> to vector<128x1xf32>
      %c7_i32_327 = arith.constant 7 : i32
      %829 = vector.broadcast %c7_i32_327 : i32 to vector<128x16xi32>
      %830 = arith.cmpi eq, %34, %829 : vector<128x16xi32>
      %cst_328 = arith.constant -3.000000e+38 : f32
      %831 = vector.shape_cast %828 : vector<128x1xf32> to vector<128x1xf32>
      %832 = vector.broadcast %831 : vector<128x1xf32> to vector<128x16xf32>
      %833 = vector.broadcast %cst_328 : f32 to vector<128x16xf32>
      %834 = arith.select %830, %832, %833 : vector<128x16xi1>, vector<128x16xf32>
      %835 = arith.maximumf %821, %834 : vector<128x16xf32>
      %c8_329 = arith.constant 8 : index
      %c384_330 = arith.constant 384 : index
      %836 = vector.load %arg7[%c8_329, %c384_330] : memref<16x512xf32, #tpu.memory_space<vmem>>, vector<1x128xf32>
      %cst_331 = arith.constant -3.000000e+38 : f32
      %837 = vector.shape_cast %836 : vector<1x128xf32> to vector<1x128xf32>
      %838 = vector.broadcast %837 : vector<1x128xf32> to vector<128x128xf32>
      %839 = vector.broadcast %cst_331 : f32 to vector<128x128xf32>
      %840 = arith.select %723, %838, %839 : vector<128x128xi1>, vector<128x128xf32>
      %cst_332 = arith.constant dense<0xFF800000> : vector<128xf32>
      %841 = vector.multi_reduction <maximumf>, %840, %cst_332 [1] : vector<128x128xf32> to vector<128xf32>
      %842 = vector.shape_cast %841 : vector<128xf32> to vector<128x1xf32>
      %c8_i32_333 = arith.constant 8 : i32
      %843 = vector.broadcast %c8_i32_333 : i32 to vector<128x16xi32>
      %844 = arith.cmpi eq, %34, %843 : vector<128x16xi32>
      %cst_334 = arith.constant -3.000000e+38 : f32
      %845 = vector.shape_cast %842 : vector<128x1xf32> to vector<128x1xf32>
      %846 = vector.broadcast %845 : vector<128x1xf32> to vector<128x16xf32>
      %847 = vector.broadcast %cst_334 : f32 to vector<128x16xf32>
      %848 = arith.select %844, %846, %847 : vector<128x16xi1>, vector<128x16xf32>
      %849 = arith.maximumf %835, %848 : vector<128x16xf32>
      %c9_335 = arith.constant 9 : index
      %c384_336 = arith.constant 384 : index
      %850 = vector.load %arg7[%c9_335, %c384_336] : memref<16x512xf32, #tpu.memory_space<vmem>>, vector<1x128xf32>
      %cst_337 = arith.constant -3.000000e+38 : f32
      %851 = vector.shape_cast %850 : vector<1x128xf32> to vector<1x128xf32>
      %852 = vector.broadcast %851 : vector<1x128xf32> to vector<128x128xf32>
      %853 = vector.broadcast %cst_337 : f32 to vector<128x128xf32>
      %854 = arith.select %723, %852, %853 : vector<128x128xi1>, vector<128x128xf32>
      %cst_338 = arith.constant dense<0xFF800000> : vector<128xf32>
      %855 = vector.multi_reduction <maximumf>, %854, %cst_338 [1] : vector<128x128xf32> to vector<128xf32>
      %856 = vector.shape_cast %855 : vector<128xf32> to vector<128x1xf32>
      %c9_i32_339 = arith.constant 9 : i32
      %857 = vector.broadcast %c9_i32_339 : i32 to vector<128x16xi32>
      %858 = arith.cmpi eq, %34, %857 : vector<128x16xi32>
      %cst_340 = arith.constant -3.000000e+38 : f32
      %859 = vector.shape_cast %856 : vector<128x1xf32> to vector<128x1xf32>
      %860 = vector.broadcast %859 : vector<128x1xf32> to vector<128x16xf32>
      %861 = vector.broadcast %cst_340 : f32 to vector<128x16xf32>
      %862 = arith.select %858, %860, %861 : vector<128x16xi1>, vector<128x16xf32>
      %863 = arith.maximumf %849, %862 : vector<128x16xf32>
      %c10_341 = arith.constant 10 : index
      %c384_342 = arith.constant 384 : index
      %864 = vector.load %arg7[%c10_341, %c384_342] : memref<16x512xf32, #tpu.memory_space<vmem>>, vector<1x128xf32>
      %cst_343 = arith.constant -3.000000e+38 : f32
      %865 = vector.shape_cast %864 : vector<1x128xf32> to vector<1x128xf32>
      %866 = vector.broadcast %865 : vector<1x128xf32> to vector<128x128xf32>
      %867 = vector.broadcast %cst_343 : f32 to vector<128x128xf32>
      %868 = arith.select %723, %866, %867 : vector<128x128xi1>, vector<128x128xf32>
      %cst_344 = arith.constant dense<0xFF800000> : vector<128xf32>
      %869 = vector.multi_reduction <maximumf>, %868, %cst_344 [1] : vector<128x128xf32> to vector<128xf32>
      %870 = vector.shape_cast %869 : vector<128xf32> to vector<128x1xf32>
      %c10_i32_345 = arith.constant 10 : i32
      %871 = vector.broadcast %c10_i32_345 : i32 to vector<128x16xi32>
      %872 = arith.cmpi eq, %34, %871 : vector<128x16xi32>
      %cst_346 = arith.constant -3.000000e+38 : f32
      %873 = vector.shape_cast %870 : vector<128x1xf32> to vector<128x1xf32>
      %874 = vector.broadcast %873 : vector<128x1xf32> to vector<128x16xf32>
      %875 = vector.broadcast %cst_346 : f32 to vector<128x16xf32>
      %876 = arith.select %872, %874, %875 : vector<128x16xi1>, vector<128x16xf32>
      %877 = arith.maximumf %863, %876 : vector<128x16xf32>
      %c11_347 = arith.constant 11 : index
      %c384_348 = arith.constant 384 : index
      %878 = vector.load %arg7[%c11_347, %c384_348] : memref<16x512xf32, #tpu.memory_space<vmem>>, vector<1x128xf32>
      %cst_349 = arith.constant -3.000000e+38 : f32
      %879 = vector.shape_cast %878 : vector<1x128xf32> to vector<1x128xf32>
      %880 = vector.broadcast %879 : vector<1x128xf32> to vector<128x128xf32>
      %881 = vector.broadcast %cst_349 : f32 to vector<128x128xf32>
      %882 = arith.select %723, %880, %881 : vector<128x128xi1>, vector<128x128xf32>
      %cst_350 = arith.constant dense<0xFF800000> : vector<128xf32>
      %883 = vector.multi_reduction <maximumf>, %882, %cst_350 [1] : vector<128x128xf32> to vector<128xf32>
      %884 = vector.shape_cast %883 : vector<128xf32> to vector<128x1xf32>
      %c11_i32_351 = arith.constant 11 : i32
      %885 = vector.broadcast %c11_i32_351 : i32 to vector<128x16xi32>
      %886 = arith.cmpi eq, %34, %885 : vector<128x16xi32>
      %cst_352 = arith.constant -3.000000e+38 : f32
      %887 = vector.shape_cast %884 : vector<128x1xf32> to vector<128x1xf32>
      %888 = vector.broadcast %887 : vector<128x1xf32> to vector<128x16xf32>
      %889 = vector.broadcast %cst_352 : f32 to vector<128x16xf32>
      %890 = arith.select %886, %888, %889 : vector<128x16xi1>, vector<128x16xf32>
      %891 = arith.maximumf %877, %890 : vector<128x16xf32>
      %c12_353 = arith.constant 12 : index
      %c384_354 = arith.constant 384 : index
      %892 = vector.load %arg7[%c12_353, %c384_354] : memref<16x512xf32, #tpu.memory_space<vmem>>, vector<1x128xf32>
      %cst_355 = arith.constant -3.000000e+38 : f32
      %893 = vector.shape_cast %892 : vector<1x128xf32> to vector<1x128xf32>
      %894 = vector.broadcast %893 : vector<1x128xf32> to vector<128x128xf32>
      %895 = vector.broadcast %cst_355 : f32 to vector<128x128xf32>
      %896 = arith.select %723, %894, %895 : vector<128x128xi1>, vector<128x128xf32>
      %cst_356 = arith.constant dense<0xFF800000> : vector<128xf32>
      %897 = vector.multi_reduction <maximumf>, %896, %cst_356 [1] : vector<128x128xf32> to vector<128xf32>
      %898 = vector.shape_cast %897 : vector<128xf32> to vector<128x1xf32>
      %c12_i32_357 = arith.constant 12 : i32
      %899 = vector.broadcast %c12_i32_357 : i32 to vector<128x16xi32>
      %900 = arith.cmpi eq, %34, %899 : vector<128x16xi32>
      %cst_358 = arith.constant -3.000000e+38 : f32
      %901 = vector.shape_cast %898 : vector<128x1xf32> to vector<128x1xf32>
      %902 = vector.broadcast %901 : vector<128x1xf32> to vector<128x16xf32>
      %903 = vector.broadcast %cst_358 : f32 to vector<128x16xf32>
      %904 = arith.select %900, %902, %903 : vector<128x16xi1>, vector<128x16xf32>
      %905 = arith.maximumf %891, %904 : vector<128x16xf32>
      %c13_359 = arith.constant 13 : index
      %c384_360 = arith.constant 384 : index
      %906 = vector.load %arg7[%c13_359, %c384_360] : memref<16x512xf32, #tpu.memory_space<vmem>>, vector<1x128xf32>
      %cst_361 = arith.constant -3.000000e+38 : f32
      %907 = vector.shape_cast %906 : vector<1x128xf32> to vector<1x128xf32>
      %908 = vector.broadcast %907 : vector<1x128xf32> to vector<128x128xf32>
      %909 = vector.broadcast %cst_361 : f32 to vector<128x128xf32>
      %910 = arith.select %723, %908, %909 : vector<128x128xi1>, vector<128x128xf32>
      %cst_362 = arith.constant dense<0xFF800000> : vector<128xf32>
      %911 = vector.multi_reduction <maximumf>, %910, %cst_362 [1] : vector<128x128xf32> to vector<128xf32>
      %912 = vector.shape_cast %911 : vector<128xf32> to vector<128x1xf32>
      %c13_i32_363 = arith.constant 13 : i32
      %913 = vector.broadcast %c13_i32_363 : i32 to vector<128x16xi32>
      %914 = arith.cmpi eq, %34, %913 : vector<128x16xi32>
      %cst_364 = arith.constant -3.000000e+38 : f32
      %915 = vector.shape_cast %912 : vector<128x1xf32> to vector<128x1xf32>
      %916 = vector.broadcast %915 : vector<128x1xf32> to vector<128x16xf32>
      %917 = vector.broadcast %cst_364 : f32 to vector<128x16xf32>
      %918 = arith.select %914, %916, %917 : vector<128x16xi1>, vector<128x16xf32>
      %919 = arith.maximumf %905, %918 : vector<128x16xf32>
      %c14_365 = arith.constant 14 : index
      %c384_366 = arith.constant 384 : index
      %920 = vector.load %arg7[%c14_365, %c384_366] : memref<16x512xf32, #tpu.memory_space<vmem>>, vector<1x128xf32>
      %cst_367 = arith.constant -3.000000e+38 : f32
      %921 = vector.shape_cast %920 : vector<1x128xf32> to vector<1x128xf32>
      %922 = vector.broadcast %921 : vector<1x128xf32> to vector<128x128xf32>
      %923 = vector.broadcast %cst_367 : f32 to vector<128x128xf32>
      %924 = arith.select %723, %922, %923 : vector<128x128xi1>, vector<128x128xf32>
      %cst_368 = arith.constant dense<0xFF800000> : vector<128xf32>
      %925 = vector.multi_reduction <maximumf>, %924, %cst_368 [1] : vector<128x128xf32> to vector<128xf32>
      %926 = vector.shape_cast %925 : vector<128xf32> to vector<128x1xf32>
      %c14_i32_369 = arith.constant 14 : i32
      %927 = vector.broadcast %c14_i32_369 : i32 to vector<128x16xi32>
      %928 = arith.cmpi eq, %34, %927 : vector<128x16xi32>
      %cst_370 = arith.constant -3.000000e+38 : f32
      %929 = vector.shape_cast %926 : vector<128x1xf32> to vector<128x1xf32>
      %930 = vector.broadcast %929 : vector<128x1xf32> to vector<128x16xf32>
      %931 = vector.broadcast %cst_370 : f32 to vector<128x16xf32>
      %932 = arith.select %928, %930, %931 : vector<128x16xi1>, vector<128x16xf32>
      %933 = arith.maximumf %919, %932 : vector<128x16xf32>
      %c15_371 = arith.constant 15 : index
      %c384_372 = arith.constant 384 : index
      %934 = vector.load %arg7[%c15_371, %c384_372] : memref<16x512xf32, #tpu.memory_space<vmem>>, vector<1x128xf32>
      %cst_373 = arith.constant -3.000000e+38 : f32
      %935 = vector.shape_cast %934 : vector<1x128xf32> to vector<1x128xf32>
      %936 = vector.broadcast %935 : vector<1x128xf32> to vector<128x128xf32>
      %937 = vector.broadcast %cst_373 : f32 to vector<128x128xf32>
      %938 = arith.select %723, %936, %937 : vector<128x128xi1>, vector<128x128xf32>
      %cst_374 = arith.constant dense<0xFF800000> : vector<128xf32>
      %939 = vector.multi_reduction <maximumf>, %938, %cst_374 [1] : vector<128x128xf32> to vector<128xf32>
      %940 = vector.shape_cast %939 : vector<128xf32> to vector<128x1xf32>
      %c15_i32_375 = arith.constant 15 : i32
      %941 = vector.broadcast %c15_i32_375 : i32 to vector<128x16xi32>
      %942 = arith.cmpi eq, %34, %941 : vector<128x16xi32>
      %cst_376 = arith.constant -3.000000e+38 : f32
      %943 = vector.shape_cast %940 : vector<128x1xf32> to vector<128x1xf32>
      %944 = vector.broadcast %943 : vector<128x1xf32> to vector<128x16xf32>
      %945 = vector.broadcast %cst_376 : f32 to vector<128x16xf32>
      %946 = arith.select %942, %944, %945 : vector<128x16xi1>, vector<128x16xf32>
      %947 = arith.maximumf %933, %946 : vector<128x16xf32>
      %c0_377 = arith.constant 0 : index
      %c0_378 = arith.constant 0 : index
      %948 = vector.load %arg10[%c0_377, %c0_378] : memref<128x16xf32, #tpu.memory_space<vmem>>, vector<128x16xf32>
      tpu.vector_store %arg10[%c0_377, %c0_378], %947 {strides = array<i32>} : memref<128x16xf32, #tpu.memory_space<vmem>>, vector<128x16xf32>,
    } else {
    }
    %c2_i32 = arith.constant 2 : i32
    %14 = arith.andi %3, %c2_i32 : i32
    %c0_i32_4 = arith.constant 0 : i32
    %15 = arith.cmpi ne, %14, %c0_i32_4 : i32
    %16 = arith.extui %15 : i1 to i32
    %c0_i32_5 = arith.constant 0 : i32
    %17 = arith.cmpi ne, %16, %c0_i32_5 : i32
    scf.if %17 {
      %c0 = arith.constant 0 : index
      %c0_6 = arith.constant 0 : index
      %18 = vector.load %arg9[%c0, %c0_6] : memref<128x12xf32, #tpu.memory_space<vmem>>, vector<128x4xf32>
      %c0_7 = arith.constant 0 : index
      %c4 = arith.constant 4 : index
      %19 = vector.load %arg9[%c0_7, %c4] : memref<128x12xf32, #tpu.memory_space<vmem>>, vector<128x4xf32>
      %20 = arith.addf %18, %19 : vector<128x4xf32>
      %c0_8 = arith.constant 0 : index
      %c8 = arith.constant 8 : index
      %21 = vector.load %arg9[%c0_8, %c8] : memref<128x12xf32, #tpu.memory_space<vmem>>, vector<128x4xf32>
      %22 = arith.addf %20, %21 : vector<128x4xf32>
      %23 = vector.extract_strided_slice %22 {offsets = [0, 0], sizes = [128, 1], strides = [1, 1]} : vector<128x4xf32> to vector<128x1xf32>
      %cst = arith.constant 1.000000e+00 : f32
      %24 = vector.broadcast %cst : f32 to vector<128x1xf32>
      %25 = arith.maximumf %23, %24 : vector<128x1xf32>
      %26 = vector.extract_strided_slice %22 {offsets = [0, 1], sizes = [128, 3], strides = [1, 1]} : vector<128x4xf32> to vector<128x3xf32>
      %27 = vector.broadcast %25 : vector<128x1xf32> to vector<128x3xf32>
      %28 = arith.divf %26, %27 : vector<128x3xf32>
      %c0_9 = arith.constant 0 : index
      %c0_10 = arith.constant 0 : index
      %29 = vector.load %arg10[%c0_9, %c0_10] : memref<128x16xf32, #tpu.memory_space<vmem>>, vector<128x16xf32>
      %30 = tpu.concatenate %28, %29 in 1 : vector<128x3xf32>, vector<128x16xf32> -> vector<128x19xf32>
      %c0_11 = arith.constant 0 : index
      %c0_12 = arith.constant 0 : index
      %31 = vector.load %arg8[%c0_11, %c0_12] : memref<128x19xf32, #tpu.memory_space<vmem>>, vector<128x19xf32>
      tpu.vector_store %arg8[%c0_11, %c0_12], %30 {strides = array<i32>} : memref<128x19xf32, #tpu.memory_space<vmem>>, vector<128x19xf32>,
    } else {
    }
    return
  }
  func.func @transform_0(%arg0: i32, %arg1: i32, %arg2: memref<1xi32, #tpu.memory_space<smem>>, %arg3: memref<1xi32, #tpu.memory_space<smem>>, %arg4: memref<1xi32, #tpu.memory_space<smem>>) -> (i32, i32) {
    %c1_i32 = arith.constant 1 : i32
    %0 = arith.muli %arg0, %c1_i32 : i32
    %1 = arith.addi %0, %arg1 : i32
    %2 = arith.index_cast %1 : i32 to index
    %3 = memref.load %arg3[%2] : memref<1xi32, #tpu.memory_space<smem>>
    %c0_i32 = arith.constant 0 : i32
    %c0_i32_0 = arith.constant 0 : i32
    return %c0_i32, %3 : i32, i32
  }
  func.func @transform_1(%arg0: i32, %arg1: i32, %arg2: memref<1xi32, #tpu.memory_space<smem>>, %arg3: memref<1xi32, #tpu.memory_space<smem>>, %arg4: memref<1xi32, #tpu.memory_space<smem>>) -> (i32, i32) {
    %c1_i32 = arith.constant 1 : i32
    %0 = arith.muli %arg0, %c1_i32 : i32
    %1 = arith.addi %0, %arg1 : i32
    %2 = arith.index_cast %1 : i32 to index
    %3 = memref.load %arg3[%2] : memref<1xi32, #tpu.memory_space<smem>>
    %c0_i32 = arith.constant 0 : i32
    %c0_i32_0 = arith.constant 0 : i32
    return %3, %c0_i32 : i32, i32
  }
  func.func @transform_2(%arg0: i32, %arg1: i32, %arg2: memref<1xi32, #tpu.memory_space<smem>>, %arg3: memref<1xi32, #tpu.memory_space<smem>>, %arg4: memref<1xi32, #tpu.memory_space<smem>>) -> (i32, i32) {
    %c1_i32 = arith.constant 1 : i32
    %0 = arith.muli %arg0, %c1_i32 : i32
    %1 = arith.addi %0, %arg1 : i32
    %2 = arith.index_cast %1 : i32 to index
    %3 = memref.load %arg3[%2] : memref<1xi32, #tpu.memory_space<smem>>
    %c0_i32 = arith.constant 0 : i32
    %c0_i32_0 = arith.constant 0 : i32
    return %c0_i32, %3 : i32, i32
  }
  func.func @transform_3(%arg0: i32, %arg1: i32, %arg2: memref<1xi32, #tpu.memory_space<smem>>, %arg3: memref<1xi32, #tpu.memory_space<smem>>, %arg4: memref<1xi32, #tpu.memory_space<smem>>) -> (i32, i32) {
    %c1_i32 = arith.constant 1 : i32
    %0 = arith.muli %arg0, %c1_i32 : i32
    %1 = arith.addi %0, %arg1 : i32
    %2 = arith.index_cast %1 : i32 to index
    %3 = memref.load %arg2[%2] : memref<1xi32, #tpu.memory_space<smem>>
    %c0_i32 = arith.constant 0 : i32
    %c0_i32_0 = arith.constant 0 : i32
    return %3, %c0_i32 : i32, i32
  }
}

</mosaic_0001>

<llo_original>
// kernel: tpu_custom_call.1
$region0: #{tpu_custom_call.1}
  #allocation0 [shape = 'u32[]', space=smem, size = 0x4, offset = 0x4, fixed_abs, tag = 'smem constant byte address 0x4 - core index']
  #allocation1 [shape = 'u32[144,128]{1,0:T(1,128)}', space=vmem, size = 0x12000, scoped, tag = 'internal scratch']
  #allocation2 [shape = 'f32[128,12]{1,0:T(8,128)}', space=vmem, size = 0x10000, scoped, tag = 'scratch operand']
  #allocation3 [shape = 'f32[128,16]{1,0:T(8,128)}', space=vmem, size = 0x10000, scoped, tag = 'scratch operand']
  #allocation4 [shape = 's32[1]{0}', space=sflag, size = 0x4, scoped, tag = 'scoped memory for tpu_custom_call.1']
  #allocation5 [shape = 's32[1]{0:T(128)S(6)}', space=smem, size = 0x200, scoped, tag = 'prefetched SMEM operand 0']
  #allocation6 [shape = 's32[1]{0:T(128)S(6)}', space=smem, size = 0x200, scoped, tag = 'prefetched SMEM operand 1']
  #allocation7 [shape = 's32[1]{0:T(128)S(6)}', space=smem, size = 0x200, scoped, tag = 'prefetched SMEM operand 2']
  %s0 = inlined_call_operand.<no memory space> [shape: s32[1], index: 0, kind: input, shape index: {}]
  %s1 = inlined_call_operand.<no memory space> [shape: s32[1], index: 1, kind: input, shape index: {}]
  %s2 = inlined_call_operand.<no memory space> [shape: s32[1], index: 2, kind: input, shape index: {}]
  %s3 = inlined_call_operand.vmem [shape: s32[1,512], index: 3, kind: input, shape index: {}]
  %s4 = inlined_call_operand.vmem [shape: bf16[512,12], index: 4, kind: input, shape index: {}]
  %s5 = inlined_call_operand.vmem [shape: f32[16,512], index: 5, kind: input, shape index: {}]
  %s6 = inlined_call_operand.vmem [shape: f32[128,19], index: 6, kind: output, shape index: {}]
  %s7 = sld [smem:[#allocation0]]
  $region34: #{tpu_custom_call.1} parent=0
    _
  %s9 = ssub.s32 1, %s7
  %s10 = scalar_select 0, %s9, %s7
  %11 = sst [smem:[#allocation5]] %s0
  %12 = sst [smem:[#allocation6]] %s1
  %13 = sst [smem:[#allocation7]] %s2
  // Predicated region
  $region2: #{tpu_custom_call.1} parent=0 // pred_check
    _
  $region3: #{tpu_custom_call.1} parent=0 // pred_check_branch
    %15 = sbr.rel (0) target = $region5
  $region4: #{tpu_custom_call.1} parent=0 // pred_region
    %s16 = sadd.s32 0, 0
    %s17 = sld [smem:[#allocation6 + %s16]]
    %s18 = smul.u32 4, %s17
    %p19 = scmp.lt.s32.totalorder %s18, 3
    %s20 = scalar_select %p19, %s18, 3
    %s21 = scalar_lea.vmem %s3, %s20
    %s22 = sadd.s32 0, 0
    %s23 = sld [smem:[#allocation6 + %s22]]
    %s24 = smul.u32 4, %s23
  $region5: #{tpu_custom_call.1} parent=0 // pred_fallthru
    _
  // Predicated region
  $region6: #{tpu_custom_call.1} parent=0 // pred_check
    _
  $region7: #{tpu_custom_call.1} parent=0 // pred_check_branch
    %26 = sbr.rel (0) target = $region9
  $region8: #{tpu_custom_call.1} parent=0 // pred_region
    %s27 = sadd.s32 0, 0
    %s28 = sld [smem:[#allocation6 + %s27]]
    %s29 = smul.u32 64, %s28
    %p30 = scmp.lt.s32.totalorder %s29, 63
    %s31 = scalar_select %p30, %s29, 63
    %s32 = smul.addr %s31, 4
    %s33 = scalar_lea.vmem %s4, %s32
    %s34 = sadd.s32 0, 0
    %s35 = sld [smem:[#allocation6 + %s34]]
    %s36 = smul.u32 64, %s35
  $region9: #{tpu_custom_call.1} parent=0 // pred_fallthru
    _
  // Predicated region
  $region10: #{tpu_custom_call.1} parent=0 // pred_check
    _
  $region11: #{tpu_custom_call.1} parent=0 // pred_check_branch
    %38 = sbr.rel (0) target = $region13
  $region12: #{tpu_custom_call.1} parent=0 // pred_region
    %s39 = sadd.s32 0, 0
    %s40 = sld [smem:[#allocation6 + %s39]]
    %s41 = smul.u32 4, %s40
    %p42 = scmp.lt.s32.totalorder %s41, 3
    %s43 = scalar_select %p42, %s41, 3
    %s44 = smul.addr %s43, 8
    %s45 = scalar_lea.vmem %s5, %s44
    %s46 = sadd.s32 0, 0
    %s47 = sld [smem:[#allocation6 + %s46]]
    %s48 = smul.u32 4, %s47
  $region13: #{tpu_custom_call.1} parent=0 // pred_fallthru
    _
  %s49 = sadd.s32 0, 0
  %s50 = sld [smem:[#allocation6 + %s49]]
  %s51 = smul.u32 4, %s50
  %p52 = scmp.lt.s32.totalorder %s51, 3
  %s53 = scalar_select %p52, %s51, 3
  %s54 = scalar_lea.vmem %s3, %s53
  %s55 = sadd.s32 0, 0
  %s56 = sld [smem:[#allocation6 + %s55]]
  %s57 = smul.u32 64, %s56
  %p58 = scmp.lt.s32.totalorder %s57, 63
  %s59 = scalar_select %p58, %s57, 63
  %s60 = smul.addr %s59, 4
  %s61 = scalar_lea.vmem %s4, %s60
  %s62 = sadd.s32 0, 0
  %s63 = sld [smem:[#allocation6 + %s62]]
  %s64 = smul.u32 4, %s63
  %p65 = scmp.lt.s32.totalorder %s64, 3
  %s66 = scalar_select %p65, %s64, 3
  %s67 = smul.addr %s66, 8
  %s68 = scalar_lea.vmem %s5, %s67
  %s69 = sadd.s32 0, 0
  %s70 = sld [smem:[#allocation5 + %s69]]
  %s71 = smul.u32 16, %s70
  %p72 = scmp.lt.s32.totalorder %s71, 15
  %s73 = scalar_select %p72, %s71, 15
  %s74 = smul.addr %s73, 8
  %s75 = scalar_lea.vmem %s6, %s74
  %s76 = sadd.s32 0, 0
  %s77 = sld [smem:[#allocation6 + %s76]]
  %s78 = smul.u32 4, %s77
  %p79 = scmp.lt.s32.totalorder %s78, 3
  %s80 = scalar_select %p79, %s78, 3
  %s81 = scalar_lea.vmem %s3, %s80
  %s82 = sadd.s32 0, 0
  %s83 = sld [smem:[#allocation6 + %s82]]
  %s84 = smul.u32 4, %s83
  %s85 = sadd.s32 0, 0
  %s86 = sld [smem:[#allocation6 + %s85]]
  %s87 = smul.u32 64, %s86
  %p88 = scmp.lt.s32.totalorder %s87, 63
  %s89 = scalar_select %p88, %s87, 63
  %s90 = smul.addr %s89, 4
  %s91 = scalar_lea.vmem %s4, %s90
  %s92 = sadd.s32 0, 0
  %s93 = sld [smem:[#allocation6 + %s92]]
  %s94 = smul.u32 64, %s93
  %s95 = sadd.s32 0, 0
  %s96 = sld [smem:[#allocation6 + %s95]]
  %s97 = smul.u32 4, %s96
  %p98 = scmp.lt.s32.totalorder %s97, 3
  %s99 = scalar_select %p98, %s97, 3
  %s100 = smul.addr %s99, 8
  %s101 = scalar_lea.vmem %s5, %s100
  %s102 = sadd.s32 0, 0
  %s103 = sld [smem:[#allocation6 + %s102]]
  %s104 = smul.u32 4, %s103
  %s105 = sadd.s32 0, 0
  %s106 = sld [smem:[#allocation5 + %s105]]
  %s107 = smul.u32 16, %s106
  %p108 = scmp.lt.s32.totalorder %s107, 15
  %s109 = scalar_select %p108, %s107, 15
  %s110 = smul.addr %s109, 8
  %s111 = scalar_lea.vmem %s6, %s110
  %s112 = sadd.s32 0, 0
  %s113 = sld [smem:[#allocation5 + %s112]]
  %s114 = smul.u32 16, %s113
  %s116 = sadd.s32 0, 0
  %s117 = sld [smem:[#allocation7 + %s116]]
  %s118 = sld [smem:[#allocation5 + %s116]]
  %s119 = sand.u32 %s117, 1
  %p120 = scmp.ne.s32.totalorder %s119, 0
  // Predicated region
  $region14: #{tpu_custom_call.1} parent=0 // pred_check
    %p121 = pneg %p120
  $region15: #{tpu_custom_call.1} parent=0 // pred_check_branch
    %123 = sbr.rel (%p121) target = $region17
  $region16: #{tpu_custom_call.1} parent=0 // pred_region
    %vm124 = vcmask 97280
    %125 = vst.msk [vmem:[#allocation2] sm:$0xff] %vm124, 0.0
    %126 = vst.msk [vmem:[#allocation2 + $0x8] sm:$0xff] %vm124, 0.0
    %127 = vst.msk [vmem:[#allocation2 + $0x10] sm:$0xff] %vm124, 0.0
    %128 = vst.msk [vmem:[#allocation2 + $0x18] sm:$0xff] %vm124, 0.0
    %129 = vst.msk [vmem:[#allocation2 + $0x20] sm:$0xff] %vm124, 0.0
    %130 = vst.msk [vmem:[#allocation2 + $0x28] sm:$0xff] %vm124, 0.0
    %131 = vst.msk [vmem:[#allocation2 + $0x30] sm:$0xff] %vm124, 0.0
    %132 = vst.msk [vmem:[#allocation2 + $0x38] sm:$0xff] %vm124, 0.0
    %133 = vst.msk [vmem:[#allocation2 + $0x40] sm:$0xff] %vm124, 0.0
    %134 = vst.msk [vmem:[#allocation2 + $0x48] sm:$0xff] %vm124, 0.0
    %135 = vst.msk [vmem:[#allocation2 + $0x50] sm:$0xff] %vm124, 0.0
    %136 = vst.msk [vmem:[#allocation2 + $0x58] sm:$0xff] %vm124, 0.0
    %137 = vst.msk [vmem:[#allocation2 + $0x60] sm:$0xff] %vm124, 0.0
    %138 = vst.msk [vmem:[#allocation2 + $0x68] sm:$0xff] %vm124, 0.0
    %139 = vst.msk [vmem:[#allocation2 + $0x70] sm:$0xff] %vm124, 0.0
    %140 = vst.msk [vmem:[#allocation2 + $0x78] sm:$0xff] %vm124, 0.0
    %vm141 = vcmask 130048
    %142 = vst.msk [vmem:[#allocation3] sm:$0xff] %vm141, -3e+38
    %143 = vst.msk [vmem:[#allocation3 + $0x8] sm:$0xff] %vm141, -3e+38
    %144 = vst.msk [vmem:[#allocation3 + $0x10] sm:$0xff] %vm141, -3e+38
    %145 = vst.msk [vmem:[#allocation3 + $0x18] sm:$0xff] %vm141, -3e+38
    %146 = vst.msk [vmem:[#allocation3 + $0x20] sm:$0xff] %vm141, -3e+38
    %147 = vst.msk [vmem:[#allocation3 + $0x28] sm:$0xff] %vm141, -3e+38
    %148 = vst.msk [vmem:[#allocation3 + $0x30] sm:$0xff] %vm141, -3e+38
    %149 = vst.msk [vmem:[#allocation3 + $0x38] sm:$0xff] %vm141, -3e+38
    %150 = vst.msk [vmem:[#allocation3 + $0x40] sm:$0xff] %vm141, -3e+38
    %151 = vst.msk [vmem:[#allocation3 + $0x48] sm:$0xff] %vm141, -3e+38
    %152 = vst.msk [vmem:[#allocation3 + $0x50] sm:$0xff] %vm141, -3e+38
    %153 = vst.msk [vmem:[#allocation3 + $0x58] sm:$0xff] %vm141, -3e+38
    %154 = vst.msk [vmem:[#allocation3 + $0x60] sm:$0xff] %vm141, -3e+38
    %155 = vst.msk [vmem:[#allocation3 + $0x68] sm:$0xff] %vm141, -3e+38
    %156 = vst.msk [vmem:[#allocation3 + $0x70] sm:$0xff] %vm141, -3e+38
    %157 = vst.msk [vmem:[#allocation3 + $0x78] sm:$0xff] %vm141, -3e+38
  $region17: #{tpu_custom_call.1} parent=0 // pred_fallthru
    _
  %s158 = sand.u32 %s117, 4
  %p159 = scmp.ne.s32.totalorder %s158, 0
  // Predicated region
  $region18: #{tpu_custom_call.1} parent=0 // pred_check
    %p160 = pneg %p159
  $region19: #{tpu_custom_call.1} parent=0 // pred_check_branch
    %162 = sbr.rel (%p160) target = $region21
  $region20: #{tpu_custom_call.1} parent=0 // pred_region
    %v163 = vld [vmem:[%s81] sm:$0xf]
    %s164 = smul.u32 %s118, 128
    %v165 = vlaneseq
    %v166 = vshrl.u32 %v165, 7
    %v167 = vadd.s32 %v166, 8
    %v168 = vadd.s32 %v166, 16
    %v169 = vadd.s32 %v166, 24
    %v170 = vadd.s32 %v166, 32
    %v171 = vadd.s32 %v166, 40
    %v172 = vadd.s32 %v166, 48
    %v173 = vadd.s32 %v166, 56
    %v174 = vadd.s32 %v166, 64
    %v175 = vadd.s32 %v166, 72
    %v176 = vadd.s32 %v166, 80
    %v177 = vadd.s32 %v166, 88
    %v178 = vadd.s32 %v166, 96
    %v179 = vadd.s32 %v166, 104
    %v180 = vadd.s32 %v166, 112
    %v181 = vadd.s32 %v166, 120
    %v182 = vstv %s164
    %v183 = vadd.s32 %v182, %v166
    %v184 = vadd.s32 %v182, %v167
    %v185 = vadd.s32 %v182, %v168
    %v186 = vadd.s32 %v182, %v169
    %v187 = vadd.s32 %v182, %v170
    %v188 = vadd.s32 %v182, %v171
    %v189 = vadd.s32 %v182, %v172
    %v190 = vadd.s32 %v182, %v173
    %v191 = vadd.s32 %v182, %v174
    %v192 = vadd.s32 %v182, %v175
    %v193 = vadd.s32 %v182, %v176
    %v194 = vadd.s32 %v182, %v177
    %v195 = vadd.s32 %v182, %v178
    %v196 = vadd.s32 %v182, %v179
    %v197 = vadd.s32 %v182, %v180
    %v198 = vadd.s32 %v182, %v181
    %v199 = vlaneseq
    %v200 = vshrl.u32 %v199, 7
    %v201 = vsub.s32 0, %v200
    %v202 = vrot.slane %v163, %v201
    %v203 = vlaneseq
    %v204 = vshrl.u32 %v203, 7
    %v205 = vsub.s32 1, %v204
    %v206 = vrot.slane %v163, %v205
    %v207 = vlaneseq
    %v208 = vshrl.u32 %v207, 7
    %v209 = vsub.s32 2, %v208
    %v210 = vrot.slane %v163, %v209
    %v211 = vlaneseq
    %v212 = vshrl.u32 %v211, 7
    %v213 = vsub.s32 3, %v212
    %v214 = vrot.slane %v163, %v213
    %vm215 = vcmp.eq.s32.totalorder %v202, %v183
    %vm216 = vcmp.eq.s32.totalorder %v206, %v183
    %vm217 = vcmp.eq.s32.totalorder %v210, %v183
    %vm218 = vcmp.eq.s32.totalorder %v214, %v183
    %vm219 = vcmp.eq.s32.totalorder %v202, %v184
    %vm220 = vcmp.eq.s32.totalorder %v206, %v184
    %vm221 = vcmp.eq.s32.totalorder %v210, %v184
    %vm222 = vcmp.eq.s32.totalorder %v214, %v184
    %vm223 = vcmp.eq.s32.totalorder %v202, %v185
    %vm224 = vcmp.eq.s32.totalorder %v206, %v185
    %vm225 = vcmp.eq.s32.totalorder %v210, %v185
    %vm226 = vcmp.eq.s32.totalorder %v214, %v185
    %vm227 = vcmp.eq.s32.totalorder %v202, %v186
    %vm228 = vcmp.eq.s32.totalorder %v206, %v186
    %vm229 = vcmp.eq.s32.totalorder %v210, %v186
    %vm230 = vcmp.eq.s32.totalorder %v214, %v186
    %vm231 = vcmp.eq.s32.totalorder %v202, %v187
    %vm232 = vcmp.eq.s32.totalorder %v206, %v187
    %vm233 = vcmp.eq.s32.totalorder %v210, %v187
    %vm234 = vcmp.eq.s32.totalorder %v214, %v187
    %vm235 = vcmp.eq.s32.totalorder %v202, %v188
    %vm236 = vcmp.eq.s32.totalorder %v206, %v188
    %vm237 = vcmp.eq.s32.totalorder %v210, %v188
    %vm238 = vcmp.eq.s32.totalorder %v214, %v188
    %vm239 = vcmp.eq.s32.totalorder %v202, %v189
    %vm240 = vcmp.eq.s32.totalorder %v206, %v189
    %vm241 = vcmp.eq.s32.totalorder %v210, %v189
    %vm242 = vcmp.eq.s32.totalorder %v214, %v189
    %vm243 = vcmp.eq.s32.totalorder %v202, %v190
    %vm244 = vcmp.eq.s32.totalorder %v206, %v190
    %vm245 = vcmp.eq.s32.totalorder %v210, %v190
    %vm246 = vcmp.eq.s32.totalorder %v214, %v190
    %vm247 = vcmp.eq.s32.totalorder %v202, %v191
    %vm248 = vcmp.eq.s32.totalorder %v206, %v191
    %vm249 = vcmp.eq.s32.totalorder %v210, %v191
    %vm250 = vcmp.eq.s32.totalorder %v214, %v191
    %vm251 = vcmp.eq.s32.totalorder %v202, %v192
    %vm252 = vcmp.eq.s32.totalorder %v206, %v192
    %vm253 = vcmp.eq.s32.totalorder %v210, %v192
    %vm254 = vcmp.eq.s32.totalorder %v214, %v192
    %vm255 = vcmp.eq.s32.totalorder %v202, %v193
    %vm256 = vcmp.eq.s32.totalorder %v206, %v193
    %vm257 = vcmp.eq.s32.totalorder %v210, %v193
    %vm258 = vcmp.eq.s32.totalorder %v214, %v193
    %vm259 = vcmp.eq.s32.totalorder %v202, %v194
    %vm260 = vcmp.eq.s32.totalorder %v206, %v194
    %vm261 = vcmp.eq.s32.totalorder %v210, %v194
    %vm262 = vcmp.eq.s32.totalorder %v214, %v194
    %vm263 = vcmp.eq.s32.totalorder %v202, %v195
    %vm264 = vcmp.eq.s32.totalorder %v206, %v195
    %vm265 = vcmp.eq.s32.totalorder %v210, %v195
    %vm266 = vcmp.eq.s32.totalorder %v214, %v195
    %vm267 = vcmp.eq.s32.totalorder %v202, %v196
    %vm268 = vcmp.eq.s32.totalorder %v206, %v196
    %vm269 = vcmp.eq.s32.totalorder %v210, %v196
    %vm270 = vcmp.eq.s32.totalorder %v214, %v196
    %vm271 = vcmp.eq.s32.totalorder %v202, %v197
    %vm272 = vcmp.eq.s32.totalorder %v206, %v197
    %vm273 = vcmp.eq.s32.totalorder %v210, %v197
    %vm274 = vcmp.eq.s32.totalorder %v214, %v197
    %vm275 = vcmp.eq.s32.totalorder %v202, %v198
    %vm276 = vcmp.eq.s32.totalorder %v206, %v198
    %vm277 = vcmp.eq.s32.totalorder %v210, %v198
    %vm278 = vcmp.eq.s32.totalorder %v214, %v198
    %v279 = vsel %vm215, 1, 0
    %v280 = vsel %vm216, 1, 0
    %v281 = vsel %vm217, 1, 0
    %v282 = vsel %vm218, 1, 0
    %v283 = vsel %vm219, 1, 0
    %v284 = vsel %vm220, 1, 0
    %v285 = vsel %vm221, 1, 0
    %v286 = vsel %vm222, 1, 0
    %v287 = vsel %vm223, 1, 0
    %v288 = vsel %vm224, 1, 0
    %v289 = vsel %vm225, 1, 0
    %v290 = vsel %vm226, 1, 0
    %v291 = vsel %vm227, 1, 0
    %v292 = vsel %vm228, 1, 0
    %v293 = vsel %vm229, 1, 0
    %v294 = vsel %vm230, 1, 0
    %v295 = vsel %vm231, 1, 0
    %v296 = vsel %vm232, 1, 0
    %v297 = vsel %vm233, 1, 0
    %v298 = vsel %vm234, 1, 0
    %v299 = vsel %vm235, 1, 0
    %v300 = vsel %vm236, 1, 0
    %v301 = vsel %vm237, 1, 0
    %v302 = vsel %vm238, 1, 0
    %v303 = vsel %vm239, 1, 0
    %v304 = vsel %vm240, 1, 0
    %v305 = vsel %vm241, 1, 0
    %v306 = vsel %vm242, 1, 0
    %v307 = vsel %vm243, 1, 0
    %v308 = vsel %vm244, 1, 0
    %v309 = vsel %vm245, 1, 0
    %v310 = vsel %vm246, 1, 0
    %v311 = vsel %vm247, 1, 0
    %v312 = vsel %vm248, 1, 0
    %v313 = vsel %vm249, 1, 0
    %v314 = vsel %vm250, 1, 0
    %v315 = vsel %vm251, 1, 0
    %v316 = vsel %vm252, 1, 0
    %v317 = vsel %vm253, 1, 0
    %v318 = vsel %vm254, 1, 0
    %v319 = vsel %vm255, 1, 0
    %v320 = vsel %vm256, 1, 0
    %v321 = vsel %vm257, 1, 0
    %v322 = vsel %vm258, 1, 0
    %v323 = vsel %vm259, 1, 0
    %v324 = vsel %vm260, 1, 0
    %v325 = vsel %vm261, 1, 0
    %v326 = vsel %vm262, 1, 0
    %v327 = vsel %vm263, 1, 0
    %v328 = vsel %vm264, 1, 0
    %v329 = vsel %vm265, 1, 0
    %v330 = vsel %vm266, 1, 0
    %v331 = vsel %vm267, 1, 0
    %v332 = vsel %vm268, 1, 0
    %v333 = vsel %vm269, 1, 0
    %v334 = vsel %vm270, 1, 0
    %v335 = vsel %vm271, 1, 0
    %v336 = vsel %vm272, 1, 0
    %v337 = vsel %vm273, 1, 0
    %v338 = vsel %vm274, 1, 0
    %v339 = vsel %vm275, 1, 0
    %v340 = vsel %vm276, 1, 0
    %v341 = vsel %vm277, 1, 0
    %v342 = vsel %vm278, 1, 0
    %v343 = vcvt.s32.f32 %v279
    %v344 = vcvt.s32.f32 %v280
    %v345 = vcvt.s32.f32 %v281
    %v346 = vcvt.s32.f32 %v282
    %v347 = vcvt.s32.f32 %v283
    %v348 = vcvt.s32.f32 %v284
    %v349 = vcvt.s32.f32 %v285
    %v350 = vcvt.s32.f32 %v286
    %v351 = vcvt.s32.f32 %v287
    %v352 = vcvt.s32.f32 %v288
    %v353 = vcvt.s32.f32 %v289
    %v354 = vcvt.s32.f32 %v290
    %v355 = vcvt.s32.f32 %v291
    %v356 = vcvt.s32.f32 %v292
    %v357 = vcvt.s32.f32 %v293
    %v358 = vcvt.s32.f32 %v294
    %v359 = vcvt.s32.f32 %v295
    %v360 = vcvt.s32.f32 %v296
    %v361 = vcvt.s32.f32 %v297
    %v362 = vcvt.s32.f32 %v298
    %v363 = vcvt.s32.f32 %v299
    %v364 = vcvt.s32.f32 %v300
    %v365 = vcvt.s32.f32 %v301
    %v366 = vcvt.s32.f32 %v302
    %v367 = vcvt.s32.f32 %v303
    %v368 = vcvt.s32.f32 %v304
    %v369 = vcvt.s32.f32 %v305
    %v370 = vcvt.s32.f32 %v306
    %v371 = vcvt.s32.f32 %v307
    %v372 = vcvt.s32.f32 %v308
    %v373 = vcvt.s32.f32 %v309
    %v374 = vcvt.s32.f32 %v310
    %v375 = vcvt.s32.f32 %v311
    %v376 = vcvt.s32.f32 %v312
    %v377 = vcvt.s32.f32 %v313
    %v378 = vcvt.s32.f32 %v314
    %v379 = vcvt.s32.f32 %v315
    %v380 = vcvt.s32.f32 %v316
    %v381 = vcvt.s32.f32 %v317
    %v382 = vcvt.s32.f32 %v318
    %v383 = vcvt.s32.f32 %v319
    %v384 = vcvt.s32.f32 %v320
    %v385 = vcvt.s32.f32 %v321
    %v386 = vcvt.s32.f32 %v322
    %v387 = vcvt.s32.f32 %v323
    %v388 = vcvt.s32.f32 %v324
    %v389 = vcvt.s32.f32 %v325
    %v390 = vcvt.s32.f32 %v326
    %v391 = vcvt.s32.f32 %v327
    %v392 = vcvt.s32.f32 %v328
    %v393 = vcvt.s32.f32 %v329
    %v394 = vcvt.s32.f32 %v330
    %v395 = vcvt.s32.f32 %v331
    %v396 = vcvt.s32.f32 %v332
    %v397 = vcvt.s32.f32 %v333
    %v398 = vcvt.s32.f32 %v334
    %v399 = vcvt.s32.f32 %v335
    %v400 = vcvt.s32.f32 %v336
    %v401 = vcvt.s32.f32 %v337
    %v402 = vcvt.s32.f32 %v338
    %v403 = vcvt.s32.f32 %v339
    %v404 = vcvt.s32.f32 %v340
    %v405 = vcvt.s32.f32 %v341
    %v406 = vcvt.s32.f32 %v342
    %v407 = vpack.c.bf16 %v347, %v343
    %v408 = vpack.c.bf16 %v348, %v344
    %v409 = vpack.c.bf16 %v349, %v345
    %v410 = vpack.c.bf16 %v350, %v346
    %v411 = vpack.c.bf16 %v355, %v351
    %v412 = vpack.c.bf16 %v356, %v352
    %v413 = vpack.c.bf16 %v357, %v353
    %v414 = vpack.c.bf16 %v358, %v354
    %v415 = vpack.c.bf16 %v363, %v359
    %v416 = vpack.c.bf16 %v364, %v360
    %v417 = vpack.c.bf16 %v365, %v361
    %v418 = vpack.c.bf16 %v366, %v362
    %v419 = vpack.c.bf16 %v371, %v367
    %v420 = vpack.c.bf16 %v372, %v368
    %v421 = vpack.c.bf16 %v373, %v369
    %v422 = vpack.c.bf16 %v374, %v370
    %v423 = vpack.c.bf16 %v379, %v375
    %v424 = vpack.c.bf16 %v380, %v376
    %v425 = vpack.c.bf16 %v381, %v377
    %v426 = vpack.c.bf16 %v382, %v378
    %v427 = vpack.c.bf16 %v387, %v383
    %v428 = vpack.c.bf16 %v388, %v384
    %v429 = vpack.c.bf16 %v389, %v385
    %v430 = vpack.c.bf16 %v390, %v386
    %v431 = vpack.c.bf16 %v395, %v391
    %v432 = vpack.c.bf16 %v396, %v392
    %v433 = vpack.c.bf16 %v397, %v393
    %v434 = vpack.c.bf16 %v398, %v394
    %v435 = vpack.c.bf16 %v403, %v399
    %v436 = vpack.c.bf16 %v404, %v400
    %v437 = vpack.c.bf16 %v405, %v401
    %v438 = vpack.c.bf16 %v406, %v402
    %v439 = vld [vmem:[#allocation2] sm:$0xff]
    %v440 = vld [vmem:[#allocation2 + $0x8] sm:$0xff]
    %v441 = vld [vmem:[#allocation2 + $0x10] sm:$0xff]
    %v442 = vld [vmem:[#allocation2 + $0x18] sm:$0xff]
    %v443 = vld [vmem:[#allocation2 + $0x20] sm:$0xff]
    %v444 = vld [vmem:[#allocation2 + $0x28] sm:$0xff]
    %v445 = vld [vmem:[#allocation2 + $0x30] sm:$0xff]
    %v446 = vld [vmem:[#allocation2 + $0x38] sm:$0xff]
    %v447 = vld [vmem:[#allocation2 + $0x40] sm:$0xff]
    %v448 = vld [vmem:[#allocation2 + $0x48] sm:$0xff]
    %v449 = vld [vmem:[#allocation2 + $0x50] sm:$0xff]
    %v450 = vld [vmem:[#allocation2 + $0x58] sm:$0xff]
    %v451 = vld [vmem:[#allocation2 + $0x60] sm:$0xff]
    %v452 = vld [vmem:[#allocation2 + $0x68] sm:$0xff]
    %v453 = vld [vmem:[#allocation2 + $0x70] sm:$0xff]
    %v454 = vld [vmem:[#allocation2 + $0x78] sm:$0xff]
    %v455 = vld [vmem:[%s91] sm:$0xf]
    %v456 = vld [vmem:[%s91 + $0x4] sm:$0xf]
    %v457 = vld [vmem:[%s91 + $0x8] sm:$0xf]
    %v458 = vld [vmem:[%s91 + $0xc] sm:$0xf]
    %v459 = vld [vmem:[%s91 + $0x10] sm:$0xf]
    %v460 = vld [vmem:[%s91 + $0x14] sm:$0xf]
    %v461 = vld [vmem:[%s91 + $0x18] sm:$0xf]
    %v462 = vld [vmem:[%s91 + $0x1c] sm:$0xf]
    %v463 = vld [vmem:[%s91 + $0x20] sm:$0xf]
    %v464 = vld [vmem:[%s91 + $0x24] sm:$0xf]
    %v465 = vld [vmem:[%s91 + $0x28] sm:$0xf]
    %v466 = vld [vmem:[%s91 + $0x2c] sm:$0xf]
    %v467 = vld [vmem:[%s91 + $0x30] sm:$0xf]
    %v468 = vld [vmem:[%s91 + $0x34] sm:$0xf]
    %v469 = vld [vmem:[%s91 + $0x38] sm:$0xf]
    %v470 = vld [vmem:[%s91 + $0x3c] sm:$0xf]
    %v471 = vld [vmem:[%s91 + $0x40] sm:$0xf]
    %v472 = vld [vmem:[%s91 + $0x44] sm:$0xf]
    %v473 = vld [vmem:[%s91 + $0x48] sm:$0xf]
    %v474 = vld [vmem:[%s91 + $0x4c] sm:$0xf]
    %v475 = vld [vmem:[%s91 + $0x50] sm:$0xf]
    %v476 = vld [vmem:[%s91 + $0x54] sm:$0xf]
    %v477 = vld [vmem:[%s91 + $0x58] sm:$0xf]
    %v478 = vld [vmem:[%s91 + $0x5c] sm:$0xf]
    %v479 = vld [vmem:[%s91 + $0x60] sm:$0xf]
    %v480 = vld [vmem:[%s91 + $0x64] sm:$0xf]
    %v481 = vld [vmem:[%s91 + $0x68] sm:$0xf]
    %v482 = vld [vmem:[%s91 + $0x6c] sm:$0xf]
    %v483 = vld [vmem:[%s91 + $0x70] sm:$0xf]
    %v484 = vld [vmem:[%s91 + $0x74] sm:$0xf]
    %v485 = vld [vmem:[%s91 + $0x78] sm:$0xf]
    %v486 = vld [vmem:[%s91 + $0x7c] sm:$0xf]
    %v487 = vld [vmem:[%s91 + $0x80] sm:$0xf]
    %v488 = vld [vmem:[%s91 + $0x84] sm:$0xf]
    %v489 = vld [vmem:[%s91 + $0x88] sm:$0xf]
    %v490 = vld [vmem:[%s91 + $0x8c] sm:$0xf]
    %v491 = vld [vmem:[%s91 + $0x90] sm:$0xf]
    %v492 = vld [vmem:[%s91 + $0x94] sm:$0xf]
    %v493 = vld [vmem:[%s91 + $0x98] sm:$0xf]
    %v494 = vld [vmem:[%s91 + $0x9c] sm:$0xf]
    %v495 = vld [vmem:[%s91 + $0xa0] sm:$0xf]
    %v496 = vld [vmem:[%s91 + $0xa4] sm:$0xf]
    %v497 = vld [vmem:[%s91 + $0xa8] sm:$0xf]
    %v498 = vld [vmem:[%s91 + $0xac] sm:$0xf]
    %v499 = vld [vmem:[%s91 + $0xb0] sm:$0xf]
    %v500 = vld [vmem:[%s91 + $0xb4] sm:$0xf]
    %v501 = vld [vmem:[%s91 + $0xb8] sm:$0xf]
    %v502 = vld [vmem:[%s91 + $0xbc] sm:$0xf]
    %v503 = vld [vmem:[%s91 + $0xc0] sm:$0xf]
    %v504 = vld [vmem:[%s91 + $0xc4] sm:$0xf]
    %v505 = vld [vmem:[%s91 + $0xc8] sm:$0xf]
    %v506 = vld [vmem:[%s91 + $0xcc] sm:$0xf]
    %v507 = vld [vmem:[%s91 + $0xd0] sm:$0xf]
    %v508 = vld [vmem:[%s91 + $0xd4] sm:$0xf]
    %v509 = vld [vmem:[%s91 + $0xd8] sm:$0xf]
    %v510 = vld [vmem:[%s91 + $0xdc] sm:$0xf]
    %v511 = vld [vmem:[%s91 + $0xe0] sm:$0xf]
    %v512 = vld [vmem:[%s91 + $0xe4] sm:$0xf]
    %v513 = vld [vmem:[%s91 + $0xe8] sm:$0xf]
    %v514 = vld [vmem:[%s91 + $0xec] sm:$0xf]
    %v515 = vld [vmem:[%s91 + $0xf0] sm:$0xf]
    %v516 = vld [vmem:[%s91 + $0xf4] sm:$0xf]
    %v517 = vld [vmem:[%s91 + $0xf8] sm:$0xf]
    %v518 = vld [vmem:[%s91 + $0xfc] sm:$0xf]
    %v583 = vunpack.c.l.b16 %v455
    %v584 = vunpack.c.l.b16 %v456
    %v585 = vunpack.c.l.b16 %v457
    %v586 = vunpack.c.l.b16 %v458
    %v587 = vunpack.c.l.b16 %v459
    %v588 = vunpack.c.l.b16 %v460
    %v589 = vunpack.c.l.b16 %v461
    %v590 = vunpack.c.l.b16 %v462
    %v591 = vunpack.c.l.b16 %v463
    %v592 = vunpack.c.l.b16 %v464
    %v593 = vunpack.c.l.b16 %v465
    %v594 = vunpack.c.l.b16 %v466
    %v595 = vunpack.c.l.b16 %v467
    %v596 = vunpack.c.l.b16 %v468
    %v597 = vunpack.c.l.b16 %v469
    %v598 = vunpack.c.l.b16 %v470
    %v599 = vunpack.c.l.b16 %v471
    %v600 = vunpack.c.l.b16 %v472
    %v601 = vunpack.c.l.b16 %v473
    %v602 = vunpack.c.l.b16 %v474
    %v603 = vunpack.c.l.b16 %v475
    %v604 = vunpack.c.l.b16 %v476
    %v605 = vunpack.c.l.b16 %v477
    %v606 = vunpack.c.l.b16 %v478
    %v607 = vunpack.c.l.b16 %v479
    %v608 = vunpack.c.l.b16 %v480
    %v609 = vunpack.c.l.b16 %v481
    %v610 = vunpack.c.l.b16 %v482
    %v611 = vunpack.c.l.b16 %v483
    %v612 = vunpack.c.l.b16 %v484
    %v613 = vunpack.c.l.b16 %v485
    %v614 = vunpack.c.l.b16 %v486
    %v615 = vunpack.c.l.b16 %v487
    %v616 = vunpack.c.l.b16 %v488
    %v617 = vunpack.c.l.b16 %v489
    %v618 = vunpack.c.l.b16 %v490
    %v619 = vunpack.c.l.b16 %v491
    %v620 = vunpack.c.l.b16 %v492
    %v621 = vunpack.c.l.b16 %v493
    %v622 = vunpack.c.l.b16 %v494
    %v623 = vunpack.c.l.b16 %v495
    %v624 = vunpack.c.l.b16 %v496
    %v625 = vunpack.c.l.b16 %v497
    %v626 = vunpack.c.l.b16 %v498
    %v627 = vunpack.c.l.b16 %v499
    %v628 = vunpack.c.l.b16 %v500
    %v629 = vunpack.c.l.b16 %v501
    %v630 = vunpack.c.l.b16 %v502
    %v631 = vunpack.c.l.b16 %v503
    %v632 = vunpack.c.l.b16 %v504
    %v633 = vunpack.c.l.b16 %v505
    %v634 = vunpack.c.l.b16 %v506
    %v635 = vunpack.c.l.b16 %v507
    %v636 = vunpack.c.l.b16 %v508
    %v637 = vunpack.c.l.b16 %v509
    %v638 = vunpack.c.l.b16 %v510
    %v639 = vunpack.c.l.b16 %v511
    %v640 = vunpack.c.l.b16 %v512
    %v641 = vunpack.c.l.b16 %v513
    %v642 = vunpack.c.l.b16 %v514
    %v643 = vunpack.c.l.b16 %v515
    %v644 = vunpack.c.l.b16 %v516
    %v645 = vunpack.c.l.b16 %v517
    %v646 = vunpack.c.l.b16 %v518
    %v647 = vpack.c.b16 %v584, %v583
    %v648 = vpack.c.b16 %v586, %v585
    %v649 = vpack.c.b16 %v588, %v587
    %v650 = vpack.c.b16 %v590, %v589
    %v651 = vpack.c.b16 %v592, %v591
    %v652 = vpack.c.b16 %v594, %v593
    %v653 = vpack.c.b16 %v596, %v595
    %v654 = vpack.c.b16 %v598, %v597
    %v655 = vpack.c.b16 %v600, %v599
    %v656 = vpack.c.b16 %v602, %v601
    %v657 = vpack.c.b16 %v604, %v603
    %v658 = vpack.c.b16 %v606, %v605
    %v659 = vpack.c.b16 %v608, %v607
    %v660 = vpack.c.b16 %v610, %v609
    %v661 = vpack.c.b16 %v612, %v611
    %v662 = vpack.c.b16 %v614, %v613
    %v663 = vpack.c.b16 %v616, %v615
    %v664 = vpack.c.b16 %v618, %v617
    %v665 = vpack.c.b16 %v620, %v619
    %v666 = vpack.c.b16 %v622, %v621
    %v667 = vpack.c.b16 %v624, %v623
    %v668 = vpack.c.b16 %v626, %v625
    %v669 = vpack.c.b16 %v628, %v627
    %v670 = vpack.c.b16 %v630, %v629
    %v671 = vpack.c.b16 %v632, %v631
    %v672 = vpack.c.b16 %v634, %v633
    %v673 = vpack.c.b16 %v636, %v635
    %v674 = vpack.c.b16 %v638, %v637
    %v675 = vpack.c.b16 %v640, %v639
    %v676 = vpack.c.b16 %v642, %v641
    %v677 = vpack.c.b16 %v644, %v643
    %v678 = vpack.c.b16 %v646, %v645
    %711 = vmatprep.subr.bf16.mxu0 0
    %712 = vmatpush1.bf16.msra.mxu0 %v647
    %713 = vmatprep.subr.bf16.mxu0 0
    %714 = vmatpush1.bf16.msra.mxu0 %v648
    %715 = vmatprep.subr.bf16.mxu0 0
    %716 = vmatpush1.bf16.msra.mxu0 %v649
    %717 = vmatprep.subr.bf16.mxu0 0
    %718 = vmatpush1.bf16.msra.mxu0 %v650
    %719 = vmatprep.subr.bf16.mxu0 0
    %720 = vmatpush1.bf16.msra.mxu0 %v651
    %721 = vmatprep.subr.bf16.mxu0 0
    %722 = vmatpush1.bf16.msra.mxu0 %v652
    %723 = vmatprep.subr.bf16.mxu0 0
    %724 = vmatpush1.bf16.msra.mxu0 %v653
    %725 = vmatprep.subr.bf16.mxu0 0
    %726 = vmatpush1.bf16.msra.mxu0 %v654
    %727 = vmatprep.subr.bf16.mxu0 0
    %728 = vmatpush1.bf16.msra.mxu0 %v655
    %729 = vmatprep.subr.bf16.mxu0 0
    %730 = vmatpush1.bf16.msra.mxu0 %v656
    %731 = vmatprep.subr.bf16.mxu0 0
    %732 = vmatpush1.bf16.msra.mxu0 %v657
    %733 = vmatprep.subr.bf16.mxu0 0
    %734 = vmatpush1.bf16.msra.mxu0 %v658
    %735 = vmatprep.subr.bf16.mxu0 0
    %736 = vmatpush1.bf16.msra.mxu0 %v659
    %737 = vmatprep.subr.bf16.mxu0 0
    %738 = vmatpush1.bf16.msra.mxu0 %v660
    %739 = vmatprep.subr.bf16.mxu0 0
    %740 = vmatpush1.bf16.msra.mxu0 %v661
    %741 = vmatprep.subr.bf16.mxu0 0
    %742 = vmatpush1.bf16.msra.mxu0 %v662
    %743 = vmatprep.mubr.bf16.mxu0 %v408
    %744 = vmatmul.mubr.bf16.gmra.mrb[0].mxu0 %v407
    %v745 = vpop.f32.mrb[0].mxu0
    %v746 = vadd.f32 0.0, %v745
    %v747 = vpop.f32.mrb[0].mxu0
    %v748 = vpop.f32.mrb[0].mxu0
    %v749 = vadd.f32 0.0, %v748
    %v750 = vpop.f32.mrb[0].mxu0
    %751 = vmatprep.mubr.bf16.mxu0 %v412
    %752 = vmatmul.mubr.bf16.gmra.mrb[0].mxu0 %v411
    %v753 = vpop.f32.mrb[0].mxu0
    %v754 = vadd.f32 0.0, %v753
    %v755 = vpop.f32.mrb[0].mxu0
    %v756 = vpop.f32.mrb[0].mxu0
    %v757 = vadd.f32 0.0, %v756
    %v758 = vpop.f32.mrb[0].mxu0
    %759 = vmatprep.mubr.bf16.mxu0 %v416
    %760 = vmatmul.mubr.bf16.gmra.mrb[0].mxu0 %v415
    %v761 = vpop.f32.mrb[0].mxu0
    %v762 = vadd.f32 0.0, %v761
    %v763 = vpop.f32.mrb[0].mxu0
    %v764 = vpop.f32.mrb[0].mxu0
    %v765 = vadd.f32 0.0, %v764
    %v766 = vpop.f32.mrb[0].mxu0
    %767 = vmatprep.mubr.bf16.mxu0 %v420
    %768 = vmatmul.mubr.bf16.gmra.mrb[0].mxu0 %v419
    %v769 = vpop.f32.mrb[0].mxu0
    %v770 = vadd.f32 0.0, %v769
    %v771 = vpop.f32.mrb[0].mxu0
    %v772 = vpop.f32.mrb[0].mxu0
    %v773 = vadd.f32 0.0, %v772
    %v774 = vpop.f32.mrb[0].mxu0
    %775 = vmatprep.mubr.bf16.mxu0 %v424
    %776 = vmatmul.mubr.bf16.gmra.mrb[0].mxu0 %v423
    %v777 = vpop.f32.mrb[0].mxu0
    %v778 = vadd.f32 0.0, %v777
    %v779 = vpop.f32.mrb[0].mxu0
    %v780 = vpop.f32.mrb[0].mxu0
    %v781 = vadd.f32 0.0, %v780
    %v782 = vpop.f32.mrb[0].mxu0
    %783 = vmatprep.mubr.bf16.mxu0 %v428
    %784 = vmatmul.mubr.bf16.gmra.mrb[0].mxu0 %v427
    %v785 = vpop.f32.mrb[0].mxu0
    %v786 = vadd.f32 0.0, %v785
    %v787 = vpop.f32.mrb[0].mxu0
    %v788 = vpop.f32.mrb[0].mxu0
    %v789 = vadd.f32 0.0, %v788
    %v790 = vpop.f32.mrb[0].mxu0
    %791 = vmatprep.mubr.bf16.mxu0 %v432
    %792 = vmatmul.mubr.bf16.gmra.mrb[0].mxu0 %v431
    %v793 = vpop.f32.mrb[0].mxu0
    %v794 = vadd.f32 0.0, %v793
    %v795 = vpop.f32.mrb[0].mxu0
    %v796 = vpop.f32.mrb[0].mxu0
    %v797 = vadd.f32 0.0, %v796
    %v798 = vpop.f32.mrb[0].mxu0
    %799 = vmatprep.mubr.bf16.mxu0 %v436
    %800 = vmatmul.mubr.bf16.gmra.mrb[0].mxu0 %v435
    %v801 = vpop.f32.mrb[0].mxu0
    %v802 = vadd.f32 0.0, %v801
    %v803 = vpop.f32.mrb[0].mxu0
    %v804 = vpop.f32.mrb[0].mxu0
    %v805 = vadd.f32 0.0, %v804
    %v806 = vpop.f32.mrb[0].mxu0
    %807 = vdwg.mxu0
    %808 = vmatprep.subr.bf16.mxu0 0
    %809 = vmatpush1.bf16.msra.mxu0 %v663
    %810 = vmatprep.subr.bf16.mxu0 0
    %811 = vmatpush1.bf16.msra.mxu0 %v664
    %812 = vmatprep.subr.bf16.mxu0 0
    %813 = vmatpush1.bf16.msra.mxu0 %v665
    %814 = vmatprep.subr.bf16.mxu0 0
    %815 = vmatpush1.bf16.msra.mxu0 %v666
    %816 = vmatprep.subr.bf16.mxu0 0
    %817 = vmatpush1.bf16.msra.mxu0 %v667
    %818 = vmatprep.subr.bf16.mxu0 0
    %819 = vmatpush1.bf16.msra.mxu0 %v668
    %820 = vmatprep.subr.bf16.mxu0 0
    %821 = vmatpush1.bf16.msra.mxu0 %v669
    %822 = vmatprep.subr.bf16.mxu0 0
    %823 = vmatpush1.bf16.msra.mxu0 %v670
    %824 = vmatprep.subr.bf16.mxu0 0
    %825 = vmatpush1.bf16.msra.mxu0 %v671
    %826 = vmatprep.subr.bf16.mxu0 0
    %827 = vmatpush1.bf16.msra.mxu0 %v672
    %828 = vmatprep.subr.bf16.mxu0 0
    %829 = vmatpush1.bf16.msra.mxu0 %v673
    %830 = vmatprep.subr.bf16.mxu0 0
    %831 = vmatpush1.bf16.msra.mxu0 %v674
    %832 = vmatprep.subr.bf16.mxu0 0
    %833 = vmatpush1.bf16.msra.mxu0 %v675
    %834 = vmatprep.subr.bf16.mxu0 0
    %835 = vmatpush1.bf16.msra.mxu0 %v676
    %836 = vmatprep.subr.bf16.mxu0 0
    %837 = vmatpush1.bf16.msra.mxu0 %v677
    %838 = vmatprep.subr.bf16.mxu0 0
    %839 = vmatpush1.bf16.msra.mxu0 %v678
    %840 = vmatprep.mubr.bf16.mxu0 %v410
    %841 = vmatmul.mubr.bf16.gmra.mrb[0].mxu0 %v409
    %v842 = vpop.f32.mrb[0].mxu0
    %v843 = vadd.f32 %v746, %v842
    %v844 = vpop.f32.mrb[0].mxu0
    %v845 = vpop.f32.mrb[0].mxu0
    %v846 = vadd.f32 %v749, %v845
    %v847 = vpop.f32.mrb[0].mxu0
    %848 = vmatprep.mubr.bf16.mxu0 %v414
    %849 = vmatmul.mubr.bf16.gmra.mrb[0].mxu0 %v413
    %v850 = vpop.f32.mrb[0].mxu0
    %v851 = vadd.f32 %v754, %v850
    %v852 = vpop.f32.mrb[0].mxu0
    %v853 = vpop.f32.mrb[0].mxu0
    %v854 = vadd.f32 %v757, %v853
    %v855 = vpop.f32.mrb[0].mxu0
    %856 = vmatprep.mubr.bf16.mxu0 %v418
    %857 = vmatmul.mubr.bf16.gmra.mrb[0].mxu0 %v417
    %v858 = vpop.f32.mrb[0].mxu0
    %v859 = vadd.f32 %v762, %v858
    %v860 = vpop.f32.mrb[0].mxu0
    %v861 = vpop.f32.mrb[0].mxu0
    %v862 = vadd.f32 %v765, %v861
    %v863 = vpop.f32.mrb[0].mxu0
    %864 = vmatprep.mubr.bf16.mxu0 %v422
    %865 = vmatmul.mubr.bf16.gmra.mrb[0].mxu0 %v421
    %v866 = vpop.f32.mrb[0].mxu0
    %v867 = vadd.f32 %v770, %v866
    %v868 = vpop.f32.mrb[0].mxu0
    %v869 = vpop.f32.mrb[0].mxu0
    %v870 = vadd.f32 %v773, %v869
    %v871 = vpop.f32.mrb[0].mxu0
    %872 = vmatprep.mubr.bf16.mxu0 %v426
    %873 = vmatmul.mubr.bf16.gmra.mrb[0].mxu0 %v425
    %v874 = vpop.f32.mrb[0].mxu0
    %v875 = vadd.f32 %v778, %v874
    %v876 = vpop.f32.mrb[0].mxu0
    %v877 = vpop.f32.mrb[0].mxu0
    %v878 = vadd.f32 %v781, %v877
    %v879 = vpop.f32.mrb[0].mxu0
    %880 = vmatprep.mubr.bf16.mxu0 %v430
    %881 = vmatmul.mubr.bf16.gmra.mrb[0].mxu0 %v429
    %v882 = vpop.f32.mrb[0].mxu0
    %v883 = vadd.f32 %v786, %v882
    %v884 = vpop.f32.mrb[0].mxu0
    %v885 = vpop.f32.mrb[0].mxu0
    %v886 = vadd.f32 %v789, %v885
    %v887 = vpop.f32.mrb[0].mxu0
    %888 = vmatprep.mubr.bf16.mxu0 %v434
    %889 = vmatmul.mubr.bf16.gmra.mrb[0].mxu0 %v433
    %v890 = vpop.f32.mrb[0].mxu0
    %v891 = vadd.f32 %v794, %v890
    %v892 = vpop.f32.mrb[0].mxu0
    %v893 = vpop.f32.mrb[0].mxu0
    %v894 = vadd.f32 %v797, %v893
    %v895 = vpop.f32.mrb[0].mxu0
    %896 = vmatprep.mubr.bf16.mxu0 %v438
    %897 = vmatmul.mubr.bf16.gmra.mrb[0].mxu0 %v437
    %v898 = vpop.f32.mrb[0].mxu0
    %v899 = vadd.f32 %v802, %v898
    %v900 = vpop.f32.mrb[0].mxu0
    %v901 = vpop.f32.mrb[0].mxu0
    %v902 = vadd.f32 %v805, %v901
    %v903 = vpop.f32.mrb[0].mxu0
    %904 = vdwg.mxu0
    %v905 = vadd.f32 %v439, %v843
    %v906 = vadd.f32 %v440, %v846
    %v907 = vadd.f32 %v441, %v851
    %v908 = vadd.f32 %v442, %v854
    %v909 = vadd.f32 %v443, %v859
    %v910 = vadd.f32 %v444, %v862
    %v911 = vadd.f32 %v445, %v867
    %v912 = vadd.f32 %v446, %v870
    %v913 = vadd.f32 %v447, %v875
    %v914 = vadd.f32 %v448, %v878
    %v915 = vadd.f32 %v449, %v883
    %v916 = vadd.f32 %v450, %v886
    %v917 = vadd.f32 %v451, %v891
    %v918 = vadd.f32 %v452, %v894
    %v919 = vadd.f32 %v453, %v899
    %v920 = vadd.f32 %v454, %v902
    %vm921 = vcmask 97280
    %922 = vst.msk [vmem:[#allocation2] sm:$0xff] %vm921, %v905
    %923 = vst.msk [vmem:[#allocation2 + $0x8] sm:$0xff] %vm921, %v906
    %924 = vst.msk [vmem:[#allocation2 + $0x10] sm:$0xff] %vm921, %v907
    %925 = vst.msk [vmem:[#allocation2 + $0x18] sm:$0xff] %vm921, %v908
    %926 = vst.msk [vmem:[#allocation2 + $0x20] sm:$0xff] %vm921, %v909
    %927 = vst.msk [vmem:[#allocation2 + $0x28] sm:$0xff] %vm921, %v910
    %928 = vst.msk [vmem:[#allocation2 + $0x30] sm:$0xff] %vm921, %v911
    %929 = vst.msk [vmem:[#allocation2 + $0x38] sm:$0xff] %vm921, %v912
    %930 = vst.msk [vmem:[#allocation2 + $0x40] sm:$0xff] %vm921, %v913
    %931 = vst.msk [vmem:[#allocation2 + $0x48] sm:$0xff] %vm921, %v914
    %932 = vst.msk [vmem:[#allocation2 + $0x50] sm:$0xff] %vm921, %v915
    %933 = vst.msk [vmem:[#allocation2 + $0x58] sm:$0xff] %vm921, %v916
    %934 = vst.msk [vmem:[#allocation2 + $0x60] sm:$0xff] %vm921, %v917
    %935 = vst.msk [vmem:[#allocation2 + $0x68] sm:$0xff] %vm921, %v918
    %936 = vst.msk [vmem:[#allocation2 + $0x70] sm:$0xff] %vm921, %v919
    %937 = vst.msk [vmem:[#allocation2 + $0x78] sm:$0xff] %vm921, %v920
    %v938 = vlaneseq
    %v939 = vand.u32 %v938, 127
    %v940 = vld [vmem:[#allocation3] sm:$0xff]
    %v941 = vld [vmem:[#allocation3 + $0x8] sm:$0xff]
    %v942 = vld [vmem:[#allocation3 + $0x10] sm:$0xff]
    %v943 = vld [vmem:[#allocation3 + $0x18] sm:$0xff]
    %v944 = vld [vmem:[#allocation3 + $0x20] sm:$0xff]
    %v945 = vld [vmem:[#allocation3 + $0x28] sm:$0xff]
    %v946 = vld [vmem:[#allocation3 + $0x30] sm:$0xff]
    %v947 = vld [vmem:[#allocation3 + $0x38] sm:$0xff]
    %v948 = vld [vmem:[#allocation3 + $0x40] sm:$0xff]
    %v949 = vld [vmem:[#allocation3 + $0x48] sm:$0xff]
    %v950 = vld [vmem:[#allocation3 + $0x50] sm:$0xff]
    %v951 = vld [vmem:[#allocation3 + $0x58] sm:$0xff]
    %v952 = vld [vmem:[#allocation3 + $0x60] sm:$0xff]
    %v953 = vld [vmem:[#allocation3 + $0x68] sm:$0xff]
    %v954 = vld [vmem:[#allocation3 + $0x70] sm:$0xff]
    %v955 = vld [vmem:[#allocation3 + $0x78] sm:$0xff]
    %v956 = vld [vmem:[%s81] sm:$0x1]
    %v957 = vlaneseq
    %v958 = vshrl.u32 %v957, 7
    %v959 = vsub.s32 0, %v958
    %v960 = vrot.slane %v956, %v959
    %vm961 = vcmp.eq.s32.totalorder %v960, %v183
    %vm962 = vcmp.eq.s32.totalorder %v960, %v184
    %vm963 = vcmp.eq.s32.totalorder %v960, %v185
    %vm964 = vcmp.eq.s32.totalorder %v960, %v186
    %vm965 = vcmp.eq.s32.totalorder %v960, %v187
    %vm966 = vcmp.eq.s32.totalorder %v960, %v188
    %vm967 = vcmp.eq.s32.totalorder %v960, %v189
    %vm968 = vcmp.eq.s32.totalorder %v960, %v190
    %vm969 = vcmp.eq.s32.totalorder %v960, %v191
    %vm970 = vcmp.eq.s32.totalorder %v960, %v192
    %vm971 = vcmp.eq.s32.totalorder %v960, %v193
    %vm972 = vcmp.eq.s32.totalorder %v960, %v194
    %vm973 = vcmp.eq.s32.totalorder %v960, %v195
    %vm974 = vcmp.eq.s32.totalorder %v960, %v196
    %vm975 = vcmp.eq.s32.totalorder %v960, %v197
    %vm976 = vcmp.eq.s32.totalorder %v960, %v198
    %v977 = vld [vmem:[%s101] ss:$0 sm:$0xff]
    %v978 = vsel %vm961, %v977, -3e+38
    %v979 = vsel %vm962, %v977, -3e+38
    %v980 = vsel %vm963, %v977, -3e+38
    %v981 = vsel %vm964, %v977, -3e+38
    %v982 = vsel %vm965, %v977, -3e+38
    %v983 = vsel %vm966, %v977, -3e+38
    %v984 = vsel %vm967, %v977, -3e+38
    %v985 = vsel %vm968, %v977, -3e+38
    %v986 = vsel %vm969, %v977, -3e+38
    %v987 = vsel %vm970, %v977, -3e+38
    %v988 = vsel %vm971, %v977, -3e+38
    %v989 = vsel %vm972, %v977, -3e+38
    %v990 = vsel %vm973, %v977, -3e+38
    %v991 = vsel %vm974, %v977, -3e+38
    %v992 = vsel %vm975, %v977, -3e+38
    %v993 = vsel %vm976, %v977, -3e+38
    %994 = vmax.xlane.f32.xlu0 %v978
    %v995 = vpop.xlane.xlu0 %994
    %996 = vmax.xlane.f32.xlu0 %v979
    %v997 = vpop.xlane.xlu0 %996
    %998 = vmax.xlane.f32.xlu0 %v980
    %v999 = vpop.xlane.xlu0 %998
    %1000 = vmax.xlane.f32.xlu0 %v981
    %v1001 = vpop.xlane.xlu0 %1000
    %1002 = vmax.xlane.f32.xlu0 %v982
    %v1003 = vpop.xlane.xlu0 %1002
    %1004 = vmax.xlane.f32.xlu0 %v983
    %v1005 = vpop.xlane.xlu0 %1004
    %1006 = vmax.xlane.f32.xlu0 %v984
    %v1007 = vpop.xlane.xlu0 %1006
    %1008 = vmax.xlane.f32.xlu0 %v985
    %v1009 = vpop.xlane.xlu0 %1008
    %1010 = vmax.xlane.f32.xlu0 %v986
    %v1011 = vpop.xlane.xlu0 %1010
    %1012 = vmax.xlane.f32.xlu0 %v987
    %v1013 = vpop.xlane.xlu0 %1012
    %1014 = vmax.xlane.f32.xlu0 %v988
    %v1015 = vpop.xlane.xlu0 %1014
    %1016 = vmax.xlane.f32.xlu0 %v989
    %v1017 = vpop.xlane.xlu0 %1016
    %1018 = vmax.xlane.f32.xlu0 %v990
    %v1019 = vpop.xlane.xlu0 %1018
    %1020 = vmax.xlane.f32.xlu0 %v991
    %v1021 = vpop.xlane.xlu0 %1020
    %1022 = vmax.xlane.f32.xlu0 %v992
    %v1023 = vpop.xlane.xlu0 %1022
    %1024 = vmax.xlane.f32.xlu0 %v993
    %v1025 = vpop.xlane.xlu0 %1024
    %vm1026 = vcmp.eq.s32.totalorder %v939, 0
    %v1027 = vsel %vm1026, %v995, -3e+38
    %v1028 = vsel %vm1026, %v997, -3e+38
    %v1029 = vsel %vm1026, %v999, -3e+38
    %v1030 = vsel %vm1026, %v1001, -3e+38
    %v1031 = vsel %vm1026, %v1003, -3e+38
    %v1032 = vsel %vm1026, %v1005, -3e+38
    %v1033 = vsel %vm1026, %v1007, -3e+38
    %v1034 = vsel %vm1026, %v1009, -3e+38
    %v1035 = vsel %vm1026, %v1011, -3e+38
    %v1036 = vsel %vm1026, %v1013, -3e+38
    %v1037 = vsel %vm1026, %v1015, -3e+38
    %v1038 = vsel %vm1026, %v1017, -3e+38
    %v1039 = vsel %vm1026, %v1019, -3e+38
    %v1040 = vsel %vm1026, %v1021, -3e+38
    %v1041 = vsel %vm1026, %v1023, -3e+38
    %v1042 = vsel %vm1026, %v1025, -3e+38
    %v1043 = vmax.f32 %v940, %v1027
    %v1044 = vmax.f32 %v941, %v1028
    %v1045 = vmax.f32 %v942, %v1029
    %v1046 = vmax.f32 %v943, %v1030
    %v1047 = vmax.f32 %v944, %v1031
    %v1048 = vmax.f32 %v945, %v1032
    %v1049 = vmax.f32 %v946, %v1033
    %v1050 = vmax.f32 %v947, %v1034
    %v1051 = vmax.f32 %v948, %v1035
    %v1052 = vmax.f32 %v949, %v1036
    %v1053 = vmax.f32 %v950, %v1037
    %v1054 = vmax.f32 %v951, %v1038
    %v1055 = vmax.f32 %v952, %v1039
    %v1056 = vmax.f32 %v953, %v1040
    %v1057 = vmax.f32 %v954, %v1041
    %v1058 = vmax.f32 %v955, %v1042
    %v1059 = vld [vmem:[%s101 + $0x1] ss:$0 sm:$0xff]
    %v1060 = vsel %vm961, %v1059, -3e+38
    %v1061 = vsel %vm962, %v1059, -3e+38
    %v1062 = vsel %vm963, %v1059, -3e+38
    %v1063 = vsel %vm964, %v1059, -3e+38
    %v1064 = vsel %vm965, %v1059, -3e+38
    %v1065 = vsel %vm966, %v1059, -3e+38
    %v1066 = vsel %vm967, %v1059, -3e+38
    %v1067 = vsel %vm968, %v1059, -3e+38
    %v1068 = vsel %vm969, %v1059, -3e+38
    %v1069 = vsel %vm970, %v1059, -3e+38
    %v1070 = vsel %vm971, %v1059, -3e+38
    %v1071 = vsel %vm972, %v1059, -3e+38
    %v1072 = vsel %vm973, %v1059, -3e+38
    %v1073 = vsel %vm974, %v1059, -3e+38
    %v1074 = vsel %vm975, %v1059, -3e+38
    %v1075 = vsel %vm976, %v1059, -3e+38
    %1076 = vmax.xlane.f32.xlu0 %v1060
    %v1077 = vpop.xlane.xlu0 %1076
    %1078 = vmax.xlane.f32.xlu0 %v1061
    %v1079 = vpop.xlane.xlu0 %1078
    %1080 = vmax.xlane.f32.xlu0 %v1062
    %v1081 = vpop.xlane.xlu0 %1080
    %1082 = vmax.xlane.f32.xlu0 %v1063
    %v1083 = vpop.xlane.xlu0 %1082
    %1084 = vmax.xlane.f32.xlu0 %v1064
    %v1085 = vpop.xlane.xlu0 %1084
    %1086 = vmax.xlane.f32.xlu0 %v1065
    %v1087 = vpop.xlane.xlu0 %1086
    %1088 = vmax.xlane.f32.xlu0 %v1066
    %v1089 = vpop.xlane.xlu0 %1088
    %1090 = vmax.xlane.f32.xlu0 %v1067
    %v1091 = vpop.xlane.xlu0 %1090
    %1092 = vmax.xlane.f32.xlu0 %v1068
    %v1093 = vpop.xlane.xlu0 %1092
    %1094 = vmax.xlane.f32.xlu0 %v1069
    %v1095 = vpop.xlane.xlu0 %1094
    %1096 = vmax.xlane.f32.xlu0 %v1070
    %v1097 = vpop.xlane.xlu0 %1096
    %1098 = vmax.xlane.f32.xlu0 %v1071
    %v1099 = vpop.xlane.xlu0 %1098
    %1100 = vmax.xlane.f32.xlu0 %v1072
    %v1101 = vpop.xlane.xlu0 %1100
    %1102 = vmax.xlane.f32.xlu0 %v1073
    %v1103 = vpop.xlane.xlu0 %1102
    %1104 = vmax.xlane.f32.xlu0 %v1074
    %v1105 = vpop.xlane.xlu0 %1104
    %1106 = vmax.xlane.f32.xlu0 %v1075
    %v1107 = vpop.xlane.xlu0 %1106
    %vm1108 = vcmp.eq.s32.totalorder %v939, 1
    %v1109 = vsel %vm1108, %v1077, -3e+38
    %v1110 = vsel %vm1108, %v1079, -3e+38
    %v1111 = vsel %vm1108, %v1081, -3e+38
    %v1112 = vsel %vm1108, %v1083, -3e+38
    %v1113 = vsel %vm1108, %v1085, -3e+38
    %v1114 = vsel %vm1108, %v1087, -3e+38
    %v1115 = vsel %vm1108, %v1089, -3e+38
    %v1116 = vsel %vm1108, %v1091, -3e+38
    %v1117 = vsel %vm1108, %v1093, -3e+38
    %v1118 = vsel %vm1108, %v1095, -3e+38
    %v1119 = vsel %vm1108, %v1097, -3e+38
    %v1120 = vsel %vm1108, %v1099, -3e+38
    %v1121 = vsel %vm1108, %v1101, -3e+38
    %v1122 = vsel %vm1108, %v1103, -3e+38
    %v1123 = vsel %vm1108, %v1105, -3e+38
    %v1124 = vsel %vm1108, %v1107, -3e+38
    %v1125 = vmax.f32 %v1043, %v1109
    %v1126 = vmax.f32 %v1044, %v1110
    %v1127 = vmax.f32 %v1045, %v1111
    %v1128 = vmax.f32 %v1046, %v1112
    %v1129 = vmax.f32 %v1047, %v1113
    %v1130 = vmax.f32 %v1048, %v1114
    %v1131 = vmax.f32 %v1049, %v1115
    %v1132 = vmax.f32 %v1050, %v1116
    %v1133 = vmax.f32 %v1051, %v1117
    %v1134 = vmax.f32 %v1052, %v1118
    %v1135 = vmax.f32 %v1053, %v1119
    %v1136 = vmax.f32 %v1054, %v1120
    %v1137 = vmax.f32 %v1055, %v1121
    %v1138 = vmax.f32 %v1056, %v1122
    %v1139 = vmax.f32 %v1057, %v1123
    %v1140 = vmax.f32 %v1058, %v1124
    %v1141 = vld [vmem:[%s101 + $0x2] ss:$0 sm:$0xff]
    %v1142 = vsel %vm961, %v1141, -3e+38
    %v1143 = vsel %vm962, %v1141, -3e+38
    %v1144 = vsel %vm963, %v1141, -3e+38
    %v1145 = vsel %vm964, %v1141, -3e+38
    %v1146 = vsel %vm965, %v1141, -3e+38
    %v1147 = vsel %vm966, %v1141, -3e+38
    %v1148 = vsel %vm967, %v1141, -3e+38
    %v1149 = vsel %vm968, %v1141, -3e+38
    %v1150 = vsel %vm969, %v1141, -3e+38
    %v1151 = vsel %vm970, %v1141, -3e+38
    %v1152 = vsel %vm971, %v1141, -3e+38
    %v1153 = vsel %vm972, %v1141, -3e+38
    %v1154 = vsel %vm973, %v1141, -3e+38
    %v1155 = vsel %vm974, %v1141, -3e+38
    %v1156 = vsel %vm975, %v1141, -3e+38
    %v1157 = vsel %vm976, %v1141, -3e+38
    %1158 = vmax.xlane.f32.xlu0 %v1142
    %v1159 = vpop.xlane.xlu0 %1158
    %1160 = vmax.xlane.f32.xlu0 %v1143
    %v1161 = vpop.xlane.xlu0 %1160
    %1162 = vmax.xlane.f32.xlu0 %v1144
    %v1163 = vpop.xlane.xlu0 %1162
    %1164 = vmax.xlane.f32.xlu0 %v1145
    %v1165 = vpop.xlane.xlu0 %1164
    %1166 = vmax.xlane.f32.xlu0 %v1146
    %v1167 = vpop.xlane.xlu0 %1166
    %1168 = vmax.xlane.f32.xlu0 %v1147
    %v1169 = vpop.xlane.xlu0 %1168
    %1170 = vmax.xlane.f32.xlu0 %v1148
    %v1171 = vpop.xlane.xlu0 %1170
    %1172 = vmax.xlane.f32.xlu0 %v1149
    %v1173 = vpop.xlane.xlu0 %1172
    %1174 = vmax.xlane.f32.xlu0 %v1150
    %v1175 = vpop.xlane.xlu0 %1174
    %1176 = vmax.xlane.f32.xlu0 %v1151
    %v1177 = vpop.xlane.xlu0 %1176
    %1178 = vmax.xlane.f32.xlu0 %v1152
    %v1179 = vpop.xlane.xlu0 %1178
    %1180 = vmax.xlane.f32.xlu0 %v1153
    %v1181 = vpop.xlane.xlu0 %1180
    %1182 = vmax.xlane.f32.xlu0 %v1154
    %v1183 = vpop.xlane.xlu0 %1182
    %1184 = vmax.xlane.f32.xlu0 %v1155
    %v1185 = vpop.xlane.xlu0 %1184
    %1186 = vmax.xlane.f32.xlu0 %v1156
    %v1187 = vpop.xlane.xlu0 %1186
    %1188 = vmax.xlane.f32.xlu0 %v1157
    %v1189 = vpop.xlane.xlu0 %1188
    %vm1190 = vcmp.eq.s32.totalorder %v939, 2
    %v1191 = vsel %vm1190, %v1159, -3e+38
    %v1192 = vsel %vm1190, %v1161, -3e+38
    %v1193 = vsel %vm1190, %v1163, -3e+38
    %v1194 = vsel %vm1190, %v1165, -3e+38
    %v1195 = vsel %vm1190, %v1167, -3e+38
    %v1196 = vsel %vm1190, %v1169, -3e+38
    %v1197 = vsel %vm1190, %v1171, -3e+38
    %v1198 = vsel %vm1190, %v1173, -3e+38
    %v1199 = vsel %vm1190, %v1175, -3e+38
    %v1200 = vsel %vm1190, %v1177, -3e+38
    %v1201 = vsel %vm1190, %v1179, -3e+38
    %v1202 = vsel %vm1190, %v1181, -3e+38
    %v1203 = vsel %vm1190, %v1183, -3e+38
    %v1204 = vsel %vm1190, %v1185, -3e+38
    %v1205 = vsel %vm1190, %v1187, -3e+38
    %v1206 = vsel %vm1190, %v1189, -3e+38
    %v1207 = vmax.f32 %v1125, %v1191
    %v1208 = vmax.f32 %v1126, %v1192
    %v1209 = vmax.f32 %v1127, %v1193
    %v1210 = vmax.f32 %v1128, %v1194
    %v1211 = vmax.f32 %v1129, %v1195
    %v1212 = vmax.f32 %v1130, %v1196
    %v1213 = vmax.f32 %v1131, %v1197
    %v1214 = vmax.f32 %v1132, %v1198
    %v1215 = vmax.f32 %v1133, %v1199
    %v1216 = vmax.f32 %v1134, %v1200
    %v1217 = vmax.f32 %v1135, %v1201
    %v1218 = vmax.f32 %v1136, %v1202
    %v1219 = vmax.f32 %v1137, %v1203
    %v1220 = vmax.f32 %v1138, %v1204
    %v1221 = vmax.f32 %v1139, %v1205
    %v1222 = vmax.f32 %v1140, %v1206
    %v1223 = vld [vmem:[%s101 + $0x3] ss:$0 sm:$0xff]
    %v1224 = vsel %vm961, %v1223, -3e+38
    %v1225 = vsel %vm962, %v1223, -3e+38
    %v1226 = vsel %vm963, %v1223, -3e+38
    %v1227 = vsel %vm964, %v1223, -3e+38
    %v1228 = vsel %vm965, %v1223, -3e+38
    %v1229 = vsel %vm966, %v1223, -3e+38
    %v1230 = vsel %vm967, %v1223, -3e+38
    %v1231 = vsel %vm968, %v1223, -3e+38
    %v1232 = vsel %vm969, %v1223, -3e+38
    %v1233 = vsel %vm970, %v1223, -3e+38
    %v1234 = vsel %vm971, %v1223, -3e+38
    %v1235 = vsel %vm972, %v1223, -3e+38
    %v1236 = vsel %vm973, %v1223, -3e+38
    %v1237 = vsel %vm974, %v1223, -3e+38
    %v1238 = vsel %vm975, %v1223, -3e+38
    %v1239 = vsel %vm976, %v1223, -3e+38
    %1240 = vmax.xlane.f32.xlu0 %v1224
    %v1241 = vpop.xlane.xlu0 %1240
    %1242 = vmax.xlane.f32.xlu0 %v1225
    %v1243 = vpop.xlane.xlu0 %1242
    %1244 = vmax.xlane.f32.xlu0 %v1226
    %v1245 = vpop.xlane.xlu0 %1244
    %1246 = vmax.xlane.f32.xlu0 %v1227
    %v1247 = vpop.xlane.xlu0 %1246
    %1248 = vmax.xlane.f32.xlu0 %v1228
    %v1249 = vpop.xlane.xlu0 %1248
    %1250 = vmax.xlane.f32.xlu0 %v1229
    %v1251 = vpop.xlane.xlu0 %1250
    %1252 = vmax.xlane.f32.xlu0 %v1230
    %v1253 = vpop.xlane.xlu0 %1252
    %1254 = vmax.xlane.f32.xlu0 %v1231
    %v1255 = vpop.xlane.xlu0 %1254
    %1256 = vmax.xlane.f32.xlu0 %v1232
    %v1257 = vpop.xlane.xlu0 %1256
    %1258 = vmax.xlane.f32.xlu0 %v1233
    %v1259 = vpop.xlane.xlu0 %1258
    %1260 = vmax.xlane.f32.xlu0 %v1234
    %v1261 = vpop.xlane.xlu0 %1260
    %1262 = vmax.xlane.f32.xlu0 %v1235
    %v1263 = vpop.xlane.xlu0 %1262
    %1264 = vmax.xlane.f32.xlu0 %v1236
    %v1265 = vpop.xlane.xlu0 %1264
    %1266 = vmax.xlane.f32.xlu0 %v1237
    %v1267 = vpop.xlane.xlu0 %1266
    %1268 = vmax.xlane.f32.xlu0 %v1238
    %v1269 = vpop.xlane.xlu0 %1268
    %1270 = vmax.xlane.f32.xlu0 %v1239
    %v1271 = vpop.xlane.xlu0 %1270
    %vm1272 = vcmp.eq.s32.totalorder %v939, 3
    %v1273 = vsel %vm1272, %v1241, -3e+38
    %v1274 = vsel %vm1272, %v1243, -3e+38
    %v1275 = vsel %vm1272, %v1245, -3e+38
    %v1276 = vsel %vm1272, %v1247, -3e+38
    %v1277 = vsel %vm1272, %v1249, -3e+38
    %v1278 = vsel %vm1272, %v1251, -3e+38
    %v1279 = vsel %vm1272, %v1253, -3e+38
    %v1280 = vsel %vm1272, %v1255, -3e+38
    %v1281 = vsel %vm1272, %v1257, -3e+38
    %v1282 = vsel %vm1272, %v1259, -3e+38
    %v1283 = vsel %vm1272, %v1261, -3e+38
    %v1284 = vsel %vm1272, %v1263, -3e+38
    %v1285 = vsel %vm1272, %v1265, -3e+38
    %v1286 = vsel %vm1272, %v1267, -3e+38
    %v1287 = vsel %vm1272, %v1269, -3e+38
    %v1288 = vsel %vm1272, %v1271, -3e+38
    %v1289 = vmax.f32 %v1207, %v1273
    %v1290 = vmax.f32 %v1208, %v1274
    %v1291 = vmax.f32 %v1209, %v1275
    %v1292 = vmax.f32 %v1210, %v1276
    %v1293 = vmax.f32 %v1211, %v1277
    %v1294 = vmax.f32 %v1212, %v1278
    %v1295 = vmax.f32 %v1213, %v1279
    %v1296 = vmax.f32 %v1214, %v1280
    %v1297 = vmax.f32 %v1215, %v1281
    %v1298 = vmax.f32 %v1216, %v1282
    %v1299 = vmax.f32 %v1217, %v1283
    %v1300 = vmax.f32 %v1218, %v1284
    %v1301 = vmax.f32 %v1219, %v1285
    %v1302 = vmax.f32 %v1220, %v1286
    %v1303 = vmax.f32 %v1221, %v1287
    %v1304 = vmax.f32 %v1222, %v1288
    %v1305 = vld [vmem:[%s101 + $0x4] ss:$0 sm:$0xff]
    %v1306 = vsel %vm961, %v1305, -3e+38
    %v1307 = vsel %vm962, %v1305, -3e+38
    %v1308 = vsel %vm963, %v1305, -3e+38
    %v1309 = vsel %vm964, %v1305, -3e+38
    %v1310 = vsel %vm965, %v1305, -3e+38
    %v1311 = vsel %vm966, %v1305, -3e+38
    %v1312 = vsel %vm967, %v1305, -3e+38
    %v1313 = vsel %vm968, %v1305, -3e+38
    %v1314 = vsel %vm969, %v1305, -3e+38
    %v1315 = vsel %vm970, %v1305, -3e+38
    %v1316 = vsel %vm971, %v1305, -3e+38
    %v1317 = vsel %vm972, %v1305, -3e+38
    %v1318 = vsel %vm973, %v1305, -3e+38
    %v1319 = vsel %vm974, %v1305, -3e+38
    %v1320 = vsel %vm975, %v1305, -3e+38
    %v1321 = vsel %vm976, %v1305, -3e+38
    %1322 = vmax.xlane.f32.xlu0 %v1306
    %v1323 = vpop.xlane.xlu0 %1322
    %1324 = vmax.xlane.f32.xlu0 %v1307
    %v1325 = vpop.xlane.xlu0 %1324
    %1326 = vmax.xlane.f32.xlu0 %v1308
    %v1327 = vpop.xlane.xlu0 %1326
    %1328 = vmax.xlane.f32.xlu0 %v1309
    %v1329 = vpop.xlane.xlu0 %1328
    %1330 = vmax.xlane.f32.xlu0 %v1310
    %v1331 = vpop.xlane.xlu0 %1330
    %1332 = vmax.xlane.f32.xlu0 %v1311
    %v1333 = vpop.xlane.xlu0 %1332
    %1334 = vmax.xlane.f32.xlu0 %v1312
    %v1335 = vpop.xlane.xlu0 %1334
    %1336 = vmax.xlane.f32.xlu0 %v1313
    %v1337 = vpop.xlane.xlu0 %1336
    %1338 = vmax.xlane.f32.xlu0 %v1314
    %v1339 = vpop.xlane.xlu0 %1338
    %1340 = vmax.xlane.f32.xlu0 %v1315
    %v1341 = vpop.xlane.xlu0 %1340
    %1342 = vmax.xlane.f32.xlu0 %v1316
    %v1343 = vpop.xlane.xlu0 %1342
    %1344 = vmax.xlane.f32.xlu0 %v1317
    %v1345 = vpop.xlane.xlu0 %1344
    %1346 = vmax.xlane.f32.xlu0 %v1318
    %v1347 = vpop.xlane.xlu0 %1346
    %1348 = vmax.xlane.f32.xlu0 %v1319
    %v1349 = vpop.xlane.xlu0 %1348
    %1350 = vmax.xlane.f32.xlu0 %v1320
    %v1351 = vpop.xlane.xlu0 %1350
    %1352 = vmax.xlane.f32.xlu0 %v1321
    %v1353 = vpop.xlane.xlu0 %1352
    %vm1354 = vcmp.eq.s32.totalorder %v939, 4
    %v1355 = vsel %vm1354, %v1323, -3e+38
    %v1356 = vsel %vm1354, %v1325, -3e+38
    %v1357 = vsel %vm1354, %v1327, -3e+38
    %v1358 = vsel %vm1354, %v1329, -3e+38
    %v1359 = vsel %vm1354, %v1331, -3e+38
    %v1360 = vsel %vm1354, %v1333, -3e+38
    %v1361 = vsel %vm1354, %v1335, -3e+38
    %v1362 = vsel %vm1354, %v1337, -3e+38
    %v1363 = vsel %vm1354, %v1339, -3e+38
    %v1364 = vsel %vm1354, %v1341, -3e+38
    %v1365 = vsel %vm1354, %v1343, -3e+38
    %v1366 = vsel %vm1354, %v1345, -3e+38
    %v1367 = vsel %vm1354, %v1347, -3e+38
    %v1368 = vsel %vm1354, %v1349, -3e+38
    %v1369 = vsel %vm1354, %v1351, -3e+38
    %v1370 = vsel %vm1354, %v1353, -3e+38
    %v1371 = vmax.f32 %v1289, %v1355
    %v1372 = vmax.f32 %v1290, %v1356
    %v1373 = vmax.f32 %v1291, %v1357
    %v1374 = vmax.f32 %v1292, %v1358
    %v1375 = vmax.f32 %v1293, %v1359
    %v1376 = vmax.f32 %v1294, %v1360
    %v1377 = vmax.f32 %v1295, %v1361
    %v1378 = vmax.f32 %v1296, %v1362
    %v1379 = vmax.f32 %v1297, %v1363
    %v1380 = vmax.f32 %v1298, %v1364
    %v1381 = vmax.f32 %v1299, %v1365
    %v1382 = vmax.f32 %v1300, %v1366
    %v1383 = vmax.f32 %v1301, %v1367
    %v1384 = vmax.f32 %v1302, %v1368
    %v1385 = vmax.f32 %v1303, %v1369
    %v1386 = vmax.f32 %v1304, %v1370
    %v1387 = vld [vmem:[%s101 + $0x5] ss:$0 sm:$0xff]
    %v1388 = vsel %vm961, %v1387, -3e+38
    %v1389 = vsel %vm962, %v1387, -3e+38
    %v1390 = vsel %vm963, %v1387, -3e+38
    %v1391 = vsel %vm964, %v1387, -3e+38
    %v1392 = vsel %vm965, %v1387, -3e+38
    %v1393 = vsel %vm966, %v1387, -3e+38
    %v1394 = vsel %vm967, %v1387, -3e+38
    %v1395 = vsel %vm968, %v1387, -3e+38
    %v1396 = vsel %vm969, %v1387, -3e+38
    %v1397 = vsel %vm970, %v1387, -3e+38
    %v1398 = vsel %vm971, %v1387, -3e+38
    %v1399 = vsel %vm972, %v1387, -3e+38
    %v1400 = vsel %vm973, %v1387, -3e+38
    %v1401 = vsel %vm974, %v1387, -3e+38
    %v1402 = vsel %vm975, %v1387, -3e+38
    %v1403 = vsel %vm976, %v1387, -3e+38
    %1404 = vmax.xlane.f32.xlu0 %v1388
    %v1405 = vpop.xlane.xlu0 %1404
    %1406 = vmax.xlane.f32.xlu0 %v1389
    %v1407 = vpop.xlane.xlu0 %1406
    %1408 = vmax.xlane.f32.xlu0 %v1390
    %v1409 = vpop.xlane.xlu0 %1408
    %1410 = vmax.xlane.f32.xlu0 %v1391
    %v1411 = vpop.xlane.xlu0 %1410
    %1412 = vmax.xlane.f32.xlu0 %v1392
    %v1413 = vpop.xlane.xlu0 %1412
    %1414 = vmax.xlane.f32.xlu0 %v1393
    %v1415 = vpop.xlane.xlu0 %1414
    %1416 = vmax.xlane.f32.xlu0 %v1394
    %v1417 = vpop.xlane.xlu0 %1416
    %1418 = vmax.xlane.f32.xlu0 %v1395
    %v1419 = vpop.xlane.xlu0 %1418
    %1420 = vmax.xlane.f32.xlu0 %v1396
    %v1421 = vpop.xlane.xlu0 %1420
    %1422 = vmax.xlane.f32.xlu0 %v1397
    %v1423 = vpop.xlane.xlu0 %1422
    %1424 = vmax.xlane.f32.xlu0 %v1398
    %v1425 = vpop.xlane.xlu0 %1424
    %1426 = vmax.xlane.f32.xlu0 %v1399
    %v1427 = vpop.xlane.xlu0 %1426
    %1428 = vmax.xlane.f32.xlu0 %v1400
    %v1429 = vpop.xlane.xlu0 %1428
    %1430 = vmax.xlane.f32.xlu0 %v1401
    %v1431 = vpop.xlane.xlu0 %1430
    %1432 = vmax.xlane.f32.xlu0 %v1402
    %v1433 = vpop.xlane.xlu0 %1432
    %1434 = vmax.xlane.f32.xlu0 %v1403
    %v1435 = vpop.xlane.xlu0 %1434
    %vm1436 = vcmp.eq.s32.totalorder %v939, 5
    %v1437 = vsel %vm1436, %v1405, -3e+38
    %v1438 = vsel %vm1436, %v1407, -3e+38
    %v1439 = vsel %vm1436, %v1409, -3e+38
    %v1440 = vsel %vm1436, %v1411, -3e+38
    %v1441 = vsel %vm1436, %v1413, -3e+38
    %v1442 = vsel %vm1436, %v1415, -3e+38
    %v1443 = vsel %vm1436, %v1417, -3e+38
    %v1444 = vsel %vm1436, %v1419, -3e+38
    %v1445 = vsel %vm1436, %v1421, -3e+38
    %v1446 = vsel %vm1436, %v1423, -3e+38
    %v1447 = vsel %vm1436, %v1425, -3e+38
    %v1448 = vsel %vm1436, %v1427, -3e+38
    %v1449 = vsel %vm1436, %v1429, -3e+38
    %v1450 = vsel %vm1436, %v1431, -3e+38
    %v1451 = vsel %vm1436, %v1433, -3e+38
    %v1452 = vsel %vm1436, %v1435, -3e+38
    %v1453 = vmax.f32 %v1371, %v1437
    %v1454 = vmax.f32 %v1372, %v1438
    %v1455 = vmax.f32 %v1373, %v1439
    %v1456 = vmax.f32 %v1374, %v1440
    %v1457 = vmax.f32 %v1375, %v1441
    %v1458 = vmax.f32 %v1376, %v1442
    %v1459 = vmax.f32 %v1377, %v1443
    %v1460 = vmax.f32 %v1378, %v1444
    %v1461 = vmax.f32 %v1379, %v1445
    %v1462 = vmax.f32 %v1380, %v1446
    %v1463 = vmax.f32 %v1381, %v1447
    %v1464 = vmax.f32 %v1382, %v1448
    %v1465 = vmax.f32 %v1383, %v1449
    %v1466 = vmax.f32 %v1384, %v1450
    %v1467 = vmax.f32 %v1385, %v1451
    %v1468 = vmax.f32 %v1386, %v1452
    %v1469 = vld [vmem:[%s101 + $0x6] ss:$0 sm:$0xff]
    %v1470 = vsel %vm961, %v1469, -3e+38
    %v1471 = vsel %vm962, %v1469, -3e+38
    %v1472 = vsel %vm963, %v1469, -3e+38
    %v1473 = vsel %vm964, %v1469, -3e+38
    %v1474 = vsel %vm965, %v1469, -3e+38
    %v1475 = vsel %vm966, %v1469, -3e+38
    %v1476 = vsel %vm967, %v1469, -3e+38
    %v1477 = vsel %vm968, %v1469, -3e+38
    %v1478 = vsel %vm969, %v1469, -3e+38
    %v1479 = vsel %vm970, %v1469, -3e+38
    %v1480 = vsel %vm971, %v1469, -3e+38
    %v1481 = vsel %vm972, %v1469, -3e+38
    %v1482 = vsel %vm973, %v1469, -3e+38
    %v1483 = vsel %vm974, %v1469, -3e+38
    %v1484 = vsel %vm975, %v1469, -3e+38
    %v1485 = vsel %vm976, %v1469, -3e+38
    %1486 = vmax.xlane.f32.xlu0 %v1470
    %v1487 = vpop.xlane.xlu0 %1486
    %1488 = vmax.xlane.f32.xlu0 %v1471
    %v1489 = vpop.xlane.xlu0 %1488
    %1490 = vmax.xlane.f32.xlu0 %v1472
    %v1491 = vpop.xlane.xlu0 %1490
    %1492 = vmax.xlane.f32.xlu0 %v1473
    %v1493 = vpop.xlane.xlu0 %1492
    %1494 = vmax.xlane.f32.xlu0 %v1474
    %v1495 = vpop.xlane.xlu0 %1494
    %1496 = vmax.xlane.f32.xlu0 %v1475
    %v1497 = vpop.xlane.xlu0 %1496
    %1498 = vmax.xlane.f32.xlu0 %v1476
    %v1499 = vpop.xlane.xlu0 %1498
    %1500 = vmax.xlane.f32.xlu0 %v1477
    %v1501 = vpop.xlane.xlu0 %1500
    %1502 = vmax.xlane.f32.xlu0 %v1478
    %v1503 = vpop.xlane.xlu0 %1502
    %1504 = vmax.xlane.f32.xlu0 %v1479
    %v1505 = vpop.xlane.xlu0 %1504
    %1506 = vmax.xlane.f32.xlu0 %v1480
    %v1507 = vpop.xlane.xlu0 %1506
    %1508 = vmax.xlane.f32.xlu0 %v1481
    %v1509 = vpop.xlane.xlu0 %1508
    %1510 = vmax.xlane.f32.xlu0 %v1482
    %v1511 = vpop.xlane.xlu0 %1510
    %1512 = vmax.xlane.f32.xlu0 %v1483
    %v1513 = vpop.xlane.xlu0 %1512
    %1514 = vmax.xlane.f32.xlu0 %v1484
    %v1515 = vpop.xlane.xlu0 %1514
    %1516 = vmax.xlane.f32.xlu0 %v1485
    %v1517 = vpop.xlane.xlu0 %1516
    %vm1518 = vcmp.eq.s32.totalorder %v939, 6
    %v1519 = vsel %vm1518, %v1487, -3e+38
    %v1520 = vsel %vm1518, %v1489, -3e+38
    %v1521 = vsel %vm1518, %v1491, -3e+38
    %v1522 = vsel %vm1518, %v1493, -3e+38
    %v1523 = vsel %vm1518, %v1495, -3e+38
    %v1524 = vsel %vm1518, %v1497, -3e+38
    %v1525 = vsel %vm1518, %v1499, -3e+38
    %v1526 = vsel %vm1518, %v1501, -3e+38
    %v1527 = vsel %vm1518, %v1503, -3e+38
    %v1528 = vsel %vm1518, %v1505, -3e+38
    %v1529 = vsel %vm1518, %v1507, -3e+38
    %v1530 = vsel %vm1518, %v1509, -3e+38
    %v1531 = vsel %vm1518, %v1511, -3e+38
    %v1532 = vsel %vm1518, %v1513, -3e+38
    %v1533 = vsel %vm1518, %v1515, -3e+38
    %v1534 = vsel %vm1518, %v1517, -3e+38
    %v1535 = vmax.f32 %v1453, %v1519
    %v1536 = vmax.f32 %v1454, %v1520
    %v1537 = vmax.f32 %v1455, %v1521
    %v1538 = vmax.f32 %v1456, %v1522
    %v1539 = vmax.f32 %v1457, %v1523
    %v1540 = vmax.f32 %v1458, %v1524
    %v1541 = vmax.f32 %v1459, %v1525
    %v1542 = vmax.f32 %v1460, %v1526
    %v1543 = vmax.f32 %v1461, %v1527
    %v1544 = vmax.f32 %v1462, %v1528
    %v1545 = vmax.f32 %v1463, %v1529
    %v1546 = vmax.f32 %v1464, %v1530
    %v1547 = vmax.f32 %v1465, %v1531
    %v1548 = vmax.f32 %v1466, %v1532
    %v1549 = vmax.f32 %v1467, %v1533
    %v1550 = vmax.f32 %v1468, %v1534
    %v1551 = vld [vmem:[%s101 + $0x7] ss:$0 sm:$0xff]
    %v1552 = vsel %vm961, %v1551, -3e+38
    %v1553 = vsel %vm962, %v1551, -3e+38
    %v1554 = vsel %vm963, %v1551, -3e+38
    %v1555 = vsel %vm964, %v1551, -3e+38
    %v1556 = vsel %vm965, %v1551, -3e+38
    %v1557 = vsel %vm966, %v1551, -3e+38
    %v1558 = vsel %vm967, %v1551, -3e+38
    %v1559 = vsel %vm968, %v1551, -3e+38
    %v1560 = vsel %vm969, %v1551, -3e+38
    %v1561 = vsel %vm970, %v1551, -3e+38
    %v1562 = vsel %vm971, %v1551, -3e+38
    %v1563 = vsel %vm972, %v1551, -3e+38
    %v1564 = vsel %vm973, %v1551, -3e+38
    %v1565 = vsel %vm974, %v1551, -3e+38
    %v1566 = vsel %vm975, %v1551, -3e+38
    %v1567 = vsel %vm976, %v1551, -3e+38
    %1568 = vmax.xlane.f32.xlu0 %v1552
    %v1569 = vpop.xlane.xlu0 %1568
    %1570 = vmax.xlane.f32.xlu0 %v1553
    %v1571 = vpop.xlane.xlu0 %1570
    %1572 = vmax.xlane.f32.xlu0 %v1554
    %v1573 = vpop.xlane.xlu0 %1572
    %1574 = vmax.xlane.f32.xlu0 %v1555
    %v1575 = vpop.xlane.xlu0 %1574
    %1576 = vmax.xlane.f32.xlu0 %v1556
    %v1577 = vpop.xlane.xlu0 %1576
    %1578 = vmax.xlane.f32.xlu0 %v1557
    %v1579 = vpop.xlane.xlu0 %1578
    %1580 = vmax.xlane.f32.xlu0 %v1558
    %v1581 = vpop.xlane.xlu0 %1580
    %1582 = vmax.xlane.f32.xlu0 %v1559
    %v1583 = vpop.xlane.xlu0 %1582
    %1584 = vmax.xlane.f32.xlu0 %v1560
    %v1585 = vpop.xlane.xlu0 %1584
    %1586 = vmax.xlane.f32.xlu0 %v1561
    %v1587 = vpop.xlane.xlu0 %1586
    %1588 = vmax.xlane.f32.xlu0 %v1562
    %v1589 = vpop.xlane.xlu0 %1588
    %1590 = vmax.xlane.f32.xlu0 %v1563
    %v1591 = vpop.xlane.xlu0 %1590
    %1592 = vmax.xlane.f32.xlu0 %v1564
    %v1593 = vpop.xlane.xlu0 %1592
    %1594 = vmax.xlane.f32.xlu0 %v1565
    %v1595 = vpop.xlane.xlu0 %1594
    %1596 = vmax.xlane.f32.xlu0 %v1566
    %v1597 = vpop.xlane.xlu0 %1596
    %1598 = vmax.xlane.f32.xlu0 %v1567
    %v1599 = vpop.xlane.xlu0 %1598
    %vm1600 = vcmp.eq.s32.totalorder %v939, 7
    %v1601 = vsel %vm1600, %v1569, -3e+38
    %v1602 = vsel %vm1600, %v1571, -3e+38
    %v1603 = vsel %vm1600, %v1573, -3e+38
    %v1604 = vsel %vm1600, %v1575, -3e+38
    %v1605 = vsel %vm1600, %v1577, -3e+38
    %v1606 = vsel %vm1600, %v1579, -3e+38
    %v1607 = vsel %vm1600, %v1581, -3e+38
    %v1608 = vsel %vm1600, %v1583, -3e+38
    %v1609 = vsel %vm1600, %v1585, -3e+38
    %v1610 = vsel %vm1600, %v1587, -3e+38
    %v1611 = vsel %vm1600, %v1589, -3e+38
    %v1612 = vsel %vm1600, %v1591, -3e+38
    %v1613 = vsel %vm1600, %v1593, -3e+38
    %v1614 = vsel %vm1600, %v1595, -3e+38
    %v1615 = vsel %vm1600, %v1597, -3e+38
    %v1616 = vsel %vm1600, %v1599, -3e+38
    %v1617 = vmax.f32 %v1535, %v1601
    %v1618 = vmax.f32 %v1536, %v1602
    %v1619 = vmax.f32 %v1537, %v1603
    %v1620 = vmax.f32 %v1538, %v1604
    %v1621 = vmax.f32 %v1539, %v1605
    %v1622 = vmax.f32 %v1540, %v1606
    %v1623 = vmax.f32 %v1541, %v1607
    %v1624 = vmax.f32 %v1542, %v1608
    %v1625 = vmax.f32 %v1543, %v1609
    %v1626 = vmax.f32 %v1544, %v1610
    %v1627 = vmax.f32 %v1545, %v1611
    %v1628 = vmax.f32 %v1546, %v1612
    %v1629 = vmax.f32 %v1547, %v1613
    %v1630 = vmax.f32 %v1548, %v1614
    %v1631 = vmax.f32 %v1549, %v1615
    %v1632 = vmax.f32 %v1550, %v1616
    %v1633 = vld [vmem:[%s101 + $0x20] ss:$0 sm:$0xff]
    %v1634 = vsel %vm961, %v1633, -3e+38
    %v1635 = vsel %vm962, %v1633, -3e+38
    %v1636 = vsel %vm963, %v1633, -3e+38
    %v1637 = vsel %vm964, %v1633, -3e+38
    %v1638 = vsel %vm965, %v1633, -3e+38
    %v1639 = vsel %vm966, %v1633, -3e+38
    %v1640 = vsel %vm967, %v1633, -3e+38
    %v1641 = vsel %vm968, %v1633, -3e+38
    %v1642 = vsel %vm969, %v1633, -3e+38
    %v1643 = vsel %vm970, %v1633, -3e+38
    %v1644 = vsel %vm971, %v1633, -3e+38
    %v1645 = vsel %vm972, %v1633, -3e+38
    %v1646 = vsel %vm973, %v1633, -3e+38
    %v1647 = vsel %vm974, %v1633, -3e+38
    %v1648 = vsel %vm975, %v1633, -3e+38
    %v1649 = vsel %vm976, %v1633, -3e+38
    %1650 = vmax.xlane.f32.xlu0 %v1634
    %v1651 = vpop.xlane.xlu0 %1650
    %1652 = vmax.xlane.f32.xlu0 %v1635
    %v1653 = vpop.xlane.xlu0 %1652
    %1654 = vmax.xlane.f32.xlu0 %v1636
    %v1655 = vpop.xlane.xlu0 %1654
    %1656 = vmax.xlane.f32.xlu0 %v1637
    %v1657 = vpop.xlane.xlu0 %1656
    %1658 = vmax.xlane.f32.xlu0 %v1638
    %v1659 = vpop.xlane.xlu0 %1658
    %1660 = vmax.xlane.f32.xlu0 %v1639
    %v1661 = vpop.xlane.xlu0 %1660
    %1662 = vmax.xlane.f32.xlu0 %v1640
    %v1663 = vpop.xlane.xlu0 %1662
    %1664 = vmax.xlane.f32.xlu0 %v1641
    %v1665 = vpop.xlane.xlu0 %1664
    %1666 = vmax.xlane.f32.xlu0 %v1642
    %v1667 = vpop.xlane.xlu0 %1666
    %1668 = vmax.xlane.f32.xlu0 %v1643
    %v1669 = vpop.xlane.xlu0 %1668
    %1670 = vmax.xlane.f32.xlu0 %v1644
    %v1671 = vpop.xlane.xlu0 %1670
    %1672 = vmax.xlane.f32.xlu0 %v1645
    %v1673 = vpop.xlane.xlu0 %1672
    %1674 = vmax.xlane.f32.xlu0 %v1646
    %v1675 = vpop.xlane.xlu0 %1674
    %1676 = vmax.xlane.f32.xlu0 %v1647
    %v1677 = vpop.xlane.xlu0 %1676
    %1678 = vmax.xlane.f32.xlu0 %v1648
    %v1679 = vpop.xlane.xlu0 %1678
    %1680 = vmax.xlane.f32.xlu0 %v1649
    %v1681 = vpop.xlane.xlu0 %1680
    %vm1682 = vcmp.eq.s32.totalorder %v939, 8
    %v1683 = vsel %vm1682, %v1651, -3e+38
    %v1684 = vsel %vm1682, %v1653, -3e+38
    %v1685 = vsel %vm1682, %v1655, -3e+38
    %v1686 = vsel %vm1682, %v1657, -3e+38
    %v1687 = vsel %vm1682, %v1659, -3e+38
    %v1688 = vsel %vm1682, %v1661, -3e+38
    %v1689 = vsel %vm1682, %v1663, -3e+38
    %v1690 = vsel %vm1682, %v1665, -3e+38
    %v1691 = vsel %vm1682, %v1667, -3e+38
    %v1692 = vsel %vm1682, %v1669, -3e+38
    %v1693 = vsel %vm1682, %v1671, -3e+38
    %v1694 = vsel %vm1682, %v1673, -3e+38
    %v1695 = vsel %vm1682, %v1675, -3e+38
    %v1696 = vsel %vm1682, %v1677, -3e+38
    %v1697 = vsel %vm1682, %v1679, -3e+38
    %v1698 = vsel %vm1682, %v1681, -3e+38
    %v1699 = vmax.f32 %v1617, %v1683
    %v1700 = vmax.f32 %v1618, %v1684
    %v1701 = vmax.f32 %v1619, %v1685
    %v1702 = vmax.f32 %v1620, %v1686
    %v1703 = vmax.f32 %v1621, %v1687
    %v1704 = vmax.f32 %v1622, %v1688
    %v1705 = vmax.f32 %v1623, %v1689
    %v1706 = vmax.f32 %v1624, %v1690
    %v1707 = vmax.f32 %v1625, %v1691
    %v1708 = vmax.f32 %v1626, %v1692
    %v1709 = vmax.f32 %v1627, %v1693
    %v1710 = vmax.f32 %v1628, %v1694
    %v1711 = vmax.f32 %v1629, %v1695
    %v1712 = vmax.f32 %v1630, %v1696
    %v1713 = vmax.f32 %v1631, %v1697
    %v1714 = vmax.f32 %v1632, %v1698
    %v1715 = vld [vmem:[%s101 + $0x21] ss:$0 sm:$0xff]
    %v1716 = vsel %vm961, %v1715, -3e+38
    %v1717 = vsel %vm962, %v1715, -3e+38
    %v1718 = vsel %vm963, %v1715, -3e+38
    %v1719 = vsel %vm964, %v1715, -3e+38
    %v1720 = vsel %vm965, %v1715, -3e+38
    %v1721 = vsel %vm966, %v1715, -3e+38
    %v1722 = vsel %vm967, %v1715, -3e+38
    %v1723 = vsel %vm968, %v1715, -3e+38
    %v1724 = vsel %vm969, %v1715, -3e+38
    %v1725 = vsel %vm970, %v1715, -3e+38
    %v1726 = vsel %vm971, %v1715, -3e+38
    %v1727 = vsel %vm972, %v1715, -3e+38
    %v1728 = vsel %vm973, %v1715, -3e+38
    %v1729 = vsel %vm974, %v1715, -3e+38
    %v1730 = vsel %vm975, %v1715, -3e+38
    %v1731 = vsel %vm976, %v1715, -3e+38
    %1732 = vmax.xlane.f32.xlu0 %v1716
    %v1733 = vpop.xlane.xlu0 %1732
    %1734 = vmax.xlane.f32.xlu0 %v1717
    %v1735 = vpop.xlane.xlu0 %1734
    %1736 = vmax.xlane.f32.xlu0 %v1718
    %v1737 = vpop.xlane.xlu0 %1736
    %1738 = vmax.xlane.f32.xlu0 %v1719
    %v1739 = vpop.xlane.xlu0 %1738
    %1740 = vmax.xlane.f32.xlu0 %v1720
    %v1741 = vpop.xlane.xlu0 %1740
    %1742 = vmax.xlane.f32.xlu0 %v1721
    %v1743 = vpop.xlane.xlu0 %1742
    %1744 = vmax.xlane.f32.xlu0 %v1722
    %v1745 = vpop.xlane.xlu0 %1744
    %1746 = vmax.xlane.f32.xlu0 %v1723
    %v1747 = vpop.xlane.xlu0 %1746
    %1748 = vmax.xlane.f32.xlu0 %v1724
    %v1749 = vpop.xlane.xlu0 %1748
    %1750 = vmax.xlane.f32.xlu0 %v1725
    %v1751 = vpop.xlane.xlu0 %1750
    %1752 = vmax.xlane.f32.xlu0 %v1726
    %v1753 = vpop.xlane.xlu0 %1752
    %1754 = vmax.xlane.f32.xlu0 %v1727
    %v1755 = vpop.xlane.xlu0 %1754
    %1756 = vmax.xlane.f32.xlu0 %v1728
    %v1757 = vpop.xlane.xlu0 %1756
    %1758 = vmax.xlane.f32.xlu0 %v1729
    %v1759 = vpop.xlane.xlu0 %1758
    %1760 = vmax.xlane.f32.xlu0 %v1730
    %v1761 = vpop.xlane.xlu0 %1760
    %1762 = vmax.xlane.f32.xlu0 %v1731
    %v1763 = vpop.xlane.xlu0 %1762
    %vm1764 = vcmp.eq.s32.totalorder %v939, 9
    %v1765 = vsel %vm1764, %v1733, -3e+38
    %v1766 = vsel %vm1764, %v1735, -3e+38
    %v1767 = vsel %vm1764, %v1737, -3e+38
    %v1768 = vsel %vm1764, %v1739, -3e+38
    %v1769 = vsel %vm1764, %v1741, -3e+38
    %v1770 = vsel %vm1764, %v1743, -3e+38
    %v1771 = vsel %vm1764, %v1745, -3e+38
    %v1772 = vsel %vm1764, %v1747, -3e+38
    %v1773 = vsel %vm1764, %v1749, -3e+38
    %v1774 = vsel %vm1764, %v1751, -3e+38
    %v1775 = vsel %vm1764, %v1753, -3e+38
    %v1776 = vsel %vm1764, %v1755, -3e+38
    %v1777 = vsel %vm1764, %v1757, -3e+38
    %v1778 = vsel %vm1764, %v1759, -3e+38
    %v1779 = vsel %vm1764, %v1761, -3e+38
    %v1780 = vsel %vm1764, %v1763, -3e+38
    %v1781 = vmax.f32 %v1699, %v1765
    %v1782 = vmax.f32 %v1700, %v1766
    %v1783 = vmax.f32 %v1701, %v1767
    %v1784 = vmax.f32 %v1702, %v1768
    %v1785 = vmax.f32 %v1703, %v1769
    %v1786 = vmax.f32 %v1704, %v1770
    %v1787 = vmax.f32 %v1705, %v1771
    %v1788 = vmax.f32 %v1706, %v1772
    %v1789 = vmax.f32 %v1707, %v1773
    %v1790 = vmax.f32 %v1708, %v1774
    %v1791 = vmax.f32 %v1709, %v1775
    %v1792 = vmax.f32 %v1710, %v1776
    %v1793 = vmax.f32 %v1711, %v1777
    %v1794 = vmax.f32 %v1712, %v1778
    %v1795 = vmax.f32 %v1713, %v1779
    %v1796 = vmax.f32 %v1714, %v1780
    %v1797 = vld [vmem:[%s101 + $0x22] ss:$0 sm:$0xff]
    %v1798 = vsel %vm961, %v1797, -3e+38
    %v1799 = vsel %vm962, %v1797, -3e+38
    %v1800 = vsel %vm963, %v1797, -3e+38
    %v1801 = vsel %vm964, %v1797, -3e+38
    %v1802 = vsel %vm965, %v1797, -3e+38
    %v1803 = vsel %vm966, %v1797, -3e+38
    %v1804 = vsel %vm967, %v1797, -3e+38
    %v1805 = vsel %vm968, %v1797, -3e+38
    %v1806 = vsel %vm969, %v1797, -3e+38
    %v1807 = vsel %vm970, %v1797, -3e+38
    %v1808 = vsel %vm971, %v1797, -3e+38
    %v1809 = vsel %vm972, %v1797, -3e+38
    %v1810 = vsel %vm973, %v1797, -3e+38
    %v1811 = vsel %vm974, %v1797, -3e+38
    %v1812 = vsel %vm975, %v1797, -3e+38
    %v1813 = vsel %vm976, %v1797, -3e+38
    %1814 = vmax.xlane.f32.xlu0 %v1798
    %v1815 = vpop.xlane.xlu0 %1814
    %1816 = vmax.xlane.f32.xlu0 %v1799
    %v1817 = vpop.xlane.xlu0 %1816
    %1818 = vmax.xlane.f32.xlu0 %v1800
    %v1819 = vpop.xlane.xlu0 %1818
    %1820 = vmax.xlane.f32.xlu0 %v1801
    %v1821 = vpop.xlane.xlu0 %1820
    %1822 = vmax.xlane.f32.xlu0 %v1802
    %v1823 = vpop.xlane.xlu0 %1822
    %1824 = vmax.xlane.f32.xlu0 %v1803
    %v1825 = vpop.xlane.xlu0 %1824
    %1826 = vmax.xlane.f32.xlu0 %v1804
    %v1827 = vpop.xlane.xlu0 %1826
    %1828 = vmax.xlane.f32.xlu0 %v1805
    %v1829 = vpop.xlane.xlu0 %1828
    %1830 = vmax.xlane.f32.xlu0 %v1806
    %v1831 = vpop.xlane.xlu0 %1830
    %1832 = vmax.xlane.f32.xlu0 %v1807
    %v1833 = vpop.xlane.xlu0 %1832
    %1834 = vmax.xlane.f32.xlu0 %v1808
    %v1835 = vpop.xlane.xlu0 %1834
    %1836 = vmax.xlane.f32.xlu0 %v1809
    %v1837 = vpop.xlane.xlu0 %1836
    %1838 = vmax.xlane.f32.xlu0 %v1810
    %v1839 = vpop.xlane.xlu0 %1838
    %1840 = vmax.xlane.f32.xlu0 %v1811
    %v1841 = vpop.xlane.xlu0 %1840
    %1842 = vmax.xlane.f32.xlu0 %v1812
    %v1843 = vpop.xlane.xlu0 %1842
    %1844 = vmax.xlane.f32.xlu0 %v1813
    %v1845 = vpop.xlane.xlu0 %1844
    %vm1846 = vcmp.eq.s32.totalorder %v939, 10
    %v1847 = vsel %vm1846, %v1815, -3e+38
    %v1848 = vsel %vm1846, %v1817, -3e+38
    %v1849 = vsel %vm1846, %v1819, -3e+38
    %v1850 = vsel %vm1846, %v1821, -3e+38
    %v1851 = vsel %vm1846, %v1823, -3e+38
    %v1852 = vsel %vm1846, %v1825, -3e+38
    %v1853 = vsel %vm1846, %v1827, -3e+38
    %v1854 = vsel %vm1846, %v1829, -3e+38
    %v1855 = vsel %vm1846, %v1831, -3e+38
    %v1856 = vsel %vm1846, %v1833, -3e+38
    %v1857 = vsel %vm1846, %v1835, -3e+38
    %v1858 = vsel %vm1846, %v1837, -3e+38
    %v1859 = vsel %vm1846, %v1839, -3e+38
    %v1860 = vsel %vm1846, %v1841, -3e+38
    %v1861 = vsel %vm1846, %v1843, -3e+38
    %v1862 = vsel %vm1846, %v1845, -3e+38
    %v1863 = vmax.f32 %v1781, %v1847
    %v1864 = vmax.f32 %v1782, %v1848
    %v1865 = vmax.f32 %v1783, %v1849
    %v1866 = vmax.f32 %v1784, %v1850
    %v1867 = vmax.f32 %v1785, %v1851
    %v1868 = vmax.f32 %v1786, %v1852
    %v1869 = vmax.f32 %v1787, %v1853
    %v1870 = vmax.f32 %v1788, %v1854
    %v1871 = vmax.f32 %v1789, %v1855
    %v1872 = vmax.f32 %v1790, %v1856
    %v1873 = vmax.f32 %v1791, %v1857
    %v1874 = vmax.f32 %v1792, %v1858
    %v1875 = vmax.f32 %v1793, %v1859
    %v1876 = vmax.f32 %v1794, %v1860
    %v1877 = vmax.f32 %v1795, %v1861
    %v1878 = vmax.f32 %v1796, %v1862
    %v1879 = vld [vmem:[%s101 + $0x23] ss:$0 sm:$0xff]
    %v1880 = vsel %vm961, %v1879, -3e+38
    %v1881 = vsel %vm962, %v1879, -3e+38
    %v1882 = vsel %vm963, %v1879, -3e+38
    %v1883 = vsel %vm964, %v1879, -3e+38
    %v1884 = vsel %vm965, %v1879, -3e+38
    %v1885 = vsel %vm966, %v1879, -3e+38
    %v1886 = vsel %vm967, %v1879, -3e+38
    %v1887 = vsel %vm968, %v1879, -3e+38
    %v1888 = vsel %vm969, %v1879, -3e+38
    %v1889 = vsel %vm970, %v1879, -3e+38
    %v1890 = vsel %vm971, %v1879, -3e+38
    %v1891 = vsel %vm972, %v1879, -3e+38
    %v1892 = vsel %vm973, %v1879, -3e+38
    %v1893 = vsel %vm974, %v1879, -3e+38
    %v1894 = vsel %vm975, %v1879, -3e+38
    %v1895 = vsel %vm976, %v1879, -3e+38
    %1896 = vmax.xlane.f32.xlu0 %v1880
    %v1897 = vpop.xlane.xlu0 %1896
    %1898 = vmax.xlane.f32.xlu0 %v1881
    %v1899 = vpop.xlane.xlu0 %1898
    %1900 = vmax.xlane.f32.xlu0 %v1882
    %v1901 = vpop.xlane.xlu0 %1900
    %1902 = vmax.xlane.f32.xlu0 %v1883
    %v1903 = vpop.xlane.xlu0 %1902
    %1904 = vmax.xlane.f32.xlu0 %v1884
    %v1905 = vpop.xlane.xlu0 %1904
    %1906 = vmax.xlane.f32.xlu0 %v1885
    %v1907 = vpop.xlane.xlu0 %1906
    %1908 = vmax.xlane.f32.xlu0 %v1886
    %v1909 = vpop.xlane.xlu0 %1908
    %1910 = vmax.xlane.f32.xlu0 %v1887
    %v1911 = vpop.xlane.xlu0 %1910
    %1912 = vmax.xlane.f32.xlu0 %v1888
    %v1913 = vpop.xlane.xlu0 %1912
    %1914 = vmax.xlane.f32.xlu0 %v1889
    %v1915 = vpop.xlane.xlu0 %1914
    %1916 = vmax.xlane.f32.xlu0 %v1890
    %v1917 = vpop.xlane.xlu0 %1916
    %1918 = vmax.xlane.f32.xlu0 %v1891
    %v1919 = vpop.xlane.xlu0 %1918
    %1920 = vmax.xlane.f32.xlu0 %v1892
    %v1921 = vpop.xlane.xlu0 %1920
    %1922 = vmax.xlane.f32.xlu0 %v1893
    %v1923 = vpop.xlane.xlu0 %1922
    %1924 = vmax.xlane.f32.xlu0 %v1894
    %v1925 = vpop.xlane.xlu0 %1924
    %1926 = vmax.xlane.f32.xlu0 %v1895
    %v1927 = vpop.xlane.xlu0 %1926
    %vm1928 = vcmp.eq.s32.totalorder %v939, 11
    %v1929 = vsel %vm1928, %v1897, -3e+38
    %v1930 = vsel %vm1928, %v1899, -3e+38
    %v1931 = vsel %vm1928, %v1901, -3e+38
    %v1932 = vsel %vm1928, %v1903, -3e+38
    %v1933 = vsel %vm1928, %v1905, -3e+38
    %v1934 = vsel %vm1928, %v1907, -3e+38
    %v1935 = vsel %vm1928, %v1909, -3e+38
    %v1936 = vsel %vm1928, %v1911, -3e+38
    %v1937 = vsel %vm1928, %v1913, -3e+38
    %v1938 = vsel %vm1928, %v1915, -3e+38
    %v1939 = vsel %vm1928, %v1917, -3e+38
    %v1940 = vsel %vm1928, %v1919, -3e+38
    %v1941 = vsel %vm1928, %v1921, -3e+38
    %v1942 = vsel %vm1928, %v1923, -3e+38
    %v1943 = vsel %vm1928, %v1925, -3e+38
    %v1944 = vsel %vm1928, %v1927, -3e+38
    %v1945 = vmax.f32 %v1863, %v1929
    %v1946 = vmax.f32 %v1864, %v1930
    %v1947 = vmax.f32 %v1865, %v1931
    %v1948 = vmax.f32 %v1866, %v1932
    %v1949 = vmax.f32 %v1867, %v1933
    %v1950 = vmax.f32 %v1868, %v1934
    %v1951 = vmax.f32 %v1869, %v1935
    %v1952 = vmax.f32 %v1870, %v1936
    %v1953 = vmax.f32 %v1871, %v1937
    %v1954 = vmax.f32 %v1872, %v1938
    %v1955 = vmax.f32 %v1873, %v1939
    %v1956 = vmax.f32 %v1874, %v1940
    %v1957 = vmax.f32 %v1875, %v1941
    %v1958 = vmax.f32 %v1876, %v1942
    %v1959 = vmax.f32 %v1877, %v1943
    %v1960 = vmax.f32 %v1878, %v1944
    %v1961 = vld [vmem:[%s101 + $0x24] ss:$0 sm:$0xff]
    %v1962 = vsel %vm961, %v1961, -3e+38
    %v1963 = vsel %vm962, %v1961, -3e+38
    %v1964 = vsel %vm963, %v1961, -3e+38
    %v1965 = vsel %vm964, %v1961, -3e+38
    %v1966 = vsel %vm965, %v1961, -3e+38
    %v1967 = vsel %vm966, %v1961, -3e+38
    %v1968 = vsel %vm967, %v1961, -3e+38
    %v1969 = vsel %vm968, %v1961, -3e+38
    %v1970 = vsel %vm969, %v1961, -3e+38
    %v1971 = vsel %vm970, %v1961, -3e+38
    %v1972 = vsel %vm971, %v1961, -3e+38
    %v1973 = vsel %vm972, %v1961, -3e+38
    %v1974 = vsel %vm973, %v1961, -3e+38
    %v1975 = vsel %vm974, %v1961, -3e+38
    %v1976 = vsel %vm975, %v1961, -3e+38
    %v1977 = vsel %vm976, %v1961, -3e+38
    %1978 = vmax.xlane.f32.xlu0 %v1962
    %v1979 = vpop.xlane.xlu0 %1978
    %1980 = vmax.xlane.f32.xlu0 %v1963
    %v1981 = vpop.xlane.xlu0 %1980
    %1982 = vmax.xlane.f32.xlu0 %v1964
    %v1983 = vpop.xlane.xlu0 %1982
    %1984 = vmax.xlane.f32.xlu0 %v1965
    %v1985 = vpop.xlane.xlu0 %1984
    %1986 = vmax.xlane.f32.xlu0 %v1966
    %v1987 = vpop.xlane.xlu0 %1986
    %1988 = vmax.xlane.f32.xlu0 %v1967
    %v1989 = vpop.xlane.xlu0 %1988
    %1990 = vmax.xlane.f32.xlu0 %v1968
    %v1991 = vpop.xlane.xlu0 %1990
    %1992 = vmax.xlane.f32.xlu0 %v1969
    %v1993 = vpop.xlane.xlu0 %1992
    %1994 = vmax.xlane.f32.xlu0 %v1970
    %v1995 = vpop.xlane.xlu0 %1994
    %1996 = vmax.xlane.f32.xlu0 %v1971
    %v1997 = vpop.xlane.xlu0 %1996
    %1998 = vmax.xlane.f32.xlu0 %v1972
    %v1999 = vpop.xlane.xlu0 %1998
    %2000 = vmax.xlane.f32.xlu0 %v1973
    %v2001 = vpop.xlane.xlu0 %2000
    %2002 = vmax.xlane.f32.xlu0 %v1974
    %v2003 = vpop.xlane.xlu0 %2002
    %2004 = vmax.xlane.f32.xlu0 %v1975
    %v2005 = vpop.xlane.xlu0 %2004
    %2006 = vmax.xlane.f32.xlu0 %v1976
    %v2007 = vpop.xlane.xlu0 %2006
    %2008 = vmax.xlane.f32.xlu0 %v1977
    %v2009 = vpop.xlane.xlu0 %2008
    %vm2010 = vcmp.eq.s32.totalorder %v939, 12
    %v2011 = vsel %vm2010, %v1979, -3e+38
    %v2012 = vsel %vm2010, %v1981, -3e+38
    %v2013 = vsel %vm2010, %v1983, -3e+38
    %v2014 = vsel %vm2010, %v1985, -3e+38
    %v2015 = vsel %vm2010, %v1987, -3e+38
    %v2016 = vsel %vm2010, %v1989, -3e+38
    %v2017 = vsel %vm2010, %v1991, -3e+38
    %v2018 = vsel %vm2010, %v1993, -3e+38
    %v2019 = vsel %vm2010, %v1995, -3e+38
    %v2020 = vsel %vm2010, %v1997, -3e+38
    %v2021 = vsel %vm2010, %v1999, -3e+38
    %v2022 = vsel %vm2010, %v2001, -3e+38
    %v2023 = vsel %vm2010, %v2003, -3e+38
    %v2024 = vsel %vm2010, %v2005, -3e+38
    %v2025 = vsel %vm2010, %v2007, -3e+38
    %v2026 = vsel %vm2010, %v2009, -3e+38
    %v2027 = vmax.f32 %v1945, %v2011
    %v2028 = vmax.f32 %v1946, %v2012
    %v2029 = vmax.f32 %v1947, %v2013
    %v2030 = vmax.f32 %v1948, %v2014
    %v2031 = vmax.f32 %v1949, %v2015
    %v2032 = vmax.f32 %v1950, %v2016
    %v2033 = vmax.f32 %v1951, %v2017
    %v2034 = vmax.f32 %v1952, %v2018
    %v2035 = vmax.f32 %v1953, %v2019
    %v2036 = vmax.f32 %v1954, %v2020
    %v2037 = vmax.f32 %v1955, %v2021
    %v2038 = vmax.f32 %v1956, %v2022
    %v2039 = vmax.f32 %v1957, %v2023
    %v2040 = vmax.f32 %v1958, %v2024
    %v2041 = vmax.f32 %v1959, %v2025
    %v2042 = vmax.f32 %v1960, %v2026
    %v2043 = vld [vmem:[%s101 + $0x25] ss:$0 sm:$0xff]
    %v2044 = vsel %vm961, %v2043, -3e+38
    %v2045 = vsel %vm962, %v2043, -3e+38
    %v2046 = vsel %vm963, %v2043, -3e+38
    %v2047 = vsel %vm964, %v2043, -3e+38
    %v2048 = vsel %vm965, %v2043, -3e+38
    %v2049 = vsel %vm966, %v2043, -3e+38
    %v2050 = vsel %vm967, %v2043, -3e+38
    %v2051 = vsel %vm968, %v2043, -3e+38
    %v2052 = vsel %vm969, %v2043, -3e+38
    %v2053 = vsel %vm970, %v2043, -3e+38
    %v2054 = vsel %vm971, %v2043, -3e+38
    %v2055 = vsel %vm972, %v2043, -3e+38
    %v2056 = vsel %vm973, %v2043, -3e+38
    %v2057 = vsel %vm974, %v2043, -3e+38
    %v2058 = vsel %vm975, %v2043, -3e+38
    %v2059 = vsel %vm976, %v2043, -3e+38
    %2060 = vmax.xlane.f32.xlu0 %v2044
    %v2061 = vpop.xlane.xlu0 %2060
    %2062 = vmax.xlane.f32.xlu0 %v2045
    %v2063 = vpop.xlane.xlu0 %2062
    %2064 = vmax.xlane.f32.xlu0 %v2046
    %v2065 = vpop.xlane.xlu0 %2064
    %2066 = vmax.xlane.f32.xlu0 %v2047
    %v2067 = vpop.xlane.xlu0 %2066
    %2068 = vmax.xlane.f32.xlu0 %v2048
    %v2069 = vpop.xlane.xlu0 %2068
    %2070 = vmax.xlane.f32.xlu0 %v2049
    %v2071 = vpop.xlane.xlu0 %2070
    %2072 = vmax.xlane.f32.xlu0 %v2050
    %v2073 = vpop.xlane.xlu0 %2072
    %2074 = vmax.xlane.f32.xlu0 %v2051
    %v2075 = vpop.xlane.xlu0 %2074
    %2076 = vmax.xlane.f32.xlu0 %v2052
    %v2077 = vpop.xlane.xlu0 %2076
    %2078 = vmax.xlane.f32.xlu0 %v2053
    %v2079 = vpop.xlane.xlu0 %2078
    %2080 = vmax.xlane.f32.xlu0 %v2054
    %v2081 = vpop.xlane.xlu0 %2080
    %2082 = vmax.xlane.f32.xlu0 %v2055
    %v2083 = vpop.xlane.xlu0 %2082
    %2084 = vmax.xlane.f32.xlu0 %v2056
    %v2085 = vpop.xlane.xlu0 %2084
    %2086 = vmax.xlane.f32.xlu0 %v2057
    %v2087 = vpop.xlane.xlu0 %2086
    %2088 = vmax.xlane.f32.xlu0 %v2058
    %v2089 = vpop.xlane.xlu0 %2088
    %2090 = vmax.xlane.f32.xlu0 %v2059
    %v2091 = vpop.xlane.xlu0 %2090
    %vm2092 = vcmp.eq.s32.totalorder %v939, 13
    %v2093 = vsel %vm2092, %v2061, -3e+38
    %v2094 = vsel %vm2092, %v2063, -3e+38
    %v2095 = vsel %vm2092, %v2065, -3e+38
    %v2096 = vsel %vm2092, %v2067, -3e+38
    %v2097 = vsel %vm2092, %v2069, -3e+38
    %v2098 = vsel %vm2092, %v2071, -3e+38
    %v2099 = vsel %vm2092, %v2073, -3e+38
    %v2100 = vsel %vm2092, %v2075, -3e+38
    %v2101 = vsel %vm2092, %v2077, -3e+38
    %v2102 = vsel %vm2092, %v2079, -3e+38
    %v2103 = vsel %vm2092, %v2081, -3e+38
    %v2104 = vsel %vm2092, %v2083, -3e+38
    %v2105 = vsel %vm2092, %v2085, -3e+38
    %v2106 = vsel %vm2092, %v2087, -3e+38
    %v2107 = vsel %vm2092, %v2089, -3e+38
    %v2108 = vsel %vm2092, %v2091, -3e+38
    %v2109 = vmax.f32 %v2027, %v2093
    %v2110 = vmax.f32 %v2028, %v2094
    %v2111 = vmax.f32 %v2029, %v2095
    %v2112 = vmax.f32 %v2030, %v2096
    %v2113 = vmax.f32 %v2031, %v2097
    %v2114 = vmax.f32 %v2032, %v2098
    %v2115 = vmax.f32 %v2033, %v2099
    %v2116 = vmax.f32 %v2034, %v2100
    %v2117 = vmax.f32 %v2035, %v2101
    %v2118 = vmax.f32 %v2036, %v2102
    %v2119 = vmax.f32 %v2037, %v2103
    %v2120 = vmax.f32 %v2038, %v2104
    %v2121 = vmax.f32 %v2039, %v2105
    %v2122 = vmax.f32 %v2040, %v2106
    %v2123 = vmax.f32 %v2041, %v2107
    %v2124 = vmax.f32 %v2042, %v2108
    %v2125 = vld [vmem:[%s101 + $0x26] ss:$0 sm:$0xff]
    %v2126 = vsel %vm961, %v2125, -3e+38
    %v2127 = vsel %vm962, %v2125, -3e+38
    %v2128 = vsel %vm963, %v2125, -3e+38
    %v2129 = vsel %vm964, %v2125, -3e+38
    %v2130 = vsel %vm965, %v2125, -3e+38
    %v2131 = vsel %vm966, %v2125, -3e+38
    %v2132 = vsel %vm967, %v2125, -3e+38
    %v2133 = vsel %vm968, %v2125, -3e+38
    %v2134 = vsel %vm969, %v2125, -3e+38
    %v2135 = vsel %vm970, %v2125, -3e+38
    %v2136 = vsel %vm971, %v2125, -3e+38
    %v2137 = vsel %vm972, %v2125, -3e+38
    %v2138 = vsel %vm973, %v2125, -3e+38
    %v2139 = vsel %vm974, %v2125, -3e+38
    %v2140 = vsel %vm975, %v2125, -3e+38
    %v2141 = vsel %vm976, %v2125, -3e+38
    %2142 = vmax.xlane.f32.xlu0 %v2126
    %v2143 = vpop.xlane.xlu0 %2142
    %2144 = vmax.xlane.f32.xlu0 %v2127
    %v2145 = vpop.xlane.xlu0 %2144
    %2146 = vmax.xlane.f32.xlu0 %v2128
    %v2147 = vpop.xlane.xlu0 %2146
    %2148 = vmax.xlane.f32.xlu0 %v2129
    %v2149 = vpop.xlane.xlu0 %2148
    %2150 = vmax.xlane.f32.xlu0 %v2130
    %v2151 = vpop.xlane.xlu0 %2150
    %2152 = vmax.xlane.f32.xlu0 %v2131
    %v2153 = vpop.xlane.xlu0 %2152
    %2154 = vmax.xlane.f32.xlu0 %v2132
    %v2155 = vpop.xlane.xlu0 %2154
    %2156 = vmax.xlane.f32.xlu0 %v2133
    %v2157 = vpop.xlane.xlu0 %2156
    %2158 = vmax.xlane.f32.xlu0 %v2134
    %v2159 = vpop.xlane.xlu0 %2158
    %2160 = vmax.xlane.f32.xlu0 %v2135
    %v2161 = vpop.xlane.xlu0 %2160
    %2162 = vmax.xlane.f32.xlu0 %v2136
    %v2163 = vpop.xlane.xlu0 %2162
    %2164 = vmax.xlane.f32.xlu0 %v2137
    %v2165 = vpop.xlane.xlu0 %2164
    %2166 = vmax.xlane.f32.xlu0 %v2138
    %v2167 = vpop.xlane.xlu0 %2166
    %2168 = vmax.xlane.f32.xlu0 %v2139
    %v2169 = vpop.xlane.xlu0 %2168
    %2170 = vmax.xlane.f32.xlu0 %v2140
    %v2171 = vpop.xlane.xlu0 %2170
    %2172 = vmax.xlane.f32.xlu0 %v2141
    %v2173 = vpop.xlane.xlu0 %2172
    %vm2174 = vcmp.eq.s32.totalorder %v939, 14
    %v2175 = vsel %vm2174, %v2143, -3e+38
    %v2176 = vsel %vm2174, %v2145, -3e+38
    %v2177 = vsel %vm2174, %v2147, -3e+38
    %v2178 = vsel %vm2174, %v2149, -3e+38
    %v2179 = vsel %vm2174, %v2151, -3e+38
    %v2180 = vsel %vm2174, %v2153, -3e+38
    %v2181 = vsel %vm2174, %v2155, -3e+38
    %v2182 = vsel %vm2174, %v2157, -3e+38
    %v2183 = vsel %vm2174, %v2159, -3e+38
    %v2184 = vsel %vm2174, %v2161, -3e+38
    %v2185 = vsel %vm2174, %v2163, -3e+38
    %v2186 = vsel %vm2174, %v2165, -3e+38
    %v2187 = vsel %vm2174, %v2167, -3e+38
    %v2188 = vsel %vm2174, %v2169, -3e+38
    %v2189 = vsel %vm2174, %v2171, -3e+38
    %v2190 = vsel %vm2174, %v2173, -3e+38
    %v2191 = vmax.f32 %v2109, %v2175
    %v2192 = vmax.f32 %v2110, %v2176
    %v2193 = vmax.f32 %v2111, %v2177
    %v2194 = vmax.f32 %v2112, %v2178
    %v2195 = vmax.f32 %v2113, %v2179
    %v2196 = vmax.f32 %v2114, %v2180
    %v2197 = vmax.f32 %v2115, %v2181
    %v2198 = vmax.f32 %v2116, %v2182
    %v2199 = vmax.f32 %v2117, %v2183
    %v2200 = vmax.f32 %v2118, %v2184
    %v2201 = vmax.f32 %v2119, %v2185
    %v2202 = vmax.f32 %v2120, %v2186
    %v2203 = vmax.f32 %v2121, %v2187
    %v2204 = vmax.f32 %v2122, %v2188
    %v2205 = vmax.f32 %v2123, %v2189
    %v2206 = vmax.f32 %v2124, %v2190
    %v2207 = vld [vmem:[%s101 + $0x27] ss:$0 sm:$0xff]
    %v2208 = vsel %vm961, %v2207, -3e+38
    %v2209 = vsel %vm962, %v2207, -3e+38
    %v2210 = vsel %vm963, %v2207, -3e+38
    %v2211 = vsel %vm964, %v2207, -3e+38
    %v2212 = vsel %vm965, %v2207, -3e+38
    %v2213 = vsel %vm966, %v2207, -3e+38
    %v2214 = vsel %vm967, %v2207, -3e+38
    %v2215 = vsel %vm968, %v2207, -3e+38
    %v2216 = vsel %vm969, %v2207, -3e+38
    %v2217 = vsel %vm970, %v2207, -3e+38
    %v2218 = vsel %vm971, %v2207, -3e+38
    %v2219 = vsel %vm972, %v2207, -3e+38
    %v2220 = vsel %vm973, %v2207, -3e+38
    %v2221 = vsel %vm974, %v2207, -3e+38
    %v2222 = vsel %vm975, %v2207, -3e+38
    %v2223 = vsel %vm976, %v2207, -3e+38
    %2224 = vmax.xlane.f32.xlu0 %v2208
    %v2225 = vpop.xlane.xlu0 %2224
    %2226 = vmax.xlane.f32.xlu0 %v2209
    %v2227 = vpop.xlane.xlu0 %2226
    %2228 = vmax.xlane.f32.xlu0 %v2210
    %v2229 = vpop.xlane.xlu0 %2228
    %2230 = vmax.xlane.f32.xlu0 %v2211
    %v2231 = vpop.xlane.xlu0 %2230
    %2232 = vmax.xlane.f32.xlu0 %v2212
    %v2233 = vpop.xlane.xlu0 %2232
    %2234 = vmax.xlane.f32.xlu0 %v2213
    %v2235 = vpop.xlane.xlu0 %2234
    %2236 = vmax.xlane.f32.xlu0 %v2214
    %v2237 = vpop.xlane.xlu0 %2236
    %2238 = vmax.xlane.f32.xlu0 %v2215
    %v2239 = vpop.xlane.xlu0 %2238
    %2240 = vmax.xlane.f32.xlu0 %v2216
    %v2241 = vpop.xlane.xlu0 %2240
    %2242 = vmax.xlane.f32.xlu0 %v2217
    %v2243 = vpop.xlane.xlu0 %2242
    %2244 = vmax.xlane.f32.xlu0 %v2218
    %v2245 = vpop.xlane.xlu0 %2244
    %2246 = vmax.xlane.f32.xlu0 %v2219
    %v2247 = vpop.xlane.xlu0 %2246
    %2248 = vmax.xlane.f32.xlu0 %v2220
    %v2249 = vpop.xlane.xlu0 %2248
    %2250 = vmax.xlane.f32.xlu0 %v2221
    %v2251 = vpop.xlane.xlu0 %2250
    %2252 = vmax.xlane.f32.xlu0 %v2222
    %v2253 = vpop.xlane.xlu0 %2252
    %2254 = vmax.xlane.f32.xlu0 %v2223
    %v2255 = vpop.xlane.xlu0 %2254
    %vm2256 = vcmp.eq.s32.totalorder %v939, 15
    %v2257 = vsel %vm2256, %v2225, -3e+38
    %v2258 = vsel %vm2256, %v2227, -3e+38
    %v2259 = vsel %vm2256, %v2229, -3e+38
    %v2260 = vsel %vm2256, %v2231, -3e+38
    %v2261 = vsel %vm2256, %v2233, -3e+38
    %v2262 = vsel %vm2256, %v2235, -3e+38
    %v2263 = vsel %vm2256, %v2237, -3e+38
    %v2264 = vsel %vm2256, %v2239, -3e+38
    %v2265 = vsel %vm2256, %v2241, -3e+38
    %v2266 = vsel %vm2256, %v2243, -3e+38
    %v2267 = vsel %vm2256, %v2245, -3e+38
    %v2268 = vsel %vm2256, %v2247, -3e+38
    %v2269 = vsel %vm2256, %v2249, -3e+38
    %v2270 = vsel %vm2256, %v2251, -3e+38
    %v2271 = vsel %vm2256, %v2253, -3e+38
    %v2272 = vsel %vm2256, %v2255, -3e+38
    %v2273 = vmax.f32 %v2191, %v2257
    %v2274 = vmax.f32 %v2192, %v2258
    %v2275 = vmax.f32 %v2193, %v2259
    %v2276 = vmax.f32 %v2194, %v2260
    %v2277 = vmax.f32 %v2195, %v2261
    %v2278 = vmax.f32 %v2196, %v2262
    %v2279 = vmax.f32 %v2197, %v2263
    %v2280 = vmax.f32 %v2198, %v2264
    %v2281 = vmax.f32 %v2199, %v2265
    %v2282 = vmax.f32 %v2200, %v2266
    %v2283 = vmax.f32 %v2201, %v2267
    %v2284 = vmax.f32 %v2202, %v2268
    %v2285 = vmax.f32 %v2203, %v2269
    %v2286 = vmax.f32 %v2204, %v2270
    %v2287 = vmax.f32 %v2205, %v2271
    %v2288 = vmax.f32 %v2206, %v2272
    %v2289 = vld [vmem:[%s81 + $0x1] sm:$0x1]
    %v2290 = vlaneseq
    %v2291 = vshrl.u32 %v2290, 7
    %v2292 = vsub.s32 0, %v2291
    %v2293 = vrot.slane %v2289, %v2292
    %vm2294 = vcmp.eq.s32.totalorder %v2293, %v183
    %vm2295 = vcmp.eq.s32.totalorder %v2293, %v184
    %vm2296 = vcmp.eq.s32.totalorder %v2293, %v185
    %vm2297 = vcmp.eq.s32.totalorder %v2293, %v186
    %vm2298 = vcmp.eq.s32.totalorder %v2293, %v187
    %vm2299 = vcmp.eq.s32.totalorder %v2293, %v188
    %vm2300 = vcmp.eq.s32.totalorder %v2293, %v189
    %vm2301 = vcmp.eq.s32.totalorder %v2293, %v190
    %vm2302 = vcmp.eq.s32.totalorder %v2293, %v191
    %vm2303 = vcmp.eq.s32.totalorder %v2293, %v192
    %vm2304 = vcmp.eq.s32.totalorder %v2293, %v193
    %vm2305 = vcmp.eq.s32.totalorder %v2293, %v194
    %vm2306 = vcmp.eq.s32.totalorder %v2293, %v195
    %vm2307 = vcmp.eq.s32.totalorder %v2293, %v196
    %vm2308 = vcmp.eq.s32.totalorder %v2293, %v197
    %vm2309 = vcmp.eq.s32.totalorder %v2293, %v198
    %v2310 = vld [vmem:[%s101 + $0x8] ss:$0 sm:$0xff]
    %v2311 = vsel %vm2294, %v2310, -3e+38
    %v2312 = vsel %vm2295, %v2310, -3e+38
    %v2313 = vsel %vm2296, %v2310, -3e+38
    %v2314 = vsel %vm2297, %v2310, -3e+38
    %v2315 = vsel %vm2298, %v2310, -3e+38
    %v2316 = vsel %vm2299, %v2310, -3e+38
    %v2317 = vsel %vm2300, %v2310, -3e+38
    %v2318 = vsel %vm2301, %v2310, -3e+38
    %v2319 = vsel %vm2302, %v2310, -3e+38
    %v2320 = vsel %vm2303, %v2310, -3e+38
    %v2321 = vsel %vm2304, %v2310, -3e+38
    %v2322 = vsel %vm2305, %v2310, -3e+38
    %v2323 = vsel %vm2306, %v2310, -3e+38
    %v2324 = vsel %vm2307, %v2310, -3e+38
    %v2325 = vsel %vm2308, %v2310, -3e+38
    %v2326 = vsel %vm2309, %v2310, -3e+38
    %2327 = vmax.xlane.f32.xlu0 %v2311
    %v2328 = vpop.xlane.xlu0 %2327
    %2329 = vmax.xlane.f32.xlu0 %v2312
    %v2330 = vpop.xlane.xlu0 %2329
    %2331 = vmax.xlane.f32.xlu0 %v2313
    %v2332 = vpop.xlane.xlu0 %2331
    %2333 = vmax.xlane.f32.xlu0 %v2314
    %v2334 = vpop.xlane.xlu0 %2333
    %2335 = vmax.xlane.f32.xlu0 %v2315
    %v2336 = vpop.xlane.xlu0 %2335
    %2337 = vmax.xlane.f32.xlu0 %v2316
    %v2338 = vpop.xlane.xlu0 %2337
    %2339 = vmax.xlane.f32.xlu0 %v2317
    %v2340 = vpop.xlane.xlu0 %2339
    %2341 = vmax.xlane.f32.xlu0 %v2318
    %v2342 = vpop.xlane.xlu0 %2341
    %2343 = vmax.xlane.f32.xlu0 %v2319
    %v2344 = vpop.xlane.xlu0 %2343
    %2345 = vmax.xlane.f32.xlu0 %v2320
    %v2346 = vpop.xlane.xlu0 %2345
    %2347 = vmax.xlane.f32.xlu0 %v2321
    %v2348 = vpop.xlane.xlu0 %2347
    %2349 = vmax.xlane.f32.xlu0 %v2322
    %v2350 = vpop.xlane.xlu0 %2349
    %2351 = vmax.xlane.f32.xlu0 %v2323
    %v2352 = vpop.xlane.xlu0 %2351
    %2353 = vmax.xlane.f32.xlu0 %v2324
    %v2354 = vpop.xlane.xlu0 %2353
    %2355 = vmax.xlane.f32.xlu0 %v2325
    %v2356 = vpop.xlane.xlu0 %2355
    %2357 = vmax.xlane.f32.xlu0 %v2326
    %v2358 = vpop.xlane.xlu0 %2357
    %v2359 = vsel %vm1026, %v2328, -3e+38
    %v2360 = vsel %vm1026, %v2330, -3e+38
    %v2361 = vsel %vm1026, %v2332, -3e+38
    %v2362 = vsel %vm1026, %v2334, -3e+38
    %v2363 = vsel %vm1026, %v2336, -3e+38
    %v2364 = vsel %vm1026, %v2338, -3e+38
    %v2365 = vsel %vm1026, %v2340, -3e+38
    %v2366 = vsel %vm1026, %v2342, -3e+38
    %v2367 = vsel %vm1026, %v2344, -3e+38
    %v2368 = vsel %vm1026, %v2346, -3e+38
    %v2369 = vsel %vm1026, %v2348, -3e+38
    %v2370 = vsel %vm1026, %v2350, -3e+38
    %v2371 = vsel %vm1026, %v2352, -3e+38
    %v2372 = vsel %vm1026, %v2354, -3e+38
    %v2373 = vsel %vm1026, %v2356, -3e+38
    %v2374 = vsel %vm1026, %v2358, -3e+38
    %v2375 = vmax.f32 %v2273, %v2359
    %v2376 = vmax.f32 %v2274, %v2360
    %v2377 = vmax.f32 %v2275, %v2361
    %v2378 = vmax.f32 %v2276, %v2362
    %v2379 = vmax.f32 %v2277, %v2363
    %v2380 = vmax.f32 %v2278, %v2364
    %v2381 = vmax.f32 %v2279, %v2365
    %v2382 = vmax.f32 %v2280, %v2366
    %v2383 = vmax.f32 %v2281, %v2367
    %v2384 = vmax.f32 %v2282, %v2368
    %v2385 = vmax.f32 %v2283, %v2369
    %v2386 = vmax.f32 %v2284, %v2370
    %v2387 = vmax.f32 %v2285, %v2371
    %v2388 = vmax.f32 %v2286, %v2372
    %v2389 = vmax.f32 %v2287, %v2373
    %v2390 = vmax.f32 %v2288, %v2374
    %v2391 = vld [vmem:[%s101 + $0x9] ss:$0 sm:$0xff]
    %v2392 = vsel %vm2294, %v2391, -3e+38
    %v2393 = vsel %vm2295, %v2391, -3e+38
    %v2394 = vsel %vm2296, %v2391, -3e+38
    %v2395 = vsel %vm2297, %v2391, -3e+38
    %v2396 = vsel %vm2298, %v2391, -3e+38
    %v2397 = vsel %vm2299, %v2391, -3e+38
    %v2398 = vsel %vm2300, %v2391, -3e+38
    %v2399 = vsel %vm2301, %v2391, -3e+38
    %v2400 = vsel %vm2302, %v2391, -3e+38
    %v2401 = vsel %vm2303, %v2391, -3e+38
    %v2402 = vsel %vm2304, %v2391, -3e+38
    %v2403 = vsel %vm2305, %v2391, -3e+38
    %v2404 = vsel %vm2306, %v2391, -3e+38
    %v2405 = vsel %vm2307, %v2391, -3e+38
    %v2406 = vsel %vm2308, %v2391, -3e+38
    %v2407 = vsel %vm2309, %v2391, -3e+38
    %2408 = vmax.xlane.f32.xlu0 %v2392
    %v2409 = vpop.xlane.xlu0 %2408
    %2410 = vmax.xlane.f32.xlu0 %v2393
    %v2411 = vpop.xlane.xlu0 %2410
    %2412 = vmax.xlane.f32.xlu0 %v2394
    %v2413 = vpop.xlane.xlu0 %2412
    %2414 = vmax.xlane.f32.xlu0 %v2395
    %v2415 = vpop.xlane.xlu0 %2414
    %2416 = vmax.xlane.f32.xlu0 %v2396
    %v2417 = vpop.xlane.xlu0 %2416
    %2418 = vmax.xlane.f32.xlu0 %v2397
    %v2419 = vpop.xlane.xlu0 %2418
    %2420 = vmax.xlane.f32.xlu0 %v2398
    %v2421 = vpop.xlane.xlu0 %2420
    %2422 = vmax.xlane.f32.xlu0 %v2399
    %v2423 = vpop.xlane.xlu0 %2422
    %2424 = vmax.xlane.f32.xlu0 %v2400
    %v2425 = vpop.xlane.xlu0 %2424
    %2426 = vmax.xlane.f32.xlu0 %v2401
    %v2427 = vpop.xlane.xlu0 %2426
    %2428 = vmax.xlane.f32.xlu0 %v2402
    %v2429 = vpop.xlane.xlu0 %2428
    %2430 = vmax.xlane.f32.xlu0 %v2403
    %v2431 = vpop.xlane.xlu0 %2430
    %2432 = vmax.xlane.f32.xlu0 %v2404
    %v2433 = vpop.xlane.xlu0 %2432
    %2434 = vmax.xlane.f32.xlu0 %v2405
    %v2435 = vpop.xlane.xlu0 %2434
    %2436 = vmax.xlane.f32.xlu0 %v2406
    %v2437 = vpop.xlane.xlu0 %2436
    %2438 = vmax.xlane.f32.xlu0 %v2407
    %v2439 = vpop.xlane.xlu0 %2438
    %v2440 = vsel %vm1108, %v2409, -3e+38
    %v2441 = vsel %vm1108, %v2411, -3e+38
    %v2442 = vsel %vm1108, %v2413, -3e+38
    %v2443 = vsel %vm1108, %v2415, -3e+38
    %v2444 = vsel %vm1108, %v2417, -3e+38
    %v2445 = vsel %vm1108, %v2419, -3e+38
    %v2446 = vsel %vm1108, %v2421, -3e+38
    %v2447 = vsel %vm1108, %v2423, -3e+38
    %v2448 = vsel %vm1108, %v2425, -3e+38
    %v2449 = vsel %vm1108, %v2427, -3e+38
    %v2450 = vsel %vm1108, %v2429, -3e+38
    %v2451 = vsel %vm1108, %v2431, -3e+38
    %v2452 = vsel %vm1108, %v2433, -3e+38
    %v2453 = vsel %vm1108, %v2435, -3e+38
    %v2454 = vsel %vm1108, %v2437, -3e+38
    %v2455 = vsel %vm1108, %v2439, -3e+38
    %v2456 = vmax.f32 %v2375, %v2440
    %v2457 = vmax.f32 %v2376, %v2441
    %v2458 = vmax.f32 %v2377, %v2442
    %v2459 = vmax.f32 %v2378, %v2443
    %v2460 = vmax.f32 %v2379, %v2444
    %v2461 = vmax.f32 %v2380, %v2445
    %v2462 = vmax.f32 %v2381, %v2446
    %v2463 = vmax.f32 %v2382, %v2447
    %v2464 = vmax.f32 %v2383, %v2448
    %v2465 = vmax.f32 %v2384, %v2449
    %v2466 = vmax.f32 %v2385, %v2450
    %v2467 = vmax.f32 %v2386, %v2451
    %v2468 = vmax.f32 %v2387, %v2452
    %v2469 = vmax.f32 %v2388, %v2453
    %v2470 = vmax.f32 %v2389, %v2454
    %v2471 = vmax.f32 %v2390, %v2455
    %v2472 = vld [vmem:[%s101 + $0xa] ss:$0 sm:$0xff]
    %v2473 = vsel %vm2294, %v2472, -3e+38
    %v2474 = vsel %vm2295, %v2472, -3e+38
    %v2475 = vsel %vm2296, %v2472, -3e+38
    %v2476 = vsel %vm2297, %v2472, -3e+38
    %v2477 = vsel %vm2298, %v2472, -3e+38
    %v2478 = vsel %vm2299, %v2472, -3e+38
    %v2479 = vsel %vm2300, %v2472, -3e+38
    %v2480 = vsel %vm2301, %v2472, -3e+38
    %v2481 = vsel %vm2302, %v2472, -3e+38
    %v2482 = vsel %vm2303, %v2472, -3e+38
    %v2483 = vsel %vm2304, %v2472, -3e+38
    %v2484 = vsel %vm2305, %v2472, -3e+38
    %v2485 = vsel %vm2306, %v2472, -3e+38
    %v2486 = vsel %vm2307, %v2472, -3e+38
    %v2487 = vsel %vm2308, %v2472, -3e+38
    %v2488 = vsel %vm2309, %v2472, -3e+38
    %2489 = vmax.xlane.f32.xlu0 %v2473
    %v2490 = vpop.xlane.xlu0 %2489
    %2491 = vmax.xlane.f32.xlu0 %v2474
    %v2492 = vpop.xlane.xlu0 %2491
    %2493 = vmax.xlane.f32.xlu0 %v2475
    %v2494 = vpop.xlane.xlu0 %2493
    %2495 = vmax.xlane.f32.xlu0 %v2476
    %v2496 = vpop.xlane.xlu0 %2495
    %2497 = vmax.xlane.f32.xlu0 %v2477
    %v2498 = vpop.xlane.xlu0 %2497
    %2499 = vmax.xlane.f32.xlu0 %v2478
    %v2500 = vpop.xlane.xlu0 %2499
    %2501 = vmax.xlane.f32.xlu0 %v2479
    %v2502 = vpop.xlane.xlu0 %2501
    %2503 = vmax.xlane.f32.xlu0 %v2480
    %v2504 = vpop.xlane.xlu0 %2503
    %2505 = vmax.xlane.f32.xlu0 %v2481
    %v2506 = vpop.xlane.xlu0 %2505
    %2507 = vmax.xlane.f32.xlu0 %v2482
    %v2508 = vpop.xlane.xlu0 %2507
    %2509 = vmax.xlane.f32.xlu0 %v2483
    %v2510 = vpop.xlane.xlu0 %2509
    %2511 = vmax.xlane.f32.xlu0 %v2484
    %v2512 = vpop.xlane.xlu0 %2511
    %2513 = vmax.xlane.f32.xlu0 %v2485
    %v2514 = vpop.xlane.xlu0 %2513
    %2515 = vmax.xlane.f32.xlu0 %v2486
    %v2516 = vpop.xlane.xlu0 %2515
    %2517 = vmax.xlane.f32.xlu0 %v2487
    %v2518 = vpop.xlane.xlu0 %2517
    %2519 = vmax.xlane.f32.xlu0 %v2488
    %v2520 = vpop.xlane.xlu0 %2519
    %v2521 = vsel %vm1190, %v2490, -3e+38
    %v2522 = vsel %vm1190, %v2492, -3e+38
    %v2523 = vsel %vm1190, %v2494, -3e+38
    %v2524 = vsel %vm1190, %v2496, -3e+38
    %v2525 = vsel %vm1190, %v2498, -3e+38
    %v2526 = vsel %vm1190, %v2500, -3e+38
    %v2527 = vsel %vm1190, %v2502, -3e+38
    %v2528 = vsel %vm1190, %v2504, -3e+38
    %v2529 = vsel %vm1190, %v2506, -3e+38
    %v2530 = vsel %vm1190, %v2508, -3e+38
    %v2531 = vsel %vm1190, %v2510, -3e+38
    %v2532 = vsel %vm1190, %v2512, -3e+38
    %v2533 = vsel %vm1190, %v2514, -3e+38
    %v2534 = vsel %vm1190, %v2516, -3e+38
    %v2535 = vsel %vm1190, %v2518, -3e+38
    %v2536 = vsel %vm1190, %v2520, -3e+38
    %v2537 = vmax.f32 %v2456, %v2521
    %v2538 = vmax.f32 %v2457, %v2522
    %v2539 = vmax.f32 %v2458, %v2523
    %v2540 = vmax.f32 %v2459, %v2524
    %v2541 = vmax.f32 %v2460, %v2525
    %v2542 = vmax.f32 %v2461, %v2526
    %v2543 = vmax.f32 %v2462, %v2527
    %v2544 = vmax.f32 %v2463, %v2528
    %v2545 = vmax.f32 %v2464, %v2529
    %v2546 = vmax.f32 %v2465, %v2530
    %v2547 = vmax.f32 %v2466, %v2531
    %v2548 = vmax.f32 %v2467, %v2532
    %v2549 = vmax.f32 %v2468, %v2533
    %v2550 = vmax.f32 %v2469, %v2534
    %v2551 = vmax.f32 %v2470, %v2535
    %v2552 = vmax.f32 %v2471, %v2536
    %v2553 = vld [vmem:[%s101 + $0xb] ss:$0 sm:$0xff]
    %v2554 = vsel %vm2294, %v2553, -3e+38
    %v2555 = vsel %vm2295, %v2553, -3e+38
    %v2556 = vsel %vm2296, %v2553, -3e+38
    %v2557 = vsel %vm2297, %v2553, -3e+38
    %v2558 = vsel %vm2298, %v2553, -3e+38
    %v2559 = vsel %vm2299, %v2553, -3e+38
    %v2560 = vsel %vm2300, %v2553, -3e+38
    %v2561 = vsel %vm2301, %v2553, -3e+38
    %v2562 = vsel %vm2302, %v2553, -3e+38
    %v2563 = vsel %vm2303, %v2553, -3e+38
    %v2564 = vsel %vm2304, %v2553, -3e+38
    %v2565 = vsel %vm2305, %v2553, -3e+38
    %v2566 = vsel %vm2306, %v2553, -3e+38
    %v2567 = vsel %vm2307, %v2553, -3e+38
    %v2568 = vsel %vm2308, %v2553, -3e+38
    %v2569 = vsel %vm2309, %v2553, -3e+38
    %2570 = vmax.xlane.f32.xlu0 %v2554
    %v2571 = vpop.xlane.xlu0 %2570
    %2572 = vmax.xlane.f32.xlu0 %v2555
    %v2573 = vpop.xlane.xlu0 %2572
    %2574 = vmax.xlane.f32.xlu0 %v2556
    %v2575 = vpop.xlane.xlu0 %2574
    %2576 = vmax.xlane.f32.xlu0 %v2557
    %v2577 = vpop.xlane.xlu0 %2576
    %2578 = vmax.xlane.f32.xlu0 %v2558
    %v2579 = vpop.xlane.xlu0 %2578
    %2580 = vmax.xlane.f32.xlu0 %v2559
    %v2581 = vpop.xlane.xlu0 %2580
    %2582 = vmax.xlane.f32.xlu0 %v2560
    %v2583 = vpop.xlane.xlu0 %2582
    %2584 = vmax.xlane.f32.xlu0 %v2561
    %v2585 = vpop.xlane.xlu0 %2584
    %2586 = vmax.xlane.f32.xlu0 %v2562
    %v2587 = vpop.xlane.xlu0 %2586
    %2588 = vmax.xlane.f32.xlu0 %v2563
    %v2589 = vpop.xlane.xlu0 %2588
    %2590 = vmax.xlane.f32.xlu0 %v2564
    %v2591 = vpop.xlane.xlu0 %2590
    %2592 = vmax.xlane.f32.xlu0 %v2565
    %v2593 = vpop.xlane.xlu0 %2592
    %2594 = vmax.xlane.f32.xlu0 %v2566
    %v2595 = vpop.xlane.xlu0 %2594
    %2596 = vmax.xlane.f32.xlu0 %v2567
    %v2597 = vpop.xlane.xlu0 %2596
    %2598 = vmax.xlane.f32.xlu0 %v2568
    %v2599 = vpop.xlane.xlu0 %2598
    %2600 = vmax.xlane.f32.xlu0 %v2569
    %v2601 = vpop.xlane.xlu0 %2600
    %v2602 = vsel %vm1272, %v2571, -3e+38
    %v2603 = vsel %vm1272, %v2573, -3e+38
    %v2604 = vsel %vm1272, %v2575, -3e+38
    %v2605 = vsel %vm1272, %v2577, -3e+38
    %v2606 = vsel %vm1272, %v2579, -3e+38
    %v2607 = vsel %vm1272, %v2581, -3e+38
    %v2608 = vsel %vm1272, %v2583, -3e+38
    %v2609 = vsel %vm1272, %v2585, -3e+38
    %v2610 = vsel %vm1272, %v2587, -3e+38
    %v2611 = vsel %vm1272, %v2589, -3e+38
    %v2612 = vsel %vm1272, %v2591, -3e+38
    %v2613 = vsel %vm1272, %v2593, -3e+38
    %v2614 = vsel %vm1272, %v2595, -3e+38
    %v2615 = vsel %vm1272, %v2597, -3e+38
    %v2616 = vsel %vm1272, %v2599, -3e+38
    %v2617 = vsel %vm1272, %v2601, -3e+38
    %v2618 = vmax.f32 %v2537, %v2602
    %v2619 = vmax.f32 %v2538, %v2603
    %v2620 = vmax.f32 %v2539, %v2604
    %v2621 = vmax.f32 %v2540, %v2605
    %v2622 = vmax.f32 %v2541, %v2606
    %v2623 = vmax.f32 %v2542, %v2607
    %v2624 = vmax.f32 %v2543, %v2608
    %v2625 = vmax.f32 %v2544, %v2609
    %v2626 = vmax.f32 %v2545, %v2610
    %v2627 = vmax.f32 %v2546, %v2611
    %v2628 = vmax.f32 %v2547, %v2612
    %v2629 = vmax.f32 %v2548, %v2613
    %v2630 = vmax.f32 %v2549, %v2614
    %v2631 = vmax.f32 %v2550, %v2615
    %v2632 = vmax.f32 %v2551, %v2616
    %v2633 = vmax.f32 %v2552, %v2617
    %v2634 = vld [vmem:[%s101 + $0xc] ss:$0 sm:$0xff]
    %v2635 = vsel %vm2294, %v2634, -3e+38
    %v2636 = vsel %vm2295, %v2634, -3e+38
    %v2637 = vsel %vm2296, %v2634, -3e+38
    %v2638 = vsel %vm2297, %v2634, -3e+38
    %v2639 = vsel %vm2298, %v2634, -3e+38
    %v2640 = vsel %vm2299, %v2634, -3e+38
    %v2641 = vsel %vm2300, %v2634, -3e+38
    %v2642 = vsel %vm2301, %v2634, -3e+38
    %v2643 = vsel %vm2302, %v2634, -3e+38
    %v2644 = vsel %vm2303, %v2634, -3e+38
    %v2645 = vsel %vm2304, %v2634, -3e+38
    %v2646 = vsel %vm2305, %v2634, -3e+38
    %v2647 = vsel %vm2306, %v2634, -3e+38
    %v2648 = vsel %vm2307, %v2634, -3e+38
    %v2649 = vsel %vm2308, %v2634, -3e+38
    %v2650 = vsel %vm2309, %v2634, -3e+38
    %2651 = vmax.xlane.f32.xlu0 %v2635
    %v2652 = vpop.xlane.xlu0 %2651
    %2653 = vmax.xlane.f32.xlu0 %v2636
    %v2654 = vpop.xlane.xlu0 %2653
    %2655 = vmax.xlane.f32.xlu0 %v2637
    %v2656 = vpop.xlane.xlu0 %2655
    %2657 = vmax.xlane.f32.xlu0 %v2638
    %v2658 = vpop.xlane.xlu0 %2657
    %2659 = vmax.xlane.f32.xlu0 %v2639
    %v2660 = vpop.xlane.xlu0 %2659
    %2661 = vmax.xlane.f32.xlu0 %v2640
    %v2662 = vpop.xlane.xlu0 %2661
    %2663 = vmax.xlane.f32.xlu0 %v2641
    %v2664 = vpop.xlane.xlu0 %2663
    %2665 = vmax.xlane.f32.xlu0 %v2642
    %v2666 = vpop.xlane.xlu0 %2665
    %2667 = vmax.xlane.f32.xlu0 %v2643
    %v2668 = vpop.xlane.xlu0 %2667
    %2669 = vmax.xlane.f32.xlu0 %v2644
    %v2670 = vpop.xlane.xlu0 %2669
    %2671 = vmax.xlane.f32.xlu0 %v2645
    %v2672 = vpop.xlane.xlu0 %2671
    %2673 = vmax.xlane.f32.xlu0 %v2646
    %v2674 = vpop.xlane.xlu0 %2673
    %2675 = vmax.xlane.f32.xlu0 %v2647
    %v2676 = vpop.xlane.xlu0 %2675
    %2677 = vmax.xlane.f32.xlu0 %v2648
    %v2678 = vpop.xlane.xlu0 %2677
    %2679 = vmax.xlane.f32.xlu0 %v2649
    %v2680 = vpop.xlane.xlu0 %2679
    %2681 = vmax.xlane.f32.xlu0 %v2650
    %v2682 = vpop.xlane.xlu0 %2681
    %v2683 = vsel %vm1354, %v2652, -3e+38
    %v2684 = vsel %vm1354, %v2654, -3e+38
    %v2685 = vsel %vm1354, %v2656, -3e+38
    %v2686 = vsel %vm1354, %v2658, -3e+38
    %v2687 = vsel %vm1354, %v2660, -3e+38
    %v2688 = vsel %vm1354, %v2662, -3e+38
    %v2689 = vsel %vm1354, %v2664, -3e+38
    %v2690 = vsel %vm1354, %v2666, -3e+38
    %v2691 = vsel %vm1354, %v2668, -3e+38
    %v2692 = vsel %vm1354, %v2670, -3e+38
    %v2693 = vsel %vm1354, %v2672, -3e+38
    %v2694 = vsel %vm1354, %v2674, -3e+38
    %v2695 = vsel %vm1354, %v2676, -3e+38
    %v2696 = vsel %vm1354, %v2678, -3e+38
    %v2697 = vsel %vm1354, %v2680, -3e+38
    %v2698 = vsel %vm1354, %v2682, -3e+38
    %v2699 = vmax.f32 %v2618, %v2683
    %v2700 = vmax.f32 %v2619, %v2684
    %v2701 = vmax.f32 %v2620, %v2685
    %v2702 = vmax.f32 %v2621, %v2686
    %v2703 = vmax.f32 %v2622, %v2687
    %v2704 = vmax.f32 %v2623, %v2688
    %v2705 = vmax.f32 %v2624, %v2689
    %v2706 = vmax.f32 %v2625, %v2690
    %v2707 = vmax.f32 %v2626, %v2691
    %v2708 = vmax.f32 %v2627, %v2692
    %v2709 = vmax.f32 %v2628, %v2693
    %v2710 = vmax.f32 %v2629, %v2694
    %v2711 = vmax.f32 %v2630, %v2695
    %v2712 = vmax.f32 %v2631, %v2696
    %v2713 = vmax.f32 %v2632, %v2697
    %v2714 = vmax.f32 %v2633, %v2698
    %v2715 = vld [vmem:[%s101 + $0xd] ss:$0 sm:$0xff]
    %v2716 = vsel %vm2294, %v2715, -3e+38
    %v2717 = vsel %vm2295, %v2715, -3e+38
    %v2718 = vsel %vm2296, %v2715, -3e+38
    %v2719 = vsel %vm2297, %v2715, -3e+38
    %v2720 = vsel %vm2298, %v2715, -3e+38
    %v2721 = vsel %vm2299, %v2715, -3e+38
    %v2722 = vsel %vm2300, %v2715, -3e+38
    %v2723 = vsel %vm2301, %v2715, -3e+38
    %v2724 = vsel %vm2302, %v2715, -3e+38
    %v2725 = vsel %vm2303, %v2715, -3e+38
    %v2726 = vsel %vm2304, %v2715, -3e+38
    %v2727 = vsel %vm2305, %v2715, -3e+38
    %v2728 = vsel %vm2306, %v2715, -3e+38
    %v2729 = vsel %vm2307, %v2715, -3e+38
    %v2730 = vsel %vm2308, %v2715, -3e+38
    %v2731 = vsel %vm2309, %v2715, -3e+38
    %2732 = vmax.xlane.f32.xlu0 %v2716
    %v2733 = vpop.xlane.xlu0 %2732
    %2734 = vmax.xlane.f32.xlu0 %v2717
    %v2735 = vpop.xlane.xlu0 %2734
    %2736 = vmax.xlane.f32.xlu0 %v2718
    %v2737 = vpop.xlane.xlu0 %2736
    %2738 = vmax.xlane.f32.xlu0 %v2719
    %v2739 = vpop.xlane.xlu0 %2738
    %2740 = vmax.xlane.f32.xlu0 %v2720
    %v2741 = vpop.xlane.xlu0 %2740
    %2742 = vmax.xlane.f32.xlu0 %v2721
    %v2743 = vpop.xlane.xlu0 %2742
    %2744 = vmax.xlane.f32.xlu0 %v2722
    %v2745 = vpop.xlane.xlu0 %2744
    %2746 = vmax.xlane.f32.xlu0 %v2723
    %v2747 = vpop.xlane.xlu0 %2746
    %2748 = vmax.xlane.f32.xlu0 %v2724
    %v2749 = vpop.xlane.xlu0 %2748
    %2750 = vmax.xlane.f32.xlu0 %v2725
    %v2751 = vpop.xlane.xlu0 %2750
    %2752 = vmax.xlane.f32.xlu0 %v2726
    %v2753 = vpop.xlane.xlu0 %2752
    %2754 = vmax.xlane.f32.xlu0 %v2727
    %v2755 = vpop.xlane.xlu0 %2754
    %2756 = vmax.xlane.f32.xlu0 %v2728
    %v2757 = vpop.xlane.xlu0 %2756
    %2758 = vmax.xlane.f32.xlu0 %v2729
    %v2759 = vpop.xlane.xlu0 %2758
    %2760 = vmax.xlane.f32.xlu0 %v2730
    %v2761 = vpop.xlane.xlu0 %2760
    %2762 = vmax.xlane.f32.xlu0 %v2731
    %v2763 = vpop.xlane.xlu0 %2762
    %v2764 = vsel %vm1436, %v2733, -3e+38
    %v2765 = vsel %vm1436, %v2735, -3e+38
    %v2766 = vsel %vm1436, %v2737, -3e+38
    %v2767 = vsel %vm1436, %v2739, -3e+38
    %v2768 = vsel %vm1436, %v2741, -3e+38
    %v2769 = vsel %vm1436, %v2743, -3e+38
    %v2770 = vsel %vm1436, %v2745, -3e+38
    %v2771 = vsel %vm1436, %v2747, -3e+38
    %v2772 = vsel %vm1436, %v2749, -3e+38
    %v2773 = vsel %vm1436, %v2751, -3e+38
    %v2774 = vsel %vm1436, %v2753, -3e+38
    %v2775 = vsel %vm1436, %v2755, -3e+38
    %v2776 = vsel %vm1436, %v2757, -3e+38
    %v2777 = vsel %vm1436, %v2759, -3e+38
    %v2778 = vsel %vm1436, %v2761, -3e+38
    %v2779 = vsel %vm1436, %v2763, -3e+38
    %v2780 = vmax.f32 %v2699, %v2764
    %v2781 = vmax.f32 %v2700, %v2765
    %v2782 = vmax.f32 %v2701, %v2766
    %v2783 = vmax.f32 %v2702, %v2767
    %v2784 = vmax.f32 %v2703, %v2768
    %v2785 = vmax.f32 %v2704, %v2769
    %v2786 = vmax.f32 %v2705, %v2770
    %v2787 = vmax.f32 %v2706, %v2771
    %v2788 = vmax.f32 %v2707, %v2772
    %v2789 = vmax.f32 %v2708, %v2773
    %v2790 = vmax.f32 %v2709, %v2774
    %v2791 = vmax.f32 %v2710, %v2775
    %v2792 = vmax.f32 %v2711, %v2776
    %v2793 = vmax.f32 %v2712, %v2777
    %v2794 = vmax.f32 %v2713, %v2778
    %v2795 = vmax.f32 %v2714, %v2779
    %v2796 = vld [vmem:[%s101 + $0xe] ss:$0 sm:$0xff]
    %v2797 = vsel %vm2294, %v2796, -3e+38
    %v2798 = vsel %vm2295, %v2796, -3e+38
    %v2799 = vsel %vm2296, %v2796, -3e+38
    %v2800 = vsel %vm2297, %v2796, -3e+38
    %v2801 = vsel %vm2298, %v2796, -3e+38
    %v2802 = vsel %vm2299, %v2796, -3e+38
    %v2803 = vsel %vm2300, %v2796, -3e+38
    %v2804 = vsel %vm2301, %v2796, -3e+38
    %v2805 = vsel %vm2302, %v2796, -3e+38
    %v2806 = vsel %vm2303, %v2796, -3e+38
    %v2807 = vsel %vm2304, %v2796, -3e+38
    %v2808 = vsel %vm2305, %v2796, -3e+38
    %v2809 = vsel %vm2306, %v2796, -3e+38
    %v2810 = vsel %vm2307, %v2796, -3e+38
    %v2811 = vsel %vm2308, %v2796, -3e+38
    %v2812 = vsel %vm2309, %v2796, -3e+38
    %2813 = vmax.xlane.f32.xlu0 %v2797
    %v2814 = vpop.xlane.xlu0 %2813
    %2815 = vmax.xlane.f32.xlu0 %v2798
    %v2816 = vpop.xlane.xlu0 %2815
    %2817 = vmax.xlane.f32.xlu0 %v2799
    %v2818 = vpop.xlane.xlu0 %2817
    %2819 = vmax.xlane.f32.xlu0 %v2800
    %v2820 = vpop.xlane.xlu0 %2819
    %2821 = vmax.xlane.f32.xlu0 %v2801
    %v2822 = vpop.xlane.xlu0 %2821
    %2823 = vmax.xlane.f32.xlu0 %v2802
    %v2824 = vpop.xlane.xlu0 %2823
    %2825 = vmax.xlane.f32.xlu0 %v2803
    %v2826 = vpop.xlane.xlu0 %2825
    %2827 = vmax.xlane.f32.xlu0 %v2804
    %v2828 = vpop.xlane.xlu0 %2827
    %2829 = vmax.xlane.f32.xlu0 %v2805
    %v2830 = vpop.xlane.xlu0 %2829
    %2831 = vmax.xlane.f32.xlu0 %v2806
    %v2832 = vpop.xlane.xlu0 %2831
    %2833 = vmax.xlane.f32.xlu0 %v2807
    %v2834 = vpop.xlane.xlu0 %2833
    %2835 = vmax.xlane.f32.xlu0 %v2808
    %v2836 = vpop.xlane.xlu0 %2835
    %2837 = vmax.xlane.f32.xlu0 %v2809
    %v2838 = vpop.xlane.xlu0 %2837
    %2839 = vmax.xlane.f32.xlu0 %v2810
    %v2840 = vpop.xlane.xlu0 %2839
    %2841 = vmax.xlane.f32.xlu0 %v2811
    %v2842 = vpop.xlane.xlu0 %2841
    %2843 = vmax.xlane.f32.xlu0 %v2812
    %v2844 = vpop.xlane.xlu0 %2843
    %v2845 = vsel %vm1518, %v2814, -3e+38
    %v2846 = vsel %vm1518, %v2816, -3e+38
    %v2847 = vsel %vm1518, %v2818, -3e+38
    %v2848 = vsel %vm1518, %v2820, -3e+38
    %v2849 = vsel %vm1518, %v2822, -3e+38
    %v2850 = vsel %vm1518, %v2824, -3e+38
    %v2851 = vsel %vm1518, %v2826, -3e+38
    %v2852 = vsel %vm1518, %v2828, -3e+38
    %v2853 = vsel %vm1518, %v2830, -3e+38
    %v2854 = vsel %vm1518, %v2832, -3e+38
    %v2855 = vsel %vm1518, %v2834, -3e+38
    %v2856 = vsel %vm1518, %v2836, -3e+38
    %v2857 = vsel %vm1518, %v2838, -3e+38
    %v2858 = vsel %vm1518, %v2840, -3e+38
    %v2859 = vsel %vm1518, %v2842, -3e+38
    %v2860 = vsel %vm1518, %v2844, -3e+38
    %v2861 = vmax.f32 %v2780, %v2845
    %v2862 = vmax.f32 %v2781, %v2846
    %v2863 = vmax.f32 %v2782, %v2847
    %v2864 = vmax.f32 %v2783, %v2848
    %v2865 = vmax.f32 %v2784, %v2849
    %v2866 = vmax.f32 %v2785, %v2850
    %v2867 = vmax.f32 %v2786, %v2851
    %v2868 = vmax.f32 %v2787, %v2852
    %v2869 = vmax.f32 %v2788, %v2853
    %v2870 = vmax.f32 %v2789, %v2854
    %v2871 = vmax.f32 %v2790, %v2855
    %v2872 = vmax.f32 %v2791, %v2856
    %v2873 = vmax.f32 %v2792, %v2857
    %v2874 = vmax.f32 %v2793, %v2858
    %v2875 = vmax.f32 %v2794, %v2859
    %v2876 = vmax.f32 %v2795, %v2860
    %v2877 = vld [vmem:[%s101 + $0xf] ss:$0 sm:$0xff]
    %v2878 = vsel %vm2294, %v2877, -3e+38
    %v2879 = vsel %vm2295, %v2877, -3e+38
    %v2880 = vsel %vm2296, %v2877, -3e+38
    %v2881 = vsel %vm2297, %v2877, -3e+38
    %v2882 = vsel %vm2298, %v2877, -3e+38
    %v2883 = vsel %vm2299, %v2877, -3e+38
    %v2884 = vsel %vm2300, %v2877, -3e+38
    %v2885 = vsel %vm2301, %v2877, -3e+38
    %v2886 = vsel %vm2302, %v2877, -3e+38
    %v2887 = vsel %vm2303, %v2877, -3e+38
    %v2888 = vsel %vm2304, %v2877, -3e+38
    %v2889 = vsel %vm2305, %v2877, -3e+38
    %v2890 = vsel %vm2306, %v2877, -3e+38
    %v2891 = vsel %vm2307, %v2877, -3e+38
    %v2892 = vsel %vm2308, %v2877, -3e+38
    %v2893 = vsel %vm2309, %v2877, -3e+38
    %2894 = vmax.xlane.f32.xlu0 %v2878
    %v2895 = vpop.xlane.xlu0 %2894
    %2896 = vmax.xlane.f32.xlu0 %v2879
    %v2897 = vpop.xlane.xlu0 %2896
    %2898 = vmax.xlane.f32.xlu0 %v2880
    %v2899 = vpop.xlane.xlu0 %2898
    %2900 = vmax.xlane.f32.xlu0 %v2881
    %v2901 = vpop.xlane.xlu0 %2900
    %2902 = vmax.xlane.f32.xlu0 %v2882
    %v2903 = vpop.xlane.xlu0 %2902
    %2904 = vmax.xlane.f32.xlu0 %v2883
    %v2905 = vpop.xlane.xlu0 %2904
    %2906 = vmax.xlane.f32.xlu0 %v2884
    %v2907 = vpop.xlane.xlu0 %2906
    %2908 = vmax.xlane.f32.xlu0 %v2885
    %v2909 = vpop.xlane.xlu0 %2908
    %2910 = vmax.xlane.f32.xlu0 %v2886
    %v2911 = vpop.xlane.xlu0 %2910
    %2912 = vmax.xlane.f32.xlu0 %v2887
    %v2913 = vpop.xlane.xlu0 %2912
    %2914 = vmax.xlane.f32.xlu0 %v2888
    %v2915 = vpop.xlane.xlu0 %2914
    %2916 = vmax.xlane.f32.xlu0 %v2889
    %v2917 = vpop.xlane.xlu0 %2916
    %2918 = vmax.xlane.f32.xlu0 %v2890
    %v2919 = vpop.xlane.xlu0 %2918
    %2920 = vmax.xlane.f32.xlu0 %v2891
    %v2921 = vpop.xlane.xlu0 %2920
    %2922 = vmax.xlane.f32.xlu0 %v2892
    %v2923 = vpop.xlane.xlu0 %2922
    %2924 = vmax.xlane.f32.xlu0 %v2893
    %v2925 = vpop.xlane.xlu0 %2924
    %v2926 = vsel %vm1600, %v2895, -3e+38
    %v2927 = vsel %vm1600, %v2897, -3e+38
    %v2928 = vsel %vm1600, %v2899, -3e+38
    %v2929 = vsel %vm1600, %v2901, -3e+38
    %v2930 = vsel %vm1600, %v2903, -3e+38
    %v2931 = vsel %vm1600, %v2905, -3e+38
    %v2932 = vsel %vm1600, %v2907, -3e+38
    %v2933 = vsel %vm1600, %v2909, -3e+38
    %v2934 = vsel %vm1600, %v2911, -3e+38
    %v2935 = vsel %vm1600, %v2913, -3e+38
    %v2936 = vsel %vm1600, %v2915, -3e+38
    %v2937 = vsel %vm1600, %v2917, -3e+38
    %v2938 = vsel %vm1600, %v2919, -3e+38
    %v2939 = vsel %vm1600, %v2921, -3e+38
    %v2940 = vsel %vm1600, %v2923, -3e+38
    %v2941 = vsel %vm1600, %v2925, -3e+38
    %v2942 = vmax.f32 %v2861, %v2926
    %v2943 = vmax.f32 %v2862, %v2927
    %v2944 = vmax.f32 %v2863, %v2928
    %v2945 = vmax.f32 %v2864, %v2929
    %v2946 = vmax.f32 %v2865, %v2930
    %v2947 = vmax.f32 %v2866, %v2931
    %v2948 = vmax.f32 %v2867, %v2932
    %v2949 = vmax.f32 %v2868, %v2933
    %v2950 = vmax.f32 %v2869, %v2934
    %v2951 = vmax.f32 %v2870, %v2935
    %v2952 = vmax.f32 %v2871, %v2936
    %v2953 = vmax.f32 %v2872, %v2937
    %v2954 = vmax.f32 %v2873, %v2938
    %v2955 = vmax.f32 %v2874, %v2939
    %v2956 = vmax.f32 %v2875, %v2940
    %v2957 = vmax.f32 %v2876, %v2941
    %v2958 = vld [vmem:[%s101 + $0x28] ss:$0 sm:$0xff]
    %v2959 = vsel %vm2294, %v2958, -3e+38
    %v2960 = vsel %vm2295, %v2958, -3e+38
    %v2961 = vsel %vm2296, %v2958, -3e+38
    %v2962 = vsel %vm2297, %v2958, -3e+38
    %v2963 = vsel %vm2298, %v2958, -3e+38
    %v2964 = vsel %vm2299, %v2958, -3e+38
    %v2965 = vsel %vm2300, %v2958, -3e+38
    %v2966 = vsel %vm2301, %v2958, -3e+38
    %v2967 = vsel %vm2302, %v2958, -3e+38
    %v2968 = vsel %vm2303, %v2958, -3e+38
    %v2969 = vsel %vm2304, %v2958, -3e+38
    %v2970 = vsel %vm2305, %v2958, -3e+38
    %v2971 = vsel %vm2306, %v2958, -3e+38
    %v2972 = vsel %vm2307, %v2958, -3e+38
    %v2973 = vsel %vm2308, %v2958, -3e+38
    %v2974 = vsel %vm2309, %v2958, -3e+38
    %2975 = vmax.xlane.f32.xlu0 %v2959
    %v2976 = vpop.xlane.xlu0 %2975
    %2977 = vmax.xlane.f32.xlu0 %v2960
    %v2978 = vpop.xlane.xlu0 %2977
    %2979 = vmax.xlane.f32.xlu0 %v2961
    %v2980 = vpop.xlane.xlu0 %2979
    %2981 = vmax.xlane.f32.xlu0 %v2962
    %v2982 = vpop.xlane.xlu0 %2981
    %2983 = vmax.xlane.f32.xlu0 %v2963
    %v2984 = vpop.xlane.xlu0 %2983
    %2985 = vmax.xlane.f32.xlu0 %v2964
    %v2986 = vpop.xlane.xlu0 %2985
    %2987 = vmax.xlane.f32.xlu0 %v2965
    %v2988 = vpop.xlane.xlu0 %2987
    %2989 = vmax.xlane.f32.xlu0 %v2966
    %v2990 = vpop.xlane.xlu0 %2989
    %2991 = vmax.xlane.f32.xlu0 %v2967
    %v2992 = vpop.xlane.xlu0 %2991
    %2993 = vmax.xlane.f32.xlu0 %v2968
    %v2994 = vpop.xlane.xlu0 %2993
    %2995 = vmax.xlane.f32.xlu0 %v2969
    %v2996 = vpop.xlane.xlu0 %2995
    %2997 = vmax.xlane.f32.xlu0 %v2970
    %v2998 = vpop.xlane.xlu0 %2997
    %2999 = vmax.xlane.f32.xlu0 %v2971
    %v3000 = vpop.xlane.xlu0 %2999
    %3001 = vmax.xlane.f32.xlu0 %v2972
    %v3002 = vpop.xlane.xlu0 %3001
    %3003 = vmax.xlane.f32.xlu0 %v2973
    %v3004 = vpop.xlane.xlu0 %3003
    %3005 = vmax.xlane.f32.xlu0 %v2974
    %v3006 = vpop.xlane.xlu0 %3005
    %v3007 = vsel %vm1682, %v2976, -3e+38
    %v3008 = vsel %vm1682, %v2978, -3e+38
    %v3009 = vsel %vm1682, %v2980, -3e+38
    %v3010 = vsel %vm1682, %v2982, -3e+38
    %v3011 = vsel %vm1682, %v2984, -3e+38
    %v3012 = vsel %vm1682, %v2986, -3e+38
    %v3013 = vsel %vm1682, %v2988, -3e+38
    %v3014 = vsel %vm1682, %v2990, -3e+38
    %v3015 = vsel %vm1682, %v2992, -3e+38
    %v3016 = vsel %vm1682, %v2994, -3e+38
    %v3017 = vsel %vm1682, %v2996, -3e+38
    %v3018 = vsel %vm1682, %v2998, -3e+38
    %v3019 = vsel %vm1682, %v3000, -3e+38
    %v3020 = vsel %vm1682, %v3002, -3e+38
    %v3021 = vsel %vm1682, %v3004, -3e+38
    %v3022 = vsel %vm1682, %v3006, -3e+38
    %v3023 = vmax.f32 %v2942, %v3007
    %v3024 = vmax.f32 %v2943, %v3008
    %v3025 = vmax.f32 %v2944, %v3009
    %v3026 = vmax.f32 %v2945, %v3010
    %v3027 = vmax.f32 %v2946, %v3011
    %v3028 = vmax.f32 %v2947, %v3012
    %v3029 = vmax.f32 %v2948, %v3013
    %v3030 = vmax.f32 %v2949, %v3014
    %v3031 = vmax.f32 %v2950, %v3015
    %v3032 = vmax.f32 %v2951, %v3016
    %v3033 = vmax.f32 %v2952, %v3017
    %v3034 = vmax.f32 %v2953, %v3018
    %v3035 = vmax.f32 %v2954, %v3019
    %v3036 = vmax.f32 %v2955, %v3020
    %v3037 = vmax.f32 %v2956, %v3021
    %v3038 = vmax.f32 %v2957, %v3022
    %v3039 = vld [vmem:[%s101 + $0x29] ss:$0 sm:$0xff]
    %v3040 = vsel %vm2294, %v3039, -3e+38
    %v3041 = vsel %vm2295, %v3039, -3e+38
    %v3042 = vsel %vm2296, %v3039, -3e+38
    %v3043 = vsel %vm2297, %v3039, -3e+38
    %v3044 = vsel %vm2298, %v3039, -3e+38
    %v3045 = vsel %vm2299, %v3039, -3e+38
    %v3046 = vsel %vm2300, %v3039, -3e+38
    %v3047 = vsel %vm2301, %v3039, -3e+38
    %v3048 = vsel %vm2302, %v3039, -3e+38
    %v3049 = vsel %vm2303, %v3039, -3e+38
    %v3050 = vsel %vm2304, %v3039, -3e+38
    %v3051 = vsel %vm2305, %v3039, -3e+38
    %v3052 = vsel %vm2306, %v3039, -3e+38
    %v3053 = vsel %vm2307, %v3039, -3e+38
    %v3054 = vsel %vm2308, %v3039, -3e+38
    %v3055 = vsel %vm2309, %v3039, -3e+38
    %3056 = vmax.xlane.f32.xlu0 %v3040
    %v3057 = vpop.xlane.xlu0 %3056
    %3058 = vmax.xlane.f32.xlu0 %v3041
    %v3059 = vpop.xlane.xlu0 %3058
    %3060 = vmax.xlane.f32.xlu0 %v3042
    %v3061 = vpop.xlane.xlu0 %3060
    %3062 = vmax.xlane.f32.xlu0 %v3043
    %v3063 = vpop.xlane.xlu0 %3062
    %3064 = vmax.xlane.f32.xlu0 %v3044
    %v3065 = vpop.xlane.xlu0 %3064
    %3066 = vmax.xlane.f32.xlu0 %v3045
    %v3067 = vpop.xlane.xlu0 %3066
    %3068 = vmax.xlane.f32.xlu0 %v3046
    %v3069 = vpop.xlane.xlu0 %3068
    %3070 = vmax.xlane.f32.xlu0 %v3047
    %v3071 = vpop.xlane.xlu0 %3070
    %3072 = vmax.xlane.f32.xlu0 %v3048
    %v3073 = vpop.xlane.xlu0 %3072
    %3074 = vmax.xlane.f32.xlu0 %v3049
    %v3075 = vpop.xlane.xlu0 %3074
    %3076 = vmax.xlane.f32.xlu0 %v3050
    %v3077 = vpop.xlane.xlu0 %3076
    %3078 = vmax.xlane.f32.xlu0 %v3051
    %v3079 = vpop.xlane.xlu0 %3078
    %3080 = vmax.xlane.f32.xlu0 %v3052
    %v3081 = vpop.xlane.xlu0 %3080
    %3082 = vmax.xlane.f32.xlu0 %v3053
    %v3083 = vpop.xlane.xlu0 %3082
    %3084 = vmax.xlane.f32.xlu0 %v3054
    %v3085 = vpop.xlane.xlu0 %3084
    %3086 = vmax.xlane.f32.xlu0 %v3055
    %v3087 = vpop.xlane.xlu0 %3086
    %v3088 = vsel %vm1764, %v3057, -3e+38
    %v3089 = vsel %vm1764, %v3059, -3e+38
    %v3090 = vsel %vm1764, %v3061, -3e+38
    %v3091 = vsel %vm1764, %v3063, -3e+38
    %v3092 = vsel %vm1764, %v3065, -3e+38
    %v3093 = vsel %vm1764, %v3067, -3e+38
    %v3094 = vsel %vm1764, %v3069, -3e+38
    %v3095 = vsel %vm1764, %v3071, -3e+38
    %v3096 = vsel %vm1764, %v3073, -3e+38
    %v3097 = vsel %vm1764, %v3075, -3e+38
    %v3098 = vsel %vm1764, %v3077, -3e+38
    %v3099 = vsel %vm1764, %v3079, -3e+38
    %v3100 = vsel %vm1764, %v3081, -3e+38
    %v3101 = vsel %vm1764, %v3083, -3e+38
    %v3102 = vsel %vm1764, %v3085, -3e+38
    %v3103 = vsel %vm1764, %v3087, -3e+38
    %v3104 = vmax.f32 %v3023, %v3088
    %v3105 = vmax.f32 %v3024, %v3089
    %v3106 = vmax.f32 %v3025, %v3090
    %v3107 = vmax.f32 %v3026, %v3091
    %v3108 = vmax.f32 %v3027, %v3092
    %v3109 = vmax.f32 %v3028, %v3093
    %v3110 = vmax.f32 %v3029, %v3094
    %v3111 = vmax.f32 %v3030, %v3095
    %v3112 = vmax.f32 %v3031, %v3096
    %v3113 = vmax.f32 %v3032, %v3097
    %v3114 = vmax.f32 %v3033, %v3098
    %v3115 = vmax.f32 %v3034, %v3099
    %v3116 = vmax.f32 %v3035, %v3100
    %v3117 = vmax.f32 %v3036, %v3101
    %v3118 = vmax.f32 %v3037, %v3102
    %v3119 = vmax.f32 %v3038, %v3103
    %v3120 = vld [vmem:[%s101 + $0x2a] ss:$0 sm:$0xff]
    %v3121 = vsel %vm2294, %v3120, -3e+38
    %v3122 = vsel %vm2295, %v3120, -3e+38
    %v3123 = vsel %vm2296, %v3120, -3e+38
    %v3124 = vsel %vm2297, %v3120, -3e+38
    %v3125 = vsel %vm2298, %v3120, -3e+38
    %v3126 = vsel %vm2299, %v3120, -3e+38
    %v3127 = vsel %vm2300, %v3120, -3e+38
    %v3128 = vsel %vm2301, %v3120, -3e+38
    %v3129 = vsel %vm2302, %v3120, -3e+38
    %v3130 = vsel %vm2303, %v3120, -3e+38
    %v3131 = vsel %vm2304, %v3120, -3e+38
    %v3132 = vsel %vm2305, %v3120, -3e+38
    %v3133 = vsel %vm2306, %v3120, -3e+38
    %v3134 = vsel %vm2307, %v3120, -3e+38
    %v3135 = vsel %vm2308, %v3120, -3e+38
    %v3136 = vsel %vm2309, %v3120, -3e+38
    %3137 = vmax.xlane.f32.xlu0 %v3121
    %v3138 = vpop.xlane.xlu0 %3137
    %3139 = vmax.xlane.f32.xlu0 %v3122
    %v3140 = vpop.xlane.xlu0 %3139
    %3141 = vmax.xlane.f32.xlu0 %v3123
    %v3142 = vpop.xlane.xlu0 %3141
    %3143 = vmax.xlane.f32.xlu0 %v3124
    %v3144 = vpop.xlane.xlu0 %3143
    %3145 = vmax.xlane.f32.xlu0 %v3125
    %v3146 = vpop.xlane.xlu0 %3145
    %3147 = vmax.xlane.f32.xlu0 %v3126
    %v3148 = vpop.xlane.xlu0 %3147
    %3149 = vmax.xlane.f32.xlu0 %v3127
    %v3150 = vpop.xlane.xlu0 %3149
    %3151 = vmax.xlane.f32.xlu0 %v3128
    %v3152 = vpop.xlane.xlu0 %3151
    %3153 = vmax.xlane.f32.xlu0 %v3129
    %v3154 = vpop.xlane.xlu0 %3153
    %3155 = vmax.xlane.f32.xlu0 %v3130
    %v3156 = vpop.xlane.xlu0 %3155
    %3157 = vmax.xlane.f32.xlu0 %v3131
    %v3158 = vpop.xlane.xlu0 %3157
    %3159 = vmax.xlane.f32.xlu0 %v3132
    %v3160 = vpop.xlane.xlu0 %3159
    %3161 = vmax.xlane.f32.xlu0 %v3133
    %v3162 = vpop.xlane.xlu0 %3161
    %3163 = vmax.xlane.f32.xlu0 %v3134
    %v3164 = vpop.xlane.xlu0 %3163
    %3165 = vmax.xlane.f32.xlu0 %v3135
    %v3166 = vpop.xlane.xlu0 %3165
    %3167 = vmax.xlane.f32.xlu0 %v3136
    %v3168 = vpop.xlane.xlu0 %3167
    %v3169 = vsel %vm1846, %v3138, -3e+38
    %v3170 = vsel %vm1846, %v3140, -3e+38
    %v3171 = vsel %vm1846, %v3142, -3e+38
    %v3172 = vsel %vm1846, %v3144, -3e+38
    %v3173 = vsel %vm1846, %v3146, -3e+38
    %v3174 = vsel %vm1846, %v3148, -3e+38
    %v3175 = vsel %vm1846, %v3150, -3e+38
    %v3176 = vsel %vm1846, %v3152, -3e+38
    %v3177 = vsel %vm1846, %v3154, -3e+38
    %v3178 = vsel %vm1846, %v3156, -3e+38
    %v3179 = vsel %vm1846, %v3158, -3e+38
    %v3180 = vsel %vm1846, %v3160, -3e+38
    %v3181 = vsel %vm1846, %v3162, -3e+38
    %v3182 = vsel %vm1846, %v3164, -3e+38
    %v3183 = vsel %vm1846, %v3166, -3e+38
    %v3184 = vsel %vm1846, %v3168, -3e+38
    %v3185 = vmax.f32 %v3104, %v3169
    %v3186 = vmax.f32 %v3105, %v3170
    %v3187 = vmax.f32 %v3106, %v3171
    %v3188 = vmax.f32 %v3107, %v3172
    %v3189 = vmax.f32 %v3108, %v3173
    %v3190 = vmax.f32 %v3109, %v3174
    %v3191 = vmax.f32 %v3110, %v3175
    %v3192 = vmax.f32 %v3111, %v3176
    %v3193 = vmax.f32 %v3112, %v3177
    %v3194 = vmax.f32 %v3113, %v3178
    %v3195 = vmax.f32 %v3114, %v3179
    %v3196 = vmax.f32 %v3115, %v3180
    %v3197 = vmax.f32 %v3116, %v3181
    %v3198 = vmax.f32 %v3117, %v3182
    %v3199 = vmax.f32 %v3118, %v3183
    %v3200 = vmax.f32 %v3119, %v3184
    %v3201 = vld [vmem:[%s101 + $0x2b] ss:$0 sm:$0xff]
    %v3202 = vsel %vm2294, %v3201, -3e+38
    %v3203 = vsel %vm2295, %v3201, -3e+38
    %v3204 = vsel %vm2296, %v3201, -3e+38
    %v3205 = vsel %vm2297, %v3201, -3e+38
    %v3206 = vsel %vm2298, %v3201, -3e+38
    %v3207 = vsel %vm2299, %v3201, -3e+38
    %v3208 = vsel %vm2300, %v3201, -3e+38
    %v3209 = vsel %vm2301, %v3201, -3e+38
    %v3210 = vsel %vm2302, %v3201, -3e+38
    %v3211 = vsel %vm2303, %v3201, -3e+38
    %v3212 = vsel %vm2304, %v3201, -3e+38
    %v3213 = vsel %vm2305, %v3201, -3e+38
    %v3214 = vsel %vm2306, %v3201, -3e+38
    %v3215 = vsel %vm2307, %v3201, -3e+38
    %v3216 = vsel %vm2308, %v3201, -3e+38
    %v3217 = vsel %vm2309, %v3201, -3e+38
    %3218 = vmax.xlane.f32.xlu0 %v3202
    %v3219 = vpop.xlane.xlu0 %3218
    %3220 = vmax.xlane.f32.xlu0 %v3203
    %v3221 = vpop.xlane.xlu0 %3220
    %3222 = vmax.xlane.f32.xlu0 %v3204
    %v3223 = vpop.xlane.xlu0 %3222
    %3224 = vmax.xlane.f32.xlu0 %v3205
    %v3225 = vpop.xlane.xlu0 %3224
    %3226 = vmax.xlane.f32.xlu0 %v3206
    %v3227 = vpop.xlane.xlu0 %3226
    %3228 = vmax.xlane.f32.xlu0 %v3207
    %v3229 = vpop.xlane.xlu0 %3228
    %3230 = vmax.xlane.f32.xlu0 %v3208
    %v3231 = vpop.xlane.xlu0 %3230
    %3232 = vmax.xlane.f32.xlu0 %v3209
    %v3233 = vpop.xlane.xlu0 %3232
    %3234 = vmax.xlane.f32.xlu0 %v3210
    %v3235 = vpop.xlane.xlu0 %3234
    %3236 = vmax.xlane.f32.xlu0 %v3211
    %v3237 = vpop.xlane.xlu0 %3236
    %3238 = vmax.xlane.f32.xlu0 %v3212
    %v3239 = vpop.xlane.xlu0 %3238
    %3240 = vmax.xlane.f32.xlu0 %v3213
    %v3241 = vpop.xlane.xlu0 %3240
    %3242 = vmax.xlane.f32.xlu0 %v3214
    %v3243 = vpop.xlane.xlu0 %3242
    %3244 = vmax.xlane.f32.xlu0 %v3215
    %v3245 = vpop.xlane.xlu0 %3244
    %3246 = vmax.xlane.f32.xlu0 %v3216
    %v3247 = vpop.xlane.xlu0 %3246
    %3248 = vmax.xlane.f32.xlu0 %v3217
    %v3249 = vpop.xlane.xlu0 %3248
    %v3250 = vsel %vm1928, %v3219, -3e+38
    %v3251 = vsel %vm1928, %v3221, -3e+38
    %v3252 = vsel %vm1928, %v3223, -3e+38
    %v3253 = vsel %vm1928, %v3225, -3e+38
    %v3254 = vsel %vm1928, %v3227, -3e+38
    %v3255 = vsel %vm1928, %v3229, -3e+38
    %v3256 = vsel %vm1928, %v3231, -3e+38
    %v3257 = vsel %vm1928, %v3233, -3e+38
    %v3258 = vsel %vm1928, %v3235, -3e+38
    %v3259 = vsel %vm1928, %v3237, -3e+38
    %v3260 = vsel %vm1928, %v3239, -3e+38
    %v3261 = vsel %vm1928, %v3241, -3e+38
    %v3262 = vsel %vm1928, %v3243, -3e+38
    %v3263 = vsel %vm1928, %v3245, -3e+38
    %v3264 = vsel %vm1928, %v3247, -3e+38
    %v3265 = vsel %vm1928, %v3249, -3e+38
    %v3266 = vmax.f32 %v3185, %v3250
    %v3267 = vmax.f32 %v3186, %v3251
    %v3268 = vmax.f32 %v3187, %v3252
    %v3269 = vmax.f32 %v3188, %v3253
    %v3270 = vmax.f32 %v3189, %v3254
    %v3271 = vmax.f32 %v3190, %v3255
    %v3272 = vmax.f32 %v3191, %v3256
    %v3273 = vmax.f32 %v3192, %v3257
    %v3274 = vmax.f32 %v3193, %v3258
    %v3275 = vmax.f32 %v3194, %v3259
    %v3276 = vmax.f32 %v3195, %v3260
    %v3277 = vmax.f32 %v3196, %v3261
    %v3278 = vmax.f32 %v3197, %v3262
    %v3279 = vmax.f32 %v3198, %v3263
    %v3280 = vmax.f32 %v3199, %v3264
    %v3281 = vmax.f32 %v3200, %v3265
    %v3282 = vld [vmem:[%s101 + $0x2c] ss:$0 sm:$0xff]
    %v3283 = vsel %vm2294, %v3282, -3e+38
    %v3284 = vsel %vm2295, %v3282, -3e+38
    %v3285 = vsel %vm2296, %v3282, -3e+38
    %v3286 = vsel %vm2297, %v3282, -3e+38
    %v3287 = vsel %vm2298, %v3282, -3e+38
    %v3288 = vsel %vm2299, %v3282, -3e+38
    %v3289 = vsel %vm2300, %v3282, -3e+38
    %v3290 = vsel %vm2301, %v3282, -3e+38
    %v3291 = vsel %vm2302, %v3282, -3e+38
    %v3292 = vsel %vm2303, %v3282, -3e+38
    %v3293 = vsel %vm2304, %v3282, -3e+38
    %v3294 = vsel %vm2305, %v3282, -3e+38
    %v3295 = vsel %vm2306, %v3282, -3e+38
    %v3296 = vsel %vm2307, %v3282, -3e+38
    %v3297 = vsel %vm2308, %v3282, -3e+38
    %v3298 = vsel %vm2309, %v3282, -3e+38
    %3299 = vmax.xlane.f32.xlu0 %v3283
    %v3300 = vpop.xlane.xlu0 %3299
    %3301 = vmax.xlane.f32.xlu0 %v3284
    %v3302 = vpop.xlane.xlu0 %3301
    %3303 = vmax.xlane.f32.xlu0 %v3285
    %v3304 = vpop.xlane.xlu0 %3303
    %3305 = vmax.xlane.f32.xlu0 %v3286
    %v3306 = vpop.xlane.xlu0 %3305
    %3307 = vmax.xlane.f32.xlu0 %v3287
    %v3308 = vpop.xlane.xlu0 %3307
    %3309 = vmax.xlane.f32.xlu0 %v3288
    %v3310 = vpop.xlane.xlu0 %3309
    %3311 = vmax.xlane.f32.xlu0 %v3289
    %v3312 = vpop.xlane.xlu0 %3311
    %3313 = vmax.xlane.f32.xlu0 %v3290
    %v3314 = vpop.xlane.xlu0 %3313
    %3315 = vmax.xlane.f32.xlu0 %v3291
    %v3316 = vpop.xlane.xlu0 %3315
    %3317 = vmax.xlane.f32.xlu0 %v3292
    %v3318 = vpop.xlane.xlu0 %3317
    %3319 = vmax.xlane.f32.xlu0 %v3293
    %v3320 = vpop.xlane.xlu0 %3319
    %3321 = vmax.xlane.f32.xlu0 %v3294
    %v3322 = vpop.xlane.xlu0 %3321
    %3323 = vmax.xlane.f32.xlu0 %v3295
    %v3324 = vpop.xlane.xlu0 %3323
    %3325 = vmax.xlane.f32.xlu0 %v3296
    %v3326 = vpop.xlane.xlu0 %3325
    %3327 = vmax.xlane.f32.xlu0 %v3297
    %v3328 = vpop.xlane.xlu0 %3327
    %3329 = vmax.xlane.f32.xlu0 %v3298
    %v3330 = vpop.xlane.xlu0 %3329
    %v3331 = vsel %vm2010, %v3300, -3e+38
    %v3332 = vsel %vm2010, %v3302, -3e+38
    %v3333 = vsel %vm2010, %v3304, -3e+38
    %v3334 = vsel %vm2010, %v3306, -3e+38
    %v3335 = vsel %vm2010, %v3308, -3e+38
    %v3336 = vsel %vm2010, %v3310, -3e+38
    %v3337 = vsel %vm2010, %v3312, -3e+38
    %v3338 = vsel %vm2010, %v3314, -3e+38
    %v3339 = vsel %vm2010, %v3316, -3e+38
    %v3340 = vsel %vm2010, %v3318, -3e+38
    %v3341 = vsel %vm2010, %v3320, -3e+38
    %v3342 = vsel %vm2010, %v3322, -3e+38
    %v3343 = vsel %vm2010, %v3324, -3e+38
    %v3344 = vsel %vm2010, %v3326, -3e+38
    %v3345 = vsel %vm2010, %v3328, -3e+38
    %v3346 = vsel %vm2010, %v3330, -3e+38
    %v3347 = vmax.f32 %v3266, %v3331
    %v3348 = vmax.f32 %v3267, %v3332
    %v3349 = vmax.f32 %v3268, %v3333
    %v3350 = vmax.f32 %v3269, %v3334
    %v3351 = vmax.f32 %v3270, %v3335
    %v3352 = vmax.f32 %v3271, %v3336
    %v3353 = vmax.f32 %v3272, %v3337
    %v3354 = vmax.f32 %v3273, %v3338
    %v3355 = vmax.f32 %v3274, %v3339
    %v3356 = vmax.f32 %v3275, %v3340
    %v3357 = vmax.f32 %v3276, %v3341
    %v3358 = vmax.f32 %v3277, %v3342
    %v3359 = vmax.f32 %v3278, %v3343
    %v3360 = vmax.f32 %v3279, %v3344
    %v3361 = vmax.f32 %v3280, %v3345
    %v3362 = vmax.f32 %v3281, %v3346
    %v3363 = vld [vmem:[%s101 + $0x2d] ss:$0 sm:$0xff]
    %v3364 = vsel %vm2294, %v3363, -3e+38
    %v3365 = vsel %vm2295, %v3363, -3e+38
    %v3366 = vsel %vm2296, %v3363, -3e+38
    %v3367 = vsel %vm2297, %v3363, -3e+38
    %v3368 = vsel %vm2298, %v3363, -3e+38
    %v3369 = vsel %vm2299, %v3363, -3e+38
    %v3370 = vsel %vm2300, %v3363, -3e+38
    %v3371 = vsel %vm2301, %v3363, -3e+38
    %v3372 = vsel %vm2302, %v3363, -3e+38
    %v3373 = vsel %vm2303, %v3363, -3e+38
    %v3374 = vsel %vm2304, %v3363, -3e+38
    %v3375 = vsel %vm2305, %v3363, -3e+38
    %v3376 = vsel %vm2306, %v3363, -3e+38
    %v3377 = vsel %vm2307, %v3363, -3e+38
    %v3378 = vsel %vm2308, %v3363, -3e+38
    %v3379 = vsel %vm2309, %v3363, -3e+38
    %3380 = vmax.xlane.f32.xlu0 %v3364
    %v3381 = vpop.xlane.xlu0 %3380
    %3382 = vmax.xlane.f32.xlu0 %v3365
    %v3383 = vpop.xlane.xlu0 %3382
    %3384 = vmax.xlane.f32.xlu0 %v3366
    %v3385 = vpop.xlane.xlu0 %3384
    %3386 = vmax.xlane.f32.xlu0 %v3367
    %v3387 = vpop.xlane.xlu0 %3386
    %3388 = vmax.xlane.f32.xlu0 %v3368
    %v3389 = vpop.xlane.xlu0 %3388
    %3390 = vmax.xlane.f32.xlu0 %v3369
    %v3391 = vpop.xlane.xlu0 %3390
    %3392 = vmax.xlane.f32.xlu0 %v3370
    %v3393 = vpop.xlane.xlu0 %3392
    %3394 = vmax.xlane.f32.xlu0 %v3371
    %v3395 = vpop.xlane.xlu0 %3394
    %3396 = vmax.xlane.f32.xlu0 %v3372
    %v3397 = vpop.xlane.xlu0 %3396
    %3398 = vmax.xlane.f32.xlu0 %v3373
    %v3399 = vpop.xlane.xlu0 %3398
    %3400 = vmax.xlane.f32.xlu0 %v3374
    %v3401 = vpop.xlane.xlu0 %3400
    %3402 = vmax.xlane.f32.xlu0 %v3375
    %v3403 = vpop.xlane.xlu0 %3402
    %3404 = vmax.xlane.f32.xlu0 %v3376
    %v3405 = vpop.xlane.xlu0 %3404
    %3406 = vmax.xlane.f32.xlu0 %v3377
    %v3407 = vpop.xlane.xlu0 %3406
    %3408 = vmax.xlane.f32.xlu0 %v3378
    %v3409 = vpop.xlane.xlu0 %3408
    %3410 = vmax.xlane.f32.xlu0 %v3379
    %v3411 = vpop.xlane.xlu0 %3410
    %v3412 = vsel %vm2092, %v3381, -3e+38
    %v3413 = vsel %vm2092, %v3383, -3e+38
    %v3414 = vsel %vm2092, %v3385, -3e+38
    %v3415 = vsel %vm2092, %v3387, -3e+38
    %v3416 = vsel %vm2092, %v3389, -3e+38
    %v3417 = vsel %vm2092, %v3391, -3e+38
    %v3418 = vsel %vm2092, %v3393, -3e+38
    %v3419 = vsel %vm2092, %v3395, -3e+38
    %v3420 = vsel %vm2092, %v3397, -3e+38
    %v3421 = vsel %vm2092, %v3399, -3e+38
    %v3422 = vsel %vm2092, %v3401, -3e+38
    %v3423 = vsel %vm2092, %v3403, -3e+38
    %v3424 = vsel %vm2092, %v3405, -3e+38
    %v3425 = vsel %vm2092, %v3407, -3e+38
    %v3426 = vsel %vm2092, %v3409, -3e+38
    %v3427 = vsel %vm2092, %v3411, -3e+38
    %v3428 = vmax.f32 %v3347, %v3412
    %v3429 = vmax.f32 %v3348, %v3413
    %v3430 = vmax.f32 %v3349, %v3414
    %v3431 = vmax.f32 %v3350, %v3415
    %v3432 = vmax.f32 %v3351, %v3416
    %v3433 = vmax.f32 %v3352, %v3417
    %v3434 = vmax.f32 %v3353, %v3418
    %v3435 = vmax.f32 %v3354, %v3419
    %v3436 = vmax.f32 %v3355, %v3420
    %v3437 = vmax.f32 %v3356, %v3421
    %v3438 = vmax.f32 %v3357, %v3422
    %v3439 = vmax.f32 %v3358, %v3423
    %v3440 = vmax.f32 %v3359, %v3424
    %v3441 = vmax.f32 %v3360, %v3425
    %v3442 = vmax.f32 %v3361, %v3426
    %v3443 = vmax.f32 %v3362, %v3427
    %v3444 = vld [vmem:[%s101 + $0x2e] ss:$0 sm:$0xff]
    %v3445 = vsel %vm2294, %v3444, -3e+38
    %v3446 = vsel %vm2295, %v3444, -3e+38
    %v3447 = vsel %vm2296, %v3444, -3e+38
    %v3448 = vsel %vm2297, %v3444, -3e+38
    %v3449 = vsel %vm2298, %v3444, -3e+38
    %v3450 = vsel %vm2299, %v3444, -3e+38
    %v3451 = vsel %vm2300, %v3444, -3e+38
    %v3452 = vsel %vm2301, %v3444, -3e+38
    %v3453 = vsel %vm2302, %v3444, -3e+38
    %v3454 = vsel %vm2303, %v3444, -3e+38
    %v3455 = vsel %vm2304, %v3444, -3e+38
    %v3456 = vsel %vm2305, %v3444, -3e+38
    %v3457 = vsel %vm2306, %v3444, -3e+38
    %v3458 = vsel %vm2307, %v3444, -3e+38
    %v3459 = vsel %vm2308, %v3444, -3e+38
    %v3460 = vsel %vm2309, %v3444, -3e+38
    %3461 = vmax.xlane.f32.xlu0 %v3445
    %v3462 = vpop.xlane.xlu0 %3461
    %3463 = vmax.xlane.f32.xlu0 %v3446
    %v3464 = vpop.xlane.xlu0 %3463
    %3465 = vmax.xlane.f32.xlu0 %v3447
    %v3466 = vpop.xlane.xlu0 %3465
    %3467 = vmax.xlane.f32.xlu0 %v3448
    %v3468 = vpop.xlane.xlu0 %3467
    %3469 = vmax.xlane.f32.xlu0 %v3449
    %v3470 = vpop.xlane.xlu0 %3469
    %3471 = vmax.xlane.f32.xlu0 %v3450
    %v3472 = vpop.xlane.xlu0 %3471
    %3473 = vmax.xlane.f32.xlu0 %v3451
    %v3474 = vpop.xlane.xlu0 %3473
    %3475 = vmax.xlane.f32.xlu0 %v3452
    %v3476 = vpop.xlane.xlu0 %3475
    %3477 = vmax.xlane.f32.xlu0 %v3453
    %v3478 = vpop.xlane.xlu0 %3477
    %3479 = vmax.xlane.f32.xlu0 %v3454
    %v3480 = vpop.xlane.xlu0 %3479
    %3481 = vmax.xlane.f32.xlu0 %v3455
    %v3482 = vpop.xlane.xlu0 %3481
    %3483 = vmax.xlane.f32.xlu0 %v3456
    %v3484 = vpop.xlane.xlu0 %3483
    %3485 = vmax.xlane.f32.xlu0 %v3457
    %v3486 = vpop.xlane.xlu0 %3485
    %3487 = vmax.xlane.f32.xlu0 %v3458
    %v3488 = vpop.xlane.xlu0 %3487
    %3489 = vmax.xlane.f32.xlu0 %v3459
    %v3490 = vpop.xlane.xlu0 %3489
    %3491 = vmax.xlane.f32.xlu0 %v3460
    %v3492 = vpop.xlane.xlu0 %3491
    %v3493 = vsel %vm2174, %v3462, -3e+38
    %v3494 = vsel %vm2174, %v3464, -3e+38
    %v3495 = vsel %vm2174, %v3466, -3e+38
    %v3496 = vsel %vm2174, %v3468, -3e+38
    %v3497 = vsel %vm2174, %v3470, -3e+38
    %v3498 = vsel %vm2174, %v3472, -3e+38
    %v3499 = vsel %vm2174, %v3474, -3e+38
    %v3500 = vsel %vm2174, %v3476, -3e+38
    %v3501 = vsel %vm2174, %v3478, -3e+38
    %v3502 = vsel %vm2174, %v3480, -3e+38
    %v3503 = vsel %vm2174, %v3482, -3e+38
    %v3504 = vsel %vm2174, %v3484, -3e+38
    %v3505 = vsel %vm2174, %v3486, -3e+38
    %v3506 = vsel %vm2174, %v3488, -3e+38
    %v3507 = vsel %vm2174, %v3490, -3e+38
    %v3508 = vsel %vm2174, %v3492, -3e+38
    %v3509 = vmax.f32 %v3428, %v3493
    %v3510 = vmax.f32 %v3429, %v3494
    %v3511 = vmax.f32 %v3430, %v3495
    %v3512 = vmax.f32 %v3431, %v3496
    %v3513 = vmax.f32 %v3432, %v3497
    %v3514 = vmax.f32 %v3433, %v3498
    %v3515 = vmax.f32 %v3434, %v3499
    %v3516 = vmax.f32 %v3435, %v3500
    %v3517 = vmax.f32 %v3436, %v3501
    %v3518 = vmax.f32 %v3437, %v3502
    %v3519 = vmax.f32 %v3438, %v3503
    %v3520 = vmax.f32 %v3439, %v3504
    %v3521 = vmax.f32 %v3440, %v3505
    %v3522 = vmax.f32 %v3441, %v3506
    %v3523 = vmax.f32 %v3442, %v3507
    %v3524 = vmax.f32 %v3443, %v3508
    %v3525 = vld [vmem:[%s101 + $0x2f] ss:$0 sm:$0xff]
    %v3526 = vsel %vm2294, %v3525, -3e+38
    %v3527 = vsel %vm2295, %v3525, -3e+38
    %v3528 = vsel %vm2296, %v3525, -3e+38
    %v3529 = vsel %vm2297, %v3525, -3e+38
    %v3530 = vsel %vm2298, %v3525, -3e+38
    %v3531 = vsel %vm2299, %v3525, -3e+38
    %v3532 = vsel %vm2300, %v3525, -3e+38
    %v3533 = vsel %vm2301, %v3525, -3e+38
    %v3534 = vsel %vm2302, %v3525, -3e+38
    %v3535 = vsel %vm2303, %v3525, -3e+38
    %v3536 = vsel %vm2304, %v3525, -3e+38
    %v3537 = vsel %vm2305, %v3525, -3e+38
    %v3538 = vsel %vm2306, %v3525, -3e+38
    %v3539 = vsel %vm2307, %v3525, -3e+38
    %v3540 = vsel %vm2308, %v3525, -3e+38
    %v3541 = vsel %vm2309, %v3525, -3e+38
    %3542 = vmax.xlane.f32.xlu0 %v3526
    %v3543 = vpop.xlane.xlu0 %3542
    %3544 = vmax.xlane.f32.xlu0 %v3527
    %v3545 = vpop.xlane.xlu0 %3544
    %3546 = vmax.xlane.f32.xlu0 %v3528
    %v3547 = vpop.xlane.xlu0 %3546
    %3548 = vmax.xlane.f32.xlu0 %v3529
    %v3549 = vpop.xlane.xlu0 %3548
    %3550 = vmax.xlane.f32.xlu0 %v3530
    %v3551 = vpop.xlane.xlu0 %3550
    %3552 = vmax.xlane.f32.xlu0 %v3531
    %v3553 = vpop.xlane.xlu0 %3552
    %3554 = vmax.xlane.f32.xlu0 %v3532
    %v3555 = vpop.xlane.xlu0 %3554
    %3556 = vmax.xlane.f32.xlu0 %v3533
    %v3557 = vpop.xlane.xlu0 %3556
    %3558 = vmax.xlane.f32.xlu0 %v3534
    %v3559 = vpop.xlane.xlu0 %3558
    %3560 = vmax.xlane.f32.xlu0 %v3535
    %v3561 = vpop.xlane.xlu0 %3560
    %3562 = vmax.xlane.f32.xlu0 %v3536
    %v3563 = vpop.xlane.xlu0 %3562
    %3564 = vmax.xlane.f32.xlu0 %v3537
    %v3565 = vpop.xlane.xlu0 %3564
    %3566 = vmax.xlane.f32.xlu0 %v3538
    %v3567 = vpop.xlane.xlu0 %3566
    %3568 = vmax.xlane.f32.xlu0 %v3539
    %v3569 = vpop.xlane.xlu0 %3568
    %3570 = vmax.xlane.f32.xlu0 %v3540
    %v3571 = vpop.xlane.xlu0 %3570
    %3572 = vmax.xlane.f32.xlu0 %v3541
    %v3573 = vpop.xlane.xlu0 %3572
    %v3574 = vsel %vm2256, %v3543, -3e+38
    %v3575 = vsel %vm2256, %v3545, -3e+38
    %v3576 = vsel %vm2256, %v3547, -3e+38
    %v3577 = vsel %vm2256, %v3549, -3e+38
    %v3578 = vsel %vm2256, %v3551, -3e+38
    %v3579 = vsel %vm2256, %v3553, -3e+38
    %v3580 = vsel %vm2256, %v3555, -3e+38
    %v3581 = vsel %vm2256, %v3557, -3e+38
    %v3582 = vsel %vm2256, %v3559, -3e+38
    %v3583 = vsel %vm2256, %v3561, -3e+38
    %v3584 = vsel %vm2256, %v3563, -3e+38
    %v3585 = vsel %vm2256, %v3565, -3e+38
    %v3586 = vsel %vm2256, %v3567, -3e+38
    %v3587 = vsel %vm2256, %v3569, -3e+38
    %v3588 = vsel %vm2256, %v3571, -3e+38
    %v3589 = vsel %vm2256, %v3573, -3e+38
    %v3590 = vmax.f32 %v3509, %v3574
    %v3591 = vmax.f32 %v3510, %v3575
    %v3592 = vmax.f32 %v3511, %v3576
    %v3593 = vmax.f32 %v3512, %v3577
    %v3594 = vmax.f32 %v3513, %v3578
    %v3595 = vmax.f32 %v3514, %v3579
    %v3596 = vmax.f32 %v3515, %v3580
    %v3597 = vmax.f32 %v3516, %v3581
    %v3598 = vmax.f32 %v3517, %v3582
    %v3599 = vmax.f32 %v3518, %v3583
    %v3600 = vmax.f32 %v3519, %v3584
    %v3601 = vmax.f32 %v3520, %v3585
    %v3602 = vmax.f32 %v3521, %v3586
    %v3603 = vmax.f32 %v3522, %v3587
    %v3604 = vmax.f32 %v3523, %v3588
    %v3605 = vmax.f32 %v3524, %v3589
    %v3606 = vld [vmem:[%s81 + $0x2] sm:$0x1]
    %v3607 = vlaneseq
    %v3608 = vshrl.u32 %v3607, 7
    %v3609 = vsub.s32 0, %v3608
    %v3610 = vrot.slane %v3606, %v3609
    %vm3611 = vcmp.eq.s32.totalorder %v3610, %v183
    %vm3612 = vcmp.eq.s32.totalorder %v3610, %v184
    %vm3613 = vcmp.eq.s32.totalorder %v3610, %v185
    %vm3614 = vcmp.eq.s32.totalorder %v3610, %v186
    %vm3615 = vcmp.eq.s32.totalorder %v3610, %v187
    %vm3616 = vcmp.eq.s32.totalorder %v3610, %v188
    %vm3617 = vcmp.eq.s32.totalorder %v3610, %v189
    %vm3618 = vcmp.eq.s32.totalorder %v3610, %v190
    %vm3619 = vcmp.eq.s32.totalorder %v3610, %v191
    %vm3620 = vcmp.eq.s32.totalorder %v3610, %v192
    %vm3621 = vcmp.eq.s32.totalorder %v3610, %v193
    %vm3622 = vcmp.eq.s32.totalorder %v3610, %v194
    %vm3623 = vcmp.eq.s32.totalorder %v3610, %v195
    %vm3624 = vcmp.eq.s32.totalorder %v3610, %v196
    %vm3625 = vcmp.eq.s32.totalorder %v3610, %v197
    %vm3626 = vcmp.eq.s32.totalorder %v3610, %v198
    %v3627 = vld [vmem:[%s101 + $0x10] ss:$0 sm:$0xff]
    %v3628 = vsel %vm3611, %v3627, -3e+38
    %v3629 = vsel %vm3612, %v3627, -3e+38
    %v3630 = vsel %vm3613, %v3627, -3e+38
    %v3631 = vsel %vm3614, %v3627, -3e+38
    %v3632 = vsel %vm3615, %v3627, -3e+38
    %v3633 = vsel %vm3616, %v3627, -3e+38
    %v3634 = vsel %vm3617, %v3627, -3e+38
    %v3635 = vsel %vm3618, %v3627, -3e+38
    %v3636 = vsel %vm3619, %v3627, -3e+38
    %v3637 = vsel %vm3620, %v3627, -3e+38
    %v3638 = vsel %vm3621, %v3627, -3e+38
    %v3639 = vsel %vm3622, %v3627, -3e+38
    %v3640 = vsel %vm3623, %v3627, -3e+38
    %v3641 = vsel %vm3624, %v3627, -3e+38
    %v3642 = vsel %vm3625, %v3627, -3e+38
    %v3643 = vsel %vm3626, %v3627, -3e+38
    %3644 = vmax.xlane.f32.xlu0 %v3628
    %v3645 = vpop.xlane.xlu0 %3644
    %3646 = vmax.xlane.f32.xlu0 %v3629
    %v3647 = vpop.xlane.xlu0 %3646
    %3648 = vmax.xlane.f32.xlu0 %v3630
    %v3649 = vpop.xlane.xlu0 %3648
    %3650 = vmax.xlane.f32.xlu0 %v3631
    %v3651 = vpop.xlane.xlu0 %3650
    %3652 = vmax.xlane.f32.xlu0 %v3632
    %v3653 = vpop.xlane.xlu0 %3652
    %3654 = vmax.xlane.f32.xlu0 %v3633
    %v3655 = vpop.xlane.xlu0 %3654
    %3656 = vmax.xlane.f32.xlu0 %v3634
    %v3657 = vpop.xlane.xlu0 %3656
    %3658 = vmax.xlane.f32.xlu0 %v3635
    %v3659 = vpop.xlane.xlu0 %3658
    %3660 = vmax.xlane.f32.xlu0 %v3636
    %v3661 = vpop.xlane.xlu0 %3660
    %3662 = vmax.xlane.f32.xlu0 %v3637
    %v3663 = vpop.xlane.xlu0 %3662
    %3664 = vmax.xlane.f32.xlu0 %v3638
    %v3665 = vpop.xlane.xlu0 %3664
    %3666 = vmax.xlane.f32.xlu0 %v3639
    %v3667 = vpop.xlane.xlu0 %3666
    %3668 = vmax.xlane.f32.xlu0 %v3640
    %v3669 = vpop.xlane.xlu0 %3668
    %3670 = vmax.xlane.f32.xlu0 %v3641
    %v3671 = vpop.xlane.xlu0 %3670
    %3672 = vmax.xlane.f32.xlu0 %v3642
    %v3673 = vpop.xlane.xlu0 %3672
    %3674 = vmax.xlane.f32.xlu0 %v3643
    %v3675 = vpop.xlane.xlu0 %3674
    %v3676 = vsel %vm1026, %v3645, -3e+38
    %v3677 = vsel %vm1026, %v3647, -3e+38
    %v3678 = vsel %vm1026, %v3649, -3e+38
    %v3679 = vsel %vm1026, %v3651, -3e+38
    %v3680 = vsel %vm1026, %v3653, -3e+38
    %v3681 = vsel %vm1026, %v3655, -3e+38
    %v3682 = vsel %vm1026, %v3657, -3e+38
    %v3683 = vsel %vm1026, %v3659, -3e+38
    %v3684 = vsel %vm1026, %v3661, -3e+38
    %v3685 = vsel %vm1026, %v3663, -3e+38
    %v3686 = vsel %vm1026, %v3665, -3e+38
    %v3687 = vsel %vm1026, %v3667, -3e+38
    %v3688 = vsel %vm1026, %v3669, -3e+38
    %v3689 = vsel %vm1026, %v3671, -3e+38
    %v3690 = vsel %vm1026, %v3673, -3e+38
    %v3691 = vsel %vm1026, %v3675, -3e+38
    %v3692 = vmax.f32 %v3590, %v3676
    %v3693 = vmax.f32 %v3591, %v3677
    %v3694 = vmax.f32 %v3592, %v3678
    %v3695 = vmax.f32 %v3593, %v3679
    %v3696 = vmax.f32 %v3594, %v3680
    %v3697 = vmax.f32 %v3595, %v3681
    %v3698 = vmax.f32 %v3596, %v3682
    %v3699 = vmax.f32 %v3597, %v3683
    %v3700 = vmax.f32 %v3598, %v3684
    %v3701 = vmax.f32 %v3599, %v3685
    %v3702 = vmax.f32 %v3600, %v3686
    %v3703 = vmax.f32 %v3601, %v3687
    %v3704 = vmax.f32 %v3602, %v3688
    %v3705 = vmax.f32 %v3603, %v3689
    %v3706 = vmax.f32 %v3604, %v3690
    %v3707 = vmax.f32 %v3605, %v3691
    %v3708 = vld [vmem:[%s101 + $0x11] ss:$0 sm:$0xff]
    %v3709 = vsel %vm3611, %v3708, -3e+38
    %v3710 = vsel %vm3612, %v3708, -3e+38
    %v3711 = vsel %vm3613, %v3708, -3e+38
    %v3712 = vsel %vm3614, %v3708, -3e+38
    %v3713 = vsel %vm3615, %v3708, -3e+38
    %v3714 = vsel %vm3616, %v3708, -3e+38
    %v3715 = vsel %vm3617, %v3708, -3e+38
    %v3716 = vsel %vm3618, %v3708, -3e+38
    %v3717 = vsel %vm3619, %v3708, -3e+38
    %v3718 = vsel %vm3620, %v3708, -3e+38
    %v3719 = vsel %vm3621, %v3708, -3e+38
    %v3720 = vsel %vm3622, %v3708, -3e+38
    %v3721 = vsel %vm3623, %v3708, -3e+38
    %v3722 = vsel %vm3624, %v3708, -3e+38
    %v3723 = vsel %vm3625, %v3708, -3e+38
    %v3724 = vsel %vm3626, %v3708, -3e+38
    %3725 = vmax.xlane.f32.xlu0 %v3709
    %v3726 = vpop.xlane.xlu0 %3725
    %3727 = vmax.xlane.f32.xlu0 %v3710
    %v3728 = vpop.xlane.xlu0 %3727
    %3729 = vmax.xlane.f32.xlu0 %v3711
    %v3730 = vpop.xlane.xlu0 %3729
    %3731 = vmax.xlane.f32.xlu0 %v3712
    %v3732 = vpop.xlane.xlu0 %3731
    %3733 = vmax.xlane.f32.xlu0 %v3713
    %v3734 = vpop.xlane.xlu0 %3733
    %3735 = vmax.xlane.f32.xlu0 %v3714
    %v3736 = vpop.xlane.xlu0 %3735
    %3737 = vmax.xlane.f32.xlu0 %v3715
    %v3738 = vpop.xlane.xlu0 %3737
    %3739 = vmax.xlane.f32.xlu0 %v3716
    %v3740 = vpop.xlane.xlu0 %3739
    %3741 = vmax.xlane.f32.xlu0 %v3717
    %v3742 = vpop.xlane.xlu0 %3741
    %3743 = vmax.xlane.f32.xlu0 %v3718
    %v3744 = vpop.xlane.xlu0 %3743
    %3745 = vmax.xlane.f32.xlu0 %v3719
    %v3746 = vpop.xlane.xlu0 %3745
    %3747 = vmax.xlane.f32.xlu0 %v3720
    %v3748 = vpop.xlane.xlu0 %3747
    %3749 = vmax.xlane.f32.xlu0 %v3721
    %v3750 = vpop.xlane.xlu0 %3749
    %3751 = vmax.xlane.f32.xlu0 %v3722
    %v3752 = vpop.xlane.xlu0 %3751
    %3753 = vmax.xlane.f32.xlu0 %v3723
    %v3754 = vpop.xlane.xlu0 %3753
    %3755 = vmax.xlane.f32.xlu0 %v3724
    %v3756 = vpop.xlane.xlu0 %3755
    %v3757 = vsel %vm1108, %v3726, -3e+38
    %v3758 = vsel %vm1108, %v3728, -3e+38
    %v3759 = vsel %vm1108, %v3730, -3e+38
    %v3760 = vsel %vm1108, %v3732, -3e+38
    %v3761 = vsel %vm1108, %v3734, -3e+38
    %v3762 = vsel %vm1108, %v3736, -3e+38
    %v3763 = vsel %vm1108, %v3738, -3e+38
    %v3764 = vsel %vm1108, %v3740, -3e+38
    %v3765 = vsel %vm1108, %v3742, -3e+38
    %v3766 = vsel %vm1108, %v3744, -3e+38
    %v3767 = vsel %vm1108, %v3746, -3e+38
    %v3768 = vsel %vm1108, %v3748, -3e+38
    %v3769 = vsel %vm1108, %v3750, -3e+38
    %v3770 = vsel %vm1108, %v3752, -3e+38
    %v3771 = vsel %vm1108, %v3754, -3e+38
    %v3772 = vsel %vm1108, %v3756, -3e+38
    %v3773 = vmax.f32 %v3692, %v3757
    %v3774 = vmax.f32 %v3693, %v3758
    %v3775 = vmax.f32 %v3694, %v3759
    %v3776 = vmax.f32 %v3695, %v3760
    %v3777 = vmax.f32 %v3696, %v3761
    %v3778 = vmax.f32 %v3697, %v3762
    %v3779 = vmax.f32 %v3698, %v3763
    %v3780 = vmax.f32 %v3699, %v3764
    %v3781 = vmax.f32 %v3700, %v3765
    %v3782 = vmax.f32 %v3701, %v3766
    %v3783 = vmax.f32 %v3702, %v3767
    %v3784 = vmax.f32 %v3703, %v3768
    %v3785 = vmax.f32 %v3704, %v3769
    %v3786 = vmax.f32 %v3705, %v3770
    %v3787 = vmax.f32 %v3706, %v3771
    %v3788 = vmax.f32 %v3707, %v3772
    %v3789 = vld [vmem:[%s101 + $0x12] ss:$0 sm:$0xff]
    %v3790 = vsel %vm3611, %v3789, -3e+38
    %v3791 = vsel %vm3612, %v3789, -3e+38
    %v3792 = vsel %vm3613, %v3789, -3e+38
    %v3793 = vsel %vm3614, %v3789, -3e+38
    %v3794 = vsel %vm3615, %v3789, -3e+38
    %v3795 = vsel %vm3616, %v3789, -3e+38
    %v3796 = vsel %vm3617, %v3789, -3e+38
    %v3797 = vsel %vm3618, %v3789, -3e+38
    %v3798 = vsel %vm3619, %v3789, -3e+38
    %v3799 = vsel %vm3620, %v3789, -3e+38
    %v3800 = vsel %vm3621, %v3789, -3e+38
    %v3801 = vsel %vm3622, %v3789, -3e+38
    %v3802 = vsel %vm3623, %v3789, -3e+38
    %v3803 = vsel %vm3624, %v3789, -3e+38
    %v3804 = vsel %vm3625, %v3789, -3e+38
    %v3805 = vsel %vm3626, %v3789, -3e+38
    %3806 = vmax.xlane.f32.xlu0 %v3790
    %v3807 = vpop.xlane.xlu0 %3806
    %3808 = vmax.xlane.f32.xlu0 %v3791
    %v3809 = vpop.xlane.xlu0 %3808
    %3810 = vmax.xlane.f32.xlu0 %v3792
    %v3811 = vpop.xlane.xlu0 %3810
    %3812 = vmax.xlane.f32.xlu0 %v3793
    %v3813 = vpop.xlane.xlu0 %3812
    %3814 = vmax.xlane.f32.xlu0 %v3794
    %v3815 = vpop.xlane.xlu0 %3814
    %3816 = vmax.xlane.f32.xlu0 %v3795
    %v3817 = vpop.xlane.xlu0 %3816
    %3818 = vmax.xlane.f32.xlu0 %v3796
    %v3819 = vpop.xlane.xlu0 %3818
    %3820 = vmax.xlane.f32.xlu0 %v3797
    %v3821 = vpop.xlane.xlu0 %3820
    %3822 = vmax.xlane.f32.xlu0 %v3798
    %v3823 = vpop.xlane.xlu0 %3822
    %3824 = vmax.xlane.f32.xlu0 %v3799
    %v3825 = vpop.xlane.xlu0 %3824
    %3826 = vmax.xlane.f32.xlu0 %v3800
    %v3827 = vpop.xlane.xlu0 %3826
    %3828 = vmax.xlane.f32.xlu0 %v3801
    %v3829 = vpop.xlane.xlu0 %3828
    %3830 = vmax.xlane.f32.xlu0 %v3802
    %v3831 = vpop.xlane.xlu0 %3830
    %3832 = vmax.xlane.f32.xlu0 %v3803
    %v3833 = vpop.xlane.xlu0 %3832
    %3834 = vmax.xlane.f32.xlu0 %v3804
    %v3835 = vpop.xlane.xlu0 %3834
    %3836 = vmax.xlane.f32.xlu0 %v3805
    %v3837 = vpop.xlane.xlu0 %3836
    %v3838 = vsel %vm1190, %v3807, -3e+38
    %v3839 = vsel %vm1190, %v3809, -3e+38
    %v3840 = vsel %vm1190, %v3811, -3e+38
    %v3841 = vsel %vm1190, %v3813, -3e+38
    %v3842 = vsel %vm1190, %v3815, -3e+38
    %v3843 = vsel %vm1190, %v3817, -3e+38
    %v3844 = vsel %vm1190, %v3819, -3e+38
    %v3845 = vsel %vm1190, %v3821, -3e+38
    %v3846 = vsel %vm1190, %v3823, -3e+38
    %v3847 = vsel %vm1190, %v3825, -3e+38
    %v3848 = vsel %vm1190, %v3827, -3e+38
    %v3849 = vsel %vm1190, %v3829, -3e+38
    %v3850 = vsel %vm1190, %v3831, -3e+38
    %v3851 = vsel %vm1190, %v3833, -3e+38
    %v3852 = vsel %vm1190, %v3835, -3e+38
    %v3853 = vsel %vm1190, %v3837, -3e+38
    %v3854 = vmax.f32 %v3773, %v3838
    %v3855 = vmax.f32 %v3774, %v3839
    %v3856 = vmax.f32 %v3775, %v3840
    %v3857 = vmax.f32 %v3776, %v3841
    %v3858 = vmax.f32 %v3777, %v3842
    %v3859 = vmax.f32 %v3778, %v3843
    %v3860 = vmax.f32 %v3779, %v3844
    %v3861 = vmax.f32 %v3780, %v3845
    %v3862 = vmax.f32 %v3781, %v3846
    %v3863 = vmax.f32 %v3782, %v3847
    %v3864 = vmax.f32 %v3783, %v3848
    %v3865 = vmax.f32 %v3784, %v3849
    %v3866 = vmax.f32 %v3785, %v3850
    %v3867 = vmax.f32 %v3786, %v3851
    %v3868 = vmax.f32 %v3787, %v3852
    %v3869 = vmax.f32 %v3788, %v3853
    %v3870 = vld [vmem:[%s101 + $0x13] ss:$0 sm:$0xff]
    %v3871 = vsel %vm3611, %v3870, -3e+38
    %v3872 = vsel %vm3612, %v3870, -3e+38
    %v3873 = vsel %vm3613, %v3870, -3e+38
    %v3874 = vsel %vm3614, %v3870, -3e+38
    %v3875 = vsel %vm3615, %v3870, -3e+38
    %v3876 = vsel %vm3616, %v3870, -3e+38
    %v3877 = vsel %vm3617, %v3870, -3e+38
    %v3878 = vsel %vm3618, %v3870, -3e+38
    %v3879 = vsel %vm3619, %v3870, -3e+38
    %v3880 = vsel %vm3620, %v3870, -3e+38
    %v3881 = vsel %vm3621, %v3870, -3e+38
    %v3882 = vsel %vm3622, %v3870, -3e+38
    %v3883 = vsel %vm3623, %v3870, -3e+38
    %v3884 = vsel %vm3624, %v3870, -3e+38
    %v3885 = vsel %vm3625, %v3870, -3e+38
    %v3886 = vsel %vm3626, %v3870, -3e+38
    %3887 = vmax.xlane.f32.xlu0 %v3871
    %v3888 = vpop.xlane.xlu0 %3887
    %3889 = vmax.xlane.f32.xlu0 %v3872
    %v3890 = vpop.xlane.xlu0 %3889
    %3891 = vmax.xlane.f32.xlu0 %v3873
    %v3892 = vpop.xlane.xlu0 %3891
    %3893 = vmax.xlane.f32.xlu0 %v3874
    %v3894 = vpop.xlane.xlu0 %3893
    %3895 = vmax.xlane.f32.xlu0 %v3875
    %v3896 = vpop.xlane.xlu0 %3895
    %3897 = vmax.xlane.f32.xlu0 %v3876
    %v3898 = vpop.xlane.xlu0 %3897
    %3899 = vmax.xlane.f32.xlu0 %v3877
    %v3900 = vpop.xlane.xlu0 %3899
    %3901 = vmax.xlane.f32.xlu0 %v3878
    %v3902 = vpop.xlane.xlu0 %3901
    %3903 = vmax.xlane.f32.xlu0 %v3879
    %v3904 = vpop.xlane.xlu0 %3903
    %3905 = vmax.xlane.f32.xlu0 %v3880
    %v3906 = vpop.xlane.xlu0 %3905
    %3907 = vmax.xlane.f32.xlu0 %v3881
    %v3908 = vpop.xlane.xlu0 %3907
    %3909 = vmax.xlane.f32.xlu0 %v3882
    %v3910 = vpop.xlane.xlu0 %3909
    %3911 = vmax.xlane.f32.xlu0 %v3883
    %v3912 = vpop.xlane.xlu0 %3911
    %3913 = vmax.xlane.f32.xlu0 %v3884
    %v3914 = vpop.xlane.xlu0 %3913
    %3915 = vmax.xlane.f32.xlu0 %v3885
    %v3916 = vpop.xlane.xlu0 %3915
    %3917 = vmax.xlane.f32.xlu0 %v3886
    %v3918 = vpop.xlane.xlu0 %3917
    %v3919 = vsel %vm1272, %v3888, -3e+38
    %v3920 = vsel %vm1272, %v3890, -3e+38
    %v3921 = vsel %vm1272, %v3892, -3e+38
    %v3922 = vsel %vm1272, %v3894, -3e+38
    %v3923 = vsel %vm1272, %v3896, -3e+38
    %v3924 = vsel %vm1272, %v3898, -3e+38
    %v3925 = vsel %vm1272, %v3900, -3e+38
    %v3926 = vsel %vm1272, %v3902, -3e+38
    %v3927 = vsel %vm1272, %v3904, -3e+38
    %v3928 = vsel %vm1272, %v3906, -3e+38
    %v3929 = vsel %vm1272, %v3908, -3e+38
    %v3930 = vsel %vm1272, %v3910, -3e+38
    %v3931 = vsel %vm1272, %v3912, -3e+38
    %v3932 = vsel %vm1272, %v3914, -3e+38
    %v3933 = vsel %vm1272, %v3916, -3e+38
    %v3934 = vsel %vm1272, %v3918, -3e+38
    %v3935 = vmax.f32 %v3854, %v3919
    %v3936 = vmax.f32 %v3855, %v3920
    %v3937 = vmax.f32 %v3856, %v3921
    %v3938 = vmax.f32 %v3857, %v3922
    %v3939 = vmax.f32 %v3858, %v3923
    %v3940 = vmax.f32 %v3859, %v3924
    %v3941 = vmax.f32 %v3860, %v3925
    %v3942 = vmax.f32 %v3861, %v3926
    %v3943 = vmax.f32 %v3862, %v3927
    %v3944 = vmax.f32 %v3863, %v3928
    %v3945 = vmax.f32 %v3864, %v3929
    %v3946 = vmax.f32 %v3865, %v3930
    %v3947 = vmax.f32 %v3866, %v3931
    %v3948 = vmax.f32 %v3867, %v3932
    %v3949 = vmax.f32 %v3868, %v3933
    %v3950 = vmax.f32 %v3869, %v3934
    %v3951 = vld [vmem:[%s101 + $0x14] ss:$0 sm:$0xff]
    %v3952 = vsel %vm3611, %v3951, -3e+38
    %v3953 = vsel %vm3612, %v3951, -3e+38
    %v3954 = vsel %vm3613, %v3951, -3e+38
    %v3955 = vsel %vm3614, %v3951, -3e+38
    %v3956 = vsel %vm3615, %v3951, -3e+38
    %v3957 = vsel %vm3616, %v3951, -3e+38
    %v3958 = vsel %vm3617, %v3951, -3e+38
    %v3959 = vsel %vm3618, %v3951, -3e+38
    %v3960 = vsel %vm3619, %v3951, -3e+38
    %v3961 = vsel %vm3620, %v3951, -3e+38
    %v3962 = vsel %vm3621, %v3951, -3e+38
    %v3963 = vsel %vm3622, %v3951, -3e+38
    %v3964 = vsel %vm3623, %v3951, -3e+38
    %v3965 = vsel %vm3624, %v3951, -3e+38
    %v3966 = vsel %vm3625, %v3951, -3e+38
    %v3967 = vsel %vm3626, %v3951, -3e+38
    %3968 = vmax.xlane.f32.xlu0 %v3952
    %v3969 = vpop.xlane.xlu0 %3968
    %3970 = vmax.xlane.f32.xlu0 %v3953
    %v3971 = vpop.xlane.xlu0 %3970
    %3972 = vmax.xlane.f32.xlu0 %v3954
    %v3973 = vpop.xlane.xlu0 %3972
    %3974 = vmax.xlane.f32.xlu0 %v3955
    %v3975 = vpop.xlane.xlu0 %3974
    %3976 = vmax.xlane.f32.xlu0 %v3956
    %v3977 = vpop.xlane.xlu0 %3976
    %3978 = vmax.xlane.f32.xlu0 %v3957
    %v3979 = vpop.xlane.xlu0 %3978
    %3980 = vmax.xlane.f32.xlu0 %v3958
    %v3981 = vpop.xlane.xlu0 %3980
    %3982 = vmax.xlane.f32.xlu0 %v3959
    %v3983 = vpop.xlane.xlu0 %3982
    %3984 = vmax.xlane.f32.xlu0 %v3960
    %v3985 = vpop.xlane.xlu0 %3984
    %3986 = vmax.xlane.f32.xlu0 %v3961
    %v3987 = vpop.xlane.xlu0 %3986
    %3988 = vmax.xlane.f32.xlu0 %v3962
    %v3989 = vpop.xlane.xlu0 %3988
    %3990 = vmax.xlane.f32.xlu0 %v3963
    %v3991 = vpop.xlane.xlu0 %3990
    %3992 = vmax.xlane.f32.xlu0 %v3964
    %v3993 = vpop.xlane.xlu0 %3992
    %3994 = vmax.xlane.f32.xlu0 %v3965
    %v3995 = vpop.xlane.xlu0 %3994
    %3996 = vmax.xlane.f32.xlu0 %v3966
    %v3997 = vpop.xlane.xlu0 %3996
    %3998 = vmax.xlane.f32.xlu0 %v3967
    %v3999 = vpop.xlane.xlu0 %3998
    %v4000 = vsel %vm1354, %v3969, -3e+38
    %v4001 = vsel %vm1354, %v3971, -3e+38
    %v4002 = vsel %vm1354, %v3973, -3e+38
    %v4003 = vsel %vm1354, %v3975, -3e+38
    %v4004 = vsel %vm1354, %v3977, -3e+38
    %v4005 = vsel %vm1354, %v3979, -3e+38
    %v4006 = vsel %vm1354, %v3981, -3e+38
    %v4007 = vsel %vm1354, %v3983, -3e+38
    %v4008 = vsel %vm1354, %v3985, -3e+38
    %v4009 = vsel %vm1354, %v3987, -3e+38
    %v4010 = vsel %vm1354, %v3989, -3e+38
    %v4011 = vsel %vm1354, %v3991, -3e+38
    %v4012 = vsel %vm1354, %v3993, -3e+38
    %v4013 = vsel %vm1354, %v3995, -3e+38
    %v4014 = vsel %vm1354, %v3997, -3e+38
    %v4015 = vsel %vm1354, %v3999, -3e+38
    %v4016 = vmax.f32 %v3935, %v4000
    %v4017 = vmax.f32 %v3936, %v4001
    %v4018 = vmax.f32 %v3937, %v4002
    %v4019 = vmax.f32 %v3938, %v4003
    %v4020 = vmax.f32 %v3939, %v4004
    %v4021 = vmax.f32 %v3940, %v4005
    %v4022 = vmax.f32 %v3941, %v4006
    %v4023 = vmax.f32 %v3942, %v4007
    %v4024 = vmax.f32 %v3943, %v4008
    %v4025 = vmax.f32 %v3944, %v4009
    %v4026 = vmax.f32 %v3945, %v4010
    %v4027 = vmax.f32 %v3946, %v4011
    %v4028 = vmax.f32 %v3947, %v4012
    %v4029 = vmax.f32 %v3948, %v4013
    %v4030 = vmax.f32 %v3949, %v4014
    %v4031 = vmax.f32 %v3950, %v4015
    %v4032 = vld [vmem:[%s101 + $0x15] ss:$0 sm:$0xff]
    %v4033 = vsel %vm3611, %v4032, -3e+38
    %v4034 = vsel %vm3612, %v4032, -3e+38
    %v4035 = vsel %vm3613, %v4032, -3e+38
    %v4036 = vsel %vm3614, %v4032, -3e+38
    %v4037 = vsel %vm3615, %v4032, -3e+38
    %v4038 = vsel %vm3616, %v4032, -3e+38
    %v4039 = vsel %vm3617, %v4032, -3e+38
    %v4040 = vsel %vm3618, %v4032, -3e+38
    %v4041 = vsel %vm3619, %v4032, -3e+38
    %v4042 = vsel %vm3620, %v4032, -3e+38
    %v4043 = vsel %vm3621, %v4032, -3e+38
    %v4044 = vsel %vm3622, %v4032, -3e+38
    %v4045 = vsel %vm3623, %v4032, -3e+38
    %v4046 = vsel %vm3624, %v4032, -3e+38
    %v4047 = vsel %vm3625, %v4032, -3e+38
    %v4048 = vsel %vm3626, %v4032, -3e+38
    %4049 = vmax.xlane.f32.xlu0 %v4033
    %v4050 = vpop.xlane.xlu0 %4049
    %4051 = vmax.xlane.f32.xlu0 %v4034
    %v4052 = vpop.xlane.xlu0 %4051
    %4053 = vmax.xlane.f32.xlu0 %v4035
    %v4054 = vpop.xlane.xlu0 %4053
    %4055 = vmax.xlane.f32.xlu0 %v4036
    %v4056 = vpop.xlane.xlu0 %4055
    %4057 = vmax.xlane.f32.xlu0 %v4037
    %v4058 = vpop.xlane.xlu0 %4057
    %4059 = vmax.xlane.f32.xlu0 %v4038
    %v4060 = vpop.xlane.xlu0 %4059
    %4061 = vmax.xlane.f32.xlu0 %v4039
    %v4062 = vpop.xlane.xlu0 %4061
    %4063 = vmax.xlane.f32.xlu0 %v4040
    %v4064 = vpop.xlane.xlu0 %4063
    %4065 = vmax.xlane.f32.xlu0 %v4041
    %v4066 = vpop.xlane.xlu0 %4065
    %4067 = vmax.xlane.f32.xlu0 %v4042
    %v4068 = vpop.xlane.xlu0 %4067
    %4069 = vmax.xlane.f32.xlu0 %v4043
    %v4070 = vpop.xlane.xlu0 %4069
    %4071 = vmax.xlane.f32.xlu0 %v4044
    %v4072 = vpop.xlane.xlu0 %4071
    %4073 = vmax.xlane.f32.xlu0 %v4045
    %v4074 = vpop.xlane.xlu0 %4073
    %4075 = vmax.xlane.f32.xlu0 %v4046
    %v4076 = vpop.xlane.xlu0 %4075
    %4077 = vmax.xlane.f32.xlu0 %v4047
    %v4078 = vpop.xlane.xlu0 %4077
    %4079 = vmax.xlane.f32.xlu0 %v4048
    %v4080 = vpop.xlane.xlu0 %4079
    %v4081 = vsel %vm1436, %v4050, -3e+38
    %v4082 = vsel %vm1436, %v4052, -3e+38
    %v4083 = vsel %vm1436, %v4054, -3e+38
    %v4084 = vsel %vm1436, %v4056, -3e+38
    %v4085 = vsel %vm1436, %v4058, -3e+38
    %v4086 = vsel %vm1436, %v4060, -3e+38
    %v4087 = vsel %vm1436, %v4062, -3e+38
    %v4088 = vsel %vm1436, %v4064, -3e+38
    %v4089 = vsel %vm1436, %v4066, -3e+38
    %v4090 = vsel %vm1436, %v4068, -3e+38
    %v4091 = vsel %vm1436, %v4070, -3e+38
    %v4092 = vsel %vm1436, %v4072, -3e+38
    %v4093 = vsel %vm1436, %v4074, -3e+38
    %v4094 = vsel %vm1436, %v4076, -3e+38
    %v4095 = vsel %vm1436, %v4078, -3e+38
    %v4096 = vsel %vm1436, %v4080, -3e+38
    %v4097 = vmax.f32 %v4016, %v4081
    %v4098 = vmax.f32 %v4017, %v4082
    %v4099 = vmax.f32 %v4018, %v4083
    %v4100 = vmax.f32 %v4019, %v4084
    %v4101 = vmax.f32 %v4020, %v4085
    %v4102 = vmax.f32 %v4021, %v4086
    %v4103 = vmax.f32 %v4022, %v4087
    %v4104 = vmax.f32 %v4023, %v4088
    %v4105 = vmax.f32 %v4024, %v4089
    %v4106 = vmax.f32 %v4025, %v4090
    %v4107 = vmax.f32 %v4026, %v4091
    %v4108 = vmax.f32 %v4027, %v4092
    %v4109 = vmax.f32 %v4028, %v4093
    %v4110 = vmax.f32 %v4029, %v4094
    %v4111 = vmax.f32 %v4030, %v4095
    %v4112 = vmax.f32 %v4031, %v4096
    %v4113 = vld [vmem:[%s101 + $0x16] ss:$0 sm:$0xff]
    %v4114 = vsel %vm3611, %v4113, -3e+38
    %v4115 = vsel %vm3612, %v4113, -3e+38
    %v4116 = vsel %vm3613, %v4113, -3e+38
    %v4117 = vsel %vm3614, %v4113, -3e+38
    %v4118 = vsel %vm3615, %v4113, -3e+38
    %v4119 = vsel %vm3616, %v4113, -3e+38
    %v4120 = vsel %vm3617, %v4113, -3e+38
    %v4121 = vsel %vm3618, %v4113, -3e+38
    %v4122 = vsel %vm3619, %v4113, -3e+38
    %v4123 = vsel %vm3620, %v4113, -3e+38
    %v4124 = vsel %vm3621, %v4113, -3e+38
    %v4125 = vsel %vm3622, %v4113, -3e+38
    %v4126 = vsel %vm3623, %v4113, -3e+38
    %v4127 = vsel %vm3624, %v4113, -3e+38
    %v4128 = vsel %vm3625, %v4113, -3e+38
    %v4129 = vsel %vm3626, %v4113, -3e+38
    %4130 = vmax.xlane.f32.xlu0 %v4114
    %v4131 = vpop.xlane.xlu0 %4130
    %4132 = vmax.xlane.f32.xlu0 %v4115
    %v4133 = vpop.xlane.xlu0 %4132
    %4134 = vmax.xlane.f32.xlu0 %v4116
    %v4135 = vpop.xlane.xlu0 %4134
    %4136 = vmax.xlane.f32.xlu0 %v4117
    %v4137 = vpop.xlane.xlu0 %4136
    %4138 = vmax.xlane.f32.xlu0 %v4118
    %v4139 = vpop.xlane.xlu0 %4138
    %4140 = vmax.xlane.f32.xlu0 %v4119
    %v4141 = vpop.xlane.xlu0 %4140
    %4142 = vmax.xlane.f32.xlu0 %v4120
    %v4143 = vpop.xlane.xlu0 %4142
    %4144 = vmax.xlane.f32.xlu0 %v4121
    %v4145 = vpop.xlane.xlu0 %4144
    %4146 = vmax.xlane.f32.xlu0 %v4122
    %v4147 = vpop.xlane.xlu0 %4146
    %4148 = vmax.xlane.f32.xlu0 %v4123
    %v4149 = vpop.xlane.xlu0 %4148
    %4150 = vmax.xlane.f32.xlu0 %v4124
    %v4151 = vpop.xlane.xlu0 %4150
    %4152 = vmax.xlane.f32.xlu0 %v4125
    %v4153 = vpop.xlane.xlu0 %4152
    %4154 = vmax.xlane.f32.xlu0 %v4126
    %v4155 = vpop.xlane.xlu0 %4154
    %4156 = vmax.xlane.f32.xlu0 %v4127
    %v4157 = vpop.xlane.xlu0 %4156
    %4158 = vmax.xlane.f32.xlu0 %v4128
    %v4159 = vpop.xlane.xlu0 %4158
    %4160 = vmax.xlane.f32.xlu0 %v4129
    %v4161 = vpop.xlane.xlu0 %4160
    %v4162 = vsel %vm1518, %v4131, -3e+38
    %v4163 = vsel %vm1518, %v4133, -3e+38
    %v4164 = vsel %vm1518, %v4135, -3e+38
    %v4165 = vsel %vm1518, %v4137, -3e+38
    %v4166 = vsel %vm1518, %v4139, -3e+38
    %v4167 = vsel %vm1518, %v4141, -3e+38
    %v4168 = vsel %vm1518, %v4143, -3e+38
    %v4169 = vsel %vm1518, %v4145, -3e+38
    %v4170 = vsel %vm1518, %v4147, -3e+38
    %v4171 = vsel %vm1518, %v4149, -3e+38
    %v4172 = vsel %vm1518, %v4151, -3e+38
    %v4173 = vsel %vm1518, %v4153, -3e+38
    %v4174 = vsel %vm1518, %v4155, -3e+38
    %v4175 = vsel %vm1518, %v4157, -3e+38
    %v4176 = vsel %vm1518, %v4159, -3e+38
    %v4177 = vsel %vm1518, %v4161, -3e+38
    %v4178 = vmax.f32 %v4097, %v4162
    %v4179 = vmax.f32 %v4098, %v4163
    %v4180 = vmax.f32 %v4099, %v4164
    %v4181 = vmax.f32 %v4100, %v4165
    %v4182 = vmax.f32 %v4101, %v4166
    %v4183 = vmax.f32 %v4102, %v4167
    %v4184 = vmax.f32 %v4103, %v4168
    %v4185 = vmax.f32 %v4104, %v4169
    %v4186 = vmax.f32 %v4105, %v4170
    %v4187 = vmax.f32 %v4106, %v4171
    %v4188 = vmax.f32 %v4107, %v4172
    %v4189 = vmax.f32 %v4108, %v4173
    %v4190 = vmax.f32 %v4109, %v4174
    %v4191 = vmax.f32 %v4110, %v4175
    %v4192 = vmax.f32 %v4111, %v4176
    %v4193 = vmax.f32 %v4112, %v4177
    %v4194 = vld [vmem:[%s101 + $0x17] ss:$0 sm:$0xff]
    %v4195 = vsel %vm3611, %v4194, -3e+38
    %v4196 = vsel %vm3612, %v4194, -3e+38
    %v4197 = vsel %vm3613, %v4194, -3e+38
    %v4198 = vsel %vm3614, %v4194, -3e+38
    %v4199 = vsel %vm3615, %v4194, -3e+38
    %v4200 = vsel %vm3616, %v4194, -3e+38
    %v4201 = vsel %vm3617, %v4194, -3e+38
    %v4202 = vsel %vm3618, %v4194, -3e+38
    %v4203 = vsel %vm3619, %v4194, -3e+38
    %v4204 = vsel %vm3620, %v4194, -3e+38
    %v4205 = vsel %vm3621, %v4194, -3e+38
    %v4206 = vsel %vm3622, %v4194, -3e+38
    %v4207 = vsel %vm3623, %v4194, -3e+38
    %v4208 = vsel %vm3624, %v4194, -3e+38
    %v4209 = vsel %vm3625, %v4194, -3e+38
    %v4210 = vsel %vm3626, %v4194, -3e+38
    %4211 = vmax.xlane.f32.xlu0 %v4195
    %v4212 = vpop.xlane.xlu0 %4211
    %4213 = vmax.xlane.f32.xlu0 %v4196
    %v4214 = vpop.xlane.xlu0 %4213
    %4215 = vmax.xlane.f32.xlu0 %v4197
    %v4216 = vpop.xlane.xlu0 %4215
    %4217 = vmax.xlane.f32.xlu0 %v4198
    %v4218 = vpop.xlane.xlu0 %4217
    %4219 = vmax.xlane.f32.xlu0 %v4199
    %v4220 = vpop.xlane.xlu0 %4219
    %4221 = vmax.xlane.f32.xlu0 %v4200
    %v4222 = vpop.xlane.xlu0 %4221
    %4223 = vmax.xlane.f32.xlu0 %v4201
    %v4224 = vpop.xlane.xlu0 %4223
    %4225 = vmax.xlane.f32.xlu0 %v4202
    %v4226 = vpop.xlane.xlu0 %4225
    %4227 = vmax.xlane.f32.xlu0 %v4203
    %v4228 = vpop.xlane.xlu0 %4227
    %4229 = vmax.xlane.f32.xlu0 %v4204
    %v4230 = vpop.xlane.xlu0 %4229
    %4231 = vmax.xlane.f32.xlu0 %v4205
    %v4232 = vpop.xlane.xlu0 %4231
    %4233 = vmax.xlane.f32.xlu0 %v4206
    %v4234 = vpop.xlane.xlu0 %4233
    %4235 = vmax.xlane.f32.xlu0 %v4207
    %v4236 = vpop.xlane.xlu0 %4235
    %4237 = vmax.xlane.f32.xlu0 %v4208
    %v4238 = vpop.xlane.xlu0 %4237
    %4239 = vmax.xlane.f32.xlu0 %v4209
    %v4240 = vpop.xlane.xlu0 %4239
    %4241 = vmax.xlane.f32.xlu0 %v4210
    %v4242 = vpop.xlane.xlu0 %4241
    %v4243 = vsel %vm1600, %v4212, -3e+38
    %v4244 = vsel %vm1600, %v4214, -3e+38
    %v4245 = vsel %vm1600, %v4216, -3e+38
    %v4246 = vsel %vm1600, %v4218, -3e+38
    %v4247 = vsel %vm1600, %v4220, -3e+38
    %v4248 = vsel %vm1600, %v4222, -3e+38
    %v4249 = vsel %vm1600, %v4224, -3e+38
    %v4250 = vsel %vm1600, %v4226, -3e+38
    %v4251 = vsel %vm1600, %v4228, -3e+38
    %v4252 = vsel %vm1600, %v4230, -3e+38
    %v4253 = vsel %vm1600, %v4232, -3e+38
    %v4254 = vsel %vm1600, %v4234, -3e+38
    %v4255 = vsel %vm1600, %v4236, -3e+38
    %v4256 = vsel %vm1600, %v4238, -3e+38
    %v4257 = vsel %vm1600, %v4240, -3e+38
    %v4258 = vsel %vm1600, %v4242, -3e+38
    %v4259 = vmax.f32 %v4178, %v4243
    %v4260 = vmax.f32 %v4179, %v4244
    %v4261 = vmax.f32 %v4180, %v4245
    %v4262 = vmax.f32 %v4181, %v4246
    %v4263 = vmax.f32 %v4182, %v4247
    %v4264 = vmax.f32 %v4183, %v4248
    %v4265 = vmax.f32 %v4184, %v4249
    %v4266 = vmax.f32 %v4185, %v4250
    %v4267 = vmax.f32 %v4186, %v4251
    %v4268 = vmax.f32 %v4187, %v4252
    %v4269 = vmax.f32 %v4188, %v4253
    %v4270 = vmax.f32 %v4189, %v4254
    %v4271 = vmax.f32 %v4190, %v4255
    %v4272 = vmax.f32 %v4191, %v4256
    %v4273 = vmax.f32 %v4192, %v4257
    %v4274 = vmax.f32 %v4193, %v4258
    %v4275 = vld [vmem:[%s101 + $0x30] ss:$0 sm:$0xff]
    %v4276 = vsel %vm3611, %v4275, -3e+38
    %v4277 = vsel %vm3612, %v4275, -3e+38
    %v4278 = vsel %vm3613, %v4275, -3e+38
    %v4279 = vsel %vm3614, %v4275, -3e+38
    %v4280 = vsel %vm3615, %v4275, -3e+38
    %v4281 = vsel %vm3616, %v4275, -3e+38
    %v4282 = vsel %vm3617, %v4275, -3e+38
    %v4283 = vsel %vm3618, %v4275, -3e+38
    %v4284 = vsel %vm3619, %v4275, -3e+38
    %v4285 = vsel %vm3620, %v4275, -3e+38
    %v4286 = vsel %vm3621, %v4275, -3e+38
    %v4287 = vsel %vm3622, %v4275, -3e+38
    %v4288 = vsel %vm3623, %v4275, -3e+38
    %v4289 = vsel %vm3624, %v4275, -3e+38
    %v4290 = vsel %vm3625, %v4275, -3e+38
    %v4291 = vsel %vm3626, %v4275, -3e+38
    %4292 = vmax.xlane.f32.xlu0 %v4276
    %v4293 = vpop.xlane.xlu0 %4292
    %4294 = vmax.xlane.f32.xlu0 %v4277
    %v4295 = vpop.xlane.xlu0 %4294
    %4296 = vmax.xlane.f32.xlu0 %v4278
    %v4297 = vpop.xlane.xlu0 %4296
    %4298 = vmax.xlane.f32.xlu0 %v4279
    %v4299 = vpop.xlane.xlu0 %4298
    %4300 = vmax.xlane.f32.xlu0 %v4280
    %v4301 = vpop.xlane.xlu0 %4300
    %4302 = vmax.xlane.f32.xlu0 %v4281
    %v4303 = vpop.xlane.xlu0 %4302
    %4304 = vmax.xlane.f32.xlu0 %v4282
    %v4305 = vpop.xlane.xlu0 %4304
    %4306 = vmax.xlane.f32.xlu0 %v4283
    %v4307 = vpop.xlane.xlu0 %4306
    %4308 = vmax.xlane.f32.xlu0 %v4284
    %v4309 = vpop.xlane.xlu0 %4308
    %4310 = vmax.xlane.f32.xlu0 %v4285
    %v4311 = vpop.xlane.xlu0 %4310
    %4312 = vmax.xlane.f32.xlu0 %v4286
    %v4313 = vpop.xlane.xlu0 %4312
    %4314 = vmax.xlane.f32.xlu0 %v4287
    %v4315 = vpop.xlane.xlu0 %4314
    %4316 = vmax.xlane.f32.xlu0 %v4288
    %v4317 = vpop.xlane.xlu0 %4316
    %4318 = vmax.xlane.f32.xlu0 %v4289
    %v4319 = vpop.xlane.xlu0 %4318
    %4320 = vmax.xlane.f32.xlu0 %v4290
    %v4321 = vpop.xlane.xlu0 %4320
    %4322 = vmax.xlane.f32.xlu0 %v4291
    %v4323 = vpop.xlane.xlu0 %4322
    %v4324 = vsel %vm1682, %v4293, -3e+38
    %v4325 = vsel %vm1682, %v4295, -3e+38
    %v4326 = vsel %vm1682, %v4297, -3e+38
    %v4327 = vsel %vm1682, %v4299, -3e+38
    %v4328 = vsel %vm1682, %v4301, -3e+38
    %v4329 = vsel %vm1682, %v4303, -3e+38
    %v4330 = vsel %vm1682, %v4305, -3e+38
    %v4331 = vsel %vm1682, %v4307, -3e+38
    %v4332 = vsel %vm1682, %v4309, -3e+38
    %v4333 = vsel %vm1682, %v4311, -3e+38
    %v4334 = vsel %vm1682, %v4313, -3e+38
    %v4335 = vsel %vm1682, %v4315, -3e+38
    %v4336 = vsel %vm1682, %v4317, -3e+38
    %v4337 = vsel %vm1682, %v4319, -3e+38
    %v4338 = vsel %vm1682, %v4321, -3e+38
    %v4339 = vsel %vm1682, %v4323, -3e+38
    %v4340 = vmax.f32 %v4259, %v4324
    %v4341 = vmax.f32 %v4260, %v4325
    %v4342 = vmax.f32 %v4261, %v4326
    %v4343 = vmax.f32 %v4262, %v4327
    %v4344 = vmax.f32 %v4263, %v4328
    %v4345 = vmax.f32 %v4264, %v4329
    %v4346 = vmax.f32 %v4265, %v4330
    %v4347 = vmax.f32 %v4266, %v4331
    %v4348 = vmax.f32 %v4267, %v4332
    %v4349 = vmax.f32 %v4268, %v4333
    %v4350 = vmax.f32 %v4269, %v4334
    %v4351 = vmax.f32 %v4270, %v4335
    %v4352 = vmax.f32 %v4271, %v4336
    %v4353 = vmax.f32 %v4272, %v4337
    %v4354 = vmax.f32 %v4273, %v4338
    %v4355 = vmax.f32 %v4274, %v4339
    %v4356 = vld [vmem:[%s101 + $0x31] ss:$0 sm:$0xff]
    %v4357 = vsel %vm3611, %v4356, -3e+38
    %v4358 = vsel %vm3612, %v4356, -3e+38
    %v4359 = vsel %vm3613, %v4356, -3e+38
    %v4360 = vsel %vm3614, %v4356, -3e+38
    %v4361 = vsel %vm3615, %v4356, -3e+38
    %v4362 = vsel %vm3616, %v4356, -3e+38
    %v4363 = vsel %vm3617, %v4356, -3e+38
    %v4364 = vsel %vm3618, %v4356, -3e+38
    %v4365 = vsel %vm3619, %v4356, -3e+38
    %v4366 = vsel %vm3620, %v4356, -3e+38
    %v4367 = vsel %vm3621, %v4356, -3e+38
    %v4368 = vsel %vm3622, %v4356, -3e+38
    %v4369 = vsel %vm3623, %v4356, -3e+38
    %v4370 = vsel %vm3624, %v4356, -3e+38
    %v4371 = vsel %vm3625, %v4356, -3e+38
    %v4372 = vsel %vm3626, %v4356, -3e+38
    %4373 = vmax.xlane.f32.xlu0 %v4357
    %v4374 = vpop.xlane.xlu0 %4373
    %4375 = vmax.xlane.f32.xlu0 %v4358
    %v4376 = vpop.xlane.xlu0 %4375
    %4377 = vmax.xlane.f32.xlu0 %v4359
    %v4378 = vpop.xlane.xlu0 %4377
    %4379 = vmax.xlane.f32.xlu0 %v4360
    %v4380 = vpop.xlane.xlu0 %4379
    %4381 = vmax.xlane.f32.xlu0 %v4361
    %v4382 = vpop.xlane.xlu0 %4381
    %4383 = vmax.xlane.f32.xlu0 %v4362
    %v4384 = vpop.xlane.xlu0 %4383
    %4385 = vmax.xlane.f32.xlu0 %v4363
    %v4386 = vpop.xlane.xlu0 %4385
    %4387 = vmax.xlane.f32.xlu0 %v4364
    %v4388 = vpop.xlane.xlu0 %4387
    %4389 = vmax.xlane.f32.xlu0 %v4365
    %v4390 = vpop.xlane.xlu0 %4389
    %4391 = vmax.xlane.f32.xlu0 %v4366
    %v4392 = vpop.xlane.xlu0 %4391
    %4393 = vmax.xlane.f32.xlu0 %v4367
    %v4394 = vpop.xlane.xlu0 %4393
    %4395 = vmax.xlane.f32.xlu0 %v4368
    %v4396 = vpop.xlane.xlu0 %4395
    %4397 = vmax.xlane.f32.xlu0 %v4369
    %v4398 = vpop.xlane.xlu0 %4397
    %4399 = vmax.xlane.f32.xlu0 %v4370
    %v4400 = vpop.xlane.xlu0 %4399
    %4401 = vmax.xlane.f32.xlu0 %v4371
    %v4402 = vpop.xlane.xlu0 %4401
    %4403 = vmax.xlane.f32.xlu0 %v4372
    %v4404 = vpop.xlane.xlu0 %4403
    %v4405 = vsel %vm1764, %v4374, -3e+38
    %v4406 = vsel %vm1764, %v4376, -3e+38
    %v4407 = vsel %vm1764, %v4378, -3e+38
    %v4408 = vsel %vm1764, %v4380, -3e+38
    %v4409 = vsel %vm1764, %v4382, -3e+38
    %v4410 = vsel %vm1764, %v4384, -3e+38
    %v4411 = vsel %vm1764, %v4386, -3e+38
    %v4412 = vsel %vm1764, %v4388, -3e+38
    %v4413 = vsel %vm1764, %v4390, -3e+38
    %v4414 = vsel %vm1764, %v4392, -3e+38
    %v4415 = vsel %vm1764, %v4394, -3e+38
    %v4416 = vsel %vm1764, %v4396, -3e+38
    %v4417 = vsel %vm1764, %v4398, -3e+38
    %v4418 = vsel %vm1764, %v4400, -3e+38
    %v4419 = vsel %vm1764, %v4402, -3e+38
    %v4420 = vsel %vm1764, %v4404, -3e+38
    %v4421 = vmax.f32 %v4340, %v4405
    %v4422 = vmax.f32 %v4341, %v4406
    %v4423 = vmax.f32 %v4342, %v4407
    %v4424 = vmax.f32 %v4343, %v4408
    %v4425 = vmax.f32 %v4344, %v4409
    %v4426 = vmax.f32 %v4345, %v4410
    %v4427 = vmax.f32 %v4346, %v4411
    %v4428 = vmax.f32 %v4347, %v4412
    %v4429 = vmax.f32 %v4348, %v4413
    %v4430 = vmax.f32 %v4349, %v4414
    %v4431 = vmax.f32 %v4350, %v4415
    %v4432 = vmax.f32 %v4351, %v4416
    %v4433 = vmax.f32 %v4352, %v4417
    %v4434 = vmax.f32 %v4353, %v4418
    %v4435 = vmax.f32 %v4354, %v4419
    %v4436 = vmax.f32 %v4355, %v4420
    %v4437 = vld [vmem:[%s101 + $0x32] ss:$0 sm:$0xff]
    %v4438 = vsel %vm3611, %v4437, -3e+38
    %v4439 = vsel %vm3612, %v4437, -3e+38
    %v4440 = vsel %vm3613, %v4437, -3e+38
    %v4441 = vsel %vm3614, %v4437, -3e+38
    %v4442 = vsel %vm3615, %v4437, -3e+38
    %v4443 = vsel %vm3616, %v4437, -3e+38
    %v4444 = vsel %vm3617, %v4437, -3e+38
    %v4445 = vsel %vm3618, %v4437, -3e+38
    %v4446 = vsel %vm3619, %v4437, -3e+38
    %v4447 = vsel %vm3620, %v4437, -3e+38
    %v4448 = vsel %vm3621, %v4437, -3e+38
    %v4449 = vsel %vm3622, %v4437, -3e+38
    %v4450 = vsel %vm3623, %v4437, -3e+38
    %v4451 = vsel %vm3624, %v4437, -3e+38
    %v4452 = vsel %vm3625, %v4437, -3e+38
    %v4453 = vsel %vm3626, %v4437, -3e+38
    %4454 = vmax.xlane.f32.xlu0 %v4438
    %v4455 = vpop.xlane.xlu0 %4454
    %4456 = vmax.xlane.f32.xlu0 %v4439
    %v4457 = vpop.xlane.xlu0 %4456
    %4458 = vmax.xlane.f32.xlu0 %v4440
    %v4459 = vpop.xlane.xlu0 %4458
    %4460 = vmax.xlane.f32.xlu0 %v4441
    %v4461 = vpop.xlane.xlu0 %4460
    %4462 = vmax.xlane.f32.xlu0 %v4442
    %v4463 = vpop.xlane.xlu0 %4462
    %4464 = vmax.xlane.f32.xlu0 %v4443
    %v4465 = vpop.xlane.xlu0 %4464
    %4466 = vmax.xlane.f32.xlu0 %v4444
    %v4467 = vpop.xlane.xlu0 %4466
    %4468 = vmax.xlane.f32.xlu0 %v4445
    %v4469 = vpop.xlane.xlu0 %4468
    %4470 = vmax.xlane.f32.xlu0 %v4446
    %v4471 = vpop.xlane.xlu0 %4470
    %4472 = vmax.xlane.f32.xlu0 %v4447
    %v4473 = vpop.xlane.xlu0 %4472
    %4474 = vmax.xlane.f32.xlu0 %v4448
    %v4475 = vpop.xlane.xlu0 %4474
    %4476 = vmax.xlane.f32.xlu0 %v4449
    %v4477 = vpop.xlane.xlu0 %4476
    %4478 = vmax.xlane.f32.xlu0 %v4450
    %v4479 = vpop.xlane.xlu0 %4478
    %4480 = vmax.xlane.f32.xlu0 %v4451
    %v4481 = vpop.xlane.xlu0 %4480
    %4482 = vmax.xlane.f32.xlu0 %v4452
    %v4483 = vpop.xlane.xlu0 %4482
    %4484 = vmax.xlane.f32.xlu0 %v4453
    %v4485 = vpop.xlane.xlu0 %4484
    %v4486 = vsel %vm1846, %v4455, -3e+38
    %v4487 = vsel %vm1846, %v4457, -3e+38
    %v4488 = vsel %vm1846, %v4459, -3e+38
    %v4489 = vsel %vm1846, %v4461, -3e+38
    %v4490 = vsel %vm1846, %v4463, -3e+38
    %v4491 = vsel %vm1846, %v4465, -3e+38
    %v4492 = vsel %vm1846, %v4467, -3e+38
    %v4493 = vsel %vm1846, %v4469, -3e+38
    %v4494 = vsel %vm1846, %v4471, -3e+38
    %v4495 = vsel %vm1846, %v4473, -3e+38
    %v4496 = vsel %vm1846, %v4475, -3e+38
    %v4497 = vsel %vm1846, %v4477, -3e+38
    %v4498 = vsel %vm1846, %v4479, -3e+38
    %v4499 = vsel %vm1846, %v4481, -3e+38
    %v4500 = vsel %vm1846, %v4483, -3e+38
    %v4501 = vsel %vm1846, %v4485, -3e+38
    %v4502 = vmax.f32 %v4421, %v4486
    %v4503 = vmax.f32 %v4422, %v4487
    %v4504 = vmax.f32 %v4423, %v4488
    %v4505 = vmax.f32 %v4424, %v4489
    %v4506 = vmax.f32 %v4425, %v4490
    %v4507 = vmax.f32 %v4426, %v4491
    %v4508 = vmax.f32 %v4427, %v4492
    %v4509 = vmax.f32 %v4428, %v4493
    %v4510 = vmax.f32 %v4429, %v4494
    %v4511 = vmax.f32 %v4430, %v4495
    %v4512 = vmax.f32 %v4431, %v4496
    %v4513 = vmax.f32 %v4432, %v4497
    %v4514 = vmax.f32 %v4433, %v4498
    %v4515 = vmax.f32 %v4434, %v4499
    %v4516 = vmax.f32 %v4435, %v4500
    %v4517 = vmax.f32 %v4436, %v4501
    %v4518 = vld [vmem:[%s101 + $0x33] ss:$0 sm:$0xff]
    %v4519 = vsel %vm3611, %v4518, -3e+38
    %v4520 = vsel %vm3612, %v4518, -3e+38
    %v4521 = vsel %vm3613, %v4518, -3e+38
    %v4522 = vsel %vm3614, %v4518, -3e+38
    %v4523 = vsel %vm3615, %v4518, -3e+38
    %v4524 = vsel %vm3616, %v4518, -3e+38
    %v4525 = vsel %vm3617, %v4518, -3e+38
    %v4526 = vsel %vm3618, %v4518, -3e+38
    %v4527 = vsel %vm3619, %v4518, -3e+38
    %v4528 = vsel %vm3620, %v4518, -3e+38
    %v4529 = vsel %vm3621, %v4518, -3e+38
    %v4530 = vsel %vm3622, %v4518, -3e+38
    %v4531 = vsel %vm3623, %v4518, -3e+38
    %v4532 = vsel %vm3624, %v4518, -3e+38
    %v4533 = vsel %vm3625, %v4518, -3e+38
    %v4534 = vsel %vm3626, %v4518, -3e+38
    %4535 = vmax.xlane.f32.xlu0 %v4519
    %v4536 = vpop.xlane.xlu0 %4535
    %4537 = vmax.xlane.f32.xlu0 %v4520
    %v4538 = vpop.xlane.xlu0 %4537
    %4539 = vmax.xlane.f32.xlu0 %v4521
    %v4540 = vpop.xlane.xlu0 %4539
    %4541 = vmax.xlane.f32.xlu0 %v4522
    %v4542 = vpop.xlane.xlu0 %4541
    %4543 = vmax.xlane.f32.xlu0 %v4523
    %v4544 = vpop.xlane.xlu0 %4543
    %4545 = vmax.xlane.f32.xlu0 %v4524
    %v4546 = vpop.xlane.xlu0 %4545
    %4547 = vmax.xlane.f32.xlu0 %v4525
    %v4548 = vpop.xlane.xlu0 %4547
    %4549 = vmax.xlane.f32.xlu0 %v4526
    %v4550 = vpop.xlane.xlu0 %4549
    %4551 = vmax.xlane.f32.xlu0 %v4527
    %v4552 = vpop.xlane.xlu0 %4551
    %4553 = vmax.xlane.f32.xlu0 %v4528
    %v4554 = vpop.xlane.xlu0 %4553
    %4555 = vmax.xlane.f32.xlu0 %v4529
    %v4556 = vpop.xlane.xlu0 %4555
    %4557 = vmax.xlane.f32.xlu0 %v4530
    %v4558 = vpop.xlane.xlu0 %4557
    %4559 = vmax.xlane.f32.xlu0 %v4531
    %v4560 = vpop.xlane.xlu0 %4559
    %4561 = vmax.xlane.f32.xlu0 %v4532
    %v4562 = vpop.xlane.xlu0 %4561
    %4563 = vmax.xlane.f32.xlu0 %v4533
    %v4564 = vpop.xlane.xlu0 %4563
    %4565 = vmax.xlane.f32.xlu0 %v4534
    %v4566 = vpop.xlane.xlu0 %4565
    %v4567 = vsel %vm1928, %v4536, -3e+38
    %v4568 = vsel %vm1928, %v4538, -3e+38
    %v4569 = vsel %vm1928, %v4540, -3e+38
    %v4570 = vsel %vm1928, %v4542, -3e+38
    %v4571 = vsel %vm1928, %v4544, -3e+38
    %v4572 = vsel %vm1928, %v4546, -3e+38
    %v4573 = vsel %vm1928, %v4548, -3e+38
    %v4574 = vsel %vm1928, %v4550, -3e+38
    %v4575 = vsel %vm1928, %v4552, -3e+38
    %v4576 = vsel %vm1928, %v4554, -3e+38
    %v4577 = vsel %vm1928, %v4556, -3e+38
    %v4578 = vsel %vm1928, %v4558, -3e+38
    %v4579 = vsel %vm1928, %v4560, -3e+38
    %v4580 = vsel %vm1928, %v4562, -3e+38
    %v4581 = vsel %vm1928, %v4564, -3e+38
    %v4582 = vsel %vm1928, %v4566, -3e+38
    %v4583 = vmax.f32 %v4502, %v4567
    %v4584 = vmax.f32 %v4503, %v4568
    %v4585 = vmax.f32 %v4504, %v4569
    %v4586 = vmax.f32 %v4505, %v4570
    %v4587 = vmax.f32 %v4506, %v4571
    %v4588 = vmax.f32 %v4507, %v4572
    %v4589 = vmax.f32 %v4508, %v4573
    %v4590 = vmax.f32 %v4509, %v4574
    %v4591 = vmax.f32 %v4510, %v4575
    %v4592 = vmax.f32 %v4511, %v4576
    %v4593 = vmax.f32 %v4512, %v4577
    %v4594 = vmax.f32 %v4513, %v4578
    %v4595 = vmax.f32 %v4514, %v4579
    %v4596 = vmax.f32 %v4515, %v4580
    %v4597 = vmax.f32 %v4516, %v4581
    %v4598 = vmax.f32 %v4517, %v4582
    %v4599 = vld [vmem:[%s101 + $0x34] ss:$0 sm:$0xff]
    %v4600 = vsel %vm3611, %v4599, -3e+38
    %v4601 = vsel %vm3612, %v4599, -3e+38
    %v4602 = vsel %vm3613, %v4599, -3e+38
    %v4603 = vsel %vm3614, %v4599, -3e+38
    %v4604 = vsel %vm3615, %v4599, -3e+38
    %v4605 = vsel %vm3616, %v4599, -3e+38
    %v4606 = vsel %vm3617, %v4599, -3e+38
    %v4607 = vsel %vm3618, %v4599, -3e+38
    %v4608 = vsel %vm3619, %v4599, -3e+38
    %v4609 = vsel %vm3620, %v4599, -3e+38
    %v4610 = vsel %vm3621, %v4599, -3e+38
    %v4611 = vsel %vm3622, %v4599, -3e+38
    %v4612 = vsel %vm3623, %v4599, -3e+38
    %v4613 = vsel %vm3624, %v4599, -3e+38
    %v4614 = vsel %vm3625, %v4599, -3e+38
    %v4615 = vsel %vm3626, %v4599, -3e+38
    %4616 = vmax.xlane.f32.xlu0 %v4600
    %v4617 = vpop.xlane.xlu0 %4616
    %4618 = vmax.xlane.f32.xlu0 %v4601
    %v4619 = vpop.xlane.xlu0 %4618
    %4620 = vmax.xlane.f32.xlu0 %v4602
    %v4621 = vpop.xlane.xlu0 %4620
    %4622 = vmax.xlane.f32.xlu0 %v4603
    %v4623 = vpop.xlane.xlu0 %4622
    %4624 = vmax.xlane.f32.xlu0 %v4604
    %v4625 = vpop.xlane.xlu0 %4624
    %4626 = vmax.xlane.f32.xlu0 %v4605
    %v4627 = vpop.xlane.xlu0 %4626
    %4628 = vmax.xlane.f32.xlu0 %v4606
    %v4629 = vpop.xlane.xlu0 %4628
    %4630 = vmax.xlane.f32.xlu0 %v4607
    %v4631 = vpop.xlane.xlu0 %4630
    %4632 = vmax.xlane.f32.xlu0 %v4608
    %v4633 = vpop.xlane.xlu0 %4632
    %4634 = vmax.xlane.f32.xlu0 %v4609
    %v4635 = vpop.xlane.xlu0 %4634
    %4636 = vmax.xlane.f32.xlu0 %v4610
    %v4637 = vpop.xlane.xlu0 %4636
    %4638 = vmax.xlane.f32.xlu0 %v4611
    %v4639 = vpop.xlane.xlu0 %4638
    %4640 = vmax.xlane.f32.xlu0 %v4612
    %v4641 = vpop.xlane.xlu0 %4640
    %4642 = vmax.xlane.f32.xlu0 %v4613
    %v4643 = vpop.xlane.xlu0 %4642
    %4644 = vmax.xlane.f32.xlu0 %v4614
    %v4645 = vpop.xlane.xlu0 %4644
    %4646 = vmax.xlane.f32.xlu0 %v4615
    %v4647 = vpop.xlane.xlu0 %4646
    %v4648 = vsel %vm2010, %v4617, -3e+38
    %v4649 = vsel %vm2010, %v4619, -3e+38
    %v4650 = vsel %vm2010, %v4621, -3e+38
    %v4651 = vsel %vm2010, %v4623, -3e+38
    %v4652 = vsel %vm2010, %v4625, -3e+38
    %v4653 = vsel %vm2010, %v4627, -3e+38
    %v4654 = vsel %vm2010, %v4629, -3e+38
    %v4655 = vsel %vm2010, %v4631, -3e+38
    %v4656 = vsel %vm2010, %v4633, -3e+38
    %v4657 = vsel %vm2010, %v4635, -3e+38
    %v4658 = vsel %vm2010, %v4637, -3e+38
    %v4659 = vsel %vm2010, %v4639, -3e+38
    %v4660 = vsel %vm2010, %v4641, -3e+38
    %v4661 = vsel %vm2010, %v4643, -3e+38
    %v4662 = vsel %vm2010, %v4645, -3e+38
    %v4663 = vsel %vm2010, %v4647, -3e+38
    %v4664 = vmax.f32 %v4583, %v4648
    %v4665 = vmax.f32 %v4584, %v4649
    %v4666 = vmax.f32 %v4585, %v4650
    %v4667 = vmax.f32 %v4586, %v4651
    %v4668 = vmax.f32 %v4587, %v4652
    %v4669 = vmax.f32 %v4588, %v4653
    %v4670 = vmax.f32 %v4589, %v4654
    %v4671 = vmax.f32 %v4590, %v4655
    %v4672 = vmax.f32 %v4591, %v4656
    %v4673 = vmax.f32 %v4592, %v4657
    %v4674 = vmax.f32 %v4593, %v4658
    %v4675 = vmax.f32 %v4594, %v4659
    %v4676 = vmax.f32 %v4595, %v4660
    %v4677 = vmax.f32 %v4596, %v4661
    %v4678 = vmax.f32 %v4597, %v4662
    %v4679 = vmax.f32 %v4598, %v4663
    %v4680 = vld [vmem:[%s101 + $0x35] ss:$0 sm:$0xff]
    %v4681 = vsel %vm3611, %v4680, -3e+38
    %v4682 = vsel %vm3612, %v4680, -3e+38
    %v4683 = vsel %vm3613, %v4680, -3e+38
    %v4684 = vsel %vm3614, %v4680, -3e+38
    %v4685 = vsel %vm3615, %v4680, -3e+38
    %v4686 = vsel %vm3616, %v4680, -3e+38
    %v4687 = vsel %vm3617, %v4680, -3e+38
    %v4688 = vsel %vm3618, %v4680, -3e+38
    %v4689 = vsel %vm3619, %v4680, -3e+38
    %v4690 = vsel %vm3620, %v4680, -3e+38
    %v4691 = vsel %vm3621, %v4680, -3e+38
    %v4692 = vsel %vm3622, %v4680, -3e+38
    %v4693 = vsel %vm3623, %v4680, -3e+38
    %v4694 = vsel %vm3624, %v4680, -3e+38
    %v4695 = vsel %vm3625, %v4680, -3e+38
    %v4696 = vsel %vm3626, %v4680, -3e+38
    %4697 = vmax.xlane.f32.xlu0 %v4681
    %v4698 = vpop.xlane.xlu0 %4697
    %4699 = vmax.xlane.f32.xlu0 %v4682
    %v4700 = vpop.xlane.xlu0 %4699
    %4701 = vmax.xlane.f32.xlu0 %v4683
    %v4702 = vpop.xlane.xlu0 %4701
    %4703 = vmax.xlane.f32.xlu0 %v4684
    %v4704 = vpop.xlane.xlu0 %4703
    %4705 = vmax.xlane.f32.xlu0 %v4685
    %v4706 = vpop.xlane.xlu0 %4705
    %4707 = vmax.xlane.f32.xlu0 %v4686
    %v4708 = vpop.xlane.xlu0 %4707
    %4709 = vmax.xlane.f32.xlu0 %v4687
    %v4710 = vpop.xlane.xlu0 %4709
    %4711 = vmax.xlane.f32.xlu0 %v4688
    %v4712 = vpop.xlane.xlu0 %4711
    %4713 = vmax.xlane.f32.xlu0 %v4689
    %v4714 = vpop.xlane.xlu0 %4713
    %4715 = vmax.xlane.f32.xlu0 %v4690
    %v4716 = vpop.xlane.xlu0 %4715
    %4717 = vmax.xlane.f32.xlu0 %v4691
    %v4718 = vpop.xlane.xlu0 %4717
    %4719 = vmax.xlane.f32.xlu0 %v4692
    %v4720 = vpop.xlane.xlu0 %4719
    %4721 = vmax.xlane.f32.xlu0 %v4693
    %v4722 = vpop.xlane.xlu0 %4721
    %4723 = vmax.xlane.f32.xlu0 %v4694
    %v4724 = vpop.xlane.xlu0 %4723
    %4725 = vmax.xlane.f32.xlu0 %v4695
    %v4726 = vpop.xlane.xlu0 %4725
    %4727 = vmax.xlane.f32.xlu0 %v4696
    %v4728 = vpop.xlane.xlu0 %4727
    %v4729 = vsel %vm2092, %v4698, -3e+38
    %v4730 = vsel %vm2092, %v4700, -3e+38
    %v4731 = vsel %vm2092, %v4702, -3e+38
    %v4732 = vsel %vm2092, %v4704, -3e+38
    %v4733 = vsel %vm2092, %v4706, -3e+38
    %v4734 = vsel %vm2092, %v4708, -3e+38
    %v4735 = vsel %vm2092, %v4710, -3e+38
    %v4736 = vsel %vm2092, %v4712, -3e+38
    %v4737 = vsel %vm2092, %v4714, -3e+38
    %v4738 = vsel %vm2092, %v4716, -3e+38
    %v4739 = vsel %vm2092, %v4718, -3e+38
    %v4740 = vsel %vm2092, %v4720, -3e+38
    %v4741 = vsel %vm2092, %v4722, -3e+38
    %v4742 = vsel %vm2092, %v4724, -3e+38
    %v4743 = vsel %vm2092, %v4726, -3e+38
    %v4744 = vsel %vm2092, %v4728, -3e+38
    %v4745 = vmax.f32 %v4664, %v4729
    %v4746 = vmax.f32 %v4665, %v4730
    %v4747 = vmax.f32 %v4666, %v4731
    %v4748 = vmax.f32 %v4667, %v4732
    %v4749 = vmax.f32 %v4668, %v4733
    %v4750 = vmax.f32 %v4669, %v4734
    %v4751 = vmax.f32 %v4670, %v4735
    %v4752 = vmax.f32 %v4671, %v4736
    %v4753 = vmax.f32 %v4672, %v4737
    %v4754 = vmax.f32 %v4673, %v4738
    %v4755 = vmax.f32 %v4674, %v4739
    %v4756 = vmax.f32 %v4675, %v4740
    %v4757 = vmax.f32 %v4676, %v4741
    %v4758 = vmax.f32 %v4677, %v4742
    %v4759 = vmax.f32 %v4678, %v4743
    %v4760 = vmax.f32 %v4679, %v4744
    %v4761 = vld [vmem:[%s101 + $0x36] ss:$0 sm:$0xff]
    %v4762 = vsel %vm3611, %v4761, -3e+38
    %v4763 = vsel %vm3612, %v4761, -3e+38
    %v4764 = vsel %vm3613, %v4761, -3e+38
    %v4765 = vsel %vm3614, %v4761, -3e+38
    %v4766 = vsel %vm3615, %v4761, -3e+38
    %v4767 = vsel %vm3616, %v4761, -3e+38
    %v4768 = vsel %vm3617, %v4761, -3e+38
    %v4769 = vsel %vm3618, %v4761, -3e+38
    %v4770 = vsel %vm3619, %v4761, -3e+38
    %v4771 = vsel %vm3620, %v4761, -3e+38
    %v4772 = vsel %vm3621, %v4761, -3e+38
    %v4773 = vsel %vm3622, %v4761, -3e+38
    %v4774 = vsel %vm3623, %v4761, -3e+38
    %v4775 = vsel %vm3624, %v4761, -3e+38
    %v4776 = vsel %vm3625, %v4761, -3e+38
    %v4777 = vsel %vm3626, %v4761, -3e+38
    %4778 = vmax.xlane.f32.xlu0 %v4762
    %v4779 = vpop.xlane.xlu0 %4778
    %4780 = vmax.xlane.f32.xlu0 %v4763
    %v4781 = vpop.xlane.xlu0 %4780
    %4782 = vmax.xlane.f32.xlu0 %v4764
    %v4783 = vpop.xlane.xlu0 %4782
    %4784 = vmax.xlane.f32.xlu0 %v4765
    %v4785 = vpop.xlane.xlu0 %4784
    %4786 = vmax.xlane.f32.xlu0 %v4766
    %v4787 = vpop.xlane.xlu0 %4786
    %4788 = vmax.xlane.f32.xlu0 %v4767
    %v4789 = vpop.xlane.xlu0 %4788
    %4790 = vmax.xlane.f32.xlu0 %v4768
    %v4791 = vpop.xlane.xlu0 %4790
    %4792 = vmax.xlane.f32.xlu0 %v4769
    %v4793 = vpop.xlane.xlu0 %4792
    %4794 = vmax.xlane.f32.xlu0 %v4770
    %v4795 = vpop.xlane.xlu0 %4794
    %4796 = vmax.xlane.f32.xlu0 %v4771
    %v4797 = vpop.xlane.xlu0 %4796
    %4798 = vmax.xlane.f32.xlu0 %v4772
    %v4799 = vpop.xlane.xlu0 %4798
    %4800 = vmax.xlane.f32.xlu0 %v4773
    %v4801 = vpop.xlane.xlu0 %4800
    %4802 = vmax.xlane.f32.xlu0 %v4774
    %v4803 = vpop.xlane.xlu0 %4802
    %4804 = vmax.xlane.f32.xlu0 %v4775
    %v4805 = vpop.xlane.xlu0 %4804
    %4806 = vmax.xlane.f32.xlu0 %v4776
    %v4807 = vpop.xlane.xlu0 %4806
    %4808 = vmax.xlane.f32.xlu0 %v4777
    %v4809 = vpop.xlane.xlu0 %4808
    %v4810 = vsel %vm2174, %v4779, -3e+38
    %v4811 = vsel %vm2174, %v4781, -3e+38
    %v4812 = vsel %vm2174, %v4783, -3e+38
    %v4813 = vsel %vm2174, %v4785, -3e+38
    %v4814 = vsel %vm2174, %v4787, -3e+38
    %v4815 = vsel %vm2174, %v4789, -3e+38
    %v4816 = vsel %vm2174, %v4791, -3e+38
    %v4817 = vsel %vm2174, %v4793, -3e+38
    %v4818 = vsel %vm2174, %v4795, -3e+38
    %v4819 = vsel %vm2174, %v4797, -3e+38
    %v4820 = vsel %vm2174, %v4799, -3e+38
    %v4821 = vsel %vm2174, %v4801, -3e+38
    %v4822 = vsel %vm2174, %v4803, -3e+38
    %v4823 = vsel %vm2174, %v4805, -3e+38
    %v4824 = vsel %vm2174, %v4807, -3e+38
    %v4825 = vsel %vm2174, %v4809, -3e+38
    %v4826 = vmax.f32 %v4745, %v4810
    %v4827 = vmax.f32 %v4746, %v4811
    %v4828 = vmax.f32 %v4747, %v4812
    %v4829 = vmax.f32 %v4748, %v4813
    %v4830 = vmax.f32 %v4749, %v4814
    %v4831 = vmax.f32 %v4750, %v4815
    %v4832 = vmax.f32 %v4751, %v4816
    %v4833 = vmax.f32 %v4752, %v4817
    %v4834 = vmax.f32 %v4753, %v4818
    %v4835 = vmax.f32 %v4754, %v4819
    %v4836 = vmax.f32 %v4755, %v4820
    %v4837 = vmax.f32 %v4756, %v4821
    %v4838 = vmax.f32 %v4757, %v4822
    %v4839 = vmax.f32 %v4758, %v4823
    %v4840 = vmax.f32 %v4759, %v4824
    %v4841 = vmax.f32 %v4760, %v4825
    %v4842 = vld [vmem:[%s101 + $0x37] ss:$0 sm:$0xff]
    %v4843 = vsel %vm3611, %v4842, -3e+38
    %v4844 = vsel %vm3612, %v4842, -3e+38
    %v4845 = vsel %vm3613, %v4842, -3e+38
    %v4846 = vsel %vm3614, %v4842, -3e+38
    %v4847 = vsel %vm3615, %v4842, -3e+38
    %v4848 = vsel %vm3616, %v4842, -3e+38
    %v4849 = vsel %vm3617, %v4842, -3e+38
    %v4850 = vsel %vm3618, %v4842, -3e+38
    %v4851 = vsel %vm3619, %v4842, -3e+38
    %v4852 = vsel %vm3620, %v4842, -3e+38
    %v4853 = vsel %vm3621, %v4842, -3e+38
    %v4854 = vsel %vm3622, %v4842, -3e+38
    %v4855 = vsel %vm3623, %v4842, -3e+38
    %v4856 = vsel %vm3624, %v4842, -3e+38
    %v4857 = vsel %vm3625, %v4842, -3e+38
    %v4858 = vsel %vm3626, %v4842, -3e+38
    %4859 = vmax.xlane.f32.xlu0 %v4843
    %v4860 = vpop.xlane.xlu0 %4859
    %4861 = vmax.xlane.f32.xlu0 %v4844
    %v4862 = vpop.xlane.xlu0 %4861
    %4863 = vmax.xlane.f32.xlu0 %v4845
    %v4864 = vpop.xlane.xlu0 %4863
    %4865 = vmax.xlane.f32.xlu0 %v4846
    %v4866 = vpop.xlane.xlu0 %4865
    %4867 = vmax.xlane.f32.xlu0 %v4847
    %v4868 = vpop.xlane.xlu0 %4867
    %4869 = vmax.xlane.f32.xlu0 %v4848
    %v4870 = vpop.xlane.xlu0 %4869
    %4871 = vmax.xlane.f32.xlu0 %v4849
    %v4872 = vpop.xlane.xlu0 %4871
    %4873 = vmax.xlane.f32.xlu0 %v4850
    %v4874 = vpop.xlane.xlu0 %4873
    %4875 = vmax.xlane.f32.xlu0 %v4851
    %v4876 = vpop.xlane.xlu0 %4875
    %4877 = vmax.xlane.f32.xlu0 %v4852
    %v4878 = vpop.xlane.xlu0 %4877
    %4879 = vmax.xlane.f32.xlu0 %v4853
    %v4880 = vpop.xlane.xlu0 %4879
    %4881 = vmax.xlane.f32.xlu0 %v4854
    %v4882 = vpop.xlane.xlu0 %4881
    %4883 = vmax.xlane.f32.xlu0 %v4855
    %v4884 = vpop.xlane.xlu0 %4883
    %4885 = vmax.xlane.f32.xlu0 %v4856
    %v4886 = vpop.xlane.xlu0 %4885
    %4887 = vmax.xlane.f32.xlu0 %v4857
    %v4888 = vpop.xlane.xlu0 %4887
    %4889 = vmax.xlane.f32.xlu0 %v4858
    %v4890 = vpop.xlane.xlu0 %4889
    %v4891 = vsel %vm2256, %v4860, -3e+38
    %v4892 = vsel %vm2256, %v4862, -3e+38
    %v4893 = vsel %vm2256, %v4864, -3e+38
    %v4894 = vsel %vm2256, %v4866, -3e+38
    %v4895 = vsel %vm2256, %v4868, -3e+38
    %v4896 = vsel %vm2256, %v4870, -3e+38
    %v4897 = vsel %vm2256, %v4872, -3e+38
    %v4898 = vsel %vm2256, %v4874, -3e+38
    %v4899 = vsel %vm2256, %v4876, -3e+38
    %v4900 = vsel %vm2256, %v4878, -3e+38
    %v4901 = vsel %vm2256, %v4880, -3e+38
    %v4902 = vsel %vm2256, %v4882, -3e+38
    %v4903 = vsel %vm2256, %v4884, -3e+38
    %v4904 = vsel %vm2256, %v4886, -3e+38
    %v4905 = vsel %vm2256, %v4888, -3e+38
    %v4906 = vsel %vm2256, %v4890, -3e+38
    %v4907 = vmax.f32 %v4826, %v4891
    %v4908 = vmax.f32 %v4827, %v4892
    %v4909 = vmax.f32 %v4828, %v4893
    %v4910 = vmax.f32 %v4829, %v4894
    %v4911 = vmax.f32 %v4830, %v4895
    %v4912 = vmax.f32 %v4831, %v4896
    %v4913 = vmax.f32 %v4832, %v4897
    %v4914 = vmax.f32 %v4833, %v4898
    %v4915 = vmax.f32 %v4834, %v4899
    %v4916 = vmax.f32 %v4835, %v4900
    %v4917 = vmax.f32 %v4836, %v4901
    %v4918 = vmax.f32 %v4837, %v4902
    %v4919 = vmax.f32 %v4838, %v4903
    %v4920 = vmax.f32 %v4839, %v4904
    %v4921 = vmax.f32 %v4840, %v4905
    %v4922 = vmax.f32 %v4841, %v4906
    %v4923 = vld [vmem:[%s81 + $0x3] sm:$0x1]
    %v4924 = vlaneseq
    %v4925 = vshrl.u32 %v4924, 7
    %v4926 = vsub.s32 0, %v4925
    %v4927 = vrot.slane %v4923, %v4926
    %vm4928 = vcmp.eq.s32.totalorder %v4927, %v183
    %vm4929 = vcmp.eq.s32.totalorder %v4927, %v184
    %vm4930 = vcmp.eq.s32.totalorder %v4927, %v185
    %vm4931 = vcmp.eq.s32.totalorder %v4927, %v186
    %vm4932 = vcmp.eq.s32.totalorder %v4927, %v187
    %vm4933 = vcmp.eq.s32.totalorder %v4927, %v188
    %vm4934 = vcmp.eq.s32.totalorder %v4927, %v189
    %vm4935 = vcmp.eq.s32.totalorder %v4927, %v190
    %vm4936 = vcmp.eq.s32.totalorder %v4927, %v191
    %vm4937 = vcmp.eq.s32.totalorder %v4927, %v192
    %vm4938 = vcmp.eq.s32.totalorder %v4927, %v193
    %vm4939 = vcmp.eq.s32.totalorder %v4927, %v194
    %vm4940 = vcmp.eq.s32.totalorder %v4927, %v195
    %vm4941 = vcmp.eq.s32.totalorder %v4927, %v196
    %vm4942 = vcmp.eq.s32.totalorder %v4927, %v197
    %vm4943 = vcmp.eq.s32.totalorder %v4927, %v198
    %v4944 = vld [vmem:[%s101 + $0x18] ss:$0 sm:$0xff]
    %v4945 = vsel %vm4928, %v4944, -3e+38
    %v4946 = vsel %vm4929, %v4944, -3e+38
    %v4947 = vsel %vm4930, %v4944, -3e+38
    %v4948 = vsel %vm4931, %v4944, -3e+38
    %v4949 = vsel %vm4932, %v4944, -3e+38
    %v4950 = vsel %vm4933, %v4944, -3e+38
    %v4951 = vsel %vm4934, %v4944, -3e+38
    %v4952 = vsel %vm4935, %v4944, -3e+38
    %v4953 = vsel %vm4936, %v4944, -3e+38
    %v4954 = vsel %vm4937, %v4944, -3e+38
    %v4955 = vsel %vm4938, %v4944, -3e+38
    %v4956 = vsel %vm4939, %v4944, -3e+38
    %v4957 = vsel %vm4940, %v4944, -3e+38
    %v4958 = vsel %vm4941, %v4944, -3e+38
    %v4959 = vsel %vm4942, %v4944, -3e+38
    %v4960 = vsel %vm4943, %v4944, -3e+38
    %4961 = vmax.xlane.f32.xlu0 %v4945
    %v4962 = vpop.xlane.xlu0 %4961
    %4963 = vmax.xlane.f32.xlu0 %v4946
    %v4964 = vpop.xlane.xlu0 %4963
    %4965 = vmax.xlane.f32.xlu0 %v4947
    %v4966 = vpop.xlane.xlu0 %4965
    %4967 = vmax.xlane.f32.xlu0 %v4948
    %v4968 = vpop.xlane.xlu0 %4967
    %4969 = vmax.xlane.f32.xlu0 %v4949
    %v4970 = vpop.xlane.xlu0 %4969
    %4971 = vmax.xlane.f32.xlu0 %v4950
    %v4972 = vpop.xlane.xlu0 %4971
    %4973 = vmax.xlane.f32.xlu0 %v4951
    %v4974 = vpop.xlane.xlu0 %4973
    %4975 = vmax.xlane.f32.xlu0 %v4952
    %v4976 = vpop.xlane.xlu0 %4975
    %4977 = vmax.xlane.f32.xlu0 %v4953
    %v4978 = vpop.xlane.xlu0 %4977
    %4979 = vmax.xlane.f32.xlu0 %v4954
    %v4980 = vpop.xlane.xlu0 %4979
    %4981 = vmax.xlane.f32.xlu0 %v4955
    %v4982 = vpop.xlane.xlu0 %4981
    %4983 = vmax.xlane.f32.xlu0 %v4956
    %v4984 = vpop.xlane.xlu0 %4983
    %4985 = vmax.xlane.f32.xlu0 %v4957
    %v4986 = vpop.xlane.xlu0 %4985
    %4987 = vmax.xlane.f32.xlu0 %v4958
    %v4988 = vpop.xlane.xlu0 %4987
    %4989 = vmax.xlane.f32.xlu0 %v4959
    %v4990 = vpop.xlane.xlu0 %4989
    %4991 = vmax.xlane.f32.xlu0 %v4960
    %v4992 = vpop.xlane.xlu0 %4991
    %v4993 = vsel %vm1026, %v4962, -3e+38
    %v4994 = vsel %vm1026, %v4964, -3e+38
    %v4995 = vsel %vm1026, %v4966, -3e+38
    %v4996 = vsel %vm1026, %v4968, -3e+38
    %v4997 = vsel %vm1026, %v4970, -3e+38
    %v4998 = vsel %vm1026, %v4972, -3e+38
    %v4999 = vsel %vm1026, %v4974, -3e+38
    %v5000 = vsel %vm1026, %v4976, -3e+38
    %v5001 = vsel %vm1026, %v4978, -3e+38
    %v5002 = vsel %vm1026, %v4980, -3e+38
    %v5003 = vsel %vm1026, %v4982, -3e+38
    %v5004 = vsel %vm1026, %v4984, -3e+38
    %v5005 = vsel %vm1026, %v4986, -3e+38
    %v5006 = vsel %vm1026, %v4988, -3e+38
    %v5007 = vsel %vm1026, %v4990, -3e+38
    %v5008 = vsel %vm1026, %v4992, -3e+38
    %v5009 = vmax.f32 %v4907, %v4993
    %v5010 = vmax.f32 %v4908, %v4994
    %v5011 = vmax.f32 %v4909, %v4995
    %v5012 = vmax.f32 %v4910, %v4996
    %v5013 = vmax.f32 %v4911, %v4997
    %v5014 = vmax.f32 %v4912, %v4998
    %v5015 = vmax.f32 %v4913, %v4999
    %v5016 = vmax.f32 %v4914, %v5000
    %v5017 = vmax.f32 %v4915, %v5001
    %v5018 = vmax.f32 %v4916, %v5002
    %v5019 = vmax.f32 %v4917, %v5003
    %v5020 = vmax.f32 %v4918, %v5004
    %v5021 = vmax.f32 %v4919, %v5005
    %v5022 = vmax.f32 %v4920, %v5006
    %v5023 = vmax.f32 %v4921, %v5007
    %v5024 = vmax.f32 %v4922, %v5008
    %v5025 = vld [vmem:[%s101 + $0x19] ss:$0 sm:$0xff]
    %v5026 = vsel %vm4928, %v5025, -3e+38
    %v5027 = vsel %vm4929, %v5025, -3e+38
    %v5028 = vsel %vm4930, %v5025, -3e+38
    %v5029 = vsel %vm4931, %v5025, -3e+38
    %v5030 = vsel %vm4932, %v5025, -3e+38
    %v5031 = vsel %vm4933, %v5025, -3e+38
    %v5032 = vsel %vm4934, %v5025, -3e+38
    %v5033 = vsel %vm4935, %v5025, -3e+38
    %v5034 = vsel %vm4936, %v5025, -3e+38
    %v5035 = vsel %vm4937, %v5025, -3e+38
    %v5036 = vsel %vm4938, %v5025, -3e+38
    %v5037 = vsel %vm4939, %v5025, -3e+38
    %v5038 = vsel %vm4940, %v5025, -3e+38
    %v5039 = vsel %vm4941, %v5025, -3e+38
    %v5040 = vsel %vm4942, %v5025, -3e+38
    %v5041 = vsel %vm4943, %v5025, -3e+38
    %5042 = vmax.xlane.f32.xlu0 %v5026
    %v5043 = vpop.xlane.xlu0 %5042
    %5044 = vmax.xlane.f32.xlu0 %v5027
    %v5045 = vpop.xlane.xlu0 %5044
    %5046 = vmax.xlane.f32.xlu0 %v5028
    %v5047 = vpop.xlane.xlu0 %5046
    %5048 = vmax.xlane.f32.xlu0 %v5029
    %v5049 = vpop.xlane.xlu0 %5048
    %5050 = vmax.xlane.f32.xlu0 %v5030
    %v5051 = vpop.xlane.xlu0 %5050
    %5052 = vmax.xlane.f32.xlu0 %v5031
    %v5053 = vpop.xlane.xlu0 %5052
    %5054 = vmax.xlane.f32.xlu0 %v5032
    %v5055 = vpop.xlane.xlu0 %5054
    %5056 = vmax.xlane.f32.xlu0 %v5033
    %v5057 = vpop.xlane.xlu0 %5056
    %5058 = vmax.xlane.f32.xlu0 %v5034
    %v5059 = vpop.xlane.xlu0 %5058
    %5060 = vmax.xlane.f32.xlu0 %v5035
    %v5061 = vpop.xlane.xlu0 %5060
    %5062 = vmax.xlane.f32.xlu0 %v5036
    %v5063 = vpop.xlane.xlu0 %5062
    %5064 = vmax.xlane.f32.xlu0 %v5037
    %v5065 = vpop.xlane.xlu0 %5064
    %5066 = vmax.xlane.f32.xlu0 %v5038
    %v5067 = vpop.xlane.xlu0 %5066
    %5068 = vmax.xlane.f32.xlu0 %v5039
    %v5069 = vpop.xlane.xlu0 %5068
    %5070 = vmax.xlane.f32.xlu0 %v5040
    %v5071 = vpop.xlane.xlu0 %5070
    %5072 = vmax.xlane.f32.xlu0 %v5041
    %v5073 = vpop.xlane.xlu0 %5072
    %v5074 = vsel %vm1108, %v5043, -3e+38
    %v5075 = vsel %vm1108, %v5045, -3e+38
    %v5076 = vsel %vm1108, %v5047, -3e+38
    %v5077 = vsel %vm1108, %v5049, -3e+38
    %v5078 = vsel %vm1108, %v5051, -3e+38
    %v5079 = vsel %vm1108, %v5053, -3e+38
    %v5080 = vsel %vm1108, %v5055, -3e+38
    %v5081 = vsel %vm1108, %v5057, -3e+38
    %v5082 = vsel %vm1108, %v5059, -3e+38
    %v5083 = vsel %vm1108, %v5061, -3e+38
    %v5084 = vsel %vm1108, %v5063, -3e+38
    %v5085 = vsel %vm1108, %v5065, -3e+38
    %v5086 = vsel %vm1108, %v5067, -3e+38
    %v5087 = vsel %vm1108, %v5069, -3e+38
    %v5088 = vsel %vm1108, %v5071, -3e+38
    %v5089 = vsel %vm1108, %v5073, -3e+38
    %v5090 = vmax.f32 %v5009, %v5074
    %v5091 = vmax.f32 %v5010, %v5075
    %v5092 = vmax.f32 %v5011, %v5076
    %v5093 = vmax.f32 %v5012, %v5077
    %v5094 = vmax.f32 %v5013, %v5078
    %v5095 = vmax.f32 %v5014, %v5079
    %v5096 = vmax.f32 %v5015, %v5080
    %v5097 = vmax.f32 %v5016, %v5081
    %v5098 = vmax.f32 %v5017, %v5082
    %v5099 = vmax.f32 %v5018, %v5083
    %v5100 = vmax.f32 %v5019, %v5084
    %v5101 = vmax.f32 %v5020, %v5085
    %v5102 = vmax.f32 %v5021, %v5086
    %v5103 = vmax.f32 %v5022, %v5087
    %v5104 = vmax.f32 %v5023, %v5088
    %v5105 = vmax.f32 %v5024, %v5089
    %v5106 = vld [vmem:[%s101 + $0x1a] ss:$0 sm:$0xff]
    %v5107 = vsel %vm4928, %v5106, -3e+38
    %v5108 = vsel %vm4929, %v5106, -3e+38
    %v5109 = vsel %vm4930, %v5106, -3e+38
    %v5110 = vsel %vm4931, %v5106, -3e+38
    %v5111 = vsel %vm4932, %v5106, -3e+38
    %v5112 = vsel %vm4933, %v5106, -3e+38
    %v5113 = vsel %vm4934, %v5106, -3e+38
    %v5114 = vsel %vm4935, %v5106, -3e+38
    %v5115 = vsel %vm4936, %v5106, -3e+38
    %v5116 = vsel %vm4937, %v5106, -3e+38
    %v5117 = vsel %vm4938, %v5106, -3e+38
    %v5118 = vsel %vm4939, %v5106, -3e+38
    %v5119 = vsel %vm4940, %v5106, -3e+38
    %v5120 = vsel %vm4941, %v5106, -3e+38
    %v5121 = vsel %vm4942, %v5106, -3e+38
    %v5122 = vsel %vm4943, %v5106, -3e+38
    %5123 = vmax.xlane.f32.xlu0 %v5107
    %v5124 = vpop.xlane.xlu0 %5123
    %5125 = vmax.xlane.f32.xlu0 %v5108
    %v5126 = vpop.xlane.xlu0 %5125
    %5127 = vmax.xlane.f32.xlu0 %v5109
    %v5128 = vpop.xlane.xlu0 %5127
    %5129 = vmax.xlane.f32.xlu0 %v5110
    %v5130 = vpop.xlane.xlu0 %5129
    %5131 = vmax.xlane.f32.xlu0 %v5111
    %v5132 = vpop.xlane.xlu0 %5131
    %5133 = vmax.xlane.f32.xlu0 %v5112
    %v5134 = vpop.xlane.xlu0 %5133
    %5135 = vmax.xlane.f32.xlu0 %v5113
    %v5136 = vpop.xlane.xlu0 %5135
    %5137 = vmax.xlane.f32.xlu0 %v5114
    %v5138 = vpop.xlane.xlu0 %5137
    %5139 = vmax.xlane.f32.xlu0 %v5115
    %v5140 = vpop.xlane.xlu0 %5139
    %5141 = vmax.xlane.f32.xlu0 %v5116
    %v5142 = vpop.xlane.xlu0 %5141
    %5143 = vmax.xlane.f32.xlu0 %v5117
    %v5144 = vpop.xlane.xlu0 %5143
    %5145 = vmax.xlane.f32.xlu0 %v5118
    %v5146 = vpop.xlane.xlu0 %5145
    %5147 = vmax.xlane.f32.xlu0 %v5119
    %v5148 = vpop.xlane.xlu0 %5147
    %5149 = vmax.xlane.f32.xlu0 %v5120
    %v5150 = vpop.xlane.xlu0 %5149
    %5151 = vmax.xlane.f32.xlu0 %v5121
    %v5152 = vpop.xlane.xlu0 %5151
    %5153 = vmax.xlane.f32.xlu0 %v5122
    %v5154 = vpop.xlane.xlu0 %5153
    %v5155 = vsel %vm1190, %v5124, -3e+38
    %v5156 = vsel %vm1190, %v5126, -3e+38
    %v5157 = vsel %vm1190, %v5128, -3e+38
    %v5158 = vsel %vm1190, %v5130, -3e+38
    %v5159 = vsel %vm1190, %v5132, -3e+38
    %v5160 = vsel %vm1190, %v5134, -3e+38
    %v5161 = vsel %vm1190, %v5136, -3e+38
    %v5162 = vsel %vm1190, %v5138, -3e+38
    %v5163 = vsel %vm1190, %v5140, -3e+38
    %v5164 = vsel %vm1190, %v5142, -3e+38
    %v5165 = vsel %vm1190, %v5144, -3e+38
    %v5166 = vsel %vm1190, %v5146, -3e+38
    %v5167 = vsel %vm1190, %v5148, -3e+38
    %v5168 = vsel %vm1190, %v5150, -3e+38
    %v5169 = vsel %vm1190, %v5152, -3e+38
    %v5170 = vsel %vm1190, %v5154, -3e+38
    %v5171 = vmax.f32 %v5090, %v5155
    %v5172 = vmax.f32 %v5091, %v5156
    %v5173 = vmax.f32 %v5092, %v5157
    %v5174 = vmax.f32 %v5093, %v5158
    %v5175 = vmax.f32 %v5094, %v5159
    %v5176 = vmax.f32 %v5095, %v5160
    %v5177 = vmax.f32 %v5096, %v5161
    %v5178 = vmax.f32 %v5097, %v5162
    %v5179 = vmax.f32 %v5098, %v5163
    %v5180 = vmax.f32 %v5099, %v5164
    %v5181 = vmax.f32 %v5100, %v5165
    %v5182 = vmax.f32 %v5101, %v5166
    %v5183 = vmax.f32 %v5102, %v5167
    %v5184 = vmax.f32 %v5103, %v5168
    %v5185 = vmax.f32 %v5104, %v5169
    %v5186 = vmax.f32 %v5105, %v5170
    %v5187 = vld [vmem:[%s101 + $0x1b] ss:$0 sm:$0xff]
    %v5188 = vsel %vm4928, %v5187, -3e+38
    %v5189 = vsel %vm4929, %v5187, -3e+38
    %v5190 = vsel %vm4930, %v5187, -3e+38
    %v5191 = vsel %vm4931, %v5187, -3e+38
    %v5192 = vsel %vm4932, %v5187, -3e+38
    %v5193 = vsel %vm4933, %v5187, -3e+38
    %v5194 = vsel %vm4934, %v5187, -3e+38
    %v5195 = vsel %vm4935, %v5187, -3e+38
    %v5196 = vsel %vm4936, %v5187, -3e+38
    %v5197 = vsel %vm4937, %v5187, -3e+38
    %v5198 = vsel %vm4938, %v5187, -3e+38
    %v5199 = vsel %vm4939, %v5187, -3e+38
    %v5200 = vsel %vm4940, %v5187, -3e+38
    %v5201 = vsel %vm4941, %v5187, -3e+38
    %v5202 = vsel %vm4942, %v5187, -3e+38
    %v5203 = vsel %vm4943, %v5187, -3e+38
    %5204 = vmax.xlane.f32.xlu0 %v5188
    %v5205 = vpop.xlane.xlu0 %5204
    %5206 = vmax.xlane.f32.xlu0 %v5189
    %v5207 = vpop.xlane.xlu0 %5206
    %5208 = vmax.xlane.f32.xlu0 %v5190
    %v5209 = vpop.xlane.xlu0 %5208
    %5210 = vmax.xlane.f32.xlu0 %v5191
    %v5211 = vpop.xlane.xlu0 %5210
    %5212 = vmax.xlane.f32.xlu0 %v5192
    %v5213 = vpop.xlane.xlu0 %5212
    %5214 = vmax.xlane.f32.xlu0 %v5193
    %v5215 = vpop.xlane.xlu0 %5214
    %5216 = vmax.xlane.f32.xlu0 %v5194
    %v5217 = vpop.xlane.xlu0 %5216
    %5218 = vmax.xlane.f32.xlu0 %v5195
    %v5219 = vpop.xlane.xlu0 %5218
    %5220 = vmax.xlane.f32.xlu0 %v5196
    %v5221 = vpop.xlane.xlu0 %5220
    %5222 = vmax.xlane.f32.xlu0 %v5197
    %v5223 = vpop.xlane.xlu0 %5222
    %5224 = vmax.xlane.f32.xlu0 %v5198
    %v5225 = vpop.xlane.xlu0 %5224
    %5226 = vmax.xlane.f32.xlu0 %v5199
    %v5227 = vpop.xlane.xlu0 %5226
    %5228 = vmax.xlane.f32.xlu0 %v5200
    %v5229 = vpop.xlane.xlu0 %5228
    %5230 = vmax.xlane.f32.xlu0 %v5201
    %v5231 = vpop.xlane.xlu0 %5230
    %5232 = vmax.xlane.f32.xlu0 %v5202
    %v5233 = vpop.xlane.xlu0 %5232
    %5234 = vmax.xlane.f32.xlu0 %v5203
    %v5235 = vpop.xlane.xlu0 %5234
    %v5236 = vsel %vm1272, %v5205, -3e+38
    %v5237 = vsel %vm1272, %v5207, -3e+38
    %v5238 = vsel %vm1272, %v5209, -3e+38
    %v5239 = vsel %vm1272, %v5211, -3e+38
    %v5240 = vsel %vm1272, %v5213, -3e+38
    %v5241 = vsel %vm1272, %v5215, -3e+38
    %v5242 = vsel %vm1272, %v5217, -3e+38
    %v5243 = vsel %vm1272, %v5219, -3e+38
    %v5244 = vsel %vm1272, %v5221, -3e+38
    %v5245 = vsel %vm1272, %v5223, -3e+38
    %v5246 = vsel %vm1272, %v5225, -3e+38
    %v5247 = vsel %vm1272, %v5227, -3e+38
    %v5248 = vsel %vm1272, %v5229, -3e+38
    %v5249 = vsel %vm1272, %v5231, -3e+38
    %v5250 = vsel %vm1272, %v5233, -3e+38
    %v5251 = vsel %vm1272, %v5235, -3e+38
    %v5252 = vmax.f32 %v5171, %v5236
    %v5253 = vmax.f32 %v5172, %v5237
    %v5254 = vmax.f32 %v5173, %v5238
    %v5255 = vmax.f32 %v5174, %v5239
    %v5256 = vmax.f32 %v5175, %v5240
    %v5257 = vmax.f32 %v5176, %v5241
    %v5258 = vmax.f32 %v5177, %v5242
    %v5259 = vmax.f32 %v5178, %v5243
    %v5260 = vmax.f32 %v5179, %v5244
    %v5261 = vmax.f32 %v5180, %v5245
    %v5262 = vmax.f32 %v5181, %v5246
    %v5263 = vmax.f32 %v5182, %v5247
    %v5264 = vmax.f32 %v5183, %v5248
    %v5265 = vmax.f32 %v5184, %v5249
    %v5266 = vmax.f32 %v5185, %v5250
    %v5267 = vmax.f32 %v5186, %v5251
    %v5268 = vld [vmem:[%s101 + $0x1c] ss:$0 sm:$0xff]
    %v5269 = vsel %vm4928, %v5268, -3e+38
    %v5270 = vsel %vm4929, %v5268, -3e+38
    %v5271 = vsel %vm4930, %v5268, -3e+38
    %v5272 = vsel %vm4931, %v5268, -3e+38
    %v5273 = vsel %vm4932, %v5268, -3e+38
    %v5274 = vsel %vm4933, %v5268, -3e+38
    %v5275 = vsel %vm4934, %v5268, -3e+38
    %v5276 = vsel %vm4935, %v5268, -3e+38
    %v5277 = vsel %vm4936, %v5268, -3e+38
    %v5278 = vsel %vm4937, %v5268, -3e+38
    %v5279 = vsel %vm4938, %v5268, -3e+38
    %v5280 = vsel %vm4939, %v5268, -3e+38
    %v5281 = vsel %vm4940, %v5268, -3e+38
    %v5282 = vsel %vm4941, %v5268, -3e+38
    %v5283 = vsel %vm4942, %v5268, -3e+38
    %v5284 = vsel %vm4943, %v5268, -3e+38
    %5285 = vmax.xlane.f32.xlu0 %v5269
    %v5286 = vpop.xlane.xlu0 %5285
    %5287 = vmax.xlane.f32.xlu0 %v5270
    %v5288 = vpop.xlane.xlu0 %5287
    %5289 = vmax.xlane.f32.xlu0 %v5271
    %v5290 = vpop.xlane.xlu0 %5289
    %5291 = vmax.xlane.f32.xlu0 %v5272
    %v5292 = vpop.xlane.xlu0 %5291
    %5293 = vmax.xlane.f32.xlu0 %v5273
    %v5294 = vpop.xlane.xlu0 %5293
    %5295 = vmax.xlane.f32.xlu0 %v5274
    %v5296 = vpop.xlane.xlu0 %5295
    %5297 = vmax.xlane.f32.xlu0 %v5275
    %v5298 = vpop.xlane.xlu0 %5297
    %5299 = vmax.xlane.f32.xlu0 %v5276
    %v5300 = vpop.xlane.xlu0 %5299
    %5301 = vmax.xlane.f32.xlu0 %v5277
    %v5302 = vpop.xlane.xlu0 %5301
    %5303 = vmax.xlane.f32.xlu0 %v5278
    %v5304 = vpop.xlane.xlu0 %5303
    %5305 = vmax.xlane.f32.xlu0 %v5279
    %v5306 = vpop.xlane.xlu0 %5305
    %5307 = vmax.xlane.f32.xlu0 %v5280
    %v5308 = vpop.xlane.xlu0 %5307
    %5309 = vmax.xlane.f32.xlu0 %v5281
    %v5310 = vpop.xlane.xlu0 %5309
    %5311 = vmax.xlane.f32.xlu0 %v5282
    %v5312 = vpop.xlane.xlu0 %5311
    %5313 = vmax.xlane.f32.xlu0 %v5283
    %v5314 = vpop.xlane.xlu0 %5313
    %5315 = vmax.xlane.f32.xlu0 %v5284
    %v5316 = vpop.xlane.xlu0 %5315
    %v5317 = vsel %vm1354, %v5286, -3e+38
    %v5318 = vsel %vm1354, %v5288, -3e+38
    %v5319 = vsel %vm1354, %v5290, -3e+38
    %v5320 = vsel %vm1354, %v5292, -3e+38
    %v5321 = vsel %vm1354, %v5294, -3e+38
    %v5322 = vsel %vm1354, %v5296, -3e+38
    %v5323 = vsel %vm1354, %v5298, -3e+38
    %v5324 = vsel %vm1354, %v5300, -3e+38
    %v5325 = vsel %vm1354, %v5302, -3e+38
    %v5326 = vsel %vm1354, %v5304, -3e+38
    %v5327 = vsel %vm1354, %v5306, -3e+38
    %v5328 = vsel %vm1354, %v5308, -3e+38
    %v5329 = vsel %vm1354, %v5310, -3e+38
    %v5330 = vsel %vm1354, %v5312, -3e+38
    %v5331 = vsel %vm1354, %v5314, -3e+38
    %v5332 = vsel %vm1354, %v5316, -3e+38
    %v5333 = vmax.f32 %v5252, %v5317
    %v5334 = vmax.f32 %v5253, %v5318
    %v5335 = vmax.f32 %v5254, %v5319
    %v5336 = vmax.f32 %v5255, %v5320
    %v5337 = vmax.f32 %v5256, %v5321
    %v5338 = vmax.f32 %v5257, %v5322
    %v5339 = vmax.f32 %v5258, %v5323
    %v5340 = vmax.f32 %v5259, %v5324
    %v5341 = vmax.f32 %v5260, %v5325
    %v5342 = vmax.f32 %v5261, %v5326
    %v5343 = vmax.f32 %v5262, %v5327
    %v5344 = vmax.f32 %v5263, %v5328
    %v5345 = vmax.f32 %v5264, %v5329
    %v5346 = vmax.f32 %v5265, %v5330
    %v5347 = vmax.f32 %v5266, %v5331
    %v5348 = vmax.f32 %v5267, %v5332
    %v5349 = vld [vmem:[%s101 + $0x1d] ss:$0 sm:$0xff]
    %v5350 = vsel %vm4928, %v5349, -3e+38
    %v5351 = vsel %vm4929, %v5349, -3e+38
    %v5352 = vsel %vm4930, %v5349, -3e+38
    %v5353 = vsel %vm4931, %v5349, -3e+38
    %v5354 = vsel %vm4932, %v5349, -3e+38
    %v5355 = vsel %vm4933, %v5349, -3e+38
    %v5356 = vsel %vm4934, %v5349, -3e+38
    %v5357 = vsel %vm4935, %v5349, -3e+38
    %v5358 = vsel %vm4936, %v5349, -3e+38
    %v5359 = vsel %vm4937, %v5349, -3e+38
    %v5360 = vsel %vm4938, %v5349, -3e+38
    %v5361 = vsel %vm4939, %v5349, -3e+38
    %v5362 = vsel %vm4940, %v5349, -3e+38
    %v5363 = vsel %vm4941, %v5349, -3e+38
    %v5364 = vsel %vm4942, %v5349, -3e+38
    %v5365 = vsel %vm4943, %v5349, -3e+38
    %5366 = vmax.xlane.f32.xlu0 %v5350
    %v5367 = vpop.xlane.xlu0 %5366
    %5368 = vmax.xlane.f32.xlu0 %v5351
    %v5369 = vpop.xlane.xlu0 %5368
    %5370 = vmax.xlane.f32.xlu0 %v5352
    %v5371 = vpop.xlane.xlu0 %5370
    %5372 = vmax.xlane.f32.xlu0 %v5353
    %v5373 = vpop.xlane.xlu0 %5372
    %5374 = vmax.xlane.f32.xlu0 %v5354
    %v5375 = vpop.xlane.xlu0 %5374
    %5376 = vmax.xlane.f32.xlu0 %v5355
    %v5377 = vpop.xlane.xlu0 %5376
    %5378 = vmax.xlane.f32.xlu0 %v5356
    %v5379 = vpop.xlane.xlu0 %5378
    %5380 = vmax.xlane.f32.xlu0 %v5357
    %v5381 = vpop.xlane.xlu0 %5380
    %5382 = vmax.xlane.f32.xlu0 %v5358
    %v5383 = vpop.xlane.xlu0 %5382
    %5384 = vmax.xlane.f32.xlu0 %v5359
    %v5385 = vpop.xlane.xlu0 %5384
    %5386 = vmax.xlane.f32.xlu0 %v5360
    %v5387 = vpop.xlane.xlu0 %5386
    %5388 = vmax.xlane.f32.xlu0 %v5361
    %v5389 = vpop.xlane.xlu0 %5388
    %5390 = vmax.xlane.f32.xlu0 %v5362
    %v5391 = vpop.xlane.xlu0 %5390
    %5392 = vmax.xlane.f32.xlu0 %v5363
    %v5393 = vpop.xlane.xlu0 %5392
    %5394 = vmax.xlane.f32.xlu0 %v5364
    %v5395 = vpop.xlane.xlu0 %5394
    %5396 = vmax.xlane.f32.xlu0 %v5365
    %v5397 = vpop.xlane.xlu0 %5396
    %v5398 = vsel %vm1436, %v5367, -3e+38
    %v5399 = vsel %vm1436, %v5369, -3e+38
    %v5400 = vsel %vm1436, %v5371, -3e+38
    %v5401 = vsel %vm1436, %v5373, -3e+38
    %v5402 = vsel %vm1436, %v5375, -3e+38
    %v5403 = vsel %vm1436, %v5377, -3e+38
    %v5404 = vsel %vm1436, %v5379, -3e+38
    %v5405 = vsel %vm1436, %v5381, -3e+38
    %v5406 = vsel %vm1436, %v5383, -3e+38
    %v5407 = vsel %vm1436, %v5385, -3e+38
    %v5408 = vsel %vm1436, %v5387, -3e+38
    %v5409 = vsel %vm1436, %v5389, -3e+38
    %v5410 = vsel %vm1436, %v5391, -3e+38
    %v5411 = vsel %vm1436, %v5393, -3e+38
    %v5412 = vsel %vm1436, %v5395, -3e+38
    %v5413 = vsel %vm1436, %v5397, -3e+38
    %v5414 = vmax.f32 %v5333, %v5398
    %v5415 = vmax.f32 %v5334, %v5399
    %v5416 = vmax.f32 %v5335, %v5400
    %v5417 = vmax.f32 %v5336, %v5401
    %v5418 = vmax.f32 %v5337, %v5402
    %v5419 = vmax.f32 %v5338, %v5403
    %v5420 = vmax.f32 %v5339, %v5404
    %v5421 = vmax.f32 %v5340, %v5405
    %v5422 = vmax.f32 %v5341, %v5406
    %v5423 = vmax.f32 %v5342, %v5407
    %v5424 = vmax.f32 %v5343, %v5408
    %v5425 = vmax.f32 %v5344, %v5409
    %v5426 = vmax.f32 %v5345, %v5410
    %v5427 = vmax.f32 %v5346, %v5411
    %v5428 = vmax.f32 %v5347, %v5412
    %v5429 = vmax.f32 %v5348, %v5413
    %v5430 = vld [vmem:[%s101 + $0x1e] ss:$0 sm:$0xff]
    %v5431 = vsel %vm4928, %v5430, -3e+38
    %v5432 = vsel %vm4929, %v5430, -3e+38
    %v5433 = vsel %vm4930, %v5430, -3e+38
    %v5434 = vsel %vm4931, %v5430, -3e+38
    %v5435 = vsel %vm4932, %v5430, -3e+38
    %v5436 = vsel %vm4933, %v5430, -3e+38
    %v5437 = vsel %vm4934, %v5430, -3e+38
    %v5438 = vsel %vm4935, %v5430, -3e+38
    %v5439 = vsel %vm4936, %v5430, -3e+38
    %v5440 = vsel %vm4937, %v5430, -3e+38
    %v5441 = vsel %vm4938, %v5430, -3e+38
    %v5442 = vsel %vm4939, %v5430, -3e+38
    %v5443 = vsel %vm4940, %v5430, -3e+38
    %v5444 = vsel %vm4941, %v5430, -3e+38
    %v5445 = vsel %vm4942, %v5430, -3e+38
    %v5446 = vsel %vm4943, %v5430, -3e+38
    %5447 = vmax.xlane.f32.xlu0 %v5431
    %v5448 = vpop.xlane.xlu0 %5447
    %5449 = vmax.xlane.f32.xlu0 %v5432
    %v5450 = vpop.xlane.xlu0 %5449
    %5451 = vmax.xlane.f32.xlu0 %v5433
    %v5452 = vpop.xlane.xlu0 %5451
    %5453 = vmax.xlane.f32.xlu0 %v5434
    %v5454 = vpop.xlane.xlu0 %5453
    %5455 = vmax.xlane.f32.xlu0 %v5435
    %v5456 = vpop.xlane.xlu0 %5455
    %5457 = vmax.xlane.f32.xlu0 %v5436
    %v5458 = vpop.xlane.xlu0 %5457
    %5459 = vmax.xlane.f32.xlu0 %v5437
    %v5460 = vpop.xlane.xlu0 %5459
    %5461 = vmax.xlane.f32.xlu0 %v5438
    %v5462 = vpop.xlane.xlu0 %5461
    %5463 = vmax.xlane.f32.xlu0 %v5439
    %v5464 = vpop.xlane.xlu0 %5463
    %5465 = vmax.xlane.f32.xlu0 %v5440
    %v5466 = vpop.xlane.xlu0 %5465
    %5467 = vmax.xlane.f32.xlu0 %v5441
    %v5468 = vpop.xlane.xlu0 %5467
    %5469 = vmax.xlane.f32.xlu0 %v5442
    %v5470 = vpop.xlane.xlu0 %5469
    %5471 = vmax.xlane.f32.xlu0 %v5443
    %v5472 = vpop.xlane.xlu0 %5471
    %5473 = vmax.xlane.f32.xlu0 %v5444
    %v5474 = vpop.xlane.xlu0 %5473
    %5475 = vmax.xlane.f32.xlu0 %v5445
    %v5476 = vpop.xlane.xlu0 %5475
    %5477 = vmax.xlane.f32.xlu0 %v5446
    %v5478 = vpop.xlane.xlu0 %5477
    %v5479 = vsel %vm1518, %v5448, -3e+38
    %v5480 = vsel %vm1518, %v5450, -3e+38
    %v5481 = vsel %vm1518, %v5452, -3e+38
    %v5482 = vsel %vm1518, %v5454, -3e+38
    %v5483 = vsel %vm1518, %v5456, -3e+38
    %v5484 = vsel %vm1518, %v5458, -3e+38
    %v5485 = vsel %vm1518, %v5460, -3e+38
    %v5486 = vsel %vm1518, %v5462, -3e+38
    %v5487 = vsel %vm1518, %v5464, -3e+38
    %v5488 = vsel %vm1518, %v5466, -3e+38
    %v5489 = vsel %vm1518, %v5468, -3e+38
    %v5490 = vsel %vm1518, %v5470, -3e+38
    %v5491 = vsel %vm1518, %v5472, -3e+38
    %v5492 = vsel %vm1518, %v5474, -3e+38
    %v5493 = vsel %vm1518, %v5476, -3e+38
    %v5494 = vsel %vm1518, %v5478, -3e+38
    %v5495 = vmax.f32 %v5414, %v5479
    %v5496 = vmax.f32 %v5415, %v5480
    %v5497 = vmax.f32 %v5416, %v5481
    %v5498 = vmax.f32 %v5417, %v5482
    %v5499 = vmax.f32 %v5418, %v5483
    %v5500 = vmax.f32 %v5419, %v5484
    %v5501 = vmax.f32 %v5420, %v5485
    %v5502 = vmax.f32 %v5421, %v5486
    %v5503 = vmax.f32 %v5422, %v5487
    %v5504 = vmax.f32 %v5423, %v5488
    %v5505 = vmax.f32 %v5424, %v5489
    %v5506 = vmax.f32 %v5425, %v5490
    %v5507 = vmax.f32 %v5426, %v5491
    %v5508 = vmax.f32 %v5427, %v5492
    %v5509 = vmax.f32 %v5428, %v5493
    %v5510 = vmax.f32 %v5429, %v5494
    %v5511 = vld [vmem:[%s101 + $0x1f] ss:$0 sm:$0xff]
    %v5512 = vsel %vm4928, %v5511, -3e+38
    %v5513 = vsel %vm4929, %v5511, -3e+38
    %v5514 = vsel %vm4930, %v5511, -3e+38
    %v5515 = vsel %vm4931, %v5511, -3e+38
    %v5516 = vsel %vm4932, %v5511, -3e+38
    %v5517 = vsel %vm4933, %v5511, -3e+38
    %v5518 = vsel %vm4934, %v5511, -3e+38
    %v5519 = vsel %vm4935, %v5511, -3e+38
    %v5520 = vsel %vm4936, %v5511, -3e+38
    %v5521 = vsel %vm4937, %v5511, -3e+38
    %v5522 = vsel %vm4938, %v5511, -3e+38
    %v5523 = vsel %vm4939, %v5511, -3e+38
    %v5524 = vsel %vm4940, %v5511, -3e+38
    %v5525 = vsel %vm4941, %v5511, -3e+38
    %v5526 = vsel %vm4942, %v5511, -3e+38
    %v5527 = vsel %vm4943, %v5511, -3e+38
    %5528 = vmax.xlane.f32.xlu0 %v5512
    %v5529 = vpop.xlane.xlu0 %5528
    %5530 = vmax.xlane.f32.xlu0 %v5513
    %v5531 = vpop.xlane.xlu0 %5530
    %5532 = vmax.xlane.f32.xlu0 %v5514
    %v5533 = vpop.xlane.xlu0 %5532
    %5534 = vmax.xlane.f32.xlu0 %v5515
    %v5535 = vpop.xlane.xlu0 %5534
    %5536 = vmax.xlane.f32.xlu0 %v5516
    %v5537 = vpop.xlane.xlu0 %5536
    %5538 = vmax.xlane.f32.xlu0 %v5517
    %v5539 = vpop.xlane.xlu0 %5538
    %5540 = vmax.xlane.f32.xlu0 %v5518
    %v5541 = vpop.xlane.xlu0 %5540
    %5542 = vmax.xlane.f32.xlu0 %v5519
    %v5543 = vpop.xlane.xlu0 %5542
    %5544 = vmax.xlane.f32.xlu0 %v5520
    %v5545 = vpop.xlane.xlu0 %5544
    %5546 = vmax.xlane.f32.xlu0 %v5521
    %v5547 = vpop.xlane.xlu0 %5546
    %5548 = vmax.xlane.f32.xlu0 %v5522
    %v5549 = vpop.xlane.xlu0 %5548
    %5550 = vmax.xlane.f32.xlu0 %v5523
    %v5551 = vpop.xlane.xlu0 %5550
    %5552 = vmax.xlane.f32.xlu0 %v5524
    %v5553 = vpop.xlane.xlu0 %5552
    %5554 = vmax.xlane.f32.xlu0 %v5525
    %v5555 = vpop.xlane.xlu0 %5554
    %5556 = vmax.xlane.f32.xlu0 %v5526
    %v5557 = vpop.xlane.xlu0 %5556
    %5558 = vmax.xlane.f32.xlu0 %v5527
    %v5559 = vpop.xlane.xlu0 %5558
    %v5560 = vsel %vm1600, %v5529, -3e+38
    %v5561 = vsel %vm1600, %v5531, -3e+38
    %v5562 = vsel %vm1600, %v5533, -3e+38
    %v5563 = vsel %vm1600, %v5535, -3e+38
    %v5564 = vsel %vm1600, %v5537, -3e+38
    %v5565 = vsel %vm1600, %v5539, -3e+38
    %v5566 = vsel %vm1600, %v5541, -3e+38
    %v5567 = vsel %vm1600, %v5543, -3e+38
    %v5568 = vsel %vm1600, %v5545, -3e+38
    %v5569 = vsel %vm1600, %v5547, -3e+38
    %v5570 = vsel %vm1600, %v5549, -3e+38
    %v5571 = vsel %vm1600, %v5551, -3e+38
    %v5572 = vsel %vm1600, %v5553, -3e+38
    %v5573 = vsel %vm1600, %v5555, -3e+38
    %v5574 = vsel %vm1600, %v5557, -3e+38
    %v5575 = vsel %vm1600, %v5559, -3e+38
    %v5576 = vmax.f32 %v5495, %v5560
    %v5577 = vmax.f32 %v5496, %v5561
    %v5578 = vmax.f32 %v5497, %v5562
    %v5579 = vmax.f32 %v5498, %v5563
    %v5580 = vmax.f32 %v5499, %v5564
    %v5581 = vmax.f32 %v5500, %v5565
    %v5582 = vmax.f32 %v5501, %v5566
    %v5583 = vmax.f32 %v5502, %v5567
    %v5584 = vmax.f32 %v5503, %v5568
    %v5585 = vmax.f32 %v5504, %v5569
    %v5586 = vmax.f32 %v5505, %v5570
    %v5587 = vmax.f32 %v5506, %v5571
    %v5588 = vmax.f32 %v5507, %v5572
    %v5589 = vmax.f32 %v5508, %v5573
    %v5590 = vmax.f32 %v5509, %v5574
    %v5591 = vmax.f32 %v5510, %v5575
    %v5592 = vld [vmem:[%s101 + $0x38] ss:$0 sm:$0xff]
    %v5593 = vsel %vm4928, %v5592, -3e+38
    %v5594 = vsel %vm4929, %v5592, -3e+38
    %v5595 = vsel %vm4930, %v5592, -3e+38
    %v5596 = vsel %vm4931, %v5592, -3e+38
    %v5597 = vsel %vm4932, %v5592, -3e+38
    %v5598 = vsel %vm4933, %v5592, -3e+38
    %v5599 = vsel %vm4934, %v5592, -3e+38
    %v5600 = vsel %vm4935, %v5592, -3e+38
    %v5601 = vsel %vm4936, %v5592, -3e+38
    %v5602 = vsel %vm4937, %v5592, -3e+38
    %v5603 = vsel %vm4938, %v5592, -3e+38
    %v5604 = vsel %vm4939, %v5592, -3e+38
    %v5605 = vsel %vm4940, %v5592, -3e+38
    %v5606 = vsel %vm4941, %v5592, -3e+38
    %v5607 = vsel %vm4942, %v5592, -3e+38
    %v5608 = vsel %vm4943, %v5592, -3e+38
    %5609 = vmax.xlane.f32.xlu0 %v5593
    %v5610 = vpop.xlane.xlu0 %5609
    %5611 = vmax.xlane.f32.xlu0 %v5594
    %v5612 = vpop.xlane.xlu0 %5611
    %5613 = vmax.xlane.f32.xlu0 %v5595
    %v5614 = vpop.xlane.xlu0 %5613
    %5615 = vmax.xlane.f32.xlu0 %v5596
    %v5616 = vpop.xlane.xlu0 %5615
    %5617 = vmax.xlane.f32.xlu0 %v5597
    %v5618 = vpop.xlane.xlu0 %5617
    %5619 = vmax.xlane.f32.xlu0 %v5598
    %v5620 = vpop.xlane.xlu0 %5619
    %5621 = vmax.xlane.f32.xlu0 %v5599
    %v5622 = vpop.xlane.xlu0 %5621
    %5623 = vmax.xlane.f32.xlu0 %v5600
    %v5624 = vpop.xlane.xlu0 %5623
    %5625 = vmax.xlane.f32.xlu0 %v5601
    %v5626 = vpop.xlane.xlu0 %5625
    %5627 = vmax.xlane.f32.xlu0 %v5602
    %v5628 = vpop.xlane.xlu0 %5627
    %5629 = vmax.xlane.f32.xlu0 %v5603
    %v5630 = vpop.xlane.xlu0 %5629
    %5631 = vmax.xlane.f32.xlu0 %v5604
    %v5632 = vpop.xlane.xlu0 %5631
    %5633 = vmax.xlane.f32.xlu0 %v5605
    %v5634 = vpop.xlane.xlu0 %5633
    %5635 = vmax.xlane.f32.xlu0 %v5606
    %v5636 = vpop.xlane.xlu0 %5635
    %5637 = vmax.xlane.f32.xlu0 %v5607
    %v5638 = vpop.xlane.xlu0 %5637
    %5639 = vmax.xlane.f32.xlu0 %v5608
    %v5640 = vpop.xlane.xlu0 %5639
    %v5641 = vsel %vm1682, %v5610, -3e+38
    %v5642 = vsel %vm1682, %v5612, -3e+38
    %v5643 = vsel %vm1682, %v5614, -3e+38
    %v5644 = vsel %vm1682, %v5616, -3e+38
    %v5645 = vsel %vm1682, %v5618, -3e+38
    %v5646 = vsel %vm1682, %v5620, -3e+38
    %v5647 = vsel %vm1682, %v5622, -3e+38
    %v5648 = vsel %vm1682, %v5624, -3e+38
    %v5649 = vsel %vm1682, %v5626, -3e+38
    %v5650 = vsel %vm1682, %v5628, -3e+38
    %v5651 = vsel %vm1682, %v5630, -3e+38
    %v5652 = vsel %vm1682, %v5632, -3e+38
    %v5653 = vsel %vm1682, %v5634, -3e+38
    %v5654 = vsel %vm1682, %v5636, -3e+38
    %v5655 = vsel %vm1682, %v5638, -3e+38
    %v5656 = vsel %vm1682, %v5640, -3e+38
    %v5657 = vmax.f32 %v5576, %v5641
    %v5658 = vmax.f32 %v5577, %v5642
    %v5659 = vmax.f32 %v5578, %v5643
    %v5660 = vmax.f32 %v5579, %v5644
    %v5661 = vmax.f32 %v5580, %v5645
    %v5662 = vmax.f32 %v5581, %v5646
    %v5663 = vmax.f32 %v5582, %v5647
    %v5664 = vmax.f32 %v5583, %v5648
    %v5665 = vmax.f32 %v5584, %v5649
    %v5666 = vmax.f32 %v5585, %v5650
    %v5667 = vmax.f32 %v5586, %v5651
    %v5668 = vmax.f32 %v5587, %v5652
    %v5669 = vmax.f32 %v5588, %v5653
    %v5670 = vmax.f32 %v5589, %v5654
    %v5671 = vmax.f32 %v5590, %v5655
    %v5672 = vmax.f32 %v5591, %v5656
    %v5673 = vld [vmem:[%s101 + $0x39] ss:$0 sm:$0xff]
    %v5674 = vsel %vm4928, %v5673, -3e+38
    %v5675 = vsel %vm4929, %v5673, -3e+38
    %v5676 = vsel %vm4930, %v5673, -3e+38
    %v5677 = vsel %vm4931, %v5673, -3e+38
    %v5678 = vsel %vm4932, %v5673, -3e+38
    %v5679 = vsel %vm4933, %v5673, -3e+38
    %v5680 = vsel %vm4934, %v5673, -3e+38
    %v5681 = vsel %vm4935, %v5673, -3e+38
    %v5682 = vsel %vm4936, %v5673, -3e+38
    %v5683 = vsel %vm4937, %v5673, -3e+38
    %v5684 = vsel %vm4938, %v5673, -3e+38
    %v5685 = vsel %vm4939, %v5673, -3e+38
    %v5686 = vsel %vm4940, %v5673, -3e+38
    %v5687 = vsel %vm4941, %v5673, -3e+38
    %v5688 = vsel %vm4942, %v5673, -3e+38
    %v5689 = vsel %vm4943, %v5673, -3e+38
    %5690 = vmax.xlane.f32.xlu0 %v5674
    %v5691 = vpop.xlane.xlu0 %5690
    %5692 = vmax.xlane.f32.xlu0 %v5675
    %v5693 = vpop.xlane.xlu0 %5692
    %5694 = vmax.xlane.f32.xlu0 %v5676
    %v5695 = vpop.xlane.xlu0 %5694
    %5696 = vmax.xlane.f32.xlu0 %v5677
    %v5697 = vpop.xlane.xlu0 %5696
    %5698 = vmax.xlane.f32.xlu0 %v5678
    %v5699 = vpop.xlane.xlu0 %5698
    %5700 = vmax.xlane.f32.xlu0 %v5679
    %v5701 = vpop.xlane.xlu0 %5700
    %5702 = vmax.xlane.f32.xlu0 %v5680
    %v5703 = vpop.xlane.xlu0 %5702
    %5704 = vmax.xlane.f32.xlu0 %v5681
    %v5705 = vpop.xlane.xlu0 %5704
    %5706 = vmax.xlane.f32.xlu0 %v5682
    %v5707 = vpop.xlane.xlu0 %5706
    %5708 = vmax.xlane.f32.xlu0 %v5683
    %v5709 = vpop.xlane.xlu0 %5708
    %5710 = vmax.xlane.f32.xlu0 %v5684
    %v5711 = vpop.xlane.xlu0 %5710
    %5712 = vmax.xlane.f32.xlu0 %v5685
    %v5713 = vpop.xlane.xlu0 %5712
    %5714 = vmax.xlane.f32.xlu0 %v5686
    %v5715 = vpop.xlane.xlu0 %5714
    %5716 = vmax.xlane.f32.xlu0 %v5687
    %v5717 = vpop.xlane.xlu0 %5716
    %5718 = vmax.xlane.f32.xlu0 %v5688
    %v5719 = vpop.xlane.xlu0 %5718
    %5720 = vmax.xlane.f32.xlu0 %v5689
    %v5721 = vpop.xlane.xlu0 %5720
    %v5722 = vsel %vm1764, %v5691, -3e+38
    %v5723 = vsel %vm1764, %v5693, -3e+38
    %v5724 = vsel %vm1764, %v5695, -3e+38
    %v5725 = vsel %vm1764, %v5697, -3e+38
    %v5726 = vsel %vm1764, %v5699, -3e+38
    %v5727 = vsel %vm1764, %v5701, -3e+38
    %v5728 = vsel %vm1764, %v5703, -3e+38
    %v5729 = vsel %vm1764, %v5705, -3e+38
    %v5730 = vsel %vm1764, %v5707, -3e+38
    %v5731 = vsel %vm1764, %v5709, -3e+38
    %v5732 = vsel %vm1764, %v5711, -3e+38
    %v5733 = vsel %vm1764, %v5713, -3e+38
    %v5734 = vsel %vm1764, %v5715, -3e+38
    %v5735 = vsel %vm1764, %v5717, -3e+38
    %v5736 = vsel %vm1764, %v5719, -3e+38
    %v5737 = vsel %vm1764, %v5721, -3e+38
    %v5738 = vmax.f32 %v5657, %v5722
    %v5739 = vmax.f32 %v5658, %v5723
    %v5740 = vmax.f32 %v5659, %v5724
    %v5741 = vmax.f32 %v5660, %v5725
    %v5742 = vmax.f32 %v5661, %v5726
    %v5743 = vmax.f32 %v5662, %v5727
    %v5744 = vmax.f32 %v5663, %v5728
    %v5745 = vmax.f32 %v5664, %v5729
    %v5746 = vmax.f32 %v5665, %v5730
    %v5747 = vmax.f32 %v5666, %v5731
    %v5748 = vmax.f32 %v5667, %v5732
    %v5749 = vmax.f32 %v5668, %v5733
    %v5750 = vmax.f32 %v5669, %v5734
    %v5751 = vmax.f32 %v5670, %v5735
    %v5752 = vmax.f32 %v5671, %v5736
    %v5753 = vmax.f32 %v5672, %v5737
    %v5754 = vld [vmem:[%s101 + $0x3a] ss:$0 sm:$0xff]
    %v5755 = vsel %vm4928, %v5754, -3e+38
    %v5756 = vsel %vm4929, %v5754, -3e+38
    %v5757 = vsel %vm4930, %v5754, -3e+38
    %v5758 = vsel %vm4931, %v5754, -3e+38
    %v5759 = vsel %vm4932, %v5754, -3e+38
    %v5760 = vsel %vm4933, %v5754, -3e+38
    %v5761 = vsel %vm4934, %v5754, -3e+38
    %v5762 = vsel %vm4935, %v5754, -3e+38
    %v5763 = vsel %vm4936, %v5754, -3e+38
    %v5764 = vsel %vm4937, %v5754, -3e+38
    %v5765 = vsel %vm4938, %v5754, -3e+38
    %v5766 = vsel %vm4939, %v5754, -3e+38
    %v5767 = vsel %vm4940, %v5754, -3e+38
    %v5768 = vsel %vm4941, %v5754, -3e+38
    %v5769 = vsel %vm4942, %v5754, -3e+38
    %v5770 = vsel %vm4943, %v5754, -3e+38
    %5771 = vmax.xlane.f32.xlu0 %v5755
    %v5772 = vpop.xlane.xlu0 %5771
    %5773 = vmax.xlane.f32.xlu0 %v5756
    %v5774 = vpop.xlane.xlu0 %5773
    %5775 = vmax.xlane.f32.xlu0 %v5757
    %v5776 = vpop.xlane.xlu0 %5775
    %5777 = vmax.xlane.f32.xlu0 %v5758
    %v5778 = vpop.xlane.xlu0 %5777
    %5779 = vmax.xlane.f32.xlu0 %v5759
    %v5780 = vpop.xlane.xlu0 %5779
    %5781 = vmax.xlane.f32.xlu0 %v5760
    %v5782 = vpop.xlane.xlu0 %5781
    %5783 = vmax.xlane.f32.xlu0 %v5761
    %v5784 = vpop.xlane.xlu0 %5783
    %5785 = vmax.xlane.f32.xlu0 %v5762
    %v5786 = vpop.xlane.xlu0 %5785
    %5787 = vmax.xlane.f32.xlu0 %v5763
    %v5788 = vpop.xlane.xlu0 %5787
    %5789 = vmax.xlane.f32.xlu0 %v5764
    %v5790 = vpop.xlane.xlu0 %5789
    %5791 = vmax.xlane.f32.xlu0 %v5765
    %v5792 = vpop.xlane.xlu0 %5791
    %5793 = vmax.xlane.f32.xlu0 %v5766
    %v5794 = vpop.xlane.xlu0 %5793
    %5795 = vmax.xlane.f32.xlu0 %v5767
    %v5796 = vpop.xlane.xlu0 %5795
    %5797 = vmax.xlane.f32.xlu0 %v5768
    %v5798 = vpop.xlane.xlu0 %5797
    %5799 = vmax.xlane.f32.xlu0 %v5769
    %v5800 = vpop.xlane.xlu0 %5799
    %5801 = vmax.xlane.f32.xlu0 %v5770
    %v5802 = vpop.xlane.xlu0 %5801
    %v5803 = vsel %vm1846, %v5772, -3e+38
    %v5804 = vsel %vm1846, %v5774, -3e+38
    %v5805 = vsel %vm1846, %v5776, -3e+38
    %v5806 = vsel %vm1846, %v5778, -3e+38
    %v5807 = vsel %vm1846, %v5780, -3e+38
    %v5808 = vsel %vm1846, %v5782, -3e+38
    %v5809 = vsel %vm1846, %v5784, -3e+38
    %v5810 = vsel %vm1846, %v5786, -3e+38
    %v5811 = vsel %vm1846, %v5788, -3e+38
    %v5812 = vsel %vm1846, %v5790, -3e+38
    %v5813 = vsel %vm1846, %v5792, -3e+38
    %v5814 = vsel %vm1846, %v5794, -3e+38
    %v5815 = vsel %vm1846, %v5796, -3e+38
    %v5816 = vsel %vm1846, %v5798, -3e+38
    %v5817 = vsel %vm1846, %v5800, -3e+38
    %v5818 = vsel %vm1846, %v5802, -3e+38
    %v5819 = vmax.f32 %v5738, %v5803
    %v5820 = vmax.f32 %v5739, %v5804
    %v5821 = vmax.f32 %v5740, %v5805
    %v5822 = vmax.f32 %v5741, %v5806
    %v5823 = vmax.f32 %v5742, %v5807
    %v5824 = vmax.f32 %v5743, %v5808
    %v5825 = vmax.f32 %v5744, %v5809
    %v5826 = vmax.f32 %v5745, %v5810
    %v5827 = vmax.f32 %v5746, %v5811
    %v5828 = vmax.f32 %v5747, %v5812
    %v5829 = vmax.f32 %v5748, %v5813
    %v5830 = vmax.f32 %v5749, %v5814
    %v5831 = vmax.f32 %v5750, %v5815
    %v5832 = vmax.f32 %v5751, %v5816
    %v5833 = vmax.f32 %v5752, %v5817
    %v5834 = vmax.f32 %v5753, %v5818
    %v5835 = vld [vmem:[%s101 + $0x3b] ss:$0 sm:$0xff]
    %v5836 = vsel %vm4928, %v5835, -3e+38
    %v5837 = vsel %vm4929, %v5835, -3e+38
    %v5838 = vsel %vm4930, %v5835, -3e+38
    %v5839 = vsel %vm4931, %v5835, -3e+38
    %v5840 = vsel %vm4932, %v5835, -3e+38
    %v5841 = vsel %vm4933, %v5835, -3e+38
    %v5842 = vsel %vm4934, %v5835, -3e+38
    %v5843 = vsel %vm4935, %v5835, -3e+38
    %v5844 = vsel %vm4936, %v5835, -3e+38
    %v5845 = vsel %vm4937, %v5835, -3e+38
    %v5846 = vsel %vm4938, %v5835, -3e+38
    %v5847 = vsel %vm4939, %v5835, -3e+38
    %v5848 = vsel %vm4940, %v5835, -3e+38
    %v5849 = vsel %vm4941, %v5835, -3e+38
    %v5850 = vsel %vm4942, %v5835, -3e+38
    %v5851 = vsel %vm4943, %v5835, -3e+38
    %5852 = vmax.xlane.f32.xlu0 %v5836
    %v5853 = vpop.xlane.xlu0 %5852
    %5854 = vmax.xlane.f32.xlu0 %v5837
    %v5855 = vpop.xlane.xlu0 %5854
    %5856 = vmax.xlane.f32.xlu0 %v5838
    %v5857 = vpop.xlane.xlu0 %5856
    %5858 = vmax.xlane.f32.xlu0 %v5839
    %v5859 = vpop.xlane.xlu0 %5858
    %5860 = vmax.xlane.f32.xlu0 %v5840
    %v5861 = vpop.xlane.xlu0 %5860
    %5862 = vmax.xlane.f32.xlu0 %v5841
    %v5863 = vpop.xlane.xlu0 %5862
    %5864 = vmax.xlane.f32.xlu0 %v5842
    %v5865 = vpop.xlane.xlu0 %5864
    %5866 = vmax.xlane.f32.xlu0 %v5843
    %v5867 = vpop.xlane.xlu0 %5866
    %5868 = vmax.xlane.f32.xlu0 %v5844
    %v5869 = vpop.xlane.xlu0 %5868
    %5870 = vmax.xlane.f32.xlu0 %v5845
    %v5871 = vpop.xlane.xlu0 %5870
    %5872 = vmax.xlane.f32.xlu0 %v5846
    %v5873 = vpop.xlane.xlu0 %5872
    %5874 = vmax.xlane.f32.xlu0 %v5847
    %v5875 = vpop.xlane.xlu0 %5874
    %5876 = vmax.xlane.f32.xlu0 %v5848
    %v5877 = vpop.xlane.xlu0 %5876
    %5878 = vmax.xlane.f32.xlu0 %v5849
    %v5879 = vpop.xlane.xlu0 %5878
    %5880 = vmax.xlane.f32.xlu0 %v5850
    %v5881 = vpop.xlane.xlu0 %5880
    %5882 = vmax.xlane.f32.xlu0 %v5851
    %v5883 = vpop.xlane.xlu0 %5882
    %v5884 = vsel %vm1928, %v5853, -3e+38
    %v5885 = vsel %vm1928, %v5855, -3e+38
    %v5886 = vsel %vm1928, %v5857, -3e+38
    %v5887 = vsel %vm1928, %v5859, -3e+38
    %v5888 = vsel %vm1928, %v5861, -3e+38
    %v5889 = vsel %vm1928, %v5863, -3e+38
    %v5890 = vsel %vm1928, %v5865, -3e+38
    %v5891 = vsel %vm1928, %v5867, -3e+38
    %v5892 = vsel %vm1928, %v5869, -3e+38
    %v5893 = vsel %vm1928, %v5871, -3e+38
    %v5894 = vsel %vm1928, %v5873, -3e+38
    %v5895 = vsel %vm1928, %v5875, -3e+38
    %v5896 = vsel %vm1928, %v5877, -3e+38
    %v5897 = vsel %vm1928, %v5879, -3e+38
    %v5898 = vsel %vm1928, %v5881, -3e+38
    %v5899 = vsel %vm1928, %v5883, -3e+38
    %v5900 = vmax.f32 %v5819, %v5884
    %v5901 = vmax.f32 %v5820, %v5885
    %v5902 = vmax.f32 %v5821, %v5886
    %v5903 = vmax.f32 %v5822, %v5887
    %v5904 = vmax.f32 %v5823, %v5888
    %v5905 = vmax.f32 %v5824, %v5889
    %v5906 = vmax.f32 %v5825, %v5890
    %v5907 = vmax.f32 %v5826, %v5891
    %v5908 = vmax.f32 %v5827, %v5892
    %v5909 = vmax.f32 %v5828, %v5893
    %v5910 = vmax.f32 %v5829, %v5894
    %v5911 = vmax.f32 %v5830, %v5895
    %v5912 = vmax.f32 %v5831, %v5896
    %v5913 = vmax.f32 %v5832, %v5897
    %v5914 = vmax.f32 %v5833, %v5898
    %v5915 = vmax.f32 %v5834, %v5899
    %v5916 = vld [vmem:[%s101 + $0x3c] ss:$0 sm:$0xff]
    %v5917 = vsel %vm4928, %v5916, -3e+38
    %v5918 = vsel %vm4929, %v5916, -3e+38
    %v5919 = vsel %vm4930, %v5916, -3e+38
    %v5920 = vsel %vm4931, %v5916, -3e+38
    %v5921 = vsel %vm4932, %v5916, -3e+38
    %v5922 = vsel %vm4933, %v5916, -3e+38
    %v5923 = vsel %vm4934, %v5916, -3e+38
    %v5924 = vsel %vm4935, %v5916, -3e+38
    %v5925 = vsel %vm4936, %v5916, -3e+38
    %v5926 = vsel %vm4937, %v5916, -3e+38
    %v5927 = vsel %vm4938, %v5916, -3e+38
    %v5928 = vsel %vm4939, %v5916, -3e+38
    %v5929 = vsel %vm4940, %v5916, -3e+38
    %v5930 = vsel %vm4941, %v5916, -3e+38
    %v5931 = vsel %vm4942, %v5916, -3e+38
    %v5932 = vsel %vm4943, %v5916, -3e+38
    %5933 = vmax.xlane.f32.xlu0 %v5917
    %v5934 = vpop.xlane.xlu0 %5933
    %5935 = vmax.xlane.f32.xlu0 %v5918
    %v5936 = vpop.xlane.xlu0 %5935
    %5937 = vmax.xlane.f32.xlu0 %v5919
    %v5938 = vpop.xlane.xlu0 %5937
    %5939 = vmax.xlane.f32.xlu0 %v5920
    %v5940 = vpop.xlane.xlu0 %5939
    %5941 = vmax.xlane.f32.xlu0 %v5921
    %v5942 = vpop.xlane.xlu0 %5941
    %5943 = vmax.xlane.f32.xlu0 %v5922
    %v5944 = vpop.xlane.xlu0 %5943
    %5945 = vmax.xlane.f32.xlu0 %v5923
    %v5946 = vpop.xlane.xlu0 %5945
    %5947 = vmax.xlane.f32.xlu0 %v5924
    %v5948 = vpop.xlane.xlu0 %5947
    %5949 = vmax.xlane.f32.xlu0 %v5925
    %v5950 = vpop.xlane.xlu0 %5949
    %5951 = vmax.xlane.f32.xlu0 %v5926
    %v5952 = vpop.xlane.xlu0 %5951
    %5953 = vmax.xlane.f32.xlu0 %v5927
    %v5954 = vpop.xlane.xlu0 %5953
    %5955 = vmax.xlane.f32.xlu0 %v5928
    %v5956 = vpop.xlane.xlu0 %5955
    %5957 = vmax.xlane.f32.xlu0 %v5929
    %v5958 = vpop.xlane.xlu0 %5957
    %5959 = vmax.xlane.f32.xlu0 %v5930
    %v5960 = vpop.xlane.xlu0 %5959
    %5961 = vmax.xlane.f32.xlu0 %v5931
    %v5962 = vpop.xlane.xlu0 %5961
    %5963 = vmax.xlane.f32.xlu0 %v5932
    %v5964 = vpop.xlane.xlu0 %5963
    %v5965 = vsel %vm2010, %v5934, -3e+38
    %v5966 = vsel %vm2010, %v5936, -3e+38
    %v5967 = vsel %vm2010, %v5938, -3e+38
    %v5968 = vsel %vm2010, %v5940, -3e+38
    %v5969 = vsel %vm2010, %v5942, -3e+38
    %v5970 = vsel %vm2010, %v5944, -3e+38
    %v5971 = vsel %vm2010, %v5946, -3e+38
    %v5972 = vsel %vm2010, %v5948, -3e+38
    %v5973 = vsel %vm2010, %v5950, -3e+38
    %v5974 = vsel %vm2010, %v5952, -3e+38
    %v5975 = vsel %vm2010, %v5954, -3e+38
    %v5976 = vsel %vm2010, %v5956, -3e+38
    %v5977 = vsel %vm2010, %v5958, -3e+38
    %v5978 = vsel %vm2010, %v5960, -3e+38
    %v5979 = vsel %vm2010, %v5962, -3e+38
    %v5980 = vsel %vm2010, %v5964, -3e+38
    %v5981 = vmax.f32 %v5900, %v5965
    %v5982 = vmax.f32 %v5901, %v5966
    %v5983 = vmax.f32 %v5902, %v5967
    %v5984 = vmax.f32 %v5903, %v5968
    %v5985 = vmax.f32 %v5904, %v5969
    %v5986 = vmax.f32 %v5905, %v5970
    %v5987 = vmax.f32 %v5906, %v5971
    %v5988 = vmax.f32 %v5907, %v5972
    %v5989 = vmax.f32 %v5908, %v5973
    %v5990 = vmax.f32 %v5909, %v5974
    %v5991 = vmax.f32 %v5910, %v5975
    %v5992 = vmax.f32 %v5911, %v5976
    %v5993 = vmax.f32 %v5912, %v5977
    %v5994 = vmax.f32 %v5913, %v5978
    %v5995 = vmax.f32 %v5914, %v5979
    %v5996 = vmax.f32 %v5915, %v5980
    %v5997 = vld [vmem:[%s101 + $0x3d] ss:$0 sm:$0xff]
    %v5998 = vsel %vm4928, %v5997, -3e+38
    %v5999 = vsel %vm4929, %v5997, -3e+38
    %v6000 = vsel %vm4930, %v5997, -3e+38
    %v6001 = vsel %vm4931, %v5997, -3e+38
    %v6002 = vsel %vm4932, %v5997, -3e+38
    %v6003 = vsel %vm4933, %v5997, -3e+38
    %v6004 = vsel %vm4934, %v5997, -3e+38
    %v6005 = vsel %vm4935, %v5997, -3e+38
    %v6006 = vsel %vm4936, %v5997, -3e+38
    %v6007 = vsel %vm4937, %v5997, -3e+38
    %v6008 = vsel %vm4938, %v5997, -3e+38
    %v6009 = vsel %vm4939, %v5997, -3e+38
    %v6010 = vsel %vm4940, %v5997, -3e+38
    %v6011 = vsel %vm4941, %v5997, -3e+38
    %v6012 = vsel %vm4942, %v5997, -3e+38
    %v6013 = vsel %vm4943, %v5997, -3e+38
    %6014 = vmax.xlane.f32.xlu0 %v5998
    %v6015 = vpop.xlane.xlu0 %6014
    %6016 = vmax.xlane.f32.xlu0 %v5999
    %v6017 = vpop.xlane.xlu0 %6016
    %6018 = vmax.xlane.f32.xlu0 %v6000
    %v6019 = vpop.xlane.xlu0 %6018
    %6020 = vmax.xlane.f32.xlu0 %v6001
    %v6021 = vpop.xlane.xlu0 %6020
    %6022 = vmax.xlane.f32.xlu0 %v6002
    %v6023 = vpop.xlane.xlu0 %6022
    %6024 = vmax.xlane.f32.xlu0 %v6003
    %v6025 = vpop.xlane.xlu0 %6024
    %6026 = vmax.xlane.f32.xlu0 %v6004
    %v6027 = vpop.xlane.xlu0 %6026
    %6028 = vmax.xlane.f32.xlu0 %v6005
    %v6029 = vpop.xlane.xlu0 %6028
    %6030 = vmax.xlane.f32.xlu0 %v6006
    %v6031 = vpop.xlane.xlu0 %6030
    %6032 = vmax.xlane.f32.xlu0 %v6007
    %v6033 = vpop.xlane.xlu0 %6032
    %6034 = vmax.xlane.f32.xlu0 %v6008
    %v6035 = vpop.xlane.xlu0 %6034
    %6036 = vmax.xlane.f32.xlu0 %v6009
    %v6037 = vpop.xlane.xlu0 %6036
    %6038 = vmax.xlane.f32.xlu0 %v6010
    %v6039 = vpop.xlane.xlu0 %6038
    %6040 = vmax.xlane.f32.xlu0 %v6011
    %v6041 = vpop.xlane.xlu0 %6040
    %6042 = vmax.xlane.f32.xlu0 %v6012
    %v6043 = vpop.xlane.xlu0 %6042
    %6044 = vmax.xlane.f32.xlu0 %v6013
    %v6045 = vpop.xlane.xlu0 %6044
    %v6046 = vsel %vm2092, %v6015, -3e+38
    %v6047 = vsel %vm2092, %v6017, -3e+38
    %v6048 = vsel %vm2092, %v6019, -3e+38
    %v6049 = vsel %vm2092, %v6021, -3e+38
    %v6050 = vsel %vm2092, %v6023, -3e+38
    %v6051 = vsel %vm2092, %v6025, -3e+38
    %v6052 = vsel %vm2092, %v6027, -3e+38
    %v6053 = vsel %vm2092, %v6029, -3e+38
    %v6054 = vsel %vm2092, %v6031, -3e+38
    %v6055 = vsel %vm2092, %v6033, -3e+38
    %v6056 = vsel %vm2092, %v6035, -3e+38
    %v6057 = vsel %vm2092, %v6037, -3e+38
    %v6058 = vsel %vm2092, %v6039, -3e+38
    %v6059 = vsel %vm2092, %v6041, -3e+38
    %v6060 = vsel %vm2092, %v6043, -3e+38
    %v6061 = vsel %vm2092, %v6045, -3e+38
    %v6062 = vmax.f32 %v5981, %v6046
    %v6063 = vmax.f32 %v5982, %v6047
    %v6064 = vmax.f32 %v5983, %v6048
    %v6065 = vmax.f32 %v5984, %v6049
    %v6066 = vmax.f32 %v5985, %v6050
    %v6067 = vmax.f32 %v5986, %v6051
    %v6068 = vmax.f32 %v5987, %v6052
    %v6069 = vmax.f32 %v5988, %v6053
    %v6070 = vmax.f32 %v5989, %v6054
    %v6071 = vmax.f32 %v5990, %v6055
    %v6072 = vmax.f32 %v5991, %v6056
    %v6073 = vmax.f32 %v5992, %v6057
    %v6074 = vmax.f32 %v5993, %v6058
    %v6075 = vmax.f32 %v5994, %v6059
    %v6076 = vmax.f32 %v5995, %v6060
    %v6077 = vmax.f32 %v5996, %v6061
    %v6078 = vld [vmem:[%s101 + $0x3e] ss:$0 sm:$0xff]
    %v6079 = vsel %vm4928, %v6078, -3e+38
    %v6080 = vsel %vm4929, %v6078, -3e+38
    %v6081 = vsel %vm4930, %v6078, -3e+38
    %v6082 = vsel %vm4931, %v6078, -3e+38
    %v6083 = vsel %vm4932, %v6078, -3e+38
    %v6084 = vsel %vm4933, %v6078, -3e+38
    %v6085 = vsel %vm4934, %v6078, -3e+38
    %v6086 = vsel %vm4935, %v6078, -3e+38
    %v6087 = vsel %vm4936, %v6078, -3e+38
    %v6088 = vsel %vm4937, %v6078, -3e+38
    %v6089 = vsel %vm4938, %v6078, -3e+38
    %v6090 = vsel %vm4939, %v6078, -3e+38
    %v6091 = vsel %vm4940, %v6078, -3e+38
    %v6092 = vsel %vm4941, %v6078, -3e+38
    %v6093 = vsel %vm4942, %v6078, -3e+38
    %v6094 = vsel %vm4943, %v6078, -3e+38
    %6095 = vmax.xlane.f32.xlu0 %v6079
    %v6096 = vpop.xlane.xlu0 %6095
    %6097 = vmax.xlane.f32.xlu0 %v6080
    %v6098 = vpop.xlane.xlu0 %6097
    %6099 = vmax.xlane.f32.xlu0 %v6081
    %v6100 = vpop.xlane.xlu0 %6099
    %6101 = vmax.xlane.f32.xlu0 %v6082
    %v6102 = vpop.xlane.xlu0 %6101
    %6103 = vmax.xlane.f32.xlu0 %v6083
    %v6104 = vpop.xlane.xlu0 %6103
    %6105 = vmax.xlane.f32.xlu0 %v6084
    %v6106 = vpop.xlane.xlu0 %6105
    %6107 = vmax.xlane.f32.xlu0 %v6085
    %v6108 = vpop.xlane.xlu0 %6107
    %6109 = vmax.xlane.f32.xlu0 %v6086
    %v6110 = vpop.xlane.xlu0 %6109
    %6111 = vmax.xlane.f32.xlu0 %v6087
    %v6112 = vpop.xlane.xlu0 %6111
    %6113 = vmax.xlane.f32.xlu0 %v6088
    %v6114 = vpop.xlane.xlu0 %6113
    %6115 = vmax.xlane.f32.xlu0 %v6089
    %v6116 = vpop.xlane.xlu0 %6115
    %6117 = vmax.xlane.f32.xlu0 %v6090
    %v6118 = vpop.xlane.xlu0 %6117
    %6119 = vmax.xlane.f32.xlu0 %v6091
    %v6120 = vpop.xlane.xlu0 %6119
    %6121 = vmax.xlane.f32.xlu0 %v6092
    %v6122 = vpop.xlane.xlu0 %6121
    %6123 = vmax.xlane.f32.xlu0 %v6093
    %v6124 = vpop.xlane.xlu0 %6123
    %6125 = vmax.xlane.f32.xlu0 %v6094
    %v6126 = vpop.xlane.xlu0 %6125
    %v6127 = vsel %vm2174, %v6096, -3e+38
    %v6128 = vsel %vm2174, %v6098, -3e+38
    %v6129 = vsel %vm2174, %v6100, -3e+38
    %v6130 = vsel %vm2174, %v6102, -3e+38
    %v6131 = vsel %vm2174, %v6104, -3e+38
    %v6132 = vsel %vm2174, %v6106, -3e+38
    %v6133 = vsel %vm2174, %v6108, -3e+38
    %v6134 = vsel %vm2174, %v6110, -3e+38
    %v6135 = vsel %vm2174, %v6112, -3e+38
    %v6136 = vsel %vm2174, %v6114, -3e+38
    %v6137 = vsel %vm2174, %v6116, -3e+38
    %v6138 = vsel %vm2174, %v6118, -3e+38
    %v6139 = vsel %vm2174, %v6120, -3e+38
    %v6140 = vsel %vm2174, %v6122, -3e+38
    %v6141 = vsel %vm2174, %v6124, -3e+38
    %v6142 = vsel %vm2174, %v6126, -3e+38
    %v6143 = vmax.f32 %v6062, %v6127
    %v6144 = vmax.f32 %v6063, %v6128
    %v6145 = vmax.f32 %v6064, %v6129
    %v6146 = vmax.f32 %v6065, %v6130
    %v6147 = vmax.f32 %v6066, %v6131
    %v6148 = vmax.f32 %v6067, %v6132
    %v6149 = vmax.f32 %v6068, %v6133
    %v6150 = vmax.f32 %v6069, %v6134
    %v6151 = vmax.f32 %v6070, %v6135
    %v6152 = vmax.f32 %v6071, %v6136
    %v6153 = vmax.f32 %v6072, %v6137
    %v6154 = vmax.f32 %v6073, %v6138
    %v6155 = vmax.f32 %v6074, %v6139
    %v6156 = vmax.f32 %v6075, %v6140
    %v6157 = vmax.f32 %v6076, %v6141
    %v6158 = vmax.f32 %v6077, %v6142
    %v6159 = vld [vmem:[%s101 + $0x3f] ss:$0 sm:$0xff]
    %v6160 = vsel %vm4928, %v6159, -3e+38
    %v6161 = vsel %vm4929, %v6159, -3e+38
    %v6162 = vsel %vm4930, %v6159, -3e+38
    %v6163 = vsel %vm4931, %v6159, -3e+38
    %v6164 = vsel %vm4932, %v6159, -3e+38
    %v6165 = vsel %vm4933, %v6159, -3e+38
    %v6166 = vsel %vm4934, %v6159, -3e+38
    %v6167 = vsel %vm4935, %v6159, -3e+38
    %v6168 = vsel %vm4936, %v6159, -3e+38
    %v6169 = vsel %vm4937, %v6159, -3e+38
    %v6170 = vsel %vm4938, %v6159, -3e+38
    %v6171 = vsel %vm4939, %v6159, -3e+38
    %v6172 = vsel %vm4940, %v6159, -3e+38
    %v6173 = vsel %vm4941, %v6159, -3e+38
    %v6174 = vsel %vm4942, %v6159, -3e+38
    %v6175 = vsel %vm4943, %v6159, -3e+38
    %6176 = vmax.xlane.f32.xlu0 %v6160
    %v6177 = vpop.xlane.xlu0 %6176
    %6178 = vmax.xlane.f32.xlu0 %v6161
    %v6179 = vpop.xlane.xlu0 %6178
    %6180 = vmax.xlane.f32.xlu0 %v6162
    %v6181 = vpop.xlane.xlu0 %6180
    %6182 = vmax.xlane.f32.xlu0 %v6163
    %v6183 = vpop.xlane.xlu0 %6182
    %6184 = vmax.xlane.f32.xlu0 %v6164
    %v6185 = vpop.xlane.xlu0 %6184
    %6186 = vmax.xlane.f32.xlu0 %v6165
    %v6187 = vpop.xlane.xlu0 %6186
    %6188 = vmax.xlane.f32.xlu0 %v6166
    %v6189 = vpop.xlane.xlu0 %6188
    %6190 = vmax.xlane.f32.xlu0 %v6167
    %v6191 = vpop.xlane.xlu0 %6190
    %6192 = vmax.xlane.f32.xlu0 %v6168
    %v6193 = vpop.xlane.xlu0 %6192
    %6194 = vmax.xlane.f32.xlu0 %v6169
    %v6195 = vpop.xlane.xlu0 %6194
    %6196 = vmax.xlane.f32.xlu0 %v6170
    %v6197 = vpop.xlane.xlu0 %6196
    %6198 = vmax.xlane.f32.xlu0 %v6171
    %v6199 = vpop.xlane.xlu0 %6198
    %6200 = vmax.xlane.f32.xlu0 %v6172
    %v6201 = vpop.xlane.xlu0 %6200
    %6202 = vmax.xlane.f32.xlu0 %v6173
    %v6203 = vpop.xlane.xlu0 %6202
    %6204 = vmax.xlane.f32.xlu0 %v6174
    %v6205 = vpop.xlane.xlu0 %6204
    %6206 = vmax.xlane.f32.xlu0 %v6175
    %v6207 = vpop.xlane.xlu0 %6206
    %v6208 = vsel %vm2256, %v6177, -3e+38
    %v6209 = vsel %vm2256, %v6179, -3e+38
    %v6210 = vsel %vm2256, %v6181, -3e+38
    %v6211 = vsel %vm2256, %v6183, -3e+38
    %v6212 = vsel %vm2256, %v6185, -3e+38
    %v6213 = vsel %vm2256, %v6187, -3e+38
    %v6214 = vsel %vm2256, %v6189, -3e+38
    %v6215 = vsel %vm2256, %v6191, -3e+38
    %v6216 = vsel %vm2256, %v6193, -3e+38
    %v6217 = vsel %vm2256, %v6195, -3e+38
    %v6218 = vsel %vm2256, %v6197, -3e+38
    %v6219 = vsel %vm2256, %v6199, -3e+38
    %v6220 = vsel %vm2256, %v6201, -3e+38
    %v6221 = vsel %vm2256, %v6203, -3e+38
    %v6222 = vsel %vm2256, %v6205, -3e+38
    %v6223 = vsel %vm2256, %v6207, -3e+38
    %v6224 = vmax.f32 %v6143, %v6208
    %v6225 = vmax.f32 %v6144, %v6209
    %v6226 = vmax.f32 %v6145, %v6210
    %v6227 = vmax.f32 %v6146, %v6211
    %v6228 = vmax.f32 %v6147, %v6212
    %v6229 = vmax.f32 %v6148, %v6213
    %v6230 = vmax.f32 %v6149, %v6214
    %v6231 = vmax.f32 %v6150, %v6215
    %v6232 = vmax.f32 %v6151, %v6216
    %v6233 = vmax.f32 %v6152, %v6217
    %v6234 = vmax.f32 %v6153, %v6218
    %v6235 = vmax.f32 %v6154, %v6219
    %v6236 = vmax.f32 %v6155, %v6220
    %v6237 = vmax.f32 %v6156, %v6221
    %v6238 = vmax.f32 %v6157, %v6222
    %v6239 = vmax.f32 %v6158, %v6223
    %vm6240 = vcmask 130048
    %6241 = vst.msk [vmem:[#allocation3] sm:$0xff] %vm6240, %v6224
    %6242 = vst.msk [vmem:[#allocation3 + $0x8] sm:$0xff] %vm6240, %v6225
    %6243 = vst.msk [vmem:[#allocation3 + $0x10] sm:$0xff] %vm6240, %v6226
    %6244 = vst.msk [vmem:[#allocation3 + $0x18] sm:$0xff] %vm6240, %v6227
    %6245 = vst.msk [vmem:[#allocation3 + $0x20] sm:$0xff] %vm6240, %v6228
    %6246 = vst.msk [vmem:[#allocation3 + $0x28] sm:$0xff] %vm6240, %v6229
    %6247 = vst.msk [vmem:[#allocation3 + $0x30] sm:$0xff] %vm6240, %v6230
    %6248 = vst.msk [vmem:[#allocation3 + $0x38] sm:$0xff] %vm6240, %v6231
    %6249 = vst.msk [vmem:[#allocation3 + $0x40] sm:$0xff] %vm6240, %v6232
    %6250 = vst.msk [vmem:[#allocation3 + $0x48] sm:$0xff] %vm6240, %v6233
    %6251 = vst.msk [vmem:[#allocation3 + $0x50] sm:$0xff] %vm6240, %v6234
    %6252 = vst.msk [vmem:[#allocation3 + $0x58] sm:$0xff] %vm6240, %v6235
    %6253 = vst.msk [vmem:[#allocation3 + $0x60] sm:$0xff] %vm6240, %v6236
    %6254 = vst.msk [vmem:[#allocation3 + $0x68] sm:$0xff] %vm6240, %v6237
    %6255 = vst.msk [vmem:[#allocation3 + $0x70] sm:$0xff] %vm6240, %v6238
    %6256 = vst.msk [vmem:[#allocation3 + $0x78] sm:$0xff] %vm6240, %v6239
  $region21: #{tpu_custom_call.1} parent=0 // pred_fallthru
    _
  %s6257 = sand.u32 %s117, 2
  %p6258 = scmp.ne.s32.totalorder %s6257, 0
  // Predicated region
  $region22: #{tpu_custom_call.1} parent=0 // pred_check
    %p6259 = pneg %p6258
  $region23: #{tpu_custom_call.1} parent=0 // pred_check_branch
    %6261 = sbr.rel (%p6259) target = $region25
  $region24: #{tpu_custom_call.1} parent=0 // pred_region
    %v6262 = vld [vmem:[#allocation2] sm:$0xff]
    %v6263 = vld [vmem:[#allocation2 + $0x8] sm:$0xff]
    %v6264 = vld [vmem:[#allocation2 + $0x10] sm:$0xff]
    %v6265 = vld [vmem:[#allocation2 + $0x18] sm:$0xff]
    %v6266 = vld [vmem:[#allocation2 + $0x20] sm:$0xff]
    %v6267 = vld [vmem:[#allocation2 + $0x28] sm:$0xff]
    %v6268 = vld [vmem:[#allocation2 + $0x30] sm:$0xff]
    %v6269 = vld [vmem:[#allocation2 + $0x38] sm:$0xff]
    %v6270 = vld [vmem:[#allocation2 + $0x40] sm:$0xff]
    %v6271 = vld [vmem:[#allocation2 + $0x48] sm:$0xff]
    %v6272 = vld [vmem:[#allocation2 + $0x50] sm:$0xff]
    %v6273 = vld [vmem:[#allocation2 + $0x58] sm:$0xff]
    %v6274 = vld [vmem:[#allocation2 + $0x60] sm:$0xff]
    %v6275 = vld [vmem:[#allocation2 + $0x68] sm:$0xff]
    %v6276 = vld [vmem:[#allocation2 + $0x70] sm:$0xff]
    %v6277 = vld [vmem:[#allocation2 + $0x78] sm:$0xff]
    %6294 = vrot.lane.b32.xlu0 %v6262, 124
    %v6295 = vpop.permute.xlu0 %6294
    %6296 = vrot.lane.b32.xlu0 %v6263, 124
    %v6297 = vpop.permute.xlu0 %6296
    %6298 = vrot.lane.b32.xlu0 %v6264, 124
    %v6299 = vpop.permute.xlu0 %6298
    %6300 = vrot.lane.b32.xlu0 %v6265, 124
    %v6301 = vpop.permute.xlu0 %6300
    %6302 = vrot.lane.b32.xlu0 %v6266, 124
    %v6303 = vpop.permute.xlu0 %6302
    %6304 = vrot.lane.b32.xlu0 %v6267, 124
    %v6305 = vpop.permute.xlu0 %6304
    %6306 = vrot.lane.b32.xlu0 %v6268, 124
    %v6307 = vpop.permute.xlu0 %6306
    %6308 = vrot.lane.b32.xlu0 %v6269, 124
    %v6309 = vpop.permute.xlu0 %6308
    %6310 = vrot.lane.b32.xlu0 %v6270, 124
    %v6311 = vpop.permute.xlu0 %6310
    %6312 = vrot.lane.b32.xlu0 %v6271, 124
    %v6313 = vpop.permute.xlu0 %6312
    %6314 = vrot.lane.b32.xlu0 %v6272, 124
    %v6315 = vpop.permute.xlu0 %6314
    %6316 = vrot.lane.b32.xlu0 %v6273, 124
    %v6317 = vpop.permute.xlu0 %6316
    %6318 = vrot.lane.b32.xlu0 %v6274, 124
    %v6319 = vpop.permute.xlu0 %6318
    %6320 = vrot.lane.b32.xlu0 %v6275, 124
    %v6321 = vpop.permute.xlu0 %6320
    %6322 = vrot.lane.b32.xlu0 %v6276, 124
    %v6323 = vpop.permute.xlu0 %6322
    %6324 = vrot.lane.b32.xlu0 %v6277, 124
    %v6325 = vpop.permute.xlu0 %6324
    %v6342 = vadd.f32 %v6262, %v6295
    %v6343 = vadd.f32 %v6263, %v6297
    %v6344 = vadd.f32 %v6264, %v6299
    %v6345 = vadd.f32 %v6265, %v6301
    %v6346 = vadd.f32 %v6266, %v6303
    %v6347 = vadd.f32 %v6267, %v6305
    %v6348 = vadd.f32 %v6268, %v6307
    %v6349 = vadd.f32 %v6269, %v6309
    %v6350 = vadd.f32 %v6270, %v6311
    %v6351 = vadd.f32 %v6271, %v6313
    %v6352 = vadd.f32 %v6272, %v6315
    %v6353 = vadd.f32 %v6273, %v6317
    %v6354 = vadd.f32 %v6274, %v6319
    %v6355 = vadd.f32 %v6275, %v6321
    %v6356 = vadd.f32 %v6276, %v6323
    %v6357 = vadd.f32 %v6277, %v6325
    %6358 = vrot.lane.b32.xlu0 %v6262, 120
    %v6359 = vpop.permute.xlu0 %6358
    %6360 = vrot.lane.b32.xlu0 %v6263, 120
    %v6361 = vpop.permute.xlu0 %6360
    %6362 = vrot.lane.b32.xlu0 %v6264, 120
    %v6363 = vpop.permute.xlu0 %6362
    %6364 = vrot.lane.b32.xlu0 %v6265, 120
    %v6365 = vpop.permute.xlu0 %6364
    %6366 = vrot.lane.b32.xlu0 %v6266, 120
    %v6367 = vpop.permute.xlu0 %6366
    %6368 = vrot.lane.b32.xlu0 %v6267, 120
    %v6369 = vpop.permute.xlu0 %6368
    %6370 = vrot.lane.b32.xlu0 %v6268, 120
    %v6371 = vpop.permute.xlu0 %6370
    %6372 = vrot.lane.b32.xlu0 %v6269, 120
    %v6373 = vpop.permute.xlu0 %6372
    %6374 = vrot.lane.b32.xlu0 %v6270, 120
    %v6375 = vpop.permute.xlu0 %6374
    %6376 = vrot.lane.b32.xlu0 %v6271, 120
    %v6377 = vpop.permute.xlu0 %6376
    %6378 = vrot.lane.b32.xlu0 %v6272, 120
    %v6379 = vpop.permute.xlu0 %6378
    %6380 = vrot.lane.b32.xlu0 %v6273, 120
    %v6381 = vpop.permute.xlu0 %6380
    %6382 = vrot.lane.b32.xlu0 %v6274, 120
    %v6383 = vpop.permute.xlu0 %6382
    %6384 = vrot.lane.b32.xlu0 %v6275, 120
    %v6385 = vpop.permute.xlu0 %6384
    %6386 = vrot.lane.b32.xlu0 %v6276, 120
    %v6387 = vpop.permute.xlu0 %6386
    %6388 = vrot.lane.b32.xlu0 %v6277, 120
    %v6389 = vpop.permute.xlu0 %6388
    %v6406 = vadd.f32 %v6342, %v6359
    %v6407 = vadd.f32 %v6343, %v6361
    %v6408 = vadd.f32 %v6344, %v6363
    %v6409 = vadd.f32 %v6345, %v6365
    %v6410 = vadd.f32 %v6346, %v6367
    %v6411 = vadd.f32 %v6347, %v6369
    %v6412 = vadd.f32 %v6348, %v6371
    %v6413 = vadd.f32 %v6349, %v6373
    %v6414 = vadd.f32 %v6350, %v6375
    %v6415 = vadd.f32 %v6351, %v6377
    %v6416 = vadd.f32 %v6352, %v6379
    %v6417 = vadd.f32 %v6353, %v6381
    %v6418 = vadd.f32 %v6354, %v6383
    %v6419 = vadd.f32 %v6355, %v6385
    %v6420 = vadd.f32 %v6356, %v6387
    %v6421 = vadd.f32 %v6357, %v6389
    %v6422 = vmax.f32 %v6406, 1.0
    %v6423 = vmax.f32 %v6407, 1.0
    %v6424 = vmax.f32 %v6408, 1.0
    %v6425 = vmax.f32 %v6409, 1.0
    %v6426 = vmax.f32 %v6410, 1.0
    %v6427 = vmax.f32 %v6411, 1.0
    %v6428 = vmax.f32 %v6412, 1.0
    %v6429 = vmax.f32 %v6413, 1.0
    %v6430 = vmax.f32 %v6414, 1.0
    %v6431 = vmax.f32 %v6415, 1.0
    %v6432 = vmax.f32 %v6416, 1.0
    %v6433 = vmax.f32 %v6417, 1.0
    %v6434 = vmax.f32 %v6418, 1.0
    %v6435 = vmax.f32 %v6419, 1.0
    %v6436 = vmax.f32 %v6420, 1.0
    %v6437 = vmax.f32 %v6421, 1.0
    %6439 = vset.pattern.permute.xlu0 0
    %6440 = vperm.xlu0 %6439, %v6422
    %v6441 = vpop.permute.xlu0 %6440
    %6444 = vset.pattern.permute.xlu0 0
    %6445 = vperm.xlu0 %6444, %v6423
    %v6446 = vpop.permute.xlu0 %6445
    %6449 = vset.pattern.permute.xlu0 0
    %6450 = vperm.xlu0 %6449, %v6424
    %v6451 = vpop.permute.xlu0 %6450
    %6454 = vset.pattern.permute.xlu0 0
    %6455 = vperm.xlu0 %6454, %v6425
    %v6456 = vpop.permute.xlu0 %6455
    %6459 = vset.pattern.permute.xlu0 0
    %6460 = vperm.xlu0 %6459, %v6426
    %v6461 = vpop.permute.xlu0 %6460
    %6464 = vset.pattern.permute.xlu0 0
    %6465 = vperm.xlu0 %6464, %v6427
    %v6466 = vpop.permute.xlu0 %6465
    %6469 = vset.pattern.permute.xlu0 0
    %6470 = vperm.xlu0 %6469, %v6428
    %v6471 = vpop.permute.xlu0 %6470
    %6474 = vset.pattern.permute.xlu0 0
    %6475 = vperm.xlu0 %6474, %v6429
    %v6476 = vpop.permute.xlu0 %6475
    %6479 = vset.pattern.permute.xlu0 0
    %6480 = vperm.xlu0 %6479, %v6430
    %v6481 = vpop.permute.xlu0 %6480
    %6484 = vset.pattern.permute.xlu0 0
    %6485 = vperm.xlu0 %6484, %v6431
    %v6486 = vpop.permute.xlu0 %6485
    %6489 = vset.pattern.permute.xlu0 0
    %6490 = vperm.xlu0 %6489, %v6432
    %v6491 = vpop.permute.xlu0 %6490
    %6494 = vset.pattern.permute.xlu0 0
    %6495 = vperm.xlu0 %6494, %v6433
    %v6496 = vpop.permute.xlu0 %6495
    %6499 = vset.pattern.permute.xlu0 0
    %6500 = vperm.xlu0 %6499, %v6434
    %v6501 = vpop.permute.xlu0 %6500
    %6504 = vset.pattern.permute.xlu0 0
    %6505 = vperm.xlu0 %6504, %v6435
    %v6506 = vpop.permute.xlu0 %6505
    %6509 = vset.pattern.permute.xlu0 0
    %6510 = vperm.xlu0 %6509, %v6436
    %v6511 = vpop.permute.xlu0 %6510
    %6514 = vset.pattern.permute.xlu0 0
    %6515 = vperm.xlu0 %6514, %v6437
    %v6516 = vpop.permute.xlu0 %6515
    %v6518 = vrcp.pop %v6441
    %v6519 = vmul.f32 %v6406, %v6518
    %v6520 = vrcp.pop %v6446
    %v6521 = vmul.f32 %v6407, %v6520
    %v6522 = vrcp.pop %v6451
    %v6523 = vmul.f32 %v6408, %v6522
    %v6524 = vrcp.pop %v6456
    %v6525 = vmul.f32 %v6409, %v6524
    %v6526 = vrcp.pop %v6461
    %v6527 = vmul.f32 %v6410, %v6526
    %v6528 = vrcp.pop %v6466
    %v6529 = vmul.f32 %v6411, %v6528
    %v6530 = vrcp.pop %v6471
    %v6531 = vmul.f32 %v6412, %v6530
    %v6532 = vrcp.pop %v6476
    %v6533 = vmul.f32 %v6413, %v6532
    %v6534 = vrcp.pop %v6481
    %v6535 = vmul.f32 %v6414, %v6534
    %v6536 = vrcp.pop %v6486
    %v6537 = vmul.f32 %v6415, %v6536
    %v6538 = vrcp.pop %v6491
    %v6539 = vmul.f32 %v6416, %v6538
    %v6540 = vrcp.pop %v6496
    %v6541 = vmul.f32 %v6417, %v6540
    %v6542 = vrcp.pop %v6501
    %v6543 = vmul.f32 %v6418, %v6542
    %v6544 = vrcp.pop %v6506
    %v6545 = vmul.f32 %v6419, %v6544
    %v6546 = vrcp.pop %v6511
    %v6547 = vmul.f32 %v6420, %v6546
    %v6548 = vrcp.pop %v6516
    %v6549 = vmul.f32 %v6421, %v6548
    %v6550 = vld [vmem:[#allocation3] sm:$0xff]
    %v6551 = vld [vmem:[#allocation3 + $0x8] sm:$0xff]
    %v6552 = vld [vmem:[#allocation3 + $0x10] sm:$0xff]
    %v6553 = vld [vmem:[#allocation3 + $0x18] sm:$0xff]
    %v6554 = vld [vmem:[#allocation3 + $0x20] sm:$0xff]
    %v6555 = vld [vmem:[#allocation3 + $0x28] sm:$0xff]
    %v6556 = vld [vmem:[#allocation3 + $0x30] sm:$0xff]
    %v6557 = vld [vmem:[#allocation3 + $0x38] sm:$0xff]
    %v6558 = vld [vmem:[#allocation3 + $0x40] sm:$0xff]
    %v6559 = vld [vmem:[#allocation3 + $0x48] sm:$0xff]
    %v6560 = vld [vmem:[#allocation3 + $0x50] sm:$0xff]
    %v6561 = vld [vmem:[#allocation3 + $0x58] sm:$0xff]
    %v6562 = vld [vmem:[#allocation3 + $0x60] sm:$0xff]
    %v6563 = vld [vmem:[#allocation3 + $0x68] sm:$0xff]
    %v6564 = vld [vmem:[#allocation3 + $0x70] sm:$0xff]
    %v6565 = vld [vmem:[#allocation3 + $0x78] sm:$0xff]
    %6582 = vrot.lane.b32.xlu0 %v6519, 127
    %v6583 = vpop.permute.xlu0 %6582
    %6584 = vrot.lane.b32.xlu0 %v6521, 127
    %v6585 = vpop.permute.xlu0 %6584
    %6586 = vrot.lane.b32.xlu0 %v6523, 127
    %v6587 = vpop.permute.xlu0 %6586
    %6588 = vrot.lane.b32.xlu0 %v6525, 127
    %v6589 = vpop.permute.xlu0 %6588
    %6590 = vrot.lane.b32.xlu0 %v6527, 127
    %v6591 = vpop.permute.xlu0 %6590
    %6592 = vrot.lane.b32.xlu0 %v6529, 127
    %v6593 = vpop.permute.xlu0 %6592
    %6594 = vrot.lane.b32.xlu0 %v6531, 127
    %v6595 = vpop.permute.xlu0 %6594
    %6596 = vrot.lane.b32.xlu0 %v6533, 127
    %v6597 = vpop.permute.xlu0 %6596
    %6598 = vrot.lane.b32.xlu0 %v6535, 127
    %v6599 = vpop.permute.xlu0 %6598
    %6600 = vrot.lane.b32.xlu0 %v6537, 127
    %v6601 = vpop.permute.xlu0 %6600
    %6602 = vrot.lane.b32.xlu0 %v6539, 127
    %v6603 = vpop.permute.xlu0 %6602
    %6604 = vrot.lane.b32.xlu0 %v6541, 127
    %v6605 = vpop.permute.xlu0 %6604
    %6606 = vrot.lane.b32.xlu0 %v6543, 127
    %v6607 = vpop.permute.xlu0 %6606
    %6608 = vrot.lane.b32.xlu0 %v6545, 127
    %v6609 = vpop.permute.xlu0 %6608
    %6610 = vrot.lane.b32.xlu0 %v6547, 127
    %v6611 = vpop.permute.xlu0 %6610
    %6612 = vrot.lane.b32.xlu0 %v6549, 127
    %v6613 = vpop.permute.xlu0 %6612
    %6646 = vrot.lane.b32.xlu0 %v6550, 3
    %v6647 = vpop.permute.xlu0 %6646
    %6648 = vrot.lane.b32.xlu0 %v6551, 3
    %v6649 = vpop.permute.xlu0 %6648
    %6650 = vrot.lane.b32.xlu0 %v6552, 3
    %v6651 = vpop.permute.xlu0 %6650
    %6652 = vrot.lane.b32.xlu0 %v6553, 3
    %v6653 = vpop.permute.xlu0 %6652
    %6654 = vrot.lane.b32.xlu0 %v6554, 3
    %v6655 = vpop.permute.xlu0 %6654
    %6656 = vrot.lane.b32.xlu0 %v6555, 3
    %v6657 = vpop.permute.xlu0 %6656
    %6658 = vrot.lane.b32.xlu0 %v6556, 3
    %v6659 = vpop.permute.xlu0 %6658
    %6660 = vrot.lane.b32.xlu0 %v6557, 3
    %v6661 = vpop.permute.xlu0 %6660
    %6662 = vrot.lane.b32.xlu0 %v6558, 3
    %v6663 = vpop.permute.xlu0 %6662
    %6664 = vrot.lane.b32.xlu0 %v6559, 3
    %v6665 = vpop.permute.xlu0 %6664
    %6666 = vrot.lane.b32.xlu0 %v6560, 3
    %v6667 = vpop.permute.xlu0 %6666
    %6668 = vrot.lane.b32.xlu0 %v6561, 3
    %v6669 = vpop.permute.xlu0 %6668
    %6670 = vrot.lane.b32.xlu0 %v6562, 3
    %v6671 = vpop.permute.xlu0 %6670
    %6672 = vrot.lane.b32.xlu0 %v6563, 3
    %v6673 = vpop.permute.xlu0 %6672
    %6674 = vrot.lane.b32.xlu0 %v6564, 3
    %v6675 = vpop.permute.xlu0 %6674
    %6676 = vrot.lane.b32.xlu0 %v6565, 3
    %v6677 = vpop.permute.xlu0 %6676
    %vm6694 = vcmask 23552
    %v6695 = vsel %vm6694, %v6583, %v6647
    %v6696 = vsel %vm6694, %v6585, %v6649
    %v6697 = vsel %vm6694, %v6587, %v6651
    %v6698 = vsel %vm6694, %v6589, %v6653
    %v6699 = vsel %vm6694, %v6591, %v6655
    %v6700 = vsel %vm6694, %v6593, %v6657
    %v6701 = vsel %vm6694, %v6595, %v6659
    %v6702 = vsel %vm6694, %v6597, %v6661
    %v6703 = vsel %vm6694, %v6599, %v6663
    %v6704 = vsel %vm6694, %v6601, %v6665
    %v6705 = vsel %vm6694, %v6603, %v6667
    %v6706 = vsel %vm6694, %v6605, %v6669
    %v6707 = vsel %vm6694, %v6607, %v6671
    %v6708 = vsel %vm6694, %v6609, %v6673
    %v6709 = vsel %vm6694, %v6611, %v6675
    %v6710 = vsel %vm6694, %v6613, %v6677
    %vm6711 = vcmask 154624
    %6712 = vst.msk [vmem:[%s111] sm:$0xff] %vm6711, %v6695
    %6713 = vst.msk [vmem:[%s111 + $0x8] sm:$0xff] %vm6711, %v6696
    %6714 = vst.msk [vmem:[%s111 + $0x10] sm:$0xff] %vm6711, %v6697
    %6715 = vst.msk [vmem:[%s111 + $0x18] sm:$0xff] %vm6711, %v6698
    %6716 = vst.msk [vmem:[%s111 + $0x20] sm:$0xff] %vm6711, %v6699
    %6717 = vst.msk [vmem:[%s111 + $0x28] sm:$0xff] %vm6711, %v6700
    %6718 = vst.msk [vmem:[%s111 + $0x30] sm:$0xff] %vm6711, %v6701
    %6719 = vst.msk [vmem:[%s111 + $0x38] sm:$0xff] %vm6711, %v6702
    %6720 = vst.msk [vmem:[%s111 + $0x40] sm:$0xff] %vm6711, %v6703
    %6721 = vst.msk [vmem:[%s111 + $0x48] sm:$0xff] %vm6711, %v6704
    %6722 = vst.msk [vmem:[%s111 + $0x50] sm:$0xff] %vm6711, %v6705
    %6723 = vst.msk [vmem:[%s111 + $0x58] sm:$0xff] %vm6711, %v6706
    %6724 = vst.msk [vmem:[%s111 + $0x60] sm:$0xff] %vm6711, %v6707
    %6725 = vst.msk [vmem:[%s111 + $0x68] sm:$0xff] %vm6711, %v6708
    %6726 = vst.msk [vmem:[%s111 + $0x70] sm:$0xff] %vm6711, %v6709
    %6727 = vst.msk [vmem:[%s111 + $0x78] sm:$0xff] %vm6711, %v6710
  $region25: #{tpu_custom_call.1} parent=0 // pred_fallthru
    _
  %s6728 = sadd.s32 0, 0
  %s6729 = sld [smem:[#allocation5 + %s6728]]
  %s6730 = smul.u32 16, %s6729
  %p6731 = scmp.lt.s32.totalorder %s6730, 15
  %s6732 = scalar_select %p6731, %s6730, 15
  %s6733 = smul.addr %s6732, 8
  %s6734 = scalar_lea.vmem %s6, %s6733
  // Predicated region
  $region26: #{tpu_custom_call.1} parent=0 // pred_check
    _
  $region27: #{tpu_custom_call.1} parent=0 // pred_check_branch
    %6736 = sbr.rel (0) target = $region29
  $region28: #{tpu_custom_call.1} parent=0 // pred_region
    %s6737 = sadd.s32 0, 0
    %s6738 = sld [smem:[#allocation5 + %s6737]]
    %s6739 = smul.u32 16, %s6738
  $region29: #{tpu_custom_call.1} parent=0 // pred_fallthru
    _
  // Predicated region
  $region30: #{tpu_custom_call.1} parent=0 // pred_check
    _
  $region31: #{tpu_custom_call.1} parent=0 // pred_check_branch
    %6741 = sbr.rel (0) target = $region33
  $region32: #{tpu_custom_call.1} parent=0 // pred_region
    %s6742 = sadd.s32 0, 0
    %s6743 = sld [smem:[#allocation5 + %s6742]]
    %s6744 = smul.u32 16, %s6743
    %p6745 = scmp.lt.s32.totalorder %s6744, 15
    %s6746 = scalar_select %p6745, %s6744, 15
    %s6747 = smul.addr %s6746, 8
    %s6748 = scalar_lea.vmem %s6, %s6747
  $region33: #{tpu_custom_call.1} parent=0 // pred_fallthru
    _

</llo_original>
